<compile_context>
chip_gen: v6e
topology: v6e:2x2x1
jax: 0.10.0
libtpu: 0.0.40
codegen_flags: <defaults>
</compile_context>

<pallas_src>
import jax
import jax.numpy as jnp
import numpy as np
from jax.experimental import pallas as pl
from jax.experimental.pallas import tpu as pltpu

_LANE = 128     # lane tile
_SUBLANE = 16   # sublane tile (16 keeps bf16 blocks natively tiled too)


def _round_up(x, m):
    return ((x + m - 1) // m) * m


def _tpu_vmem_bytes():
    """Per-TensorCore VMEM capacity (v5e/v6e: 128 MiB, v7x: 64 MiB). Fallback 64 MiB."""
    try:
        cap = int(pltpu.get_tpu_info().vmem_capacity_bytes)
        if cap > 0:
            return cap
    except Exception:
        pass
    return 64 * 1024 * 1024


def _pick_time_chunk(T, Bp, Dp, Hp, budget_bytes, max_chunk=128):
    """Largest time chunk whose double-buffered blocks + scratch fit the VMEM budget."""
    Gp = 4 * Hp
    resident = (2 * 2 * Dp * Gp          # W_ih (bf16, double-buffered)
                + 2 * 2 * Hp * Gp        # W_hh (bf16, double-buffered)
                + 2 * 2 * Gp * 4         # bias (f32, double-buffered)
                + 2 * Bp * Hp * 4        # h/c VMEM carries
                + 2 * 2 * 2 * Bp * Hp * 4)   # h_n / c_n output blocks
    per_t = (2 * Bp * Dp * 2             # x block rows (bf16, double-buffered)
             + 2 * Bp * Hp * 2           # out block rows (bf16, double-buffered)
             + Bp * Gp * 4)              # gates scratch (f32)
    avail = max(budget_bytes - resident, per_t)
    return int(max(1, min(max_chunk, T, avail // per_t)))


# ---------------------------------------------------------------------------
# Fused bidirectional LSTM layer kernel.
#   grid = (direction ["parallel"], time_block ["arbitrary"])
# ---------------------------------------------------------------------------
def _make_bilstm_kernel(Hp, Bp, t_chunk, n_tb, t_valid, unroll):
    def kernel(x_ref, wih_ref, whh_ref, b_ref,
               out_ref, h_out_ref, c_out_ref,
               gates_sc, h_sc, c_sc):
        d = pl.program_id(0)            # 0 = forward, 1 = backward
        tb = pl.program_id(1)           # time-block index (sequential recurrence)

        @pl.when(tb == 0)
        def _init():
            h_sc[...] = jnp.zeros_like(h_sc)
            c_sc[...] = jnp.zeros_like(c_sc)

        # Fused, hoisted input projection: ONE bf16 MXU matmul covers the whole time
        # chunk; bias folded in; result parked in VMEM scratch (off the serial path).
        gates_sc[...] = (
            jnp.dot(x_ref[...], wih_ref[...], preferred_element_type=jnp.float32)
            + b_ref[...])

        whh = whh_ref[...]                       # (Hp, 4Hp) bf16, hoisted out of the loop
        tb_arr = tb + d * (n_tb - 1 - 2 * tb)    # this block's position in the time-major array

        def step(j, carry):
            h, c = carry                          # f32, carried in vregs (not scratch)
            # forward walks 0..t_chunk-1, backward walks t_chunk-1..0 inside its
            # (index_map-reversed) block, so states land in natural time order.
            idx = j + d * (t_chunk - 1 - 2 * j)
            row = pl.multiple_of(idx * Bp, Bp)
            g = gates_sc[pl.ds(row, Bp), :] + jnp.dot(
                h.astype(whh.dtype), whh, preferred_element_type=jnp.float32)
            # PyTorch LSTM gate order i, f, g, o; Hp lane-aligned -> free slices.
            i_g = jax.nn.sigmoid(g[:, 0 * Hp:1 * Hp])
            f_g = jax.nn.sigmoid(g[:, 1 * Hp:2 * Hp])
            g_g = jnp.tanh(g[:, 2 * Hp:3 * Hp])
            o_g = jax.nn.sigmoid(g[:, 3 * Hp:4 * Hp])
            c_new = f_g * c + i_g * g_g
            h_new = o_g * jnp.tanh(c_new)
            if t_valid is not None:               # only compiled in when T was padded
                keep = (tb_arr * t_chunk + idx) < t_valid
                h_new = jnp.where(keep, h_new, h)
                c_new = jnp.where(keep, c_new, c)
            # Unmasked lane-dense store straight into this direction's half of the
            # concatenated output block.
            out_ref[pl.ds(row, Bp), :] = h_new.astype(jnp.bfloat16)
            return (h_new, c_new)

        h_fin, c_fin = jax.lax.fori_loop(
            0, t_chunk, step, (h_sc[...], c_sc[...]), unroll=unroll)

        # Flush carries to VMEM once per time block (not once per step).
        h_sc[...] = h_fin
        c_sc[...] = c_fin

        # Final (h_n, c_n) only on the last time block (direction stays outermost).
        @pl.when(tb == n_tb - 1)
        def _finalize():
            h_out_ref[...] = h_fin
            c_out_ref[...] = c_fin

    return kernel


def bilstm_layer(x_tm, w_ih, w_hh, b, Hp, vmem_cap):
    """One bidirectional LSTM layer (padded shapes).

    x_tm: (T, Bp, Dp) bf16   w_ih: (2, Dp, 4Hp) bf16   w_hh: (2, Hp, 4Hp) bf16
    b: (2, 4Hp) f32
    Returns (out (T, Bp, 2Hp) bf16, h_n (2, Bp, Hp) f32, c_n (2, Bp, Hp) f32).
    """
    T, Bp, Dp = x_tm.shape
    Gp = w_ih.shape[-1]                      # 4Hp

    vmem_limit = int(min(vmem_cap * 3 // 4, 100 * 1024 * 1024))
    t_chunk = _pick_time_chunk(T, Bp, Dp, Hp, vmem_cap // 2)
    n_tb = -(-T // t_chunk)
    T_pad = n_tb * t_chunk
    if T_pad != T:                            # pad + in-kernel mask, never t_chunk=1 fallback
        x_tm = jnp.pad(x_tm, ((0, T_pad - T), (0, 0), (0, 0)))
    t_valid = T if T_pad != T else None

    x_flat = x_tm.reshape(T_pad * Bp, Dp)     # free: time-major rows, lane dim untouched

    kernel = _make_bilstm_kernel(Hp, Bp, t_chunk, n_tb, t_valid,
                                 unroll=min(8, t_chunk))

    def tb_arr(d, tb):
        # forward: tb ; backward: n_tb - 1 - tb  (pure int arithmetic, d in {0,1})
        return tb + d * (n_tb - 1 - 2 * tb)

    out, h_n, c_n = pl.pallas_call(
        kernel,
        out_shape=(
            jax.ShapeDtypeStruct((T_pad * Bp, 2 * Hp), jnp.bfloat16),  # [fwd | bwd] concat
            jax.ShapeDtypeStruct((2, Bp, Hp), jnp.float32),            # h_n
            jax.ShapeDtypeStruct((2, Bp, Hp), jnp.float32),            # c_n
        ),
        grid_spec=pltpu.PrefetchScalarGridSpec(
            num_scalar_prefetch=0,
            grid=(2, n_tb),
            in_specs=[
                pl.BlockSpec((t_chunk * Bp, Dp), lambda d, tb: (tb_arr(d, tb), 0)),  # x rows
                pl.BlockSpec((None, Dp, Gp), lambda d, tb: (d, 0, 0)),   # W_ih[d] (resident)
                pl.BlockSpec((None, Hp, Gp), lambda d, tb: (d, 0, 0)),   # W_hh[d] (resident)
                pl.BlockSpec((None, 1, Gp), lambda d, tb: (d, 0, 0)),    # bias[d]
            ],
            out_specs=[
                # direction selects the column block -> output is written pre-concatenated
                pl.BlockSpec((t_chunk * Bp, Hp), lambda d, tb: (tb_arr(d, tb), d)),
                pl.BlockSpec((None, Bp, Hp), lambda d, tb: (d, 0, 0)),   # h_n (last block only)
                pl.BlockSpec((None, Bp, Hp), lambda d, tb: (d, 0, 0)),   # c_n (last block only)
            ],
            scratch_shapes=[
                pltpu.VMEM((t_chunk * Bp, Gp), jnp.float32),   # block gates (x@W_ih + b)
                pltpu.VMEM((Bp, Hp), jnp.float32),             # h carry across time blocks
                pltpu.VMEM((Bp, Hp), jnp.float32),             # c carry across time blocks
            ],
        ),
        compiler_params=pltpu.CompilerParams(
            # direction is independent -> shards across v7x's 2 TensorCores;
            # time carries the recurrence -> sequential ("arbitrary").
            dimension_semantics=("parallel", "arbitrary"),
            vmem_limit_bytes=vmem_limit),
    )(x_flat, w_ih, w_hh, b.reshape(2, 1, Gp))

    out = out.reshape(T_pad, Bp, 2 * Hp)[:T]
    return out, h_n, c_n


# ---------------------------------------------------------------------------
# Parameter init (PyTorch-like, unpadded) and padding to TPU-friendly layout.
# ---------------------------------------------------------------------------
def init_encoder_params(key, input_dim, hidden_dim, nb_rnn_layers):
    """nn.LSTM-shaped params (transposed for x @ W, directions stacked, b = b_ih + b_hh)."""
    k = 1.0 / np.sqrt(hidden_dim)
    params = []
    for layer in range(nb_rnn_layers):
        d_in = input_dim if layer == 0 else 2 * hidden_dim
        w_ih, w_hh, b = [], [], []
        for _direction in range(2):
            key, k1, k2, k3, k4 = jax.random.split(key, 5)
            w_ih.append(jax.random.uniform(k1, (d_in, 4 * hidden_dim), jnp.float32, -k, k))
            w_hh.append(jax.random.uniform(k2, (hidden_dim, 4 * hidden_dim), jnp.float32, -k, k))
            b_ih = jax.random.uniform(k3, (4 * hidden_dim,), jnp.float32, -k, k)
            b_hh = jax.random.uniform(k4, (4 * hidden_dim,), jnp.float32, -k, k)
            b.append(b_ih + b_hh)
        params.append((jnp.stack(w_ih), jnp.stack(w_hh), jnp.stack(b)))
    return params


def _pad_gate_cols(a, H, Hp):
    """Pad the last dim (4 stacked gate blocks of width H) to 4*Hp with zeros per gate."""
    if Hp == H:
        return a
    parts = jnp.split(a, 4, axis=-1)
    pad = [(0, 0)] * (a.ndim - 1) + [(0, Hp - H)]
    return jnp.concatenate([jnp.pad(p, pad) for p in parts], axis=-1)


def _pad_params(params, H, Hp):
    """Zero-pad weights/biases so padded hidden units / padded inputs stay exactly zero."""
    padded = []
    for layer, (w_ih, w_hh, b) in enumerate(params):
        w_ih_p = _pad_gate_cols(w_ih, H, Hp)                      # (2, D_in, 4Hp)
        if layer == 0:
            d_in = w_ih_p.shape[1]
            d_in_p = _round_up(d_in, _LANE)
            w_ih_p = jnp.pad(w_ih_p, ((0, 0), (0, d_in_p - d_in), (0, 0)))
        else:
            # Layer>=1 input features are [fwd H | bwd H]; re-pack rows to [fwd Hp | bwd Hp].
            fwd, bwd = w_ih_p[:, :H, :], w_ih_p[:, H:, :]
            zrows = jnp.zeros((2, Hp - H, w_ih_p.shape[-1]), w_ih_p.dtype)
            w_ih_p = jnp.concatenate([fwd, zrows, bwd, zrows], axis=1)   # (2, 2Hp, 4Hp)
        w_hh_p = jnp.pad(_pad_gate_cols(w_hh, H, Hp), ((0, 0), (0, Hp - H), (0, 0)))
        b_p = _pad_gate_cols(b, H, Hp)
        padded.append((w_ih_p.astype(jnp.bfloat16),               # MXU operands in bf16
                       w_hh_p.astype(jnp.bfloat16),
                       b_p.astype(jnp.float32)))
    return padded


# ---------------------------------------------------------------------------
# EncoderRNN forward
# ---------------------------------------------------------------------------
def encoder_rnn_forward(params, x):
    """EncoderRNN.forward: x is (B, T, input_dim) (batch_first=True).

    Returns rnn_states = (h_n, c_n), each (num_layers * 2, B, hidden_dim),
    ordered [layer0_fwd, layer0_bwd, layer1_fwd, layer1_bwd, ...] like PyTorch.
    """
    B, T, D0 = x.shape
    H = params[0][1].shape[1]                   # w_hh: (2, H, 4H)
    Hp = _round_up(H, _LANE)
    Bp = _round_up(B, _SUBLANE)
    D0p = _round_up(D0, _LANE)
    vmem_cap = _tpu_vmem_bytes()

    padded = _pad_params(params, H, Hp)

    x_tm = jnp.transpose(x, (1, 0, 2))                               # time-major (T, B, D0)
    x_tm = jnp.pad(x_tm, ((0, 0), (0, Bp - B), (0, D0p - D0)))
    layer_in = x_tm.astype(jnp.bfloat16)                             # bf16 MXU operand

    h_list, c_list = [], []
    for (w_ih, w_hh, b) in padded:
        out, h_n, c_n = bilstm_layer(layer_in, w_ih, w_hh, b, Hp, vmem_cap)
        layer_in = out                                               # (T, Bp, 2Hp), pre-concatenated
        # TODO(synk): inter-layer dropout (drop_prob) applies only in training mode; omitted.
        h_list.append(h_n[:, :B, :H])
        c_list.append(c_n[:, :B, :H])
    return jnp.concatenate(h_list, axis=0), jnp.concatenate(c_list, axis=0)


# ---------------------------------------------------------------------------
# Pure-JAX reference (f32, unpadded) for validation.
# ---------------------------------------------------------------------------
def _lstm_scan_ref(x_tm, w_ih, w_hh, b):
    H = w_hh.shape[0]
    B = x_tm.shape[1]

    def step(carry, x_t):
        h, c = carry
        g = x_t @ w_ih + h @ w_hh + b
        i = jax.nn.sigmoid(g[:, 0 * H:1 * H])
        f = jax.nn.sigmoid(g[:, 1 * H:2 * H])
        gg = jnp.tanh(g[:, 2 * H:3 * H])
        o = jax.nn.sigmoid(g[:, 3 * H:4 * H])
        c = f * c + i * gg
        h = o * jnp.tanh(c)
        return (h, c), h

    init = (jnp.zeros((B, H), jnp.float32), jnp.zeros((B, H), jnp.float32))
    (h, c), outs = jax.lax.scan(step, init, x_tm)
    return outs, h, c


def encoder_rnn_forward_ref(params, x):
    x_tm = jnp.transpose(x, (1, 0, 2))
    layer_in = x_tm
    h_list, c_list = [], []
    for (w_ih, w_hh, b) in params:
        out_f, h_f, c_f = _lstm_scan_ref(layer_in, w_ih[0], w_hh[0], b[0])
        out_b_rev, h_b, c_b = _lstm_scan_ref(layer_in[::-1], w_ih[1], w_hh[1], b[1])
        layer_in = jnp.concatenate([out_f, out_b_rev[::-1]], axis=-1)
        h_list += [h_f, h_b]
        c_list += [c_f, c_b]
    return jnp.stack(h_list, axis=0), jnp.stack(c_list, axis=0)


if __name__ == "__main__":
    input_dim, hidden_dim, nb_rnn_layers, drop_prob = 16, 32, 2, 0.0
    B, T = 2, 8

    key = jax.random.PRNGKey(0)
    kp, kx = jax.random.split(key)
    params = init_encoder_params(kp, input_dim, hidden_dim, nb_rnn_layers)
    x = jax.random.normal(kx, (B, T, input_dim), jnp.float32)

    fwd = jax.jit(encoder_rnn_forward)
    h_n, c_n = fwd(params, x)
    jax.block_until_ready((h_n, c_n))

    assert h_n.shape == (nb_rnn_layers * 2, B, hidden_dim)
    assert c_n.shape == (nb_rnn_layers * 2, B, hidden_dim)

    # Validate against the pure-JAX f32 reference.  Tolerances are loosened because
    # MXU operands (inputs, weights, recurrent h) are bf16 per the perf review.
    h_ref, c_ref = encoder_rnn_forward_ref(params, x)
    np.testing.assert_allclose(np.asarray(h_n), np.asarray(h_ref), rtol=5e-2, atol=5e-2)
    np.testing.assert_allclose(np.asarray(c_n), np.asarray(c_ref), rtol=5e-2, atol=5e-2)

    print("KERNEL_OK")
</pallas_src>

<mosaic_0001>
module attributes {stable_mosaic.version = 11 : i64} {
  func.func @kernel(%arg0: i32, %arg1: i32, %arg2: memref<128x128xbf16, #tpu.memory_space<vmem>>, %arg3: memref<1x128x512xbf16, #tpu.memory_space<vmem>>, %arg4: memref<1x128x512xbf16, #tpu.memory_space<vmem>>, %arg5: memref<1x1x512xf32, #tpu.memory_space<vmem>>, %arg6: memref<128x128xbf16, #tpu.memory_space<vmem>>, %arg7: memref<1x16x128xf32, #tpu.memory_space<vmem>>, %arg8: memref<1x16x128xf32, #tpu.memory_space<vmem>>, %arg9: memref<128x512xf32, #tpu.memory_space<vmem>>, %arg10: memref<16x128xf32, #tpu.memory_space<vmem>>, %arg11: memref<16x128xf32, #tpu.memory_space<vmem>>) attributes {dimension_semantics = [#tpu.dimension_semantics<parallel>, #tpu.dimension_semantics<arbitrary>], iteration_bounds = array<i64: 2, 1>, scalar_prefetch = 0 : i64, scratch_operands = 3 : i64, tpu.core_type = #tpu.core_type<tc>, window_params = [{transform_indices = @transform_0, window_bounds = array<i64: 128, 128>}, {transform_indices = @transform_1, window_bounds = array<i64: 1, 128, 512>}, {transform_indices = @transform_2, window_bounds = array<i64: 1, 128, 512>}, {transform_indices = @transform_3, window_bounds = array<i64: 1, 1, 512>}, {transform_indices = @transform_4, window_bounds = array<i64: 128, 128>}, {transform_indices = @transform_5, window_bounds = array<i64: 1, 16, 128>}, {transform_indices = @transform_6, window_bounds = array<i64: 1, 16, 128>}]} {
    %c0_i32 = arith.constant 0 : i32
    %0 = arith.cmpi eq, %arg1, %c0_i32 : i32
    %1 = arith.extui %0 : i1 to i32
    %c0_i32_0 = arith.constant 0 : i32
    %2 = arith.cmpi ne, %1, %c0_i32_0 : i32
    scf.if %2 {
      %cst_95 = arith.constant 0.000000e+00 : f32
      %333 = vector.broadcast %cst_95 : f32 to vector<16x128xf32>
      %c0_96 = arith.constant 0 : index
      %c0_97 = arith.constant 0 : index
      %334 = vector.load %arg10[%c0_96, %c0_97] : memref<16x128xf32, #tpu.memory_space<vmem>>, vector<16x128xf32>
      tpu.vector_store %arg10[%c0_96, %c0_97], %333 {strides = array<i32>} : memref<16x128xf32, #tpu.memory_space<vmem>>, vector<16x128xf32>,
      %cst_98 = arith.constant 0.000000e+00 : f32
      %335 = vector.broadcast %cst_98 : f32 to vector<16x128xf32>
      %c0_99 = arith.constant 0 : index
      %c0_100 = arith.constant 0 : index
      %336 = vector.load %arg11[%c0_99, %c0_100] : memref<16x128xf32, #tpu.memory_space<vmem>>, vector<16x128xf32>
      tpu.vector_store %arg11[%c0_99, %c0_100], %335 {strides = array<i32>} : memref<16x128xf32, #tpu.memory_space<vmem>>, vector<16x128xf32>,
    } else {
    }
    %c0 = arith.constant 0 : index
    %c0_1 = arith.constant 0 : index
    %3 = vector.load %arg2[%c0, %c0_1] : memref<128x128xbf16, #tpu.memory_space<vmem>>, vector<128x128xbf16>
    %c0_2 = arith.constant 0 : index
    %c0_3 = arith.constant 0 : index
    %c0_4 = arith.constant 0 : index
    %4 = vector.load %arg3[%c0_2, %c0_3, %c0_4] : memref<1x128x512xbf16, #tpu.memory_space<vmem>>, vector<1x128x512xbf16>
    %5 = vector.shape_cast %4 : vector<1x128x512xbf16> to vector<128x512xbf16>
    %cst = arith.constant dense<0.000000e+00> : vector<128x512xf32>
    %6 = tpu.matmul %3, %5, %cst {dimension_numbers = #tpu.dot_dimension_numbers<[1], [0], [0], [1], [0, 0, 1, 1], [], []>} : vector<128x128xbf16>, vector<128x512xbf16>, vector<128x512xf32> -> vector<128x512xf32>
    %c0_5 = arith.constant 0 : index
    %c0_6 = arith.constant 0 : index
    %c0_7 = arith.constant 0 : index
    %7 = vector.load %arg5[%c0_5, %c0_6, %c0_7] : memref<1x1x512xf32, #tpu.memory_space<vmem>>, vector<1x1x512xf32>
    %8 = vector.shape_cast %7 : vector<1x1x512xf32> to vector<1x512xf32>
    %9 = vector.broadcast %8 : vector<1x512xf32> to vector<128x512xf32>
    %10 = arith.addf %6, %9 : vector<128x512xf32>
    %c0_8 = arith.constant 0 : index
    %c0_9 = arith.constant 0 : index
    %11 = vector.load %arg9[%c0_8, %c0_9] : memref<128x512xf32, #tpu.memory_space<vmem>>, vector<128x512xf32>
    tpu.vector_store %arg9[%c0_8, %c0_9], %10 {strides = array<i32>} : memref<128x512xf32, #tpu.memory_space<vmem>>, vector<128x512xf32>,
    %c0_10 = arith.constant 0 : index
    %c0_11 = arith.constant 0 : index
    %c0_12 = arith.constant 0 : index
    %12 = vector.load %arg4[%c0_10, %c0_11, %c0_12] : memref<1x128x512xbf16, #tpu.memory_space<vmem>>, vector<1x128x512xbf16>
    %13 = vector.shape_cast %12 : vector<1x128x512xbf16> to vector<128x512xbf16>
    %c0_13 = arith.constant 0 : index
    %c0_14 = arith.constant 0 : index
    %14 = vector.load %arg10[%c0_13, %c0_14] : memref<16x128xf32, #tpu.memory_space<vmem>>, vector<16x128xf32>
    %c0_15 = arith.constant 0 : index
    %c0_16 = arith.constant 0 : index
    %15 = vector.load %arg11[%c0_15, %c0_16] : memref<16x128xf32, #tpu.memory_space<vmem>>, vector<16x128xf32>
    %c0_i32_17 = arith.constant 0 : i32
    %c2_i32 = arith.constant 2 : i32
    %16 = arith.muli %c2_i32, %c0_i32_17 : i32
    %c7_i32 = arith.constant 7 : i32
    %17 = arith.subi %c7_i32, %16 : i32
    %18 = arith.muli %arg0, %17 : i32
    %19 = arith.addi %c0_i32_17, %18 : i32
    %c16_i32 = arith.constant 16 : i32
    %20 = arith.muli %19, %c16_i32 : i32
    %21 = tpu.assume_multiple %20, 16 : i32
    %22 = arith.index_cast %21 : i32 to index
    %c0_18 = arith.constant 0 : index
    %23 = vector.load %arg9[%22, %c0_18] : memref<128x512xf32, #tpu.memory_space<vmem>>, vector<16x512xf32>
    %24 = arith.truncf %14 : vector<16x128xf32> to vector<16x128xbf16>
    %cst_19 = arith.constant dense<0.000000e+00> : vector<16x512xf32>
    %25 = tpu.matmul %24, %13, %cst_19 {dimension_numbers = #tpu.dot_dimension_numbers<[1], [0], [0], [1], [0, 0, 1, 1], [], []>} : vector<16x128xbf16>, vector<128x512xbf16>, vector<16x512xf32> -> vector<16x512xf32>
    %26 = arith.addf %23, %25 : vector<16x512xf32>
    %27 = vector.extract_strided_slice %26 {offsets = [0, 0], sizes = [16, 128], strides = [1, 1]} : vector<16x512xf32> to vector<16x128xf32>
    %28 = arith.negf %27 : vector<16x128xf32>
    %29 = math.exp %28 : vector<16x128xf32>
    %cst_20 = arith.constant 1.000000e+00 : f32
    %30 = vector.broadcast %cst_20 : f32 to vector<16x128xf32>
    %31 = arith.addf %30, %29 : vector<16x128xf32>
    %32 = arith.divf %30, %31 : vector<16x128xf32>
    %33 = vector.extract_strided_slice %26 {offsets = [0, 128], sizes = [16, 128], strides = [1, 1]} : vector<16x512xf32> to vector<16x128xf32>
    %34 = arith.negf %33 : vector<16x128xf32>
    %35 = math.exp %34 : vector<16x128xf32>
    %cst_21 = arith.constant 1.000000e+00 : f32
    %36 = vector.broadcast %cst_21 : f32 to vector<16x128xf32>
    %37 = arith.addf %36, %35 : vector<16x128xf32>
    %38 = arith.divf %36, %37 : vector<16x128xf32>
    %39 = vector.extract_strided_slice %26 {offsets = [0, 256], sizes = [16, 128], strides = [1, 1]} : vector<16x512xf32> to vector<16x128xf32>
    %40 = math.tanh %39 : vector<16x128xf32>
    %41 = vector.extract_strided_slice %26 {offsets = [0, 384], sizes = [16, 128], strides = [1, 1]} : vector<16x512xf32> to vector<16x128xf32>
    %42 = arith.negf %41 : vector<16x128xf32>
    %43 = math.exp %42 : vector<16x128xf32>
    %cst_22 = arith.constant 1.000000e+00 : f32
    %44 = vector.broadcast %cst_22 : f32 to vector<16x128xf32>
    %45 = arith.addf %44, %43 : vector<16x128xf32>
    %46 = arith.divf %44, %45 : vector<16x128xf32>
    %47 = arith.mulf %38, %15 : vector<16x128xf32>
    %48 = arith.mulf %32, %40 : vector<16x128xf32>
    %49 = arith.addf %47, %48 : vector<16x128xf32>
    %50 = math.tanh %49 : vector<16x128xf32>
    %51 = arith.mulf %46, %50 : vector<16x128xf32>
    %52 = arith.truncf %51 : vector<16x128xf32> to vector<16x128xbf16>
    %53 = arith.index_cast %21 : i32 to index
    %c0_23 = arith.constant 0 : index
    %54 = vector.load %arg6[%53, %c0_23] : memref<128x128xbf16, #tpu.memory_space<vmem>>, vector<16x128xbf16>
    tpu.vector_store %arg6[%53, %c0_23], %52 {strides = array<i32>} : memref<128x128xbf16, #tpu.memory_space<vmem>>, vector<16x128xbf16>,
    %c1_i32 = arith.constant 1 : i32
    %c2_i32_24 = arith.constant 2 : i32
    %55 = arith.muli %c2_i32_24, %c1_i32 : i32
    %c7_i32_25 = arith.constant 7 : i32
    %56 = arith.subi %c7_i32_25, %55 : i32
    %57 = arith.muli %arg0, %56 : i32
    %58 = arith.addi %c1_i32, %57 : i32
    %c16_i32_26 = arith.constant 16 : i32
    %59 = arith.muli %58, %c16_i32_26 : i32
    %60 = tpu.assume_multiple %59, 16 : i32
    %61 = arith.index_cast %60 : i32 to index
    %c0_27 = arith.constant 0 : index
    %62 = vector.load %arg9[%61, %c0_27] : memref<128x512xf32, #tpu.memory_space<vmem>>, vector<16x512xf32>
    %63 = arith.truncf %51 : vector<16x128xf32> to vector<16x128xbf16>
    %cst_28 = arith.constant dense<0.000000e+00> : vector<16x512xf32>
    %64 = tpu.matmul %63, %13, %cst_28 {dimension_numbers = #tpu.dot_dimension_numbers<[1], [0], [0], [1], [0, 0, 1, 1], [], []>} : vector<16x128xbf16>, vector<128x512xbf16>, vector<16x512xf32> -> vector<16x512xf32>
    %65 = arith.addf %62, %64 : vector<16x512xf32>
    %66 = vector.extract_strided_slice %65 {offsets = [0, 0], sizes = [16, 128], strides = [1, 1]} : vector<16x512xf32> to vector<16x128xf32>
    %67 = arith.negf %66 : vector<16x128xf32>
    %68 = math.exp %67 : vector<16x128xf32>
    %cst_29 = arith.constant 1.000000e+00 : f32
    %69 = vector.broadcast %cst_29 : f32 to vector<16x128xf32>
    %70 = arith.addf %69, %68 : vector<16x128xf32>
    %71 = arith.divf %69, %70 : vector<16x128xf32>
    %72 = vector.extract_strided_slice %65 {offsets = [0, 128], sizes = [16, 128], strides = [1, 1]} : vector<16x512xf32> to vector<16x128xf32>
    %73 = arith.negf %72 : vector<16x128xf32>
    %74 = math.exp %73 : vector<16x128xf32>
    %cst_30 = arith.constant 1.000000e+00 : f32
    %75 = vector.broadcast %cst_30 : f32 to vector<16x128xf32>
    %76 = arith.addf %75, %74 : vector<16x128xf32>
    %77 = arith.divf %75, %76 : vector<16x128xf32>
    %78 = vector.extract_strided_slice %65 {offsets = [0, 256], sizes = [16, 128], strides = [1, 1]} : vector<16x512xf32> to vector<16x128xf32>
    %79 = math.tanh %78 : vector<16x128xf32>
    %80 = vector.extract_strided_slice %65 {offsets = [0, 384], sizes = [16, 128], strides = [1, 1]} : vector<16x512xf32> to vector<16x128xf32>
    %81 = arith.negf %80 : vector<16x128xf32>
    %82 = math.exp %81 : vector<16x128xf32>
    %cst_31 = arith.constant 1.000000e+00 : f32
    %83 = vector.broadcast %cst_31 : f32 to vector<16x128xf32>
    %84 = arith.addf %83, %82 : vector<16x128xf32>
    %85 = arith.divf %83, %84 : vector<16x128xf32>
    %86 = arith.mulf %77, %49 : vector<16x128xf32>
    %87 = arith.mulf %71, %79 : vector<16x128xf32>
    %88 = arith.addf %86, %87 : vector<16x128xf32>
    %89 = math.tanh %88 : vector<16x128xf32>
    %90 = arith.mulf %85, %89 : vector<16x128xf32>
    %91 = arith.truncf %90 : vector<16x128xf32> to vector<16x128xbf16>
    %92 = arith.index_cast %60 : i32 to index
    %c0_32 = arith.constant 0 : index
    %93 = vector.load %arg6[%92, %c0_32] : memref<128x128xbf16, #tpu.memory_space<vmem>>, vector<16x128xbf16>
    tpu.vector_store %arg6[%92, %c0_32], %91 {strides = array<i32>} : memref<128x128xbf16, #tpu.memory_space<vmem>>, vector<16x128xbf16>,
    %c2_i32_33 = arith.constant 2 : i32
    %c2_i32_34 = arith.constant 2 : i32
    %94 = arith.muli %c2_i32_34, %c2_i32_33 : i32
    %c7_i32_35 = arith.constant 7 : i32
    %95 = arith.subi %c7_i32_35, %94 : i32
    %96 = arith.muli %arg0, %95 : i32
    %97 = arith.addi %c2_i32_33, %96 : i32
    %c16_i32_36 = arith.constant 16 : i32
    %98 = arith.muli %97, %c16_i32_36 : i32
    %99 = tpu.assume_multiple %98, 16 : i32
    %100 = arith.index_cast %99 : i32 to index
    %c0_37 = arith.constant 0 : index
    %101 = vector.load %arg9[%100, %c0_37] : memref<128x512xf32, #tpu.memory_space<vmem>>, vector<16x512xf32>
    %102 = arith.truncf %90 : vector<16x128xf32> to vector<16x128xbf16>
    %cst_38 = arith.constant dense<0.000000e+00> : vector<16x512xf32>
    %103 = tpu.matmul %102, %13, %cst_38 {dimension_numbers = #tpu.dot_dimension_numbers<[1], [0], [0], [1], [0, 0, 1, 1], [], []>} : vector<16x128xbf16>, vector<128x512xbf16>, vector<16x512xf32> -> vector<16x512xf32>
    %104 = arith.addf %101, %103 : vector<16x512xf32>
    %105 = vector.extract_strided_slice %104 {offsets = [0, 0], sizes = [16, 128], strides = [1, 1]} : vector<16x512xf32> to vector<16x128xf32>
    %106 = arith.negf %105 : vector<16x128xf32>
    %107 = math.exp %106 : vector<16x128xf32>
    %cst_39 = arith.constant 1.000000e+00 : f32
    %108 = vector.broadcast %cst_39 : f32 to vector<16x128xf32>
    %109 = arith.addf %108, %107 : vector<16x128xf32>
    %110 = arith.divf %108, %109 : vector<16x128xf32>
    %111 = vector.extract_strided_slice %104 {offsets = [0, 128], sizes = [16, 128], strides = [1, 1]} : vector<16x512xf32> to vector<16x128xf32>
    %112 = arith.negf %111 : vector<16x128xf32>
    %113 = math.exp %112 : vector<16x128xf32>
    %cst_40 = arith.constant 1.000000e+00 : f32
    %114 = vector.broadcast %cst_40 : f32 to vector<16x128xf32>
    %115 = arith.addf %114, %113 : vector<16x128xf32>
    %116 = arith.divf %114, %115 : vector<16x128xf32>
    %117 = vector.extract_strided_slice %104 {offsets = [0, 256], sizes = [16, 128], strides = [1, 1]} : vector<16x512xf32> to vector<16x128xf32>
    %118 = math.tanh %117 : vector<16x128xf32>
    %119 = vector.extract_strided_slice %104 {offsets = [0, 384], sizes = [16, 128], strides = [1, 1]} : vector<16x512xf32> to vector<16x128xf32>
    %120 = arith.negf %119 : vector<16x128xf32>
    %121 = math.exp %120 : vector<16x128xf32>
    %cst_41 = arith.constant 1.000000e+00 : f32
    %122 = vector.broadcast %cst_41 : f32 to vector<16x128xf32>
    %123 = arith.addf %122, %121 : vector<16x128xf32>
    %124 = arith.divf %122, %123 : vector<16x128xf32>
    %125 = arith.mulf %116, %88 : vector<16x128xf32>
    %126 = arith.mulf %110, %118 : vector<16x128xf32>
    %127 = arith.addf %125, %126 : vector<16x128xf32>
    %128 = math.tanh %127 : vector<16x128xf32>
    %129 = arith.mulf %124, %128 : vector<16x128xf32>
    %130 = arith.truncf %129 : vector<16x128xf32> to vector<16x128xbf16>
    %131 = arith.index_cast %99 : i32 to index
    %c0_42 = arith.constant 0 : index
    %132 = vector.load %arg6[%131, %c0_42] : memref<128x128xbf16, #tpu.memory_space<vmem>>, vector<16x128xbf16>
    tpu.vector_store %arg6[%131, %c0_42], %130 {strides = array<i32>} : memref<128x128xbf16, #tpu.memory_space<vmem>>, vector<16x128xbf16>,
    %c3_i32 = arith.constant 3 : i32
    %c2_i32_43 = arith.constant 2 : i32
    %133 = arith.muli %c2_i32_43, %c3_i32 : i32
    %c7_i32_44 = arith.constant 7 : i32
    %134 = arith.subi %c7_i32_44, %133 : i32
    %135 = arith.muli %arg0, %134 : i32
    %136 = arith.addi %c3_i32, %135 : i32
    %c16_i32_45 = arith.constant 16 : i32
    %137 = arith.muli %136, %c16_i32_45 : i32
    %138 = tpu.assume_multiple %137, 16 : i32
    %139 = arith.index_cast %138 : i32 to index
    %c0_46 = arith.constant 0 : index
    %140 = vector.load %arg9[%139, %c0_46] : memref<128x512xf32, #tpu.memory_space<vmem>>, vector<16x512xf32>
    %141 = arith.truncf %129 : vector<16x128xf32> to vector<16x128xbf16>
    %cst_47 = arith.constant dense<0.000000e+00> : vector<16x512xf32>
    %142 = tpu.matmul %141, %13, %cst_47 {dimension_numbers = #tpu.dot_dimension_numbers<[1], [0], [0], [1], [0, 0, 1, 1], [], []>} : vector<16x128xbf16>, vector<128x512xbf16>, vector<16x512xf32> -> vector<16x512xf32>
    %143 = arith.addf %140, %142 : vector<16x512xf32>
    %144 = vector.extract_strided_slice %143 {offsets = [0, 0], sizes = [16, 128], strides = [1, 1]} : vector<16x512xf32> to vector<16x128xf32>
    %145 = arith.negf %144 : vector<16x128xf32>
    %146 = math.exp %145 : vector<16x128xf32>
    %cst_48 = arith.constant 1.000000e+00 : f32
    %147 = vector.broadcast %cst_48 : f32 to vector<16x128xf32>
    %148 = arith.addf %147, %146 : vector<16x128xf32>
    %149 = arith.divf %147, %148 : vector<16x128xf32>
    %150 = vector.extract_strided_slice %143 {offsets = [0, 128], sizes = [16, 128], strides = [1, 1]} : vector<16x512xf32> to vector<16x128xf32>
    %151 = arith.negf %150 : vector<16x128xf32>
    %152 = math.exp %151 : vector<16x128xf32>
    %cst_49 = arith.constant 1.000000e+00 : f32
    %153 = vector.broadcast %cst_49 : f32 to vector<16x128xf32>
    %154 = arith.addf %153, %152 : vector<16x128xf32>
    %155 = arith.divf %153, %154 : vector<16x128xf32>
    %156 = vector.extract_strided_slice %143 {offsets = [0, 256], sizes = [16, 128], strides = [1, 1]} : vector<16x512xf32> to vector<16x128xf32>
    %157 = math.tanh %156 : vector<16x128xf32>
    %158 = vector.extract_strided_slice %143 {offsets = [0, 384], sizes = [16, 128], strides = [1, 1]} : vector<16x512xf32> to vector<16x128xf32>
    %159 = arith.negf %158 : vector<16x128xf32>
    %160 = math.exp %159 : vector<16x128xf32>
    %cst_50 = arith.constant 1.000000e+00 : f32
    %161 = vector.broadcast %cst_50 : f32 to vector<16x128xf32>
    %162 = arith.addf %161, %160 : vector<16x128xf32>
    %163 = arith.divf %161, %162 : vector<16x128xf32>
    %164 = arith.mulf %155, %127 : vector<16x128xf32>
    %165 = arith.mulf %149, %157 : vector<16x128xf32>
    %166 = arith.addf %164, %165 : vector<16x128xf32>
    %167 = math.tanh %166 : vector<16x128xf32>
    %168 = arith.mulf %163, %167 : vector<16x128xf32>
    %169 = arith.truncf %168 : vector<16x128xf32> to vector<16x128xbf16>
    %170 = arith.index_cast %138 : i32 to index
    %c0_51 = arith.constant 0 : index
    %171 = vector.load %arg6[%170, %c0_51] : memref<128x128xbf16, #tpu.memory_space<vmem>>, vector<16x128xbf16>
    tpu.vector_store %arg6[%170, %c0_51], %169 {strides = array<i32>} : memref<128x128xbf16, #tpu.memory_space<vmem>>, vector<16x128xbf16>,
    %c4_i32 = arith.constant 4 : i32
    %c2_i32_52 = arith.constant 2 : i32
    %172 = arith.muli %c2_i32_52, %c4_i32 : i32
    %c7_i32_53 = arith.constant 7 : i32
    %173 = arith.subi %c7_i32_53, %172 : i32
    %174 = arith.muli %arg0, %173 : i32
    %175 = arith.addi %c4_i32, %174 : i32
    %c16_i32_54 = arith.constant 16 : i32
    %176 = arith.muli %175, %c16_i32_54 : i32
    %177 = tpu.assume_multiple %176, 16 : i32
    %178 = arith.index_cast %177 : i32 to index
    %c0_55 = arith.constant 0 : index
    %179 = vector.load %arg9[%178, %c0_55] : memref<128x512xf32, #tpu.memory_space<vmem>>, vector<16x512xf32>
    %180 = arith.truncf %168 : vector<16x128xf32> to vector<16x128xbf16>
    %cst_56 = arith.constant dense<0.000000e+00> : vector<16x512xf32>
    %181 = tpu.matmul %180, %13, %cst_56 {dimension_numbers = #tpu.dot_dimension_numbers<[1], [0], [0], [1], [0, 0, 1, 1], [], []>} : vector<16x128xbf16>, vector<128x512xbf16>, vector<16x512xf32> -> vector<16x512xf32>
    %182 = arith.addf %179, %181 : vector<16x512xf32>
    %183 = vector.extract_strided_slice %182 {offsets = [0, 0], sizes = [16, 128], strides = [1, 1]} : vector<16x512xf32> to vector<16x128xf32>
    %184 = arith.negf %183 : vector<16x128xf32>
    %185 = math.exp %184 : vector<16x128xf32>
    %cst_57 = arith.constant 1.000000e+00 : f32
    %186 = vector.broadcast %cst_57 : f32 to vector<16x128xf32>
    %187 = arith.addf %186, %185 : vector<16x128xf32>
    %188 = arith.divf %186, %187 : vector<16x128xf32>
    %189 = vector.extract_strided_slice %182 {offsets = [0, 128], sizes = [16, 128], strides = [1, 1]} : vector<16x512xf32> to vector<16x128xf32>
    %190 = arith.negf %189 : vector<16x128xf32>
    %191 = math.exp %190 : vector<16x128xf32>
    %cst_58 = arith.constant 1.000000e+00 : f32
    %192 = vector.broadcast %cst_58 : f32 to vector<16x128xf32>
    %193 = arith.addf %192, %191 : vector<16x128xf32>
    %194 = arith.divf %192, %193 : vector<16x128xf32>
    %195 = vector.extract_strided_slice %182 {offsets = [0, 256], sizes = [16, 128], strides = [1, 1]} : vector<16x512xf32> to vector<16x128xf32>
    %196 = math.tanh %195 : vector<16x128xf32>
    %197 = vector.extract_strided_slice %182 {offsets = [0, 384], sizes = [16, 128], strides = [1, 1]} : vector<16x512xf32> to vector<16x128xf32>
    %198 = arith.negf %197 : vector<16x128xf32>
    %199 = math.exp %198 : vector<16x128xf32>
    %cst_59 = arith.constant 1.000000e+00 : f32
    %200 = vector.broadcast %cst_59 : f32 to vector<16x128xf32>
    %201 = arith.addf %200, %199 : vector<16x128xf32>
    %202 = arith.divf %200, %201 : vector<16x128xf32>
    %203 = arith.mulf %194, %166 : vector<16x128xf32>
    %204 = arith.mulf %188, %196 : vector<16x128xf32>
    %205 = arith.addf %203, %204 : vector<16x128xf32>
    %206 = math.tanh %205 : vector<16x128xf32>
    %207 = arith.mulf %202, %206 : vector<16x128xf32>
    %208 = arith.truncf %207 : vector<16x128xf32> to vector<16x128xbf16>
    %209 = arith.index_cast %177 : i32 to index
    %c0_60 = arith.constant 0 : index
    %210 = vector.load %arg6[%209, %c0_60] : memref<128x128xbf16, #tpu.memory_space<vmem>>, vector<16x128xbf16>
    tpu.vector_store %arg6[%209, %c0_60], %208 {strides = array<i32>} : memref<128x128xbf16, #tpu.memory_space<vmem>>, vector<16x128xbf16>,
    %c5_i32 = arith.constant 5 : i32
    %c2_i32_61 = arith.constant 2 : i32
    %211 = arith.muli %c2_i32_61, %c5_i32 : i32
    %c7_i32_62 = arith.constant 7 : i32
    %212 = arith.subi %c7_i32_62, %211 : i32
    %213 = arith.muli %arg0, %212 : i32
    %214 = arith.addi %c5_i32, %213 : i32
    %c16_i32_63 = arith.constant 16 : i32
    %215 = arith.muli %214, %c16_i32_63 : i32
    %216 = tpu.assume_multiple %215, 16 : i32
    %217 = arith.index_cast %216 : i32 to index
    %c0_64 = arith.constant 0 : index
    %218 = vector.load %arg9[%217, %c0_64] : memref<128x512xf32, #tpu.memory_space<vmem>>, vector<16x512xf32>
    %219 = arith.truncf %207 : vector<16x128xf32> to vector<16x128xbf16>
    %cst_65 = arith.constant dense<0.000000e+00> : vector<16x512xf32>
    %220 = tpu.matmul %219, %13, %cst_65 {dimension_numbers = #tpu.dot_dimension_numbers<[1], [0], [0], [1], [0, 0, 1, 1], [], []>} : vector<16x128xbf16>, vector<128x512xbf16>, vector<16x512xf32> -> vector<16x512xf32>
    %221 = arith.addf %218, %220 : vector<16x512xf32>
    %222 = vector.extract_strided_slice %221 {offsets = [0, 0], sizes = [16, 128], strides = [1, 1]} : vector<16x512xf32> to vector<16x128xf32>
    %223 = arith.negf %222 : vector<16x128xf32>
    %224 = math.exp %223 : vector<16x128xf32>
    %cst_66 = arith.constant 1.000000e+00 : f32
    %225 = vector.broadcast %cst_66 : f32 to vector<16x128xf32>
    %226 = arith.addf %225, %224 : vector<16x128xf32>
    %227 = arith.divf %225, %226 : vector<16x128xf32>
    %228 = vector.extract_strided_slice %221 {offsets = [0, 128], sizes = [16, 128], strides = [1, 1]} : vector<16x512xf32> to vector<16x128xf32>
    %229 = arith.negf %228 : vector<16x128xf32>
    %230 = math.exp %229 : vector<16x128xf32>
    %cst_67 = arith.constant 1.000000e+00 : f32
    %231 = vector.broadcast %cst_67 : f32 to vector<16x128xf32>
    %232 = arith.addf %231, %230 : vector<16x128xf32>
    %233 = arith.divf %231, %232 : vector<16x128xf32>
    %234 = vector.extract_strided_slice %221 {offsets = [0, 256], sizes = [16, 128], strides = [1, 1]} : vector<16x512xf32> to vector<16x128xf32>
    %235 = math.tanh %234 : vector<16x128xf32>
    %236 = vector.extract_strided_slice %221 {offsets = [0, 384], sizes = [16, 128], strides = [1, 1]} : vector<16x512xf32> to vector<16x128xf32>
    %237 = arith.negf %236 : vector<16x128xf32>
    %238 = math.exp %237 : vector<16x128xf32>
    %cst_68 = arith.constant 1.000000e+00 : f32
    %239 = vector.broadcast %cst_68 : f32 to vector<16x128xf32>
    %240 = arith.addf %239, %238 : vector<16x128xf32>
    %241 = arith.divf %239, %240 : vector<16x128xf32>
    %242 = arith.mulf %233, %205 : vector<16x128xf32>
    %243 = arith.mulf %227, %235 : vector<16x128xf32>
    %244 = arith.addf %242, %243 : vector<16x128xf32>
    %245 = math.tanh %244 : vector<16x128xf32>
    %246 = arith.mulf %241, %245 : vector<16x128xf32>
    %247 = arith.truncf %246 : vector<16x128xf32> to vector<16x128xbf16>
    %248 = arith.index_cast %216 : i32 to index
    %c0_69 = arith.constant 0 : index
    %249 = vector.load %arg6[%248, %c0_69] : memref<128x128xbf16, #tpu.memory_space<vmem>>, vector<16x128xbf16>
    tpu.vector_store %arg6[%248, %c0_69], %247 {strides = array<i32>} : memref<128x128xbf16, #tpu.memory_space<vmem>>, vector<16x128xbf16>,
    %c6_i32 = arith.constant 6 : i32
    %c2_i32_70 = arith.constant 2 : i32
    %250 = arith.muli %c2_i32_70, %c6_i32 : i32
    %c7_i32_71 = arith.constant 7 : i32
    %251 = arith.subi %c7_i32_71, %250 : i32
    %252 = arith.muli %arg0, %251 : i32
    %253 = arith.addi %c6_i32, %252 : i32
    %c16_i32_72 = arith.constant 16 : i32
    %254 = arith.muli %253, %c16_i32_72 : i32
    %255 = tpu.assume_multiple %254, 16 : i32
    %256 = arith.index_cast %255 : i32 to index
    %c0_73 = arith.constant 0 : index
    %257 = vector.load %arg9[%256, %c0_73] : memref<128x512xf32, #tpu.memory_space<vmem>>, vector<16x512xf32>
    %258 = arith.truncf %246 : vector<16x128xf32> to vector<16x128xbf16>
    %cst_74 = arith.constant dense<0.000000e+00> : vector<16x512xf32>
    %259 = tpu.matmul %258, %13, %cst_74 {dimension_numbers = #tpu.dot_dimension_numbers<[1], [0], [0], [1], [0, 0, 1, 1], [], []>} : vector<16x128xbf16>, vector<128x512xbf16>, vector<16x512xf32> -> vector<16x512xf32>
    %260 = arith.addf %257, %259 : vector<16x512xf32>
    %261 = vector.extract_strided_slice %260 {offsets = [0, 0], sizes = [16, 128], strides = [1, 1]} : vector<16x512xf32> to vector<16x128xf32>
    %262 = arith.negf %261 : vector<16x128xf32>
    %263 = math.exp %262 : vector<16x128xf32>
    %cst_75 = arith.constant 1.000000e+00 : f32
    %264 = vector.broadcast %cst_75 : f32 to vector<16x128xf32>
    %265 = arith.addf %264, %263 : vector<16x128xf32>
    %266 = arith.divf %264, %265 : vector<16x128xf32>
    %267 = vector.extract_strided_slice %260 {offsets = [0, 128], sizes = [16, 128], strides = [1, 1]} : vector<16x512xf32> to vector<16x128xf32>
    %268 = arith.negf %267 : vector<16x128xf32>
    %269 = math.exp %268 : vector<16x128xf32>
    %cst_76 = arith.constant 1.000000e+00 : f32
    %270 = vector.broadcast %cst_76 : f32 to vector<16x128xf32>
    %271 = arith.addf %270, %269 : vector<16x128xf32>
    %272 = arith.divf %270, %271 : vector<16x128xf32>
    %273 = vector.extract_strided_slice %260 {offsets = [0, 256], sizes = [16, 128], strides = [1, 1]} : vector<16x512xf32> to vector<16x128xf32>
    %274 = math.tanh %273 : vector<16x128xf32>
    %275 = vector.extract_strided_slice %260 {offsets = [0, 384], sizes = [16, 128], strides = [1, 1]} : vector<16x512xf32> to vector<16x128xf32>
    %276 = arith.negf %275 : vector<16x128xf32>
    %277 = math.exp %276 : vector<16x128xf32>
    %cst_77 = arith.constant 1.000000e+00 : f32
    %278 = vector.broadcast %cst_77 : f32 to vector<16x128xf32>
    %279 = arith.addf %278, %277 : vector<16x128xf32>
    %280 = arith.divf %278, %279 : vector<16x128xf32>
    %281 = arith.mulf %272, %244 : vector<16x128xf32>
    %282 = arith.mulf %266, %274 : vector<16x128xf32>
    %283 = arith.addf %281, %282 : vector<16x128xf32>
    %284 = math.tanh %283 : vector<16x128xf32>
    %285 = arith.mulf %280, %284 : vector<16x128xf32>
    %286 = arith.truncf %285 : vector<16x128xf32> to vector<16x128xbf16>
    %287 = arith.index_cast %255 : i32 to index
    %c0_78 = arith.constant 0 : index
    %288 = vector.load %arg6[%287, %c0_78] : memref<128x128xbf16, #tpu.memory_space<vmem>>, vector<16x128xbf16>
    tpu.vector_store %arg6[%287, %c0_78], %286 {strides = array<i32>} : memref<128x128xbf16, #tpu.memory_space<vmem>>, vector<16x128xbf16>,
    %c7_i32_79 = arith.constant 7 : i32
    %c2_i32_80 = arith.constant 2 : i32
    %289 = arith.muli %c2_i32_80, %c7_i32_79 : i32
    %c7_i32_81 = arith.constant 7 : i32
    %290 = arith.subi %c7_i32_81, %289 : i32
    %291 = arith.muli %arg0, %290 : i32
    %292 = arith.addi %c7_i32_79, %291 : i32
    %c16_i32_82 = arith.constant 16 : i32
    %293 = arith.muli %292, %c16_i32_82 : i32
    %294 = tpu.assume_multiple %293, 16 : i32
    %295 = arith.index_cast %294 : i32 to index
    %c0_83 = arith.constant 0 : index
    %296 = vector.load %arg9[%295, %c0_83] : memref<128x512xf32, #tpu.memory_space<vmem>>, vector<16x512xf32>
    %297 = arith.truncf %285 : vector<16x128xf32> to vector<16x128xbf16>
    %cst_84 = arith.constant dense<0.000000e+00> : vector<16x512xf32>
    %298 = tpu.matmul %297, %13, %cst_84 {dimension_numbers = #tpu.dot_dimension_numbers<[1], [0], [0], [1], [0, 0, 1, 1], [], []>} : vector<16x128xbf16>, vector<128x512xbf16>, vector<16x512xf32> -> vector<16x512xf32>
    %299 = arith.addf %296, %298 : vector<16x512xf32>
    %300 = vector.extract_strided_slice %299 {offsets = [0, 0], sizes = [16, 128], strides = [1, 1]} : vector<16x512xf32> to vector<16x128xf32>
    %301 = arith.negf %300 : vector<16x128xf32>
    %302 = math.exp %301 : vector<16x128xf32>
    %cst_85 = arith.constant 1.000000e+00 : f32
    %303 = vector.broadcast %cst_85 : f32 to vector<16x128xf32>
    %304 = arith.addf %303, %302 : vector<16x128xf32>
    %305 = arith.divf %303, %304 : vector<16x128xf32>
    %306 = vector.extract_strided_slice %299 {offsets = [0, 128], sizes = [16, 128], strides = [1, 1]} : vector<16x512xf32> to vector<16x128xf32>
    %307 = arith.negf %306 : vector<16x128xf32>
    %308 = math.exp %307 : vector<16x128xf32>
    %cst_86 = arith.constant 1.000000e+00 : f32
    %309 = vector.broadcast %cst_86 : f32 to vector<16x128xf32>
    %310 = arith.addf %309, %308 : vector<16x128xf32>
    %311 = arith.divf %309, %310 : vector<16x128xf32>
    %312 = vector.extract_strided_slice %299 {offsets = [0, 256], sizes = [16, 128], strides = [1, 1]} : vector<16x512xf32> to vector<16x128xf32>
    %313 = math.tanh %312 : vector<16x128xf32>
    %314 = vector.extract_strided_slice %299 {offsets = [0, 384], sizes = [16, 128], strides = [1, 1]} : vector<16x512xf32> to vector<16x128xf32>
    %315 = arith.negf %314 : vector<16x128xf32>
    %316 = math.exp %315 : vector<16x128xf32>
    %cst_87 = arith.constant 1.000000e+00 : f32
    %317 = vector.broadcast %cst_87 : f32 to vector<16x128xf32>
    %318 = arith.addf %317, %316 : vector<16x128xf32>
    %319 = arith.divf %317, %318 : vector<16x128xf32>
    %320 = arith.mulf %311, %283 : vector<16x128xf32>
    %321 = arith.mulf %305, %313 : vector<16x128xf32>
    %322 = arith.addf %320, %321 : vector<16x128xf32>
    %323 = math.tanh %322 : vector<16x128xf32>
    %324 = arith.mulf %319, %323 : vector<16x128xf32>
    %325 = arith.truncf %324 : vector<16x128xf32> to vector<16x128xbf16>
    %326 = arith.index_cast %294 : i32 to index
    %c0_88 = arith.constant 0 : index
    %327 = vector.load %arg6[%326, %c0_88] : memref<128x128xbf16, #tpu.memory_space<vmem>>, vector<16x128xbf16>
    tpu.vector_store %arg6[%326, %c0_88], %325 {strides = array<i32>} : memref<128x128xbf16, #tpu.memory_space<vmem>>, vector<16x128xbf16>,
    %c8_i32 = arith.constant 8 : i32
    %c0_89 = arith.constant 0 : index
    %c0_90 = arith.constant 0 : index
    %328 = vector.load %arg10[%c0_89, %c0_90] : memref<16x128xf32, #tpu.memory_space<vmem>>, vector<16x128xf32>
    tpu.vector_store %arg10[%c0_89, %c0_90], %324 {strides = array<i32>} : memref<16x128xf32, #tpu.memory_space<vmem>>, vector<16x128xf32>,
    %c0_91 = arith.constant 0 : index
    %c0_92 = arith.constant 0 : index
    %329 = vector.load %arg11[%c0_91, %c0_92] : memref<16x128xf32, #tpu.memory_space<vmem>>, vector<16x128xf32>
    tpu.vector_store %arg11[%c0_91, %c0_92], %322 {strides = array<i32>} : memref<16x128xf32, #tpu.memory_space<vmem>>, vector<16x128xf32>,
    %c0_i32_93 = arith.constant 0 : i32
    %330 = arith.cmpi eq, %arg1, %c0_i32_93 : i32
    %331 = arith.extui %330 : i1 to i32
    %c0_i32_94 = arith.constant 0 : i32
    %332 = arith.cmpi ne, %331, %c0_i32_94 : i32
    scf.if %332 {
      %c0_95 = arith.constant 0 : index
      %c0_96 = arith.constant 0 : index
      %c0_97 = arith.constant 0 : index
      %333 = vector.load %arg7[%c0_95, %c0_96, %c0_97] : memref<1x16x128xf32, #tpu.memory_space<vmem>>, vector<1x16x128xf32>
      %334 = vector.shape_cast %333 : vector<1x16x128xf32> to vector<16x128xf32>
      %335 = vector.shape_cast %324 : vector<16x128xf32> to vector<1x16x128xf32>
      tpu.vector_store %arg7[%c0_95, %c0_96, %c0_97], %335 {strides = array<i32>} : memref<1x16x128xf32, #tpu.memory_space<vmem>>, vector<1x16x128xf32>,
      %c0_98 = arith.constant 0 : index
      %c0_99 = arith.constant 0 : index
      %c0_100 = arith.constant 0 : index
      %336 = vector.load %arg8[%c0_98, %c0_99, %c0_100] : memref<1x16x128xf32, #tpu.memory_space<vmem>>, vector<1x16x128xf32>
      %337 = vector.shape_cast %336 : vector<1x16x128xf32> to vector<16x128xf32>
      %338 = vector.shape_cast %322 : vector<16x128xf32> to vector<1x16x128xf32>
      tpu.vector_store %arg8[%c0_98, %c0_99, %c0_100], %338 {strides = array<i32>} : memref<1x16x128xf32, #tpu.memory_space<vmem>>, vector<1x16x128xf32>,
    } else {
    }
    return
  }
  func.func @transform_0(%arg0: i32, %arg1: i32) -> (i32, i32) {
    %c2_i32 = arith.constant 2 : i32
    %0 = arith.muli %c2_i32, %arg1 : i32
    %c0_i32 = arith.constant 0 : i32
    %1 = arith.subi %c0_i32, %0 : i32
    %2 = arith.muli %arg0, %1 : i32
    %3 = arith.addi %arg1, %2 : i32
    %c0_i32_0 = arith.constant 0 : i32
    %c0_i32_1 = arith.constant 0 : i32
    return %3, %c0_i32_0 : i32, i32
  }
  func.func @transform_1(%arg0: i32, %arg1: i32) -> (i32, i32, i32) {
    %c0_i32 = arith.constant 0 : i32
    %c0_i32_0 = arith.constant 0 : i32
    %c0_i32_1 = arith.constant 0 : i32
    return %arg0, %c0_i32, %c0_i32_0 : i32, i32, i32
  }
  func.func @transform_2(%arg0: i32, %arg1: i32) -> (i32, i32, i32) {
    %c0_i32 = arith.constant 0 : i32
    %c0_i32_0 = arith.constant 0 : i32
    %c0_i32_1 = arith.constant 0 : i32
    return %arg0, %c0_i32, %c0_i32_0 : i32, i32, i32
  }
  func.func @transform_3(%arg0: i32, %arg1: i32) -> (i32, i32, i32) {
    %c0_i32 = arith.constant 0 : i32
    %c0_i32_0 = arith.constant 0 : i32
    %c0_i32_1 = arith.constant 0 : i32
    return %arg0, %c0_i32, %c0_i32_0 : i32, i32, i32
  }
  func.func @transform_4(%arg0: i32, %arg1: i32) -> (i32, i32) {
    %c2_i32 = arith.constant 2 : i32
    %0 = arith.muli %c2_i32, %arg1 : i32
    %c0_i32 = arith.constant 0 : i32
    %1 = arith.subi %c0_i32, %0 : i32
    %2 = arith.muli %arg0, %1 : i32
    %3 = arith.addi %arg1, %2 : i32
    %c0_i32_0 = arith.constant 0 : i32
    return %3, %arg0 : i32, i32
  }
  func.func @transform_5(%arg0: i32, %arg1: i32) -> (i32, i32, i32) {
    %c0_i32 = arith.constant 0 : i32
    %c0_i32_0 = arith.constant 0 : i32
    %c0_i32_1 = arith.constant 0 : i32
    return %arg0, %c0_i32, %c0_i32_0 : i32, i32, i32
  }
  func.func @transform_6(%arg0: i32, %arg1: i32) -> (i32, i32, i32) {
    %c0_i32 = arith.constant 0 : i32
    %c0_i32_0 = arith.constant 0 : i32
    %c0_i32_1 = arith.constant 0 : i32
    return %arg0, %c0_i32, %c0_i32_0 : i32, i32, i32
  }
}

module attributes {stable_mosaic.version = 11 : i64} {
  func.func @kernel(%arg0: i32, %arg1: i32, %arg2: memref<128x256xbf16, #tpu.memory_space<vmem>>, %arg3: memref<1x256x512xbf16, #tpu.memory_space<vmem>>, %arg4: memref<1x128x512xbf16, #tpu.memory_space<vmem>>, %arg5: memref<1x1x512xf32, #tpu.memory_space<vmem>>, %arg6: memref<128x128xbf16, #tpu.memory_space<vmem>>, %arg7: memref<1x16x128xf32, #tpu.memory_space<vmem>>, %arg8: memref<1x16x128xf32, #tpu.memory_space<vmem>>, %arg9: memref<128x512xf32, #tpu.memory_space<vmem>>, %arg10: memref<16x128xf32, #tpu.memory_space<vmem>>, %arg11: memref<16x128xf32, #tpu.memory_space<vmem>>) attributes {dimension_semantics = [#tpu.dimension_semantics<parallel>, #tpu.dimension_semantics<arbitrary>], iteration_bounds = array<i64: 2, 1>, scalar_prefetch = 0 : i64, scratch_operands = 3 : i64, tpu.core_type = #tpu.core_type<tc>, window_params = [{transform_indices = @transform_0, window_bounds = array<i64: 128, 256>}, {transform_indices = @transform_1, window_bounds = array<i64: 1, 256, 512>}, {transform_indices = @transform_2, window_bounds = array<i64: 1, 128, 512>}, {transform_indices = @transform_3, window_bounds = array<i64: 1, 1, 512>}, {transform_indices = @transform_4, window_bounds = array<i64: 128, 128>}, {transform_indices = @transform_5, window_bounds = array<i64: 1, 16, 128>}, {transform_indices = @transform_6, window_bounds = array<i64: 1, 16, 128>}]} {
    %c0_i32 = arith.constant 0 : i32
    %0 = arith.cmpi eq, %arg1, %c0_i32 : i32
    %1 = arith.extui %0 : i1 to i32
    %c0_i32_0 = arith.constant 0 : i32
    %2 = arith.cmpi ne, %1, %c0_i32_0 : i32
    scf.if %2 {
      %cst_95 = arith.constant 0.000000e+00 : f32
      %333 = vector.broadcast %cst_95 : f32 to vector<16x128xf32>
      %c0_96 = arith.constant 0 : index
      %c0_97 = arith.constant 0 : index
      %334 = vector.load %arg10[%c0_96, %c0_97] : memref<16x128xf32, #tpu.memory_space<vmem>>, vector<16x128xf32>
      tpu.vector_store %arg10[%c0_96, %c0_97], %333 {strides = array<i32>} : memref<16x128xf32, #tpu.memory_space<vmem>>, vector<16x128xf32>,
      %cst_98 = arith.constant 0.000000e+00 : f32
      %335 = vector.broadcast %cst_98 : f32 to vector<16x128xf32>
      %c0_99 = arith.constant 0 : index
      %c0_100 = arith.constant 0 : index
      %336 = vector.load %arg11[%c0_99, %c0_100] : memref<16x128xf32, #tpu.memory_space<vmem>>, vector<16x128xf32>
      tpu.vector_store %arg11[%c0_99, %c0_100], %335 {strides = array<i32>} : memref<16x128xf32, #tpu.memory_space<vmem>>, vector<16x128xf32>,
    } else {
    }
    %c0 = arith.constant 0 : index
    %c0_1 = arith.constant 0 : index
    %3 = vector.load %arg2[%c0, %c0_1] : memref<128x256xbf16, #tpu.memory_space<vmem>>, vector<128x256xbf16>
    %c0_2 = arith.constant 0 : index
    %c0_3 = arith.constant 0 : index
    %c0_4 = arith.constant 0 : index
    %4 = vector.load %arg3[%c0_2, %c0_3, %c0_4] : memref<1x256x512xbf16, #tpu.memory_space<vmem>>, vector<1x256x512xbf16>
    %5 = vector.shape_cast %4 : vector<1x256x512xbf16> to vector<256x512xbf16>
    %cst = arith.constant dense<0.000000e+00> : vector<128x512xf32>
    %6 = tpu.matmul %3, %5, %cst {dimension_numbers = #tpu.dot_dimension_numbers<[1], [0], [0], [1], [0, 0, 1, 1], [], []>} : vector<128x256xbf16>, vector<256x512xbf16>, vector<128x512xf32> -> vector<128x512xf32>
    %c0_5 = arith.constant 0 : index
    %c0_6 = arith.constant 0 : index
    %c0_7 = arith.constant 0 : index
    %7 = vector.load %arg5[%c0_5, %c0_6, %c0_7] : memref<1x1x512xf32, #tpu.memory_space<vmem>>, vector<1x1x512xf32>
    %8 = vector.shape_cast %7 : vector<1x1x512xf32> to vector<1x512xf32>
    %9 = vector.broadcast %8 : vector<1x512xf32> to vector<128x512xf32>
    %10 = arith.addf %6, %9 : vector<128x512xf32>
    %c0_8 = arith.constant 0 : index
    %c0_9 = arith.constant 0 : index
    %11 = vector.load %arg9[%c0_8, %c0_9] : memref<128x512xf32, #tpu.memory_space<vmem>>, vector<128x512xf32>
    tpu.vector_store %arg9[%c0_8, %c0_9], %10 {strides = array<i32>} : memref<128x512xf32, #tpu.memory_space<vmem>>, vector<128x512xf32>,
    %c0_10 = arith.constant 0 : index
    %c0_11 = arith.constant 0 : index
    %c0_12 = arith.constant 0 : index
    %12 = vector.load %arg4[%c0_10, %c0_11, %c0_12] : memref<1x128x512xbf16, #tpu.memory_space<vmem>>, vector<1x128x512xbf16>
    %13 = vector.shape_cast %12 : vector<1x128x512xbf16> to vector<128x512xbf16>
    %c0_13 = arith.constant 0 : index
    %c0_14 = arith.constant 0 : index
    %14 = vector.load %arg10[%c0_13, %c0_14] : memref<16x128xf32, #tpu.memory_space<vmem>>, vector<16x128xf32>
    %c0_15 = arith.constant 0 : index
    %c0_16 = arith.constant 0 : index
    %15 = vector.load %arg11[%c0_15, %c0_16] : memref<16x128xf32, #tpu.memory_space<vmem>>, vector<16x128xf32>
    %c0_i32_17 = arith.constant 0 : i32
    %c2_i32 = arith.constant 2 : i32
    %16 = arith.muli %c2_i32, %c0_i32_17 : i32
    %c7_i32 = arith.constant 7 : i32
    %17 = arith.subi %c7_i32, %16 : i32
    %18 = arith.muli %arg0, %17 : i32
    %19 = arith.addi %c0_i32_17, %18 : i32
    %c16_i32 = arith.constant 16 : i32
    %20 = arith.muli %19, %c16_i32 : i32
    %21 = tpu.assume_multiple %20, 16 : i32
    %22 = arith.index_cast %21 : i32 to index
    %c0_18 = arith.constant 0 : index
    %23 = vector.load %arg9[%22, %c0_18] : memref<128x512xf32, #tpu.memory_space<vmem>>, vector<16x512xf32>
    %24 = arith.truncf %14 : vector<16x128xf32> to vector<16x128xbf16>
    %cst_19 = arith.constant dense<0.000000e+00> : vector<16x512xf32>
    %25 = tpu.matmul %24, %13, %cst_19 {dimension_numbers = #tpu.dot_dimension_numbers<[1], [0], [0], [1], [0, 0, 1, 1], [], []>} : vector<16x128xbf16>, vector<128x512xbf16>, vector<16x512xf32> -> vector<16x512xf32>
    %26 = arith.addf %23, %25 : vector<16x512xf32>
    %27 = vector.extract_strided_slice %26 {offsets = [0, 0], sizes = [16, 128], strides = [1, 1]} : vector<16x512xf32> to vector<16x128xf32>
    %28 = arith.negf %27 : vector<16x128xf32>
    %29 = math.exp %28 : vector<16x128xf32>
    %cst_20 = arith.constant 1.000000e+00 : f32
    %30 = vector.broadcast %cst_20 : f32 to vector<16x128xf32>
    %31 = arith.addf %30, %29 : vector<16x128xf32>
    %32 = arith.divf %30, %31 : vector<16x128xf32>
    %33 = vector.extract_strided_slice %26 {offsets = [0, 128], sizes = [16, 128], strides = [1, 1]} : vector<16x512xf32> to vector<16x128xf32>
    %34 = arith.negf %33 : vector<16x128xf32>
    %35 = math.exp %34 : vector<16x128xf32>
    %cst_21 = arith.constant 1.000000e+00 : f32
    %36 = vector.broadcast %cst_21 : f32 to vector<16x128xf32>
    %37 = arith.addf %36, %35 : vector<16x128xf32>
    %38 = arith.divf %36, %37 : vector<16x128xf32>
    %39 = vector.extract_strided_slice %26 {offsets = [0, 256], sizes = [16, 128], strides = [1, 1]} : vector<16x512xf32> to vector<16x128xf32>
    %40 = math.tanh %39 : vector<16x128xf32>
    %41 = vector.extract_strided_slice %26 {offsets = [0, 384], sizes = [16, 128], strides = [1, 1]} : vector<16x512xf32> to vector<16x128xf32>
    %42 = arith.negf %41 : vector<16x128xf32>
    %43 = math.exp %42 : vector<16x128xf32>
    %cst_22 = arith.constant 1.000000e+00 : f32
    %44 = vector.broadcast %cst_22 : f32 to vector<16x128xf32>
    %45 = arith.addf %44, %43 : vector<16x128xf32>
    %46 = arith.divf %44, %45 : vector<16x128xf32>
    %47 = arith.mulf %38, %15 : vector<16x128xf32>
    %48 = arith.mulf %32, %40 : vector<16x128xf32>
    %49 = arith.addf %47, %48 : vector<16x128xf32>
    %50 = math.tanh %49 : vector<16x128xf32>
    %51 = arith.mulf %46, %50 : vector<16x128xf32>
    %52 = arith.truncf %51 : vector<16x128xf32> to vector<16x128xbf16>
    %53 = arith.index_cast %21 : i32 to index
    %c0_23 = arith.constant 0 : index
    %54 = vector.load %arg6[%53, %c0_23] : memref<128x128xbf16, #tpu.memory_space<vmem>>, vector<16x128xbf16>
    tpu.vector_store %arg6[%53, %c0_23], %52 {strides = array<i32>} : memref<128x128xbf16, #tpu.memory_space<vmem>>, vector<16x128xbf16>,
    %c1_i32 = arith.constant 1 : i32
    %c2_i32_24 = arith.constant 2 : i32
    %55 = arith.muli %c2_i32_24, %c1_i32 : i32
    %c7_i32_25 = arith.constant 7 : i32
    %56 = arith.subi %c7_i32_25, %55 : i32
    %57 = arith.muli %arg0, %56 : i32
    %58 = arith.addi %c1_i32, %57 : i32
    %c16_i32_26 = arith.constant 16 : i32
    %59 = arith.muli %58, %c16_i32_26 : i32
    %60 = tpu.assume_multiple %59, 16 : i32
    %61 = arith.index_cast %60 : i32 to index
    %c0_27 = arith.constant 0 : index
    %62 = vector.load %arg9[%61, %c0_27] : memref<128x512xf32, #tpu.memory_space<vmem>>, vector<16x512xf32>
    %63 = arith.truncf %51 : vector<16x128xf32> to vector<16x128xbf16>
    %cst_28 = arith.constant dense<0.000000e+00> : vector<16x512xf32>
    %64 = tpu.matmul %63, %13, %cst_28 {dimension_numbers = #tpu.dot_dimension_numbers<[1], [0], [0], [1], [0, 0, 1, 1], [], []>} : vector<16x128xbf16>, vector<128x512xbf16>, vector<16x512xf32> -> vector<16x512xf32>
    %65 = arith.addf %62, %64 : vector<16x512xf32>
    %66 = vector.extract_strided_slice %65 {offsets = [0, 0], sizes = [16, 128], strides = [1, 1]} : vector<16x512xf32> to vector<16x128xf32>
    %67 = arith.negf %66 : vector<16x128xf32>
    %68 = math.exp %67 : vector<16x128xf32>
    %cst_29 = arith.constant 1.000000e+00 : f32
    %69 = vector.broadcast %cst_29 : f32 to vector<16x128xf32>
    %70 = arith.addf %69, %68 : vector<16x128xf32>
    %71 = arith.divf %69, %70 : vector<16x128xf32>
    %72 = vector.extract_strided_slice %65 {offsets = [0, 128], sizes = [16, 128], strides = [1, 1]} : vector<16x512xf32> to vector<16x128xf32>
    %73 = arith.negf %72 : vector<16x128xf32>
    %74 = math.exp %73 : vector<16x128xf32>
    %cst_30 = arith.constant 1.000000e+00 : f32
    %75 = vector.broadcast %cst_30 : f32 to vector<16x128xf32>
    %76 = arith.addf %75, %74 : vector<16x128xf32>
    %77 = arith.divf %75, %76 : vector<16x128xf32>
    %78 = vector.extract_strided_slice %65 {offsets = [0, 256], sizes = [16, 128], strides = [1, 1]} : vector<16x512xf32> to vector<16x128xf32>
    %79 = math.tanh %78 : vector<16x128xf32>
    %80 = vector.extract_strided_slice %65 {offsets = [0, 384], sizes = [16, 128], strides = [1, 1]} : vector<16x512xf32> to vector<16x128xf32>
    %81 = arith.negf %80 : vector<16x128xf32>
    %82 = math.exp %81 : vector<16x128xf32>
    %cst_31 = arith.constant 1.000000e+00 : f32
    %83 = vector.broadcast %cst_31 : f32 to vector<16x128xf32>
    %84 = arith.addf %83, %82 : vector<16x128xf32>
    %85 = arith.divf %83, %84 : vector<16x128xf32>
    %86 = arith.mulf %77, %49 : vector<16x128xf32>
    %87 = arith.mulf %71, %79 : vector<16x128xf32>
    %88 = arith.addf %86, %87 : vector<16x128xf32>
    %89 = math.tanh %88 : vector<16x128xf32>
    %90 = arith.mulf %85, %89 : vector<16x128xf32>
    %91 = arith.truncf %90 : vector<16x128xf32> to vector<16x128xbf16>
    %92 = arith.index_cast %60 : i32 to index
    %c0_32 = arith.constant 0 : index
    %93 = vector.load %arg6[%92, %c0_32] : memref<128x128xbf16, #tpu.memory_space<vmem>>, vector<16x128xbf16>
    tpu.vector_store %arg6[%92, %c0_32], %91 {strides = array<i32>} : memref<128x128xbf16, #tpu.memory_space<vmem>>, vector<16x128xbf16>,
    %c2_i32_33 = arith.constant 2 : i32
    %c2_i32_34 = arith.constant 2 : i32
    %94 = arith.muli %c2_i32_34, %c2_i32_33 : i32
    %c7_i32_35 = arith.constant 7 : i32
    %95 = arith.subi %c7_i32_35, %94 : i32
    %96 = arith.muli %arg0, %95 : i32
    %97 = arith.addi %c2_i32_33, %96 : i32
    %c16_i32_36 = arith.constant 16 : i32
    %98 = arith.muli %97, %c16_i32_36 : i32
    %99 = tpu.assume_multiple %98, 16 : i32
    %100 = arith.index_cast %99 : i32 to index
    %c0_37 = arith.constant 0 : index
    %101 = vector.load %arg9[%100, %c0_37] : memref<128x512xf32, #tpu.memory_space<vmem>>, vector<16x512xf32>
    %102 = arith.truncf %90 : vector<16x128xf32> to vector<16x128xbf16>
    %cst_38 = arith.constant dense<0.000000e+00> : vector<16x512xf32>
    %103 = tpu.matmul %102, %13, %cst_38 {dimension_numbers = #tpu.dot_dimension_numbers<[1], [0], [0], [1], [0, 0, 1, 1], [], []>} : vector<16x128xbf16>, vector<128x512xbf16>, vector<16x512xf32> -> vector<16x512xf32>
    %104 = arith.addf %101, %103 : vector<16x512xf32>
    %105 = vector.extract_strided_slice %104 {offsets = [0, 0], sizes = [16, 128], strides = [1, 1]} : vector<16x512xf32> to vector<16x128xf32>
    %106 = arith.negf %105 : vector<16x128xf32>
    %107 = math.exp %106 : vector<16x128xf32>
    %cst_39 = arith.constant 1.000000e+00 : f32
    %108 = vector.broadcast %cst_39 : f32 to vector<16x128xf32>
    %109 = arith.addf %108, %107 : vector<16x128xf32>
    %110 = arith.divf %108, %109 : vector<16x128xf32>
    %111 = vector.extract_strided_slice %104 {offsets = [0, 128], sizes = [16, 128], strides = [1, 1]} : vector<16x512xf32> to vector<16x128xf32>
    %112 = arith.negf %111 : vector<16x128xf32>
    %113 = math.exp %112 : vector<16x128xf32>
    %cst_40 = arith.constant 1.000000e+00 : f32
    %114 = vector.broadcast %cst_40 : f32 to vector<16x128xf32>
    %115 = arith.addf %114, %113 : vector<16x128xf32>
    %116 = arith.divf %114, %115 : vector<16x128xf32>
    %117 = vector.extract_strided_slice %104 {offsets = [0, 256], sizes = [16, 128], strides = [1, 1]} : vector<16x512xf32> to vector<16x128xf32>
    %118 = math.tanh %117 : vector<16x128xf32>
    %119 = vector.extract_strided_slice %104 {offsets = [0, 384], sizes = [16, 128], strides = [1, 1]} : vector<16x512xf32> to vector<16x128xf32>
    %120 = arith.negf %119 : vector<16x128xf32>
    %121 = math.exp %120 : vector<16x128xf32>
    %cst_41 = arith.constant 1.000000e+00 : f32
    %122 = vector.broadcast %cst_41 : f32 to vector<16x128xf32>
    %123 = arith.addf %122, %121 : vector<16x128xf32>
    %124 = arith.divf %122, %123 : vector<16x128xf32>
    %125 = arith.mulf %116, %88 : vector<16x128xf32>
    %126 = arith.mulf %110, %118 : vector<16x128xf32>
    %127 = arith.addf %125, %126 : vector<16x128xf32>
    %128 = math.tanh %127 : vector<16x128xf32>
    %129 = arith.mulf %124, %128 : vector<16x128xf32>
    %130 = arith.truncf %129 : vector<16x128xf32> to vector<16x128xbf16>
    %131 = arith.index_cast %99 : i32 to index
    %c0_42 = arith.constant 0 : index
    %132 = vector.load %arg6[%131, %c0_42] : memref<128x128xbf16, #tpu.memory_space<vmem>>, vector<16x128xbf16>
    tpu.vector_store %arg6[%131, %c0_42], %130 {strides = array<i32>} : memref<128x128xbf16, #tpu.memory_space<vmem>>, vector<16x128xbf16>,
    %c3_i32 = arith.constant 3 : i32
    %c2_i32_43 = arith.constant 2 : i32
    %133 = arith.muli %c2_i32_43, %c3_i32 : i32
    %c7_i32_44 = arith.constant 7 : i32
    %134 = arith.subi %c7_i32_44, %133 : i32
    %135 = arith.muli %arg0, %134 : i32
    %136 = arith.addi %c3_i32, %135 : i32
    %c16_i32_45 = arith.constant 16 : i32
    %137 = arith.muli %136, %c16_i32_45 : i32
    %138 = tpu.assume_multiple %137, 16 : i32
    %139 = arith.index_cast %138 : i32 to index
    %c0_46 = arith.constant 0 : index
    %140 = vector.load %arg9[%139, %c0_46] : memref<128x512xf32, #tpu.memory_space<vmem>>, vector<16x512xf32>
    %141 = arith.truncf %129 : vector<16x128xf32> to vector<16x128xbf16>
    %cst_47 = arith.constant dense<0.000000e+00> : vector<16x512xf32>
    %142 = tpu.matmul %141, %13, %cst_47 {dimension_numbers = #tpu.dot_dimension_numbers<[1], [0], [0], [1], [0, 0, 1, 1], [], []>} : vector<16x128xbf16>, vector<128x512xbf16>, vector<16x512xf32> -> vector<16x512xf32>
    %143 = arith.addf %140, %142 : vector<16x512xf32>
    %144 = vector.extract_strided_slice %143 {offsets = [0, 0], sizes = [16, 128], strides = [1, 1]} : vector<16x512xf32> to vector<16x128xf32>
    %145 = arith.negf %144 : vector<16x128xf32>
    %146 = math.exp %145 : vector<16x128xf32>
    %cst_48 = arith.constant 1.000000e+00 : f32
    %147 = vector.broadcast %cst_48 : f32 to vector<16x128xf32>
    %148 = arith.addf %147, %146 : vector<16x128xf32>
    %149 = arith.divf %147, %148 : vector<16x128xf32>
    %150 = vector.extract_strided_slice %143 {offsets = [0, 128], sizes = [16, 128], strides = [1, 1]} : vector<16x512xf32> to vector<16x128xf32>
    %151 = arith.negf %150 : vector<16x128xf32>
    %152 = math.exp %151 : vector<16x128xf32>
    %cst_49 = arith.constant 1.000000e+00 : f32
    %153 = vector.broadcast %cst_49 : f32 to vector<16x128xf32>
    %154 = arith.addf %153, %152 : vector<16x128xf32>
    %155 = arith.divf %153, %154 : vector<16x128xf32>
    %156 = vector.extract_strided_slice %143 {offsets = [0, 256], sizes = [16, 128], strides = [1, 1]} : vector<16x512xf32> to vector<16x128xf32>
    %157 = math.tanh %156 : vector<16x128xf32>
    %158 = vector.extract_strided_slice %143 {offsets = [0, 384], sizes = [16, 128], strides = [1, 1]} : vector<16x512xf32> to vector<16x128xf32>
    %159 = arith.negf %158 : vector<16x128xf32>
    %160 = math.exp %159 : vector<16x128xf32>
    %cst_50 = arith.constant 1.000000e+00 : f32
    %161 = vector.broadcast %cst_50 : f32 to vector<16x128xf32>
    %162 = arith.addf %161, %160 : vector<16x128xf32>
    %163 = arith.divf %161, %162 : vector<16x128xf32>
    %164 = arith.mulf %155, %127 : vector<16x128xf32>
    %165 = arith.mulf %149, %157 : vector<16x128xf32>
    %166 = arith.addf %164, %165 : vector<16x128xf32>
    %167 = math.tanh %166 : vector<16x128xf32>
    %168 = arith.mulf %163, %167 : vector<16x128xf32>
    %169 = arith.truncf %168 : vector<16x128xf32> to vector<16x128xbf16>
    %170 = arith.index_cast %138 : i32 to index
    %c0_51 = arith.constant 0 : index
    %171 = vector.load %arg6[%170, %c0_51] : memref<128x128xbf16, #tpu.memory_space<vmem>>, vector<16x128xbf16>
    tpu.vector_store %arg6[%170, %c0_51], %169 {strides = array<i32>} : memref<128x128xbf16, #tpu.memory_space<vmem>>, vector<16x128xbf16>,
    %c4_i32 = arith.constant 4 : i32
    %c2_i32_52 = arith.constant 2 : i32
    %172 = arith.muli %c2_i32_52, %c4_i32 : i32
    %c7_i32_53 = arith.constant 7 : i32
    %173 = arith.subi %c7_i32_53, %172 : i32
    %174 = arith.muli %arg0, %173 : i32
    %175 = arith.addi %c4_i32, %174 : i32
    %c16_i32_54 = arith.constant 16 : i32
    %176 = arith.muli %175, %c16_i32_54 : i32
    %177 = tpu.assume_multiple %176, 16 : i32
    %178 = arith.index_cast %177 : i32 to index
    %c0_55 = arith.constant 0 : index
    %179 = vector.load %arg9[%178, %c0_55] : memref<128x512xf32, #tpu.memory_space<vmem>>, vector<16x512xf32>
    %180 = arith.truncf %168 : vector<16x128xf32> to vector<16x128xbf16>
    %cst_56 = arith.constant dense<0.000000e+00> : vector<16x512xf32>
    %181 = tpu.matmul %180, %13, %cst_56 {dimension_numbers = #tpu.dot_dimension_numbers<[1], [0], [0], [1], [0, 0, 1, 1], [], []>} : vector<16x128xbf16>, vector<128x512xbf16>, vector<16x512xf32> -> vector<16x512xf32>
    %182 = arith.addf %179, %181 : vector<16x512xf32>
    %183 = vector.extract_strided_slice %182 {offsets = [0, 0], sizes = [16, 128], strides = [1, 1]} : vector<16x512xf32> to vector<16x128xf32>
    %184 = arith.negf %183 : vector<16x128xf32>
    %185 = math.exp %184 : vector<16x128xf32>
    %cst_57 = arith.constant 1.000000e+00 : f32
    %186 = vector.broadcast %cst_57 : f32 to vector<16x128xf32>
    %187 = arith.addf %186, %185 : vector<16x128xf32>
    %188 = arith.divf %186, %187 : vector<16x128xf32>
    %189 = vector.extract_strided_slice %182 {offsets = [0, 128], sizes = [16, 128], strides = [1, 1]} : vector<16x512xf32> to vector<16x128xf32>
    %190 = arith.negf %189 : vector<16x128xf32>
    %191 = math.exp %190 : vector<16x128xf32>
    %cst_58 = arith.constant 1.000000e+00 : f32
    %192 = vector.broadcast %cst_58 : f32 to vector<16x128xf32>
    %193 = arith.addf %192, %191 : vector<16x128xf32>
    %194 = arith.divf %192, %193 : vector<16x128xf32>
    %195 = vector.extract_strided_slice %182 {offsets = [0, 256], sizes = [16, 128], strides = [1, 1]} : vector<16x512xf32> to vector<16x128xf32>
    %196 = math.tanh %195 : vector<16x128xf32>
    %197 = vector.extract_strided_slice %182 {offsets = [0, 384], sizes = [16, 128], strides = [1, 1]} : vector<16x512xf32> to vector<16x128xf32>
    %198 = arith.negf %197 : vector<16x128xf32>
    %199 = math.exp %198 : vector<16x128xf32>
    %cst_59 = arith.constant 1.000000e+00 : f32
    %200 = vector.broadcast %cst_59 : f32 to vector<16x128xf32>
    %201 = arith.addf %200, %199 : vector<16x128xf32>
    %202 = arith.divf %200, %201 : vector<16x128xf32>
    %203 = arith.mulf %194, %166 : vector<16x128xf32>
    %204 = arith.mulf %188, %196 : vector<16x128xf32>
    %205 = arith.addf %203, %204 : vector<16x128xf32>
    %206 = math.tanh %205 : vector<16x128xf32>
    %207 = arith.mulf %202, %206 : vector<16x128xf32>
    %208 = arith.truncf %207 : vector<16x128xf32> to vector<16x128xbf16>
    %209 = arith.index_cast %177 : i32 to index
    %c0_60 = arith.constant 0 : index
    %210 = vector.load %arg6[%209, %c0_60] : memref<128x128xbf16, #tpu.memory_space<vmem>>, vector<16x128xbf16>
    tpu.vector_store %arg6[%209, %c0_60], %208 {strides = array<i32>} : memref<128x128xbf16, #tpu.memory_space<vmem>>, vector<16x128xbf16>,
    %c5_i32 = arith.constant 5 : i32
    %c2_i32_61 = arith.constant 2 : i32
    %211 = arith.muli %c2_i32_61, %c5_i32 : i32
    %c7_i32_62 = arith.constant 7 : i32
    %212 = arith.subi %c7_i32_62, %211 : i32
    %213 = arith.muli %arg0, %212 : i32
    %214 = arith.addi %c5_i32, %213 : i32
    %c16_i32_63 = arith.constant 16 : i32
    %215 = arith.muli %214, %c16_i32_63 : i32
    %216 = tpu.assume_multiple %215, 16 : i32
    %217 = arith.index_cast %216 : i32 to index
    %c0_64 = arith.constant 0 : index
    %218 = vector.load %arg9[%217, %c0_64] : memref<128x512xf32, #tpu.memory_space<vmem>>, vector<16x512xf32>
    %219 = arith.truncf %207 : vector<16x128xf32> to vector<16x128xbf16>
    %cst_65 = arith.constant dense<0.000000e+00> : vector<16x512xf32>
    %220 = tpu.matmul %219, %13, %cst_65 {dimension_numbers = #tpu.dot_dimension_numbers<[1], [0], [0], [1], [0, 0, 1, 1], [], []>} : vector<16x128xbf16>, vector<128x512xbf16>, vector<16x512xf32> -> vector<16x512xf32>
    %221 = arith.addf %218, %220 : vector<16x512xf32>
    %222 = vector.extract_strided_slice %221 {offsets = [0, 0], sizes = [16, 128], strides = [1, 1]} : vector<16x512xf32> to vector<16x128xf32>
    %223 = arith.negf %222 : vector<16x128xf32>
    %224 = math.exp %223 : vector<16x128xf32>
    %cst_66 = arith.constant 1.000000e+00 : f32
    %225 = vector.broadcast %cst_66 : f32 to vector<16x128xf32>
    %226 = arith.addf %225, %224 : vector<16x128xf32>
    %227 = arith.divf %225, %226 : vector<16x128xf32>
    %228 = vector.extract_strided_slice %221 {offsets = [0, 128], sizes = [16, 128], strides = [1, 1]} : vector<16x512xf32> to vector<16x128xf32>
    %229 = arith.negf %228 : vector<16x128xf32>
    %230 = math.exp %229 : vector<16x128xf32>
    %cst_67 = arith.constant 1.000000e+00 : f32
    %231 = vector.broadcast %cst_67 : f32 to vector<16x128xf32>
    %232 = arith.addf %231, %230 : vector<16x128xf32>
    %233 = arith.divf %231, %232 : vector<16x128xf32>
    %234 = vector.extract_strided_slice %221 {offsets = [0, 256], sizes = [16, 128], strides = [1, 1]} : vector<16x512xf32> to vector<16x128xf32>
    %235 = math.tanh %234 : vector<16x128xf32>
    %236 = vector.extract_strided_slice %221 {offsets = [0, 384], sizes = [16, 128], strides = [1, 1]} : vector<16x512xf32> to vector<16x128xf32>
    %237 = arith.negf %236 : vector<16x128xf32>
    %238 = math.exp %237 : vector<16x128xf32>
    %cst_68 = arith.constant 1.000000e+00 : f32
    %239 = vector.broadcast %cst_68 : f32 to vector<16x128xf32>
    %240 = arith.addf %239, %238 : vector<16x128xf32>
    %241 = arith.divf %239, %240 : vector<16x128xf32>
    %242 = arith.mulf %233, %205 : vector<16x128xf32>
    %243 = arith.mulf %227, %235 : vector<16x128xf32>
    %244 = arith.addf %242, %243 : vector<16x128xf32>
    %245 = math.tanh %244 : vector<16x128xf32>
    %246 = arith.mulf %241, %245 : vector<16x128xf32>
    %247 = arith.truncf %246 : vector<16x128xf32> to vector<16x128xbf16>
    %248 = arith.index_cast %216 : i32 to index
    %c0_69 = arith.constant 0 : index
    %249 = vector.load %arg6[%248, %c0_69] : memref<128x128xbf16, #tpu.memory_space<vmem>>, vector<16x128xbf16>
    tpu.vector_store %arg6[%248, %c0_69], %247 {strides = array<i32>} : memref<128x128xbf16, #tpu.memory_space<vmem>>, vector<16x128xbf16>,
    %c6_i32 = arith.constant 6 : i32
    %c2_i32_70 = arith.constant 2 : i32
    %250 = arith.muli %c2_i32_70, %c6_i32 : i32
    %c7_i32_71 = arith.constant 7 : i32
    %251 = arith.subi %c7_i32_71, %250 : i32
    %252 = arith.muli %arg0, %251 : i32
    %253 = arith.addi %c6_i32, %252 : i32
    %c16_i32_72 = arith.constant 16 : i32
    %254 = arith.muli %253, %c16_i32_72 : i32
    %255 = tpu.assume_multiple %254, 16 : i32
    %256 = arith.index_cast %255 : i32 to index
    %c0_73 = arith.constant 0 : index
    %257 = vector.load %arg9[%256, %c0_73] : memref<128x512xf32, #tpu.memory_space<vmem>>, vector<16x512xf32>
    %258 = arith.truncf %246 : vector<16x128xf32> to vector<16x128xbf16>
    %cst_74 = arith.constant dense<0.000000e+00> : vector<16x512xf32>
    %259 = tpu.matmul %258, %13, %cst_74 {dimension_numbers = #tpu.dot_dimension_numbers<[1], [0], [0], [1], [0, 0, 1, 1], [], []>} : vector<16x128xbf16>, vector<128x512xbf16>, vector<16x512xf32> -> vector<16x512xf32>
    %260 = arith.addf %257, %259 : vector<16x512xf32>
    %261 = vector.extract_strided_slice %260 {offsets = [0, 0], sizes = [16, 128], strides = [1, 1]} : vector<16x512xf32> to vector<16x128xf32>
    %262 = arith.negf %261 : vector<16x128xf32>
    %263 = math.exp %262 : vector<16x128xf32>
    %cst_75 = arith.constant 1.000000e+00 : f32
    %264 = vector.broadcast %cst_75 : f32 to vector<16x128xf32>
    %265 = arith.addf %264, %263 : vector<16x128xf32>
    %266 = arith.divf %264, %265 : vector<16x128xf32>
    %267 = vector.extract_strided_slice %260 {offsets = [0, 128], sizes = [16, 128], strides = [1, 1]} : vector<16x512xf32> to vector<16x128xf32>
    %268 = arith.negf %267 : vector<16x128xf32>
    %269 = math.exp %268 : vector<16x128xf32>
    %cst_76 = arith.constant 1.000000e+00 : f32
    %270 = vector.broadcast %cst_76 : f32 to vector<16x128xf32>
    %271 = arith.addf %270, %269 : vector<16x128xf32>
    %272 = arith.divf %270, %271 : vector<16x128xf32>
    %273 = vector.extract_strided_slice %260 {offsets = [0, 256], sizes = [16, 128], strides = [1, 1]} : vector<16x512xf32> to vector<16x128xf32>
    %274 = math.tanh %273 : vector<16x128xf32>
    %275 = vector.extract_strided_slice %260 {offsets = [0, 384], sizes = [16, 128], strides = [1, 1]} : vector<16x512xf32> to vector<16x128xf32>
    %276 = arith.negf %275 : vector<16x128xf32>
    %277 = math.exp %276 : vector<16x128xf32>
    %cst_77 = arith.constant 1.000000e+00 : f32
    %278 = vector.broadcast %cst_77 : f32 to vector<16x128xf32>
    %279 = arith.addf %278, %277 : vector<16x128xf32>
    %280 = arith.divf %278, %279 : vector<16x128xf32>
    %281 = arith.mulf %272, %244 : vector<16x128xf32>
    %282 = arith.mulf %266, %274 : vector<16x128xf32>
    %283 = arith.addf %281, %282 : vector<16x128xf32>
    %284 = math.tanh %283 : vector<16x128xf32>
    %285 = arith.mulf %280, %284 : vector<16x128xf32>
    %286 = arith.truncf %285 : vector<16x128xf32> to vector<16x128xbf16>
    %287 = arith.index_cast %255 : i32 to index
    %c0_78 = arith.constant 0 : index
    %288 = vector.load %arg6[%287, %c0_78] : memref<128x128xbf16, #tpu.memory_space<vmem>>, vector<16x128xbf16>
    tpu.vector_store %arg6[%287, %c0_78], %286 {strides = array<i32>} : memref<128x128xbf16, #tpu.memory_space<vmem>>, vector<16x128xbf16>,
    %c7_i32_79 = arith.constant 7 : i32
    %c2_i32_80 = arith.constant 2 : i32
    %289 = arith.muli %c2_i32_80, %c7_i32_79 : i32
    %c7_i32_81 = arith.constant 7 : i32
    %290 = arith.subi %c7_i32_81, %289 : i32
    %291 = arith.muli %arg0, %290 : i32
    %292 = arith.addi %c7_i32_79, %291 : i32
    %c16_i32_82 = arith.constant 16 : i32
    %293 = arith.muli %292, %c16_i32_82 : i32
    %294 = tpu.assume_multiple %293, 16 : i32
    %295 = arith.index_cast %294 : i32 to index
    %c0_83 = arith.constant 0 : index
    %296 = vector.load %arg9[%295, %c0_83] : memref<128x512xf32, #tpu.memory_space<vmem>>, vector<16x512xf32>
    %297 = arith.truncf %285 : vector<16x128xf32> to vector<16x128xbf16>
    %cst_84 = arith.constant dense<0.000000e+00> : vector<16x512xf32>
    %298 = tpu.matmul %297, %13, %cst_84 {dimension_numbers = #tpu.dot_dimension_numbers<[1], [0], [0], [1], [0, 0, 1, 1], [], []>} : vector<16x128xbf16>, vector<128x512xbf16>, vector<16x512xf32> -> vector<16x512xf32>
    %299 = arith.addf %296, %298 : vector<16x512xf32>
    %300 = vector.extract_strided_slice %299 {offsets = [0, 0], sizes = [16, 128], strides = [1, 1]} : vector<16x512xf32> to vector<16x128xf32>
    %301 = arith.negf %300 : vector<16x128xf32>
    %302 = math.exp %301 : vector<16x128xf32>
    %cst_85 = arith.constant 1.000000e+00 : f32
    %303 = vector.broadcast %cst_85 : f32 to vector<16x128xf32>
    %304 = arith.addf %303, %302 : vector<16x128xf32>
    %305 = arith.divf %303, %304 : vector<16x128xf32>
    %306 = vector.extract_strided_slice %299 {offsets = [0, 128], sizes = [16, 128], strides = [1, 1]} : vector<16x512xf32> to vector<16x128xf32>
    %307 = arith.negf %306 : vector<16x128xf32>
    %308 = math.exp %307 : vector<16x128xf32>
    %cst_86 = arith.constant 1.000000e+00 : f32
    %309 = vector.broadcast %cst_86 : f32 to vector<16x128xf32>
    %310 = arith.addf %309, %308 : vector<16x128xf32>
    %311 = arith.divf %309, %310 : vector<16x128xf32>
    %312 = vector.extract_strided_slice %299 {offsets = [0, 256], sizes = [16, 128], strides = [1, 1]} : vector<16x512xf32> to vector<16x128xf32>
    %313 = math.tanh %312 : vector<16x128xf32>
    %314 = vector.extract_strided_slice %299 {offsets = [0, 384], sizes = [16, 128], strides = [1, 1]} : vector<16x512xf32> to vector<16x128xf32>
    %315 = arith.negf %314 : vector<16x128xf32>
    %316 = math.exp %315 : vector<16x128xf32>
    %cst_87 = arith.constant 1.000000e+00 : f32
    %317 = vector.broadcast %cst_87 : f32 to vector<16x128xf32>
    %318 = arith.addf %317, %316 : vector<16x128xf32>
    %319 = arith.divf %317, %318 : vector<16x128xf32>
    %320 = arith.mulf %311, %283 : vector<16x128xf32>
    %321 = arith.mulf %305, %313 : vector<16x128xf32>
    %322 = arith.addf %320, %321 : vector<16x128xf32>
    %323 = math.tanh %322 : vector<16x128xf32>
    %324 = arith.mulf %319, %323 : vector<16x128xf32>
    %325 = arith.truncf %324 : vector<16x128xf32> to vector<16x128xbf16>
    %326 = arith.index_cast %294 : i32 to index
    %c0_88 = arith.constant 0 : index
    %327 = vector.load %arg6[%326, %c0_88] : memref<128x128xbf16, #tpu.memory_space<vmem>>, vector<16x128xbf16>
    tpu.vector_store %arg6[%326, %c0_88], %325 {strides = array<i32>} : memref<128x128xbf16, #tpu.memory_space<vmem>>, vector<16x128xbf16>,
    %c8_i32 = arith.constant 8 : i32
    %c0_89 = arith.constant 0 : index
    %c0_90 = arith.constant 0 : index
    %328 = vector.load %arg10[%c0_89, %c0_90] : memref<16x128xf32, #tpu.memory_space<vmem>>, vector<16x128xf32>
    tpu.vector_store %arg10[%c0_89, %c0_90], %324 {strides = array<i32>} : memref<16x128xf32, #tpu.memory_space<vmem>>, vector<16x128xf32>,
    %c0_91 = arith.constant 0 : index
    %c0_92 = arith.constant 0 : index
    %329 = vector.load %arg11[%c0_91, %c0_92] : memref<16x128xf32, #tpu.memory_space<vmem>>, vector<16x128xf32>
    tpu.vector_store %arg11[%c0_91, %c0_92], %322 {strides = array<i32>} : memref<16x128xf32, #tpu.memory_space<vmem>>, vector<16x128xf32>,
    %c0_i32_93 = arith.constant 0 : i32
    %330 = arith.cmpi eq, %arg1, %c0_i32_93 : i32
    %331 = arith.extui %330 : i1 to i32
    %c0_i32_94 = arith.constant 0 : i32
    %332 = arith.cmpi ne, %331, %c0_i32_94 : i32
    scf.if %332 {
      %c0_95 = arith.constant 0 : index
      %c0_96 = arith.constant 0 : index
      %c0_97 = arith.constant 0 : index
      %333 = vector.load %arg7[%c0_95, %c0_96, %c0_97] : memref<1x16x128xf32, #tpu.memory_space<vmem>>, vector<1x16x128xf32>
      %334 = vector.shape_cast %333 : vector<1x16x128xf32> to vector<16x128xf32>
      %335 = vector.shape_cast %324 : vector<16x128xf32> to vector<1x16x128xf32>
      tpu.vector_store %arg7[%c0_95, %c0_96, %c0_97], %335 {strides = array<i32>} : memref<1x16x128xf32, #tpu.memory_space<vmem>>, vector<1x16x128xf32>,
      %c0_98 = arith.constant 0 : index
      %c0_99 = arith.constant 0 : index
      %c0_100 = arith.constant 0 : index
      %336 = vector.load %arg8[%c0_98, %c0_99, %c0_100] : memref<1x16x128xf32, #tpu.memory_space<vmem>>, vector<1x16x128xf32>
      %337 = vector.shape_cast %336 : vector<1x16x128xf32> to vector<16x128xf32>
      %338 = vector.shape_cast %322 : vector<16x128xf32> to vector<1x16x128xf32>
      tpu.vector_store %arg8[%c0_98, %c0_99, %c0_100], %338 {strides = array<i32>} : memref<1x16x128xf32, #tpu.memory_space<vmem>>, vector<1x16x128xf32>,
    } else {
    }
    return
  }
  func.func @transform_0(%arg0: i32, %arg1: i32) -> (i32, i32) {
    %c2_i32 = arith.constant 2 : i32
    %0 = arith.muli %c2_i32, %arg1 : i32
    %c0_i32 = arith.constant 0 : i32
    %1 = arith.subi %c0_i32, %0 : i32
    %2 = arith.muli %arg0, %1 : i32
    %3 = arith.addi %arg1, %2 : i32
    %c0_i32_0 = arith.constant 0 : i32
    %c0_i32_1 = arith.constant 0 : i32
    return %3, %c0_i32_0 : i32, i32
  }
  func.func @transform_1(%arg0: i32, %arg1: i32) -> (i32, i32, i32) {
    %c0_i32 = arith.constant 0 : i32
    %c0_i32_0 = arith.constant 0 : i32
    %c0_i32_1 = arith.constant 0 : i32
    return %arg0, %c0_i32, %c0_i32_0 : i32, i32, i32
  }
  func.func @transform_2(%arg0: i32, %arg1: i32) -> (i32, i32, i32) {
    %c0_i32 = arith.constant 0 : i32
    %c0_i32_0 = arith.constant 0 : i32
    %c0_i32_1 = arith.constant 0 : i32
    return %arg0, %c0_i32, %c0_i32_0 : i32, i32, i32
  }
  func.func @transform_3(%arg0: i32, %arg1: i32) -> (i32, i32, i32) {
    %c0_i32 = arith.constant 0 : i32
    %c0_i32_0 = arith.constant 0 : i32
    %c0_i32_1 = arith.constant 0 : i32
    return %arg0, %c0_i32, %c0_i32_0 : i32, i32, i32
  }
  func.func @transform_4(%arg0: i32, %arg1: i32) -> (i32, i32) {
    %c2_i32 = arith.constant 2 : i32
    %0 = arith.muli %c2_i32, %arg1 : i32
    %c0_i32 = arith.constant 0 : i32
    %1 = arith.subi %c0_i32, %0 : i32
    %2 = arith.muli %arg0, %1 : i32
    %3 = arith.addi %arg1, %2 : i32
    %c0_i32_0 = arith.constant 0 : i32
    return %3, %arg0 : i32, i32
  }
  func.func @transform_5(%arg0: i32, %arg1: i32) -> (i32, i32, i32) {
    %c0_i32 = arith.constant 0 : i32
    %c0_i32_0 = arith.constant 0 : i32
    %c0_i32_1 = arith.constant 0 : i32
    return %arg0, %c0_i32, %c0_i32_0 : i32, i32, i32
  }
  func.func @transform_6(%arg0: i32, %arg1: i32) -> (i32, i32, i32) {
    %c0_i32 = arith.constant 0 : i32
    %c0_i32_0 = arith.constant 0 : i32
    %c0_i32_1 = arith.constant 0 : i32
    return %arg0, %c0_i32, %c0_i32_0 : i32, i32, i32
  }
}

</mosaic_0001>

<llo_original>
// kernel: encoder_rnn_forward.2
$region0: #{encoder_rnn_forward.2}
  #allocation0 [shape = 'u32[]', space=smem, size = 0x4, offset = 0x4, fixed_abs, tag = 'smem constant byte address 0x4 - core index']
  #allocation1 [shape = 'u32[144,128]{1,0:T(1,128)}', space=vmem, size = 0x12000, scoped, tag = 'internal scratch']
  #allocation2 [shape = 'f32[128,512]{1,0:T(8,128)}', space=vmem, size = 0x40000, scoped, tag = 'scratch operand']
  #allocation3 [shape = 'f32[16,128]{1,0:T(8,128)}', space=vmem, size = 0x2000, scoped, tag = 'scratch operand']
  #allocation4 [shape = 'f32[16,128]{1,0:T(8,128)}', space=vmem, size = 0x2000, scoped, tag = 'scratch operand']
  %s0 = inlined_call_operand.vmem [shape: bf16[128,128], index: 0, kind: input, shape index: {}]
  %s1 = inlined_call_operand.vmem [shape: bf16[2,128,512], index: 1, kind: input, shape index: {}]
  %s2 = inlined_call_operand.vmem [shape: bf16[2,128,512], index: 2, kind: input, shape index: {}]
  %s3 = inlined_call_operand.vmem [shape: f32[2,1,512], index: 3, kind: input, shape index: {}]
  %s4 = inlined_call_operand.vmem [shape: bf16[128,256], index: 4, kind: output, shape index: {0}]
  %s5 = inlined_call_operand.vmem [shape: f32[2,16,128], index: 5, kind: output, shape index: {1}]
  %s6 = inlined_call_operand.vmem [shape: f32[2,16,128], index: 6, kind: output, shape index: {2}]
  %7 = xla_tuple %s4, %s5, %s6
  %s8 = sld [smem:[#allocation0]]
  $region110: #{encoder_rnn_forward.2} parent=0
    _
  %s10 = ssub.s32 1, %s8
  %s11 = scalar_select 0, %s10, %s8
  $region1: #{encoder_rnn_forward.2} parent=0
    #allocation5 [shape = 'u8[65536]{0}', space=vmem, size = 0x10000, scoped, tag = 'output window, operand 0']
    loop: start=0, step=1, limit=4
    $region2: #{encoder_rnn_forward.2} parent=1 // loop_pre_header
      _
    $region3: #{encoder_rnn_forward.2} parent=1 // loop_header
      %s13 = sphi 0, %s17
      %p14 = scmp.ge.s32.totalorder %s13, 4
      %s20 = sphi 0, %s32
      %s21 = sphi 0, %s28
      %s22 = sphi 0, %s20
      %s23 = sphi 0, %s21
      %s24 = sphi 0, %s22
      %s25 = sphi 0, %s23
      %s43 = sphi 0, %s45
      %s46 = sphi 0, %s43
      %s47 = sphi 0, %s46
      %s63 = sphi 0, %s47
      %s69 = sphi 0, %s71
      %s72 = sphi 0, %s69
      %s73 = sphi 0, %s72
      %s89 = sphi 0, %s73
      %s95 = sphi 0, %s97
      %s98 = sphi 0, %s95
      %s99 = sphi 0, %s98
      %s115 = sphi 0, %s99
      %s121 = sphi 0, %s123
      %s124 = sphi 0, %s121
      %s125 = sphi 0, %s124
      %s141 = sphi 0, %s125
      %s157 = sphi 0, %s159
      %s160 = sphi 0, %s157
      %s161 = sphi 0, %s160
      %s177 = sphi 0, %s161
      %s183 = sphi 0, %s185
      %s186 = sphi 0, %s183
      %s187 = sphi 0, %s186
      %s203 = sphi 0, %s187
      %s209 = sphi 0, %s211
      %s212 = sphi 0, %s209
      %s213 = sphi 0, %s212
      %s229 = sphi 0, %s213
    $region4: #{encoder_rnn_forward.2} parent=1 // loop_header_branch
      %16 = sbr.rel (%p14) target = $region8
    $region5: #{encoder_rnn_forward.2} parent=1 // loop_body
      %s18 = ssub.s32 %s13, 1
      %s19 = ssub.s32 %s13, 2
      %s26 = sadd.s32 1, %s21
      %p27 = scmp.ge.s32.totalorder %s26, 1
      %s28 = scalar_select %p27, 0, %s26
      %s29 = sadd.s32 1, %s20
      %s30 = scalar_select %p27, %s29, %s20
      %p31 = scmp.ge.s32.totalorder %s30, 2
      %s32 = scalar_select %p31, 0, %s30
      %s33 = smul.u32 %s21, 2
      %s34 = ssub.s32 0, %s33
      %s35 = smul.u32 %s20, %s34
      %s36 = sadd.s32 %s21, %s35
      %s37 = smul.u32 %s28, 2
      %s38 = ssub.s32 0, %s37
      %s39 = smul.u32 %s32, %s38
      %s40 = sadd.s32 %s28, %s39
      %s41 = ssub.s32 %s36, %s40
      %p42 = scmp.eq.s32.totalorder %s41, 0
      %s44 = sadd.s32 %s43, 1
      %s45 = scalar_select %p42, %s43, %s44
      %p48 = pneg %p42
      %p49 = scmp.eq.s32.totalorder %s13, 1
      %p50 = por %p48, %p49
      %p51 = scmp.ne.s32.totalorder %s43, %s46
      %p52 = scmp.eq.s32.totalorder %s13, 0
      %p53 = por %p51, %p52
      %p54 = scmp.ne.s32.totalorder %s43, %s46
      %p55 = scmp.eq.s32.totalorder %s18, 1
      %p56 = por %p54, %p55
      %p57 = scmp.ne.s32.totalorder %s46, %s47
      %p58 = scmp.eq.s32.totalorder %s18, 0
      %p59 = por %p57, %p58
      %p60 = scmp.ne.s32.totalorder %s46, %s47
      %p61 = scmp.eq.s32.totalorder %s19, 1
      %p62 = por %p60, %p61
      %p64 = scmp.ne.s32.totalorder %s47, %s63
      %p65 = scmp.eq.s32.totalorder %s19, 0
      %p66 = por %p64, %p65
      %s67 = ssub.s32 %s20, %s32
      %p68 = scmp.eq.s32.totalorder %s67, 0
      %s70 = sadd.s32 %s69, 1
      %s71 = scalar_select %p68, %s69, %s70
      %p74 = pneg %p68
      %p75 = scmp.eq.s32.totalorder %s13, 1
      %p76 = por %p74, %p75
      %p77 = scmp.ne.s32.totalorder %s69, %s72
      %p78 = scmp.eq.s32.totalorder %s13, 0
      %p79 = por %p77, %p78
      %p80 = scmp.ne.s32.totalorder %s69, %s72
      %p81 = scmp.eq.s32.totalorder %s18, 1
      %p82 = por %p80, %p81
      %p83 = scmp.ne.s32.totalorder %s72, %s73
      %p84 = scmp.eq.s32.totalorder %s18, 0
      %p85 = por %p83, %p84
      %p86 = scmp.ne.s32.totalorder %s72, %s73
      %p87 = scmp.eq.s32.totalorder %s19, 1
      %p88 = por %p86, %p87
      %p90 = scmp.ne.s32.totalorder %s73, %s89
      %p91 = scmp.eq.s32.totalorder %s19, 0
      %p92 = por %p90, %p91
      %s93 = ssub.s32 %s20, %s32
      %p94 = scmp.eq.s32.totalorder %s93, 0
      %s96 = sadd.s32 %s95, 1
      %s97 = scalar_select %p94, %s95, %s96
      %p100 = pneg %p94
      %p101 = scmp.eq.s32.totalorder %s13, 1
      %p102 = por %p100, %p101
      %p103 = scmp.ne.s32.totalorder %s95, %s98
      %p104 = scmp.eq.s32.totalorder %s13, 0
      %p105 = por %p103, %p104
      %p106 = scmp.ne.s32.totalorder %s95, %s98
      %p107 = scmp.eq.s32.totalorder %s18, 1
      %p108 = por %p106, %p107
      %p109 = scmp.ne.s32.totalorder %s98, %s99
      %p110 = scmp.eq.s32.totalorder %s18, 0
      %p111 = por %p109, %p110
      %p112 = scmp.ne.s32.totalorder %s98, %s99
      %p113 = scmp.eq.s32.totalorder %s19, 1
      %p114 = por %p112, %p113
      %p116 = scmp.ne.s32.totalorder %s99, %s115
      %p117 = scmp.eq.s32.totalorder %s19, 0
      %p118 = por %p116, %p117
      %s119 = ssub.s32 %s20, %s32
      %p120 = scmp.eq.s32.totalorder %s119, 0
      %s122 = sadd.s32 %s121, 1
      %s123 = scalar_select %p120, %s121, %s122
      %p126 = pneg %p120
      %p127 = scmp.eq.s32.totalorder %s13, 1
      %p128 = por %p126, %p127
      %p129 = scmp.ne.s32.totalorder %s121, %s124
      %p130 = scmp.eq.s32.totalorder %s13, 0
      %p131 = por %p129, %p130
      %p132 = scmp.ne.s32.totalorder %s121, %s124
      %p133 = scmp.eq.s32.totalorder %s18, 1
      %p134 = por %p132, %p133
      %p135 = scmp.ne.s32.totalorder %s124, %s125
      %p136 = scmp.eq.s32.totalorder %s18, 0
      %p137 = por %p135, %p136
      %p138 = scmp.ne.s32.totalorder %s124, %s125
      %p139 = scmp.eq.s32.totalorder %s19, 1
      %p140 = por %p138, %p139
      %p142 = scmp.ne.s32.totalorder %s125, %s141
      %p143 = scmp.eq.s32.totalorder %s19, 0
      %p144 = por %p142, %p143
      %s145 = smul.u32 %s21, 2
      %s146 = ssub.s32 0, %s145
      %s147 = smul.u32 %s20, %s146
      %s148 = sadd.s32 %s21, %s147
      %s149 = smul.u32 %s28, 2
      %s150 = ssub.s32 0, %s149
      %s151 = smul.u32 %s32, %s150
      %s152 = sadd.s32 %s28, %s151
      %s153 = ssub.s32 %s148, %s152
      %s154 = ssub.s32 %s20, %s32
      %s155 = sor.u32 %s153, %s154
      %p156 = scmp.eq.s32.totalorder %s155, 0
      %s158 = sadd.s32 %s157, 1
      %s159 = scalar_select %p156, %s157, %s158
      %p162 = pneg %p156
      %p163 = scmp.eq.s32.totalorder %s13, 1
      %p164 = por %p162, %p163
      %p165 = scmp.ne.s32.totalorder %s157, %s160
      %p166 = scmp.eq.s32.totalorder %s13, 0
      %p167 = por %p165, %p166
      %p168 = scmp.ne.s32.totalorder %s157, %s160
      %p169 = scmp.eq.s32.totalorder %s18, 1
      %p170 = por %p168, %p169
      %p171 = scmp.ne.s32.totalorder %s160, %s161
      %p172 = scmp.eq.s32.totalorder %s18, 0
      %p173 = por %p171, %p172
      %p174 = scmp.ne.s32.totalorder %s160, %s161
      %p175 = scmp.eq.s32.totalorder %s19, 1
      %p176 = por %p174, %p175
      %p178 = scmp.ne.s32.totalorder %s161, %s177
      %p179 = scmp.eq.s32.totalorder %s19, 0
      %p180 = por %p178, %p179
      %s181 = ssub.s32 %s20, %s32
      %p182 = scmp.eq.s32.totalorder %s181, 0
      %s184 = sadd.s32 %s183, 1
      %s185 = scalar_select %p182, %s183, %s184
      %p188 = pneg %p182
      %p189 = scmp.eq.s32.totalorder %s13, 1
      %p190 = por %p188, %p189
      %p191 = scmp.ne.s32.totalorder %s183, %s186
      %p192 = scmp.eq.s32.totalorder %s13, 0
      %p193 = por %p191, %p192
      %p194 = scmp.ne.s32.totalorder %s183, %s186
      %p195 = scmp.eq.s32.totalorder %s18, 1
      %p196 = por %p194, %p195
      %p197 = scmp.ne.s32.totalorder %s186, %s187
      %p198 = scmp.eq.s32.totalorder %s18, 0
      %p199 = por %p197, %p198
      %p200 = scmp.ne.s32.totalorder %s186, %s187
      %p201 = scmp.eq.s32.totalorder %s19, 1
      %p202 = por %p200, %p201
      %p204 = scmp.ne.s32.totalorder %s187, %s203
      %p205 = scmp.eq.s32.totalorder %s19, 0
      %p206 = por %p204, %p205
      %s207 = ssub.s32 %s20, %s32
      %p208 = scmp.eq.s32.totalorder %s207, 0
      %s210 = sadd.s32 %s209, 1
      %s211 = scalar_select %p208, %s209, %s210
      %p214 = pneg %p208
      %p215 = scmp.eq.s32.totalorder %s13, 1
      %p216 = por %p214, %p215
      %p217 = scmp.ne.s32.totalorder %s209, %s212
      %p218 = scmp.eq.s32.totalorder %s13, 0
      %p219 = por %p217, %p218
      %p220 = scmp.ne.s32.totalorder %s209, %s212
      %p221 = scmp.eq.s32.totalorder %s18, 1
      %p222 = por %p220, %p221
      %p223 = scmp.ne.s32.totalorder %s212, %s213
      %p224 = scmp.eq.s32.totalorder %s18, 0
      %p225 = por %p223, %p224
      %p226 = scmp.ne.s32.totalorder %s212, %s213
      %p227 = scmp.eq.s32.totalorder %s19, 1
      %p228 = por %p226, %p227
      %p230 = scmp.ne.s32.totalorder %s213, %s229
      %p231 = scmp.eq.s32.totalorder %s19, 0
      %p232 = por %p230, %p231
      %p233 = scmp.le.s32.totalorder 1, %s13
      %p234 = scmp.lt.s32.totalorder %s13, 3
      %p235 = pnand %p233, %p234
      %p236 = pneg %p235
      // Predicated region
      $region9: #{encoder_rnn_forward.2} parent=5 // pred_check
        _
      $region10: #{encoder_rnn_forward.2} parent=5 // pred_check_branch
        %238 = sbr.rel (%p235) target = $region12
      $region11: #{encoder_rnn_forward.2} parent=5 // pred_region
        %s239 = ssub.s32 %s13, 1
      $region12: #{encoder_rnn_forward.2} parent=5 // pred_fallthru
        _
      %p240 = scmp.lt.s32.totalorder %s13, 2
      // Predicated region
      $region13: #{encoder_rnn_forward.2} parent=5 // pred_check
        %p241 = pneg %p240
      $region14: #{encoder_rnn_forward.2} parent=5 // pred_check_branch
        %243 = sbr.rel (%p241) target = $region16
      $region15: #{encoder_rnn_forward.2} parent=5 // pred_region
        // Predicated region
        $region17: #{encoder_rnn_forward.2} parent=15 // pred_check
          %p244 = pneg %p53
        $region18: #{encoder_rnn_forward.2} parent=15 // pred_check_branch
          %246 = sbr.rel (%p244) target = $region20
        $region19: #{encoder_rnn_forward.2} parent=15 // pred_region
          %s247 = smul.u32 %s21, 2
          %s248 = ssub.s32 0, %s247
          %s249 = smul.u32 %s20, %s248
          %s250 = sadd.s32 %s21, %s249
          %s251 = smul.u32 16, %s250
          %p252 = scmp.lt.s32.totalorder %s251, 15
          %s253 = scalar_select %p252, %s251, 15
          %s254 = smul.addr %s253, 4
          %s255 = scalar_lea.vmem %s0, %s254
          %s256 = smul.u32 %s21, 2
          %s257 = ssub.s32 0, %s256
          %s258 = smul.u32 %s20, %s257
          %s259 = sadd.s32 %s21, %s258
          %s260 = smul.u32 16, %s259
        $region20: #{encoder_rnn_forward.2} parent=15 // pred_fallthru
          _
        // Predicated region
        $region21: #{encoder_rnn_forward.2} parent=15 // pred_check
          %p261 = pneg %p79
        $region22: #{encoder_rnn_forward.2} parent=15 // pred_check_branch
          %263 = sbr.rel (%p261) target = $region24
        $region23: #{encoder_rnn_forward.2} parent=15 // pred_region
          %p264 = scmp.lt.s32.totalorder %s20, 1
          %s265 = scalar_select %p264, %s20, 1
          %s266 = smul.addr %s265, 64
          %s267 = smul.addr %s266, 4
          %s268 = scalar_lea.vmem %s1, %s267
        $region24: #{encoder_rnn_forward.2} parent=15 // pred_fallthru
          _
        // Predicated region
        $region25: #{encoder_rnn_forward.2} parent=15 // pred_check
          %p269 = pneg %p105
        $region26: #{encoder_rnn_forward.2} parent=15 // pred_check_branch
          %271 = sbr.rel (%p269) target = $region28
        $region27: #{encoder_rnn_forward.2} parent=15 // pred_region
          %p272 = scmp.lt.s32.totalorder %s20, 1
          %s273 = scalar_select %p272, %s20, 1
          %s274 = smul.addr %s273, 64
          %s275 = smul.addr %s274, 4
          %s276 = scalar_lea.vmem %s2, %s275
        $region28: #{encoder_rnn_forward.2} parent=15 // pred_fallthru
          _
        // Predicated region
        $region29: #{encoder_rnn_forward.2} parent=15 // pred_check
          %p277 = pneg %p131
        $region30: #{encoder_rnn_forward.2} parent=15 // pred_check_branch
          %279 = sbr.rel (%p277) target = $region32
        $region31: #{encoder_rnn_forward.2} parent=15 // pred_region
          %p280 = scmp.lt.s32.totalorder %s20, 1
          %s281 = scalar_select %p280, %s20, 1
          %s282 = smul.addr %s281, 4
          %s283 = scalar_lea.vmem %s3, %s282
        $region32: #{encoder_rnn_forward.2} parent=15 // pred_fallthru
          _
      $region16: #{encoder_rnn_forward.2} parent=5 // pred_fallthru
        _
      %p284 = scmp.le.s32.totalorder 1, %s13
      %p285 = scmp.lt.s32.totalorder %s13, 3
      %p286 = pnand %p284, %p285
      %p287 = pneg %p286
      // Predicated region
      $region33: #{encoder_rnn_forward.2} parent=5 // pred_check
        _
      $region34: #{encoder_rnn_forward.2} parent=5 // pred_check_branch
        %289 = sbr.rel (%p286) target = $region36
      $region35: #{encoder_rnn_forward.2} parent=5 // pred_region
        %s290 = ssub.s32 %s13, 1
        %s291 = smul.u32 %s23, 2
        %s292 = ssub.s32 0, %s291
        %s293 = smul.u32 %s22, %s292
        %s294 = sadd.s32 %s23, %s293
        %s295 = smul.u32 16, %s294
        %p296 = scmp.lt.s32.totalorder %s295, 15
        %s297 = scalar_select %p296, %s295, 15
        %s298 = smul.addr %s297, 4
        %s299 = scalar_lea.vmem %s0, %s298
        %p300 = pneg %p59
        %p301 = pneg %p56
        %p302 = scmp.lt.s32.totalorder %s22, 1
        %s303 = scalar_select %p302, %s22, 1
        %s304 = smul.addr %s303, 64
        %s305 = smul.addr %s304, 4
        %s306 = scalar_lea.vmem %s1, %s305
        %p307 = pneg %p85
        %p308 = pneg %p82
        %p309 = scmp.lt.s32.totalorder %s22, 1
        %s310 = scalar_select %p309, %s22, 1
        %s311 = smul.addr %s310, 64
        %s312 = smul.addr %s311, 4
        %s313 = scalar_lea.vmem %s2, %s312
        %p314 = pneg %p111
        %p315 = pneg %p108
        %p316 = scmp.lt.s32.totalorder %s22, 1
        %s317 = scalar_select %p316, %s22, 1
        %s318 = smul.addr %s317, 4
        %s319 = scalar_lea.vmem %s3, %s318
        %p320 = pneg %p137
        %p321 = pneg %p134
        %p322 = pneg %p173
        %p323 = pneg %p170
        %s324 = sand.u32 %s160, 1
        %s325 = sand.u32 %s160, 1
        %s326 = smul.addr %s325, 64
        %s327 = scalar_lea.vmem [#allocation5], %s326
        %p328 = pneg %p199
        %p329 = pneg %p196
        %p330 = scmp.lt.s32.totalorder %s22, 1
        %s331 = scalar_select %p330, %s22, 1
        %s332 = smul.addr %s331, 2
        %s333 = smul.addr %s332, 8
        %s334 = scalar_lea.vmem %s5, %s333
        %p335 = pneg %p225
        %p336 = pneg %p222
        %p337 = scmp.lt.s32.totalorder %s22, 1
        %s338 = scalar_select %p337, %s22, 1
        %s339 = smul.addr %s338, 2
        %s340 = smul.addr %s339, 8
        %s341 = scalar_lea.vmem %s6, %s340
        %s342 = smul.u32 %s23, 2
        %s343 = ssub.s32 0, %s342
        %s344 = smul.u32 %s22, %s343
        %s345 = sadd.s32 %s23, %s344
        %s346 = smul.u32 16, %s345
        %p347 = scmp.lt.s32.totalorder %s346, 15
        %s348 = scalar_select %p347, %s346, 15
        %s349 = smul.addr %s348, 4
        %s350 = scalar_lea.vmem %s0, %s349
        %s351 = smul.u32 %s23, 2
        %s352 = ssub.s32 0, %s351
        %s353 = smul.u32 %s22, %s352
        %s354 = sadd.s32 %s23, %s353
        %s355 = smul.u32 16, %s354
        %p356 = scmp.lt.s32.totalorder %s22, 1
        %s357 = scalar_select %p356, %s22, 1
        %s358 = smul.addr %s357, 64
        %s359 = smul.addr %s358, 4
        %s360 = scalar_lea.vmem %s1, %s359
        %p361 = scmp.lt.s32.totalorder %s22, 1
        %s362 = scalar_select %p361, %s22, 1
        %s363 = smul.addr %s362, 64
        %s364 = smul.addr %s363, 4
        %s365 = scalar_lea.vmem %s2, %s364
        %p366 = scmp.lt.s32.totalorder %s22, 1
        %s367 = scalar_select %p366, %s22, 1
        %s368 = smul.addr %s367, 4
        %s369 = scalar_lea.vmem %s3, %s368
        %s370 = smul.u32 %s23, 2
        %s371 = ssub.s32 0, %s370
        %s372 = smul.u32 %s22, %s371
        %s373 = sadd.s32 %s23, %s372
        %s374 = smul.u32 16, %s373
        %p375 = scmp.lt.s32.totalorder %s22, 1
        %s376 = scalar_select %p375, %s22, 1
        %s377 = smul.addr %s376, 2
        %s378 = smul.addr %s377, 8
        %s379 = scalar_lea.vmem %s5, %s378
        %p380 = scmp.lt.s32.totalorder %s22, 1
        %s381 = scalar_select %p380, %s22, 1
        %s382 = smul.addr %s381, 2
        %s383 = smul.addr %s382, 8
        %s384 = scalar_lea.vmem %s6, %s383
        %p386 = scmp.eq.s32.totalorder %s23, 0
        // Predicated region
        $region37: #{encoder_rnn_forward.2} parent=35 // pred_check
          %p387 = pneg %p386
        $region38: #{encoder_rnn_forward.2} parent=35 // pred_check_branch
          %389 = sbr.rel (%p387) target = $region40
        $region39: #{encoder_rnn_forward.2} parent=35 // pred_region
          %390 = vst [vmem:[#allocation3] sm:$0xff] 0.0
          %391 = vst [vmem:[#allocation3 + $0x8] sm:$0xff] 0.0
          %392 = vst [vmem:[#allocation4] sm:$0xff] 0.0
          %393 = vst [vmem:[#allocation4 + $0x8] sm:$0xff] 0.0
        $region40: #{encoder_rnn_forward.2} parent=35 // pred_fallthru
          _
        %v394 = vld [vmem:[%s350] sm:$0xf]
        %v395 = vld [vmem:[%s350 + $0x4] sm:$0xf]
        %v396 = vld [vmem:[%s350 + $0x8] sm:$0xf]
        %v397 = vld [vmem:[%s350 + $0xc] sm:$0xf]
        %v398 = vld [vmem:[%s350 + $0x10] sm:$0xf]
        %v399 = vld [vmem:[%s350 + $0x14] sm:$0xf]
        %v400 = vld [vmem:[%s350 + $0x18] sm:$0xf]
        %v401 = vld [vmem:[%s350 + $0x1c] sm:$0xf]
        %v402 = vld [vmem:[%s350 + $0x20] sm:$0xf]
        %v403 = vld [vmem:[%s350 + $0x24] sm:$0xf]
        %v404 = vld [vmem:[%s350 + $0x28] sm:$0xf]
        %v405 = vld [vmem:[%s350 + $0x2c] sm:$0xf]
        %v406 = vld [vmem:[%s350 + $0x30] sm:$0xf]
        %v407 = vld [vmem:[%s350 + $0x34] sm:$0xf]
        %v408 = vld [vmem:[%s350 + $0x38] sm:$0xf]
        %v409 = vld [vmem:[%s350 + $0x3c] sm:$0xf]
        %v410 = vld [vmem:[%s360] sm:$0xff]
        %v411 = vld [vmem:[%s360 + $0x8] sm:$0xff]
        %v412 = vld [vmem:[%s360 + $0x10] sm:$0xff]
        %v413 = vld [vmem:[%s360 + $0x18] sm:$0xff]
        %v414 = vld [vmem:[%s360 + $0x20] sm:$0xff]
        %v415 = vld [vmem:[%s360 + $0x28] sm:$0xff]
        %v416 = vld [vmem:[%s360 + $0x30] sm:$0xff]
        %v417 = vld [vmem:[%s360 + $0x38] sm:$0xff]
        %v418 = vld [vmem:[%s360 + $0x40] sm:$0xff]
        %v419 = vld [vmem:[%s360 + $0x48] sm:$0xff]
        %v420 = vld [vmem:[%s360 + $0x50] sm:$0xff]
        %v421 = vld [vmem:[%s360 + $0x58] sm:$0xff]
        %v422 = vld [vmem:[%s360 + $0x60] sm:$0xff]
        %v423 = vld [vmem:[%s360 + $0x68] sm:$0xff]
        %v424 = vld [vmem:[%s360 + $0x70] sm:$0xff]
        %v425 = vld [vmem:[%s360 + $0x78] sm:$0xff]
        %v426 = vld [vmem:[%s360 + $0x80] sm:$0xff]
        %v427 = vld [vmem:[%s360 + $0x88] sm:$0xff]
        %v428 = vld [vmem:[%s360 + $0x90] sm:$0xff]
        %v429 = vld [vmem:[%s360 + $0x98] sm:$0xff]
        %v430 = vld [vmem:[%s360 + $0xa0] sm:$0xff]
        %v431 = vld [vmem:[%s360 + $0xa8] sm:$0xff]
        %v432 = vld [vmem:[%s360 + $0xb0] sm:$0xff]
        %v433 = vld [vmem:[%s360 + $0xb8] sm:$0xff]
        %v434 = vld [vmem:[%s360 + $0xc0] sm:$0xff]
        %v435 = vld [vmem:[%s360 + $0xc8] sm:$0xff]
        %v436 = vld [vmem:[%s360 + $0xd0] sm:$0xff]
        %v437 = vld [vmem:[%s360 + $0xd8] sm:$0xff]
        %v438 = vld [vmem:[%s360 + $0xe0] sm:$0xff]
        %v439 = vld [vmem:[%s360 + $0xe8] sm:$0xff]
        %v440 = vld [vmem:[%s360 + $0xf0] sm:$0xff]
        %v441 = vld [vmem:[%s360 + $0xf8] sm:$0xff]
        %v442 = vld [vmem:[%s369] sm:$0xf]
        %v444 = vlaneseq
        %v445 = vshrl.u32 %v444, 7
        %v446 = vsub.s32 0, %v445
        %v447 = vrot.slane %v442, %v446
        %v448 = vlaneseq
        %v449 = vshrl.u32 %v448, 7
        %v450 = vsub.s32 1, %v449
        %v451 = vrot.slane %v442, %v450
        %v452 = vlaneseq
        %v453 = vshrl.u32 %v452, 7
        %v454 = vsub.s32 2, %v453
        %v455 = vrot.slane %v442, %v454
        %v456 = vlaneseq
        %v457 = vshrl.u32 %v456, 7
        %v458 = vsub.s32 3, %v457
        %v459 = vrot.slane %v442, %v458
        %v480 = vunpack.c.l.b16 %v394
        %v481 = vunpack.c.l.b16 %v395
        %v482 = vunpack.c.l.b16 %v396
        %v483 = vunpack.c.l.b16 %v397
        %v484 = vunpack.c.l.b16 %v398
        %v485 = vunpack.c.l.b16 %v399
        %v486 = vunpack.c.l.b16 %v400
        %v487 = vunpack.c.l.b16 %v401
        %v488 = vunpack.c.l.b16 %v402
        %v489 = vunpack.c.l.b16 %v403
        %v490 = vunpack.c.l.b16 %v404
        %v491 = vunpack.c.l.b16 %v405
        %v492 = vunpack.c.l.b16 %v406
        %v493 = vunpack.c.l.b16 %v407
        %v494 = vunpack.c.l.b16 %v408
        %v495 = vunpack.c.l.b16 %v409
        %v496 = vpack.c.b16 %v481, %v480
        %v497 = vpack.c.b16 %v483, %v482
        %v498 = vpack.c.b16 %v485, %v484
        %v499 = vpack.c.b16 %v487, %v486
        %v500 = vpack.c.b16 %v489, %v488
        %v501 = vpack.c.b16 %v491, %v490
        %v502 = vpack.c.b16 %v493, %v492
        %v503 = vpack.c.b16 %v495, %v494
        %v544 = vunpack.c.l.b16 %v410
        %v545 = vunpack.c.h.b16 %v410
        %v546 = vunpack.c.l.b16 %v411
        %v547 = vunpack.c.h.b16 %v411
        %v548 = vunpack.c.l.b16 %v412
        %v549 = vunpack.c.h.b16 %v412
        %v550 = vunpack.c.l.b16 %v413
        %v551 = vunpack.c.h.b16 %v413
        %v552 = vunpack.c.l.b16 %v414
        %v553 = vunpack.c.h.b16 %v414
        %v554 = vunpack.c.l.b16 %v415
        %v555 = vunpack.c.h.b16 %v415
        %v556 = vunpack.c.l.b16 %v416
        %v557 = vunpack.c.h.b16 %v416
        %v558 = vunpack.c.l.b16 %v417
        %v559 = vunpack.c.h.b16 %v417
        %v560 = vunpack.c.l.b16 %v418
        %v561 = vunpack.c.h.b16 %v418
        %v562 = vunpack.c.l.b16 %v419
        %v563 = vunpack.c.h.b16 %v419
        %v564 = vunpack.c.l.b16 %v420
        %v565 = vunpack.c.h.b16 %v420
        %v566 = vunpack.c.l.b16 %v421
        %v567 = vunpack.c.h.b16 %v421
        %v568 = vunpack.c.l.b16 %v422
        %v569 = vunpack.c.h.b16 %v422
        %v570 = vunpack.c.l.b16 %v423
        %v571 = vunpack.c.h.b16 %v423
        %v572 = vunpack.c.l.b16 %v424
        %v573 = vunpack.c.h.b16 %v424
        %v574 = vunpack.c.l.b16 %v425
        %v575 = vunpack.c.h.b16 %v425
        %v576 = vunpack.c.l.b16 %v426
        %v577 = vunpack.c.h.b16 %v426
        %v578 = vunpack.c.l.b16 %v427
        %v579 = vunpack.c.h.b16 %v427
        %v580 = vunpack.c.l.b16 %v428
        %v581 = vunpack.c.h.b16 %v428
        %v582 = vunpack.c.l.b16 %v429
        %v583 = vunpack.c.h.b16 %v429
        %v584 = vunpack.c.l.b16 %v430
        %v585 = vunpack.c.h.b16 %v430
        %v586 = vunpack.c.l.b16 %v431
        %v587 = vunpack.c.h.b16 %v431
        %v588 = vunpack.c.l.b16 %v432
        %v589 = vunpack.c.h.b16 %v432
        %v590 = vunpack.c.l.b16 %v433
        %v591 = vunpack.c.h.b16 %v433
        %v592 = vunpack.c.l.b16 %v434
        %v593 = vunpack.c.h.b16 %v434
        %v594 = vunpack.c.l.b16 %v435
        %v595 = vunpack.c.h.b16 %v435
        %v596 = vunpack.c.l.b16 %v436
        %v597 = vunpack.c.h.b16 %v436
        %v598 = vunpack.c.l.b16 %v437
        %v599 = vunpack.c.h.b16 %v437
        %v600 = vunpack.c.l.b16 %v438
        %v601 = vunpack.c.h.b16 %v438
        %v602 = vunpack.c.l.b16 %v439
        %v603 = vunpack.c.h.b16 %v439
        %v604 = vunpack.c.l.b16 %v440
        %v605 = vunpack.c.h.b16 %v440
        %v606 = vunpack.c.l.b16 %v441
        %v607 = vunpack.c.h.b16 %v441
        %v608 = vpack.c.b16 %v548, %v544
        %v609 = vpack.c.b16 %v549, %v545
        %v610 = vpack.c.b16 %v550, %v546
        %v611 = vpack.c.b16 %v551, %v547
        %v612 = vpack.c.b16 %v556, %v552
        %v613 = vpack.c.b16 %v557, %v553
        %v614 = vpack.c.b16 %v558, %v554
        %v615 = vpack.c.b16 %v559, %v555
        %v616 = vpack.c.b16 %v564, %v560
        %v617 = vpack.c.b16 %v565, %v561
        %v618 = vpack.c.b16 %v566, %v562
        %v619 = vpack.c.b16 %v567, %v563
        %v620 = vpack.c.b16 %v572, %v568
        %v621 = vpack.c.b16 %v573, %v569
        %v622 = vpack.c.b16 %v574, %v570
        %v623 = vpack.c.b16 %v575, %v571
        %v624 = vpack.c.b16 %v580, %v576
        %v625 = vpack.c.b16 %v581, %v577
        %v626 = vpack.c.b16 %v582, %v578
        %v627 = vpack.c.b16 %v583, %v579
        %v628 = vpack.c.b16 %v588, %v584
        %v629 = vpack.c.b16 %v589, %v585
        %v630 = vpack.c.b16 %v590, %v586
        %v631 = vpack.c.b16 %v591, %v587
        %v632 = vpack.c.b16 %v596, %v592
        %v633 = vpack.c.b16 %v597, %v593
        %v634 = vpack.c.b16 %v598, %v594
        %v635 = vpack.c.b16 %v599, %v595
        %v636 = vpack.c.b16 %v604, %v600
        %v637 = vpack.c.b16 %v605, %v601
        %v638 = vpack.c.b16 %v606, %v602
        %v639 = vpack.c.b16 %v607, %v603
        %672 = vmatprep.subr.bf16.mxu0 %v637
        %673 = vmatpush1.bf16.msra.mxu0 %v636
        %674 = vmatprep.subr.bf16.mxu0 %v633
        %675 = vmatpush1.bf16.msra.mxu0 %v632
        %676 = vmatprep.subr.bf16.mxu0 %v629
        %677 = vmatpush1.bf16.msra.mxu0 %v628
        %678 = vmatprep.subr.bf16.mxu0 %v625
        %679 = vmatpush1.bf16.msra.mxu0 %v624
        %680 = vmatprep.subr.bf16.mxu0 %v621
        %681 = vmatpush1.bf16.msra.mxu0 %v620
        %682 = vmatprep.subr.bf16.mxu0 %v617
        %683 = vmatpush1.bf16.msra.mxu0 %v616
        %684 = vmatprep.subr.bf16.mxu0 %v613
        %685 = vmatpush1.bf16.msra.mxu0 %v612
        %686 = vmatprep.subr.bf16.mxu0 %v609
        %687 = vmatpush1.bf16.msra.mxu0 %v608
        %688 = vmatprep.subr.bf16.mxu0 0
        %689 = vmatpush2.bf16.msra.mxu0 0
        %690 = vmatprep.subr.bf16.mxu0 0
        %691 = vmatpush2.bf16.msra.mxu0 0
        %692 = vmatprep.subr.bf16.mxu0 0
        %693 = vmatpush2.bf16.msra.mxu0 0
        %694 = vmatprep.subr.bf16.mxu0 0
        %695 = vmatpush2.bf16.msra.mxu0 0
        %696 = vmatprep.subr.bf16.mxu0 0
        %697 = vmatpush2.bf16.msra.mxu0 0
        %698 = vmatprep.subr.bf16.mxu0 0
        %699 = vmatpush2.bf16.msra.mxu0 0
        %700 = vmatprep.subr.bf16.mxu0 0
        %701 = vmatpush2.bf16.msra.mxu0 0
        %702 = vmatprep.subr.bf16.mxu0 0
        %703 = vmatpush2.bf16.msra.mxu0 0
        %704 = vmatprep.mubr.bf16.mxu0 0
        %705 = vmatmul.mubr.bf16.gmra.mxu0 %v496
        %v706 = vpop.f32.mrf.mxu0
        %v707 = vadd.f32 %v447, %v706
        %v708 = vpop.f32.mrf.mxu0
        %v709 = vadd.f32 %v451, %v708
        %v710 = vpop.f32.mrf.mxu0
        %v711 = vadd.f32 %v447, %v710
        %v712 = vpop.f32.mrf.mxu0
        %v713 = vadd.f32 %v451, %v712
        %714 = vmatprep.mubr.bf16.mxu0 0
        %715 = vmatmul.mubr.bf16.gmra.mxu0 %v497
        %v716 = vpop.f32.mrf.mxu0
        %v717 = vadd.f32 %v447, %v716
        %v718 = vpop.f32.mrf.mxu0
        %v719 = vadd.f32 %v451, %v718
        %v720 = vpop.f32.mrf.mxu0
        %v721 = vadd.f32 %v447, %v720
        %v722 = vpop.f32.mrf.mxu0
        %v723 = vadd.f32 %v451, %v722
        %724 = vmatprep.mubr.bf16.mxu0 0
        %725 = vmatmul.mubr.bf16.gmra.mxu0 %v498
        %v726 = vpop.f32.mrf.mxu0
        %v727 = vadd.f32 %v447, %v726
        %v728 = vpop.f32.mrf.mxu0
        %v729 = vadd.f32 %v451, %v728
        %v730 = vpop.f32.mrf.mxu0
        %v731 = vadd.f32 %v447, %v730
        %v732 = vpop.f32.mrf.mxu0
        %v733 = vadd.f32 %v451, %v732
        %734 = vmatprep.mubr.bf16.mxu0 0
        %735 = vmatmul.mubr.bf16.gmra.mxu0 %v499
        %v736 = vpop.f32.mrf.mxu0
        %v737 = vadd.f32 %v447, %v736
        %v738 = vpop.f32.mrf.mxu0
        %v739 = vadd.f32 %v451, %v738
        %v740 = vpop.f32.mrf.mxu0
        %v741 = vadd.f32 %v447, %v740
        %v742 = vpop.f32.mrf.mxu0
        %v743 = vadd.f32 %v451, %v742
        %744 = vmatprep.mubr.bf16.mxu0 0
        %745 = vmatmul.mubr.bf16.gmra.mxu0 %v500
        %v746 = vpop.f32.mrf.mxu0
        %v747 = vadd.f32 %v447, %v746
        %v748 = vpop.f32.mrf.mxu0
        %v749 = vadd.f32 %v451, %v748
        %v750 = vpop.f32.mrf.mxu0
        %v751 = vadd.f32 %v447, %v750
        %v752 = vpop.f32.mrf.mxu0
        %v753 = vadd.f32 %v451, %v752
        %754 = vmatprep.mubr.bf16.mxu0 0
        %755 = vmatmul.mubr.bf16.gmra.mxu0 %v501
        %v756 = vpop.f32.mrf.mxu0
        %v757 = vadd.f32 %v447, %v756
        %v758 = vpop.f32.mrf.mxu0
        %v759 = vadd.f32 %v451, %v758
        %v760 = vpop.f32.mrf.mxu0
        %v761 = vadd.f32 %v447, %v760
        %v762 = vpop.f32.mrf.mxu0
        %v763 = vadd.f32 %v451, %v762
        %764 = vmatprep.mubr.bf16.mxu0 0
        %765 = vmatmul.mubr.bf16.gmra.mxu0 %v502
        %v766 = vpop.f32.mrf.mxu0
        %v767 = vadd.f32 %v447, %v766
        %v768 = vpop.f32.mrf.mxu0
        %v769 = vadd.f32 %v451, %v768
        %v770 = vpop.f32.mrf.mxu0
        %v771 = vadd.f32 %v447, %v770
        %v772 = vpop.f32.mrf.mxu0
        %v773 = vadd.f32 %v451, %v772
        %774 = vmatprep.mubr.bf16.mxu0 0
        %775 = vmatmul.mubr.bf16.gmra.mxu0 %v503
        %v776 = vpop.f32.mrf.mxu0
        %v777 = vadd.f32 %v447, %v776
        %v778 = vpop.f32.mrf.mxu0
        %v779 = vadd.f32 %v451, %v778
        %v780 = vpop.f32.mrf.mxu0
        %v781 = vadd.f32 %v447, %v780
        %v782 = vpop.f32.mrf.mxu0
        %v783 = vadd.f32 %v451, %v782
        %784 = vdwg.mxu0
        %785 = vmatprep.subr.bf16.mxu0 %v639
        %786 = vmatpush1.bf16.msra.mxu0 %v638
        %787 = vmatprep.subr.bf16.mxu0 %v635
        %788 = vmatpush1.bf16.msra.mxu0 %v634
        %789 = vmatprep.subr.bf16.mxu0 %v631
        %790 = vmatpush1.bf16.msra.mxu0 %v630
        %791 = vmatprep.subr.bf16.mxu0 %v627
        %792 = vmatpush1.bf16.msra.mxu0 %v626
        %793 = vmatprep.subr.bf16.mxu0 %v623
        %794 = vmatpush1.bf16.msra.mxu0 %v622
        %795 = vmatprep.subr.bf16.mxu0 %v619
        %796 = vmatpush1.bf16.msra.mxu0 %v618
        %797 = vmatprep.subr.bf16.mxu0 %v615
        %798 = vmatpush1.bf16.msra.mxu0 %v614
        %799 = vmatprep.subr.bf16.mxu0 %v611
        %800 = vmatpush1.bf16.msra.mxu0 %v610
        %801 = vmatprep.subr.bf16.mxu0 0
        %802 = vmatpush2.bf16.msra.mxu0 0
        %803 = vmatprep.subr.bf16.mxu0 0
        %804 = vmatpush2.bf16.msra.mxu0 0
        %805 = vmatprep.subr.bf16.mxu0 0
        %806 = vmatpush2.bf16.msra.mxu0 0
        %807 = vmatprep.subr.bf16.mxu0 0
        %808 = vmatpush2.bf16.msra.mxu0 0
        %809 = vmatprep.subr.bf16.mxu0 0
        %810 = vmatpush2.bf16.msra.mxu0 0
        %811 = vmatprep.subr.bf16.mxu0 0
        %812 = vmatpush2.bf16.msra.mxu0 0
        %813 = vmatprep.subr.bf16.mxu0 0
        %814 = vmatpush2.bf16.msra.mxu0 0
        %815 = vmatprep.subr.bf16.mxu0 0
        %816 = vmatpush2.bf16.msra.mxu0 0
        %817 = vmatprep.mubr.bf16.mxu0 0
        %818 = vmatmul.mubr.bf16.gmra.mxu0 %v496
        %v819 = vpop.f32.mrf.mxu0
        %v820 = vadd.f32 %v455, %v819
        %v821 = vpop.f32.mrf.mxu0
        %v822 = vadd.f32 %v459, %v821
        %v823 = vpop.f32.mrf.mxu0
        %v824 = vadd.f32 %v455, %v823
        %v825 = vpop.f32.mrf.mxu0
        %v826 = vadd.f32 %v459, %v825
        %827 = vmatprep.mubr.bf16.mxu0 0
        %828 = vmatmul.mubr.bf16.gmra.mxu0 %v497
        %v829 = vpop.f32.mrf.mxu0
        %v830 = vadd.f32 %v455, %v829
        %v831 = vpop.f32.mrf.mxu0
        %v832 = vadd.f32 %v459, %v831
        %v833 = vpop.f32.mrf.mxu0
        %v834 = vadd.f32 %v455, %v833
        %v835 = vpop.f32.mrf.mxu0
        %v836 = vadd.f32 %v459, %v835
        %837 = vmatprep.mubr.bf16.mxu0 0
        %838 = vmatmul.mubr.bf16.gmra.mxu0 %v498
        %v839 = vpop.f32.mrf.mxu0
        %v840 = vadd.f32 %v455, %v839
        %v841 = vpop.f32.mrf.mxu0
        %v842 = vadd.f32 %v459, %v841
        %v843 = vpop.f32.mrf.mxu0
        %v844 = vadd.f32 %v455, %v843
        %v845 = vpop.f32.mrf.mxu0
        %v846 = vadd.f32 %v459, %v845
        %847 = vmatprep.mubr.bf16.mxu0 0
        %848 = vmatmul.mubr.bf16.gmra.mxu0 %v499
        %v849 = vpop.f32.mrf.mxu0
        %v850 = vadd.f32 %v455, %v849
        %v851 = vpop.f32.mrf.mxu0
        %v852 = vadd.f32 %v459, %v851
        %v853 = vpop.f32.mrf.mxu0
        %v854 = vadd.f32 %v455, %v853
        %v855 = vpop.f32.mrf.mxu0
        %v856 = vadd.f32 %v459, %v855
        %857 = vmatprep.mubr.bf16.mxu0 0
        %858 = vmatmul.mubr.bf16.gmra.mxu0 %v500
        %v859 = vpop.f32.mrf.mxu0
        %v860 = vadd.f32 %v455, %v859
        %v861 = vpop.f32.mrf.mxu0
        %v862 = vadd.f32 %v459, %v861
        %v863 = vpop.f32.mrf.mxu0
        %v864 = vadd.f32 %v455, %v863
        %v865 = vpop.f32.mrf.mxu0
        %v866 = vadd.f32 %v459, %v865
        %867 = vmatprep.mubr.bf16.mxu0 0
        %868 = vmatmul.mubr.bf16.gmra.mxu0 %v501
        %v869 = vpop.f32.mrf.mxu0
        %v870 = vadd.f32 %v455, %v869
        %v871 = vpop.f32.mrf.mxu0
        %v872 = vadd.f32 %v459, %v871
        %v873 = vpop.f32.mrf.mxu0
        %v874 = vadd.f32 %v455, %v873
        %v875 = vpop.f32.mrf.mxu0
        %v876 = vadd.f32 %v459, %v875
        %877 = vmatprep.mubr.bf16.mxu0 0
        %878 = vmatmul.mubr.bf16.gmra.mxu0 %v502
        %v879 = vpop.f32.mrf.mxu0
        %v880 = vadd.f32 %v455, %v879
        %v881 = vpop.f32.mrf.mxu0
        %v882 = vadd.f32 %v459, %v881
        %v883 = vpop.f32.mrf.mxu0
        %v884 = vadd.f32 %v455, %v883
        %v885 = vpop.f32.mrf.mxu0
        %v886 = vadd.f32 %v459, %v885
        %887 = vmatprep.mubr.bf16.mxu0 0
        %888 = vmatmul.mubr.bf16.gmra.mxu0 %v503
        %v889 = vpop.f32.mrf.mxu0
        %v890 = vadd.f32 %v455, %v889
        %v891 = vpop.f32.mrf.mxu0
        %v892 = vadd.f32 %v459, %v891
        %v893 = vpop.f32.mrf.mxu0
        %v894 = vadd.f32 %v455, %v893
        %v895 = vpop.f32.mrf.mxu0
        %v896 = vadd.f32 %v459, %v895
        %897 = vdwg.mxu0
        %898 = vst [vmem:[#allocation2] sm:$0xff] %v707
        %899 = vst [vmem:[#allocation2 + $0x8] sm:$0xff] %v709
        %900 = vst [vmem:[#allocation2 + $0x10] sm:$0xff] %v820
        %901 = vst [vmem:[#allocation2 + $0x18] sm:$0xff] %v822
        %902 = vst [vmem:[#allocation2 + $0x20] sm:$0xff] %v711
        %903 = vst [vmem:[#allocation2 + $0x28] sm:$0xff] %v713
        %904 = vst [vmem:[#allocation2 + $0x30] sm:$0xff] %v824
        %905 = vst [vmem:[#allocation2 + $0x38] sm:$0xff] %v826
        %906 = vst [vmem:[#allocation2 + $0x40] sm:$0xff] %v717
        %907 = vst [vmem:[#allocation2 + $0x48] sm:$0xff] %v719
        %908 = vst [vmem:[#allocation2 + $0x50] sm:$0xff] %v830
        %909 = vst [vmem:[#allocation2 + $0x58] sm:$0xff] %v832
        %910 = vst [vmem:[#allocation2 + $0x60] sm:$0xff] %v721
        %911 = vst [vmem:[#allocation2 + $0x68] sm:$0xff] %v723
        %912 = vst [vmem:[#allocation2 + $0x70] sm:$0xff] %v834
        %913 = vst [vmem:[#allocation2 + $0x78] sm:$0xff] %v836
        %914 = vst [vmem:[#allocation2 + $0x80] sm:$0xff] %v727
        %915 = vst [vmem:[#allocation2 + $0x88] sm:$0xff] %v729
        %916 = vst [vmem:[#allocation2 + $0x90] sm:$0xff] %v840
        %917 = vst [vmem:[#allocation2 + $0x98] sm:$0xff] %v842
        %918 = vst [vmem:[#allocation2 + $0xa0] sm:$0xff] %v731
        %919 = vst [vmem:[#allocation2 + $0xa8] sm:$0xff] %v733
        %920 = vst [vmem:[#allocation2 + $0xb0] sm:$0xff] %v844
        %921 = vst [vmem:[#allocation2 + $0xb8] sm:$0xff] %v846
        %922 = vst [vmem:[#allocation2 + $0xc0] sm:$0xff] %v737
        %923 = vst [vmem:[#allocation2 + $0xc8] sm:$0xff] %v739
        %924 = vst [vmem:[#allocation2 + $0xd0] sm:$0xff] %v850
        %925 = vst [vmem:[#allocation2 + $0xd8] sm:$0xff] %v852
        %926 = vst [vmem:[#allocation2 + $0xe0] sm:$0xff] %v741
        %927 = vst [vmem:[#allocation2 + $0xe8] sm:$0xff] %v743
        %928 = vst [vmem:[#allocation2 + $0xf0] sm:$0xff] %v854
        %929 = vst [vmem:[#allocation2 + $0xf8] sm:$0xff] %v856
        %930 = vst [vmem:[#allocation2 + $0x100] sm:$0xff] %v747
        %931 = vst [vmem:[#allocation2 + $0x108] sm:$0xff] %v749
        %932 = vst [vmem:[#allocation2 + $0x110] sm:$0xff] %v860
        %933 = vst [vmem:[#allocation2 + $0x118] sm:$0xff] %v862
        %934 = vst [vmem:[#allocation2 + $0x120] sm:$0xff] %v751
        %935 = vst [vmem:[#allocation2 + $0x128] sm:$0xff] %v753
        %936 = vst [vmem:[#allocation2 + $0x130] sm:$0xff] %v864
        %937 = vst [vmem:[#allocation2 + $0x138] sm:$0xff] %v866
        %938 = vst [vmem:[#allocation2 + $0x140] sm:$0xff] %v757
        %939 = vst [vmem:[#allocation2 + $0x148] sm:$0xff] %v759
        %940 = vst [vmem:[#allocation2 + $0x150] sm:$0xff] %v870
        %941 = vst [vmem:[#allocation2 + $0x158] sm:$0xff] %v872
        %942 = vst [vmem:[#allocation2 + $0x160] sm:$0xff] %v761
        %943 = vst [vmem:[#allocation2 + $0x168] sm:$0xff] %v763
        %944 = vst [vmem:[#allocation2 + $0x170] sm:$0xff] %v874
        %945 = vst [vmem:[#allocation2 + $0x178] sm:$0xff] %v876
        %946 = vst [vmem:[#allocation2 + $0x180] sm:$0xff] %v767
        %947 = vst [vmem:[#allocation2 + $0x188] sm:$0xff] %v769
        %948 = vst [vmem:[#allocation2 + $0x190] sm:$0xff] %v880
        %949 = vst [vmem:[#allocation2 + $0x198] sm:$0xff] %v882
        %950 = vst [vmem:[#allocation2 + $0x1a0] sm:$0xff] %v771
        %951 = vst [vmem:[#allocation2 + $0x1a8] sm:$0xff] %v773
        %952 = vst [vmem:[#allocation2 + $0x1b0] sm:$0xff] %v884
        %953 = vst [vmem:[#allocation2 + $0x1b8] sm:$0xff] %v886
        %954 = vst [vmem:[#allocation2 + $0x1c0] sm:$0xff] %v777
        %955 = vst [vmem:[#allocation2 + $0x1c8] sm:$0xff] %v779
        %956 = vst [vmem:[#allocation2 + $0x1d0] sm:$0xff] %v890
        %957 = vst [vmem:[#allocation2 + $0x1d8] sm:$0xff] %v892
        %958 = vst [vmem:[#allocation2 + $0x1e0] sm:$0xff] %v781
        %959 = vst [vmem:[#allocation2 + $0x1e8] sm:$0xff] %v783
        %960 = vst [vmem:[#allocation2 + $0x1f0] sm:$0xff] %v894
        %961 = vst [vmem:[#allocation2 + $0x1f8] sm:$0xff] %v896
        %v962 = vld [vmem:[%s365] sm:$0xff]
        %v963 = vld [vmem:[%s365 + $0x8] sm:$0xff]
        %v964 = vld [vmem:[%s365 + $0x10] sm:$0xff]
        %v965 = vld [vmem:[%s365 + $0x18] sm:$0xff]
        %v966 = vld [vmem:[%s365 + $0x20] sm:$0xff]
        %v967 = vld [vmem:[%s365 + $0x28] sm:$0xff]
        %v968 = vld [vmem:[%s365 + $0x30] sm:$0xff]
        %v969 = vld [vmem:[%s365 + $0x38] sm:$0xff]
        %v970 = vld [vmem:[%s365 + $0x40] sm:$0xff]
        %v971 = vld [vmem:[%s365 + $0x48] sm:$0xff]
        %v972 = vld [vmem:[%s365 + $0x50] sm:$0xff]
        %v973 = vld [vmem:[%s365 + $0x58] sm:$0xff]
        %v974 = vld [vmem:[%s365 + $0x60] sm:$0xff]
        %v975 = vld [vmem:[%s365 + $0x68] sm:$0xff]
        %v976 = vld [vmem:[%s365 + $0x70] sm:$0xff]
        %v977 = vld [vmem:[%s365 + $0x78] sm:$0xff]
        %v978 = vld [vmem:[%s365 + $0x80] sm:$0xff]
        %v979 = vld [vmem:[%s365 + $0x88] sm:$0xff]
        %v980 = vld [vmem:[%s365 + $0x90] sm:$0xff]
        %v981 = vld [vmem:[%s365 + $0x98] sm:$0xff]
        %v982 = vld [vmem:[%s365 + $0xa0] sm:$0xff]
        %v983 = vld [vmem:[%s365 + $0xa8] sm:$0xff]
        %v984 = vld [vmem:[%s365 + $0xb0] sm:$0xff]
        %v985 = vld [vmem:[%s365 + $0xb8] sm:$0xff]
        %v986 = vld [vmem:[%s365 + $0xc0] sm:$0xff]
        %v987 = vld [vmem:[%s365 + $0xc8] sm:$0xff]
        %v988 = vld [vmem:[%s365 + $0xd0] sm:$0xff]
        %v989 = vld [vmem:[%s365 + $0xd8] sm:$0xff]
        %v990 = vld [vmem:[%s365 + $0xe0] sm:$0xff]
        %v991 = vld [vmem:[%s365 + $0xe8] sm:$0xff]
        %v992 = vld [vmem:[%s365 + $0xf0] sm:$0xff]
        %v993 = vld [vmem:[%s365 + $0xf8] sm:$0xff]
        %v994 = vld [vmem:[#allocation3] sm:$0xff]
        %v995 = vld [vmem:[#allocation3 + $0x8] sm:$0xff]
        %v996 = vld [vmem:[#allocation4] sm:$0xff]
        %v997 = vld [vmem:[#allocation4 + $0x8] sm:$0xff]
        %s998 = smul.u32 %s22, 112
        %s999 = sshra.s32 %s998, 3
        %s1000 = sand.u32 %s998, 7
        %s1001 = smul.u32 %s999, 4
        %s1002 = smul.addr %s1001, 8
        %s1003 = scalar_lea.vmem [#allocation2], %s1002
        %v1004 = vld [vmem:[%s1003] sm:$0xff]
        %v1005 = vld [vmem:[%s1003 + $0x8] sm:$0xff]
        %v1006 = vld [vmem:[%s1003 + $0x10] sm:$0xff]
        %v1007 = vld [vmem:[%s1003 + $0x18] sm:$0xff]
        %v1008 = vld [vmem:[%s1003 + $0x20] sm:$0xff]
        %v1009 = vld [vmem:[%s1003 + $0x28] sm:$0xff]
        %v1010 = vld [vmem:[%s1003 + $0x30] sm:$0xff]
        %v1011 = vld [vmem:[%s1003 + $0x38] sm:$0xff]
        %v1012 = vpack.c.bf16 %v995, %v994
        %v1045 = vunpack.c.l.b16 %v962
        %v1046 = vunpack.c.h.b16 %v962
        %v1047 = vunpack.c.l.b16 %v963
        %v1048 = vunpack.c.h.b16 %v963
        %v1049 = vunpack.c.l.b16 %v964
        %v1050 = vunpack.c.h.b16 %v964
        %v1051 = vunpack.c.l.b16 %v965
        %v1052 = vunpack.c.h.b16 %v965
        %v1053 = vunpack.c.l.b16 %v966
        %v1054 = vunpack.c.h.b16 %v966
        %v1055 = vunpack.c.l.b16 %v967
        %v1056 = vunpack.c.h.b16 %v967
        %v1057 = vunpack.c.l.b16 %v968
        %v1058 = vunpack.c.h.b16 %v968
        %v1059 = vunpack.c.l.b16 %v969
        %v1060 = vunpack.c.h.b16 %v969
        %v1061 = vunpack.c.l.b16 %v970
        %v1062 = vunpack.c.h.b16 %v970
        %v1063 = vunpack.c.l.b16 %v971
        %v1064 = vunpack.c.h.b16 %v971
        %v1065 = vunpack.c.l.b16 %v972
        %v1066 = vunpack.c.h.b16 %v972
        %v1067 = vunpack.c.l.b16 %v973
        %v1068 = vunpack.c.h.b16 %v973
        %v1069 = vunpack.c.l.b16 %v974
        %v1070 = vunpack.c.h.b16 %v974
        %v1071 = vunpack.c.l.b16 %v975
        %v1072 = vunpack.c.h.b16 %v975
        %v1073 = vunpack.c.l.b16 %v976
        %v1074 = vunpack.c.h.b16 %v976
        %v1075 = vunpack.c.l.b16 %v977
        %v1076 = vunpack.c.h.b16 %v977
        %v1077 = vunpack.c.l.b16 %v978
        %v1078 = vunpack.c.h.b16 %v978
        %v1079 = vunpack.c.l.b16 %v979
        %v1080 = vunpack.c.h.b16 %v979
        %v1081 = vunpack.c.l.b16 %v980
        %v1082 = vunpack.c.h.b16 %v980
        %v1083 = vunpack.c.l.b16 %v981
        %v1084 = vunpack.c.h.b16 %v981
        %v1085 = vunpack.c.l.b16 %v982
        %v1086 = vunpack.c.h.b16 %v982
        %v1087 = vunpack.c.l.b16 %v983
        %v1088 = vunpack.c.h.b16 %v983
        %v1089 = vunpack.c.l.b16 %v984
        %v1090 = vunpack.c.h.b16 %v984
        %v1091 = vunpack.c.l.b16 %v985
        %v1092 = vunpack.c.h.b16 %v985
        %v1093 = vunpack.c.l.b16 %v986
        %v1094 = vunpack.c.h.b16 %v986
        %v1095 = vunpack.c.l.b16 %v987
        %v1096 = vunpack.c.h.b16 %v987
        %v1097 = vunpack.c.l.b16 %v988
        %v1098 = vunpack.c.h.b16 %v988
        %v1099 = vunpack.c.l.b16 %v989
        %v1100 = vunpack.c.h.b16 %v989
        %v1101 = vunpack.c.l.b16 %v990
        %v1102 = vunpack.c.h.b16 %v990
        %v1103 = vunpack.c.l.b16 %v991
        %v1104 = vunpack.c.h.b16 %v991
        %v1105 = vunpack.c.l.b16 %v992
        %v1106 = vunpack.c.h.b16 %v992
        %v1107 = vunpack.c.l.b16 %v993
        %v1108 = vunpack.c.h.b16 %v993
        %v1109 = vpack.c.b16 %v1049, %v1045
        %v1110 = vpack.c.b16 %v1050, %v1046
        %v1111 = vpack.c.b16 %v1051, %v1047
        %v1112 = vpack.c.b16 %v1052, %v1048
        %v1113 = vpack.c.b16 %v1057, %v1053
        %v1114 = vpack.c.b16 %v1058, %v1054
        %v1115 = vpack.c.b16 %v1059, %v1055
        %v1116 = vpack.c.b16 %v1060, %v1056
        %v1117 = vpack.c.b16 %v1065, %v1061
        %v1118 = vpack.c.b16 %v1066, %v1062
        %v1119 = vpack.c.b16 %v1067, %v1063
        %v1120 = vpack.c.b16 %v1068, %v1064
        %v1121 = vpack.c.b16 %v1073, %v1069
        %v1122 = vpack.c.b16 %v1074, %v1070
        %v1123 = vpack.c.b16 %v1075, %v1071
        %v1124 = vpack.c.b16 %v1076, %v1072
        %v1125 = vpack.c.b16 %v1081, %v1077
        %v1126 = vpack.c.b16 %v1082, %v1078
        %v1127 = vpack.c.b16 %v1083, %v1079
        %v1128 = vpack.c.b16 %v1084, %v1080
        %v1129 = vpack.c.b16 %v1089, %v1085
        %v1130 = vpack.c.b16 %v1090, %v1086
        %v1131 = vpack.c.b16 %v1091, %v1087
        %v1132 = vpack.c.b16 %v1092, %v1088
        %v1133 = vpack.c.b16 %v1097, %v1093
        %v1134 = vpack.c.b16 %v1098, %v1094
        %v1135 = vpack.c.b16 %v1099, %v1095
        %v1136 = vpack.c.b16 %v1100, %v1096
        %v1137 = vpack.c.b16 %v1105, %v1101
        %v1138 = vpack.c.b16 %v1106, %v1102
        %v1139 = vpack.c.b16 %v1107, %v1103
        %v1140 = vpack.c.b16 %v1108, %v1104
        %1173 = vmatprep.subr.bf16.mxu0 %v1138
        %1174 = vmatpush1.bf16.msra.mxu0 %v1137
        %1175 = vmatprep.subr.bf16.mxu0 %v1134
        %1176 = vmatpush1.bf16.msra.mxu0 %v1133
        %1177 = vmatprep.subr.bf16.mxu0 %v1130
        %1178 = vmatpush1.bf16.msra.mxu0 %v1129
        %1179 = vmatprep.subr.bf16.mxu0 %v1126
        %1180 = vmatpush1.bf16.msra.mxu0 %v1125
        %1181 = vmatprep.subr.bf16.mxu0 %v1122
        %1182 = vmatpush1.bf16.msra.mxu0 %v1121
        %1183 = vmatprep.subr.bf16.mxu0 %v1118
        %1184 = vmatpush1.bf16.msra.mxu0 %v1117
        %1185 = vmatprep.subr.bf16.mxu0 %v1114
        %1186 = vmatpush1.bf16.msra.mxu0 %v1113
        %1187 = vmatprep.subr.bf16.mxu0 %v1110
        %1188 = vmatpush1.bf16.msra.mxu0 %v1109
        %1189 = vmatprep.subr.bf16.mxu0 0
        %1190 = vmatpush2.bf16.msra.mxu0 0
        %1191 = vmatprep.subr.bf16.mxu0 0
        %1192 = vmatpush2.bf16.msra.mxu0 0
        %1193 = vmatprep.subr.bf16.mxu0 0
        %1194 = vmatpush2.bf16.msra.mxu0 0
        %1195 = vmatprep.subr.bf16.mxu0 0
        %1196 = vmatpush2.bf16.msra.mxu0 0
        %1197 = vmatprep.subr.bf16.mxu0 0
        %1198 = vmatpush2.bf16.msra.mxu0 0
        %1199 = vmatprep.subr.bf16.mxu0 0
        %1200 = vmatpush2.bf16.msra.mxu0 0
        %1201 = vmatprep.subr.bf16.mxu0 0
        %1202 = vmatpush2.bf16.msra.mxu0 0
        %1203 = vmatprep.subr.bf16.mxu0 0
        %1204 = vmatpush2.bf16.msra.mxu0 0
        %1205 = vmatprep.mubr.bf16.mxu0 0
        %1206 = vmatmul.mubr.bf16.gmra.mxu0 %v1012
        %v1207 = vpop.f32.mrf.mxu0
        %v1208 = vadd.f32 0.0, %v1207
        %v1209 = vpop.f32.mrf.mxu0
        %v1210 = vadd.f32 0.0, %v1209
        %v1211 = vpop.f32.mrf.mxu0
        %v1212 = vadd.f32 0.0, %v1211
        %v1213 = vpop.f32.mrf.mxu0
        %v1214 = vadd.f32 0.0, %v1213
        %1215 = vdwg.mxu0
        %1216 = vmatprep.subr.bf16.mxu0 %v1140
        %1217 = vmatpush1.bf16.msra.mxu0 %v1139
        %1218 = vmatprep.subr.bf16.mxu0 %v1136
        %1219 = vmatpush1.bf16.msra.mxu0 %v1135
        %1220 = vmatprep.subr.bf16.mxu0 %v1132
        %1221 = vmatpush1.bf16.msra.mxu0 %v1131
        %1222 = vmatprep.subr.bf16.mxu0 %v1128
        %1223 = vmatpush1.bf16.msra.mxu0 %v1127
        %1224 = vmatprep.subr.bf16.mxu0 %v1124
        %1225 = vmatpush1.bf16.msra.mxu0 %v1123
        %1226 = vmatprep.subr.bf16.mxu0 %v1120
        %1227 = vmatpush1.bf16.msra.mxu0 %v1119
        %1228 = vmatprep.subr.bf16.mxu0 %v1116
        %1229 = vmatpush1.bf16.msra.mxu0 %v1115
        %1230 = vmatprep.subr.bf16.mxu0 %v1112
        %1231 = vmatpush1.bf16.msra.mxu0 %v1111
        %1232 = vmatprep.subr.bf16.mxu0 0
        %1233 = vmatpush2.bf16.msra.mxu0 0
        %1234 = vmatprep.subr.bf16.mxu0 0
        %1235 = vmatpush2.bf16.msra.mxu0 0
        %1236 = vmatprep.subr.bf16.mxu0 0
        %1237 = vmatpush2.bf16.msra.mxu0 0
        %1238 = vmatprep.subr.bf16.mxu0 0
        %1239 = vmatpush2.bf16.msra.mxu0 0
        %1240 = vmatprep.subr.bf16.mxu0 0
        %1241 = vmatpush2.bf16.msra.mxu0 0
        %1242 = vmatprep.subr.bf16.mxu0 0
        %1243 = vmatpush2.bf16.msra.mxu0 0
        %1244 = vmatprep.subr.bf16.mxu0 0
        %1245 = vmatpush2.bf16.msra.mxu0 0
        %1246 = vmatprep.subr.bf16.mxu0 0
        %1247 = vmatpush2.bf16.msra.mxu0 0
        %1248 = vmatprep.mubr.bf16.mxu0 0
        %1249 = vmatmul.mubr.bf16.gmra.mxu0 %v1012
        %v1250 = vpop.f32.mrf.mxu0
        %v1251 = vadd.f32 0.0, %v1250
        %v1252 = vpop.f32.mrf.mxu0
        %v1253 = vadd.f32 0.0, %v1252
        %v1254 = vpop.f32.mrf.mxu0
        %v1255 = vadd.f32 0.0, %v1254
        %v1256 = vpop.f32.mrf.mxu0
        %v1257 = vadd.f32 0.0, %v1256
        %1258 = vdwg.mxu0
        %v1259 = vadd.f32 %v1004, %v1208
        %v1260 = vadd.f32 %v1005, %v1210
        %v1261 = vadd.f32 %v1006, %v1251
        %v1262 = vadd.f32 %v1007, %v1253
        %v1263 = vadd.f32 %v1008, %v1212
        %v1264 = vadd.f32 %v1009, %v1214
        %v1265 = vadd.f32 %v1010, %v1255
        %v1266 = vadd.f32 %v1011, %v1257
        %v1267 = vxor.u32 %v1259, 2147483648
        %v1268 = vxor.u32 %v1263, 2147483648
        %v1269 = vmul.f32 %v1267, 1.442695
        %v1270 = vpow.pop %v1269
        %v1271 = vmul.f32 %v1268, 1.442695
        %v1272 = vpow.pop %v1271
        %v1273 = vadd.f32 %v1270, 1.0
        %v1274 = vadd.f32 %v1272, 1.0
        %v1275 = vrcp.pop %v1273
        %v1276 = vmul.f32 1.0, %v1275
        %v1277 = vrcp.pop %v1274
        %v1278 = vmul.f32 1.0, %v1277
        %v1279 = vxor.u32 %v1260, 2147483648
        %v1280 = vxor.u32 %v1264, 2147483648
        %v1281 = vmul.f32 %v1279, 1.442695
        %v1282 = vpow.pop %v1281
        %v1283 = vmul.f32 %v1280, 1.442695
        %v1284 = vpow.pop %v1283
        %v1285 = vadd.f32 %v1282, 1.0
        %v1286 = vadd.f32 %v1284, 1.0
        %v1287 = vrcp.pop %v1285
        %v1288 = vmul.f32 1.0, %v1287
        %v1289 = vrcp.pop %v1286
        %v1290 = vmul.f32 1.0, %v1289
        %v1291 = vtanh.pop %v1261
        %v1292 = vtanh.pop %v1265
        %v1293 = vxor.u32 %v1262, 2147483648
        %v1294 = vxor.u32 %v1266, 2147483648
        %v1295 = vmul.f32 %v1293, 1.442695
        %v1296 = vpow.pop %v1295
        %v1297 = vmul.f32 %v1294, 1.442695
        %v1298 = vpow.pop %v1297
        %v1299 = vadd.f32 %v1296, 1.0
        %v1300 = vadd.f32 %v1298, 1.0
        %v1301 = vrcp.pop %v1299
        %v1302 = vmul.f32 1.0, %v1301
        %v1303 = vrcp.pop %v1300
        %v1304 = vmul.f32 1.0, %v1303
        %v1305 = vmul.f32 %v1288, %v996
        %v1306 = vmul.f32 %v1290, %v997
        %v1307 = vmul.f32 %v1276, %v1291
        %v1308 = vmul.f32 %v1278, %v1292
        %v1309 = vadd.f32 %v1305, %v1307
        %v1310 = vadd.f32 %v1306, %v1308
        %v1311 = vtanh.pop %v1309
        %v1312 = vtanh.pop %v1310
        %v1313 = vmul.f32 %v1302, %v1311
        %v1314 = vmul.f32 %v1304, %v1312
        %v1315 = vpack.c.bf16 %v1314, %v1313
        %v1317 = vunpack.c.l.b16 %v1315
        %v1318 = vunpack.c.h.b16 %v1315
        %v1319 = vpack.c.b16 %v1317, %v1317
        %v1320 = vpack.c.b16 %v1318, %v1318
        %s1323 = smul.addr %s999, 4
        %s1324 = scalar_lea.vmem %s327, %s1323 [#allocation5]
        %1325 = vst [vmem:[%s1324] sm:$0xf] %v1319
        %1326 = vst [vmem:[%s1324 + $0x4] sm:$0xf] %v1320
        %s1327 = smul.u32 %s22, 5
        %s1328 = sadd.s32 %s1327, 1
        %s1329 = smul.u32 %s1328, 16
        %s1330 = sshra.s32 %s1329, 3
        %s1331 = sand.u32 %s1329, 7
        %s1332 = smul.u32 %s1330, 4
        %s1333 = smul.addr %s1332, 8
        %s1334 = scalar_lea.vmem [#allocation2], %s1333
        %v1335 = vld [vmem:[%s1334] sm:$0xff]
        %v1336 = vld [vmem:[%s1334 + $0x8] sm:$0xff]
        %v1337 = vld [vmem:[%s1334 + $0x10] sm:$0xff]
        %v1338 = vld [vmem:[%s1334 + $0x18] sm:$0xff]
        %v1339 = vld [vmem:[%s1334 + $0x20] sm:$0xff]
        %v1340 = vld [vmem:[%s1334 + $0x28] sm:$0xff]
        %v1341 = vld [vmem:[%s1334 + $0x30] sm:$0xff]
        %v1342 = vld [vmem:[%s1334 + $0x38] sm:$0xff]
        %1343 = vmatprep.subr.bf16.mxu0 %v1138
        %1344 = vmatpush1.bf16.msra.mxu0 %v1137
        %1345 = vmatprep.subr.bf16.mxu0 %v1134
        %1346 = vmatpush1.bf16.msra.mxu0 %v1133
        %1347 = vmatprep.subr.bf16.mxu0 %v1130
        %1348 = vmatpush1.bf16.msra.mxu0 %v1129
        %1349 = vmatprep.subr.bf16.mxu0 %v1126
        %1350 = vmatpush1.bf16.msra.mxu0 %v1125
        %1351 = vmatprep.subr.bf16.mxu0 %v1122
        %1352 = vmatpush1.bf16.msra.mxu0 %v1121
        %1353 = vmatprep.subr.bf16.mxu0 %v1118
        %1354 = vmatpush1.bf16.msra.mxu0 %v1117
        %1355 = vmatprep.subr.bf16.mxu0 %v1114
        %1356 = vmatpush1.bf16.msra.mxu0 %v1113
        %1357 = vmatprep.subr.bf16.mxu0 %v1110
        %1358 = vmatpush1.bf16.msra.mxu0 %v1109
        %1359 = vmatprep.subr.bf16.mxu0 0
        %1360 = vmatpush2.bf16.msra.mxu0 0
        %1361 = vmatprep.subr.bf16.mxu0 0
        %1362 = vmatpush2.bf16.msra.mxu0 0
        %1363 = vmatprep.subr.bf16.mxu0 0
        %1364 = vmatpush2.bf16.msra.mxu0 0
        %1365 = vmatprep.subr.bf16.mxu0 0
        %1366 = vmatpush2.bf16.msra.mxu0 0
        %1367 = vmatprep.subr.bf16.mxu0 0
        %1368 = vmatpush2.bf16.msra.mxu0 0
        %1369 = vmatprep.subr.bf16.mxu0 0
        %1370 = vmatpush2.bf16.msra.mxu0 0
        %1371 = vmatprep.subr.bf16.mxu0 0
        %1372 = vmatpush2.bf16.msra.mxu0 0
        %1373 = vmatprep.subr.bf16.mxu0 0
        %1374 = vmatpush2.bf16.msra.mxu0 0
        %1375 = vmatprep.mubr.bf16.mxu0 0
        %1376 = vmatmul.mubr.bf16.gmra.mxu0 %v1315
        %v1377 = vpop.f32.mrf.mxu0
        %v1378 = vadd.f32 0.0, %v1377
        %v1379 = vpop.f32.mrf.mxu0
        %v1380 = vadd.f32 0.0, %v1379
        %v1381 = vpop.f32.mrf.mxu0
        %v1382 = vadd.f32 0.0, %v1381
        %v1383 = vpop.f32.mrf.mxu0
        %v1384 = vadd.f32 0.0, %v1383
        %1385 = vdwg.mxu0
        %1386 = vmatprep.subr.bf16.mxu0 %v1140
        %1387 = vmatpush1.bf16.msra.mxu0 %v1139
        %1388 = vmatprep.subr.bf16.mxu0 %v1136
        %1389 = vmatpush1.bf16.msra.mxu0 %v1135
        %1390 = vmatprep.subr.bf16.mxu0 %v1132
        %1391 = vmatpush1.bf16.msra.mxu0 %v1131
        %1392 = vmatprep.subr.bf16.mxu0 %v1128
        %1393 = vmatpush1.bf16.msra.mxu0 %v1127
        %1394 = vmatprep.subr.bf16.mxu0 %v1124
        %1395 = vmatpush1.bf16.msra.mxu0 %v1123
        %1396 = vmatprep.subr.bf16.mxu0 %v1120
        %1397 = vmatpush1.bf16.msra.mxu0 %v1119
        %1398 = vmatprep.subr.bf16.mxu0 %v1116
        %1399 = vmatpush1.bf16.msra.mxu0 %v1115
        %1400 = vmatprep.subr.bf16.mxu0 %v1112
        %1401 = vmatpush1.bf16.msra.mxu0 %v1111
        %1402 = vmatprep.subr.bf16.mxu0 0
        %1403 = vmatpush2.bf16.msra.mxu0 0
        %1404 = vmatprep.subr.bf16.mxu0 0
        %1405 = vmatpush2.bf16.msra.mxu0 0
        %1406 = vmatprep.subr.bf16.mxu0 0
        %1407 = vmatpush2.bf16.msra.mxu0 0
        %1408 = vmatprep.subr.bf16.mxu0 0
        %1409 = vmatpush2.bf16.msra.mxu0 0
        %1410 = vmatprep.subr.bf16.mxu0 0
        %1411 = vmatpush2.bf16.msra.mxu0 0
        %1412 = vmatprep.subr.bf16.mxu0 0
        %1413 = vmatpush2.bf16.msra.mxu0 0
        %1414 = vmatprep.subr.bf16.mxu0 0
        %1415 = vmatpush2.bf16.msra.mxu0 0
        %1416 = vmatprep.subr.bf16.mxu0 0
        %1417 = vmatpush2.bf16.msra.mxu0 0
        %1418 = vmatprep.mubr.bf16.mxu0 0
        %1419 = vmatmul.mubr.bf16.gmra.mxu0 %v1315
        %v1420 = vpop.f32.mrf.mxu0
        %v1421 = vadd.f32 0.0, %v1420
        %v1422 = vpop.f32.mrf.mxu0
        %v1423 = vadd.f32 0.0, %v1422
        %v1424 = vpop.f32.mrf.mxu0
        %v1425 = vadd.f32 0.0, %v1424
        %v1426 = vpop.f32.mrf.mxu0
        %v1427 = vadd.f32 0.0, %v1426
        %1428 = vdwg.mxu0
        %v1429 = vadd.f32 %v1335, %v1378
        %v1430 = vadd.f32 %v1336, %v1380
        %v1431 = vadd.f32 %v1337, %v1421
        %v1432 = vadd.f32 %v1338, %v1423
        %v1433 = vadd.f32 %v1339, %v1382
        %v1434 = vadd.f32 %v1340, %v1384
        %v1435 = vadd.f32 %v1341, %v1425
        %v1436 = vadd.f32 %v1342, %v1427
        %v1437 = vxor.u32 %v1429, 2147483648
        %v1438 = vxor.u32 %v1433, 2147483648
        %v1439 = vmul.f32 %v1437, 1.442695
        %v1440 = vpow.pop %v1439
        %v1441 = vmul.f32 %v1438, 1.442695
        %v1442 = vpow.pop %v1441
        %v1443 = vadd.f32 %v1440, 1.0
        %v1444 = vadd.f32 %v1442, 1.0
        %v1445 = vrcp.pop %v1443
        %v1446 = vmul.f32 1.0, %v1445
        %v1447 = vrcp.pop %v1444
        %v1448 = vmul.f32 1.0, %v1447
        %v1449 = vxor.u32 %v1430, 2147483648
        %v1450 = vxor.u32 %v1434, 2147483648
        %v1451 = vmul.f32 %v1449, 1.442695
        %v1452 = vpow.pop %v1451
        %v1453 = vmul.f32 %v1450, 1.442695
        %v1454 = vpow.pop %v1453
        %v1455 = vadd.f32 %v1452, 1.0
        %v1456 = vadd.f32 %v1454, 1.0
        %v1457 = vrcp.pop %v1455
        %v1458 = vmul.f32 1.0, %v1457
        %v1459 = vrcp.pop %v1456
        %v1460 = vmul.f32 1.0, %v1459
        %v1461 = vtanh.pop %v1431
        %v1462 = vtanh.pop %v1435
        %v1463 = vxor.u32 %v1432, 2147483648
        %v1464 = vxor.u32 %v1436, 2147483648
        %v1465 = vmul.f32 %v1463, 1.442695
        %v1466 = vpow.pop %v1465
        %v1467 = vmul.f32 %v1464, 1.442695
        %v1468 = vpow.pop %v1467
        %v1469 = vadd.f32 %v1466, 1.0
        %v1470 = vadd.f32 %v1468, 1.0
        %v1471 = vrcp.pop %v1469
        %v1472 = vmul.f32 1.0, %v1471
        %v1473 = vrcp.pop %v1470
        %v1474 = vmul.f32 1.0, %v1473
        %v1475 = vmul.f32 %v1458, %v1309
        %v1476 = vmul.f32 %v1460, %v1310
        %v1477 = vmul.f32 %v1446, %v1461
        %v1478 = vmul.f32 %v1448, %v1462
        %v1479 = vadd.f32 %v1475, %v1477
        %v1480 = vadd.f32 %v1476, %v1478
        %v1481 = vtanh.pop %v1479
        %v1482 = vtanh.pop %v1480
        %v1483 = vmul.f32 %v1472, %v1481
        %v1484 = vmul.f32 %v1474, %v1482
        %v1485 = vpack.c.bf16 %v1484, %v1483
        %v1487 = vunpack.c.l.b16 %v1485
        %v1488 = vunpack.c.h.b16 %v1485
        %v1489 = vpack.c.b16 %v1487, %v1487
        %v1490 = vpack.c.b16 %v1488, %v1488
        %s1493 = smul.addr %s1330, 4
        %s1494 = scalar_lea.vmem %s327, %s1493 [#allocation5]
        %1495 = vst [vmem:[%s1494] sm:$0xf] %v1489
        %1496 = vst [vmem:[%s1494 + $0x4] sm:$0xf] %v1490
        %s1497 = smul.u32 %s22, 3
        %s1498 = sadd.s32 %s1497, 2
        %s1499 = smul.u32 %s1498, 16
        %s1500 = sshra.s32 %s1499, 3
        %s1501 = sand.u32 %s1499, 7
        %s1502 = smul.u32 %s1500, 4
        %s1503 = smul.addr %s1502, 8
        %s1504 = scalar_lea.vmem [#allocation2], %s1503
        %v1505 = vld [vmem:[%s1504] sm:$0xff]
        %v1506 = vld [vmem:[%s1504 + $0x8] sm:$0xff]
        %v1507 = vld [vmem:[%s1504 + $0x10] sm:$0xff]
        %v1508 = vld [vmem:[%s1504 + $0x18] sm:$0xff]
        %v1509 = vld [vmem:[%s1504 + $0x20] sm:$0xff]
        %v1510 = vld [vmem:[%s1504 + $0x28] sm:$0xff]
        %v1511 = vld [vmem:[%s1504 + $0x30] sm:$0xff]
        %v1512 = vld [vmem:[%s1504 + $0x38] sm:$0xff]
        %1513 = vmatprep.subr.bf16.mxu0 %v1138
        %1514 = vmatpush1.bf16.msra.mxu0 %v1137
        %1515 = vmatprep.subr.bf16.mxu0 %v1134
        %1516 = vmatpush1.bf16.msra.mxu0 %v1133
        %1517 = vmatprep.subr.bf16.mxu0 %v1130
        %1518 = vmatpush1.bf16.msra.mxu0 %v1129
        %1519 = vmatprep.subr.bf16.mxu0 %v1126
        %1520 = vmatpush1.bf16.msra.mxu0 %v1125
        %1521 = vmatprep.subr.bf16.mxu0 %v1122
        %1522 = vmatpush1.bf16.msra.mxu0 %v1121
        %1523 = vmatprep.subr.bf16.mxu0 %v1118
        %1524 = vmatpush1.bf16.msra.mxu0 %v1117
        %1525 = vmatprep.subr.bf16.mxu0 %v1114
        %1526 = vmatpush1.bf16.msra.mxu0 %v1113
        %1527 = vmatprep.subr.bf16.mxu0 %v1110
        %1528 = vmatpush1.bf16.msra.mxu0 %v1109
        %1529 = vmatprep.subr.bf16.mxu0 0
        %1530 = vmatpush2.bf16.msra.mxu0 0
        %1531 = vmatprep.subr.bf16.mxu0 0
        %1532 = vmatpush2.bf16.msra.mxu0 0
        %1533 = vmatprep.subr.bf16.mxu0 0
        %1534 = vmatpush2.bf16.msra.mxu0 0
        %1535 = vmatprep.subr.bf16.mxu0 0
        %1536 = vmatpush2.bf16.msra.mxu0 0
        %1537 = vmatprep.subr.bf16.mxu0 0
        %1538 = vmatpush2.bf16.msra.mxu0 0
        %1539 = vmatprep.subr.bf16.mxu0 0
        %1540 = vmatpush2.bf16.msra.mxu0 0
        %1541 = vmatprep.subr.bf16.mxu0 0
        %1542 = vmatpush2.bf16.msra.mxu0 0
        %1543 = vmatprep.subr.bf16.mxu0 0
        %1544 = vmatpush2.bf16.msra.mxu0 0
        %1545 = vmatprep.mubr.bf16.mxu0 0
        %1546 = vmatmul.mubr.bf16.gmra.mxu0 %v1485
        %v1547 = vpop.f32.mrf.mxu0
        %v1548 = vadd.f32 0.0, %v1547
        %v1549 = vpop.f32.mrf.mxu0
        %v1550 = vadd.f32 0.0, %v1549
        %v1551 = vpop.f32.mrf.mxu0
        %v1552 = vadd.f32 0.0, %v1551
        %v1553 = vpop.f32.mrf.mxu0
        %v1554 = vadd.f32 0.0, %v1553
        %1555 = vdwg.mxu0
        %1556 = vmatprep.subr.bf16.mxu0 %v1140
        %1557 = vmatpush1.bf16.msra.mxu0 %v1139
        %1558 = vmatprep.subr.bf16.mxu0 %v1136
        %1559 = vmatpush1.bf16.msra.mxu0 %v1135
        %1560 = vmatprep.subr.bf16.mxu0 %v1132
        %1561 = vmatpush1.bf16.msra.mxu0 %v1131
        %1562 = vmatprep.subr.bf16.mxu0 %v1128
        %1563 = vmatpush1.bf16.msra.mxu0 %v1127
        %1564 = vmatprep.subr.bf16.mxu0 %v1124
        %1565 = vmatpush1.bf16.msra.mxu0 %v1123
        %1566 = vmatprep.subr.bf16.mxu0 %v1120
        %1567 = vmatpush1.bf16.msra.mxu0 %v1119
        %1568 = vmatprep.subr.bf16.mxu0 %v1116
        %1569 = vmatpush1.bf16.msra.mxu0 %v1115
        %1570 = vmatprep.subr.bf16.mxu0 %v1112
        %1571 = vmatpush1.bf16.msra.mxu0 %v1111
        %1572 = vmatprep.subr.bf16.mxu0 0
        %1573 = vmatpush2.bf16.msra.mxu0 0
        %1574 = vmatprep.subr.bf16.mxu0 0
        %1575 = vmatpush2.bf16.msra.mxu0 0
        %1576 = vmatprep.subr.bf16.mxu0 0
        %1577 = vmatpush2.bf16.msra.mxu0 0
        %1578 = vmatprep.subr.bf16.mxu0 0
        %1579 = vmatpush2.bf16.msra.mxu0 0
        %1580 = vmatprep.subr.bf16.mxu0 0
        %1581 = vmatpush2.bf16.msra.mxu0 0
        %1582 = vmatprep.subr.bf16.mxu0 0
        %1583 = vmatpush2.bf16.msra.mxu0 0
        %1584 = vmatprep.subr.bf16.mxu0 0
        %1585 = vmatpush2.bf16.msra.mxu0 0
        %1586 = vmatprep.subr.bf16.mxu0 0
        %1587 = vmatpush2.bf16.msra.mxu0 0
        %1588 = vmatprep.mubr.bf16.mxu0 0
        %1589 = vmatmul.mubr.bf16.gmra.mxu0 %v1485
        %v1590 = vpop.f32.mrf.mxu0
        %v1591 = vadd.f32 0.0, %v1590
        %v1592 = vpop.f32.mrf.mxu0
        %v1593 = vadd.f32 0.0, %v1592
        %v1594 = vpop.f32.mrf.mxu0
        %v1595 = vadd.f32 0.0, %v1594
        %v1596 = vpop.f32.mrf.mxu0
        %v1597 = vadd.f32 0.0, %v1596
        %1598 = vdwg.mxu0
        %v1599 = vadd.f32 %v1505, %v1548
        %v1600 = vadd.f32 %v1506, %v1550
        %v1601 = vadd.f32 %v1507, %v1591
        %v1602 = vadd.f32 %v1508, %v1593
        %v1603 = vadd.f32 %v1509, %v1552
        %v1604 = vadd.f32 %v1510, %v1554
        %v1605 = vadd.f32 %v1511, %v1595
        %v1606 = vadd.f32 %v1512, %v1597
        %v1607 = vxor.u32 %v1599, 2147483648
        %v1608 = vxor.u32 %v1603, 2147483648
        %v1609 = vmul.f32 %v1607, 1.442695
        %v1610 = vpow.pop %v1609
        %v1611 = vmul.f32 %v1608, 1.442695
        %v1612 = vpow.pop %v1611
        %v1613 = vadd.f32 %v1610, 1.0
        %v1614 = vadd.f32 %v1612, 1.0
        %v1615 = vrcp.pop %v1613
        %v1616 = vmul.f32 1.0, %v1615
        %v1617 = vrcp.pop %v1614
        %v1618 = vmul.f32 1.0, %v1617
        %v1619 = vxor.u32 %v1600, 2147483648
        %v1620 = vxor.u32 %v1604, 2147483648
        %v1621 = vmul.f32 %v1619, 1.442695
        %v1622 = vpow.pop %v1621
        %v1623 = vmul.f32 %v1620, 1.442695
        %v1624 = vpow.pop %v1623
        %v1625 = vadd.f32 %v1622, 1.0
        %v1626 = vadd.f32 %v1624, 1.0
        %v1627 = vrcp.pop %v1625
        %v1628 = vmul.f32 1.0, %v1627
        %v1629 = vrcp.pop %v1626
        %v1630 = vmul.f32 1.0, %v1629
        %v1631 = vtanh.pop %v1601
        %v1632 = vtanh.pop %v1605
        %v1633 = vxor.u32 %v1602, 2147483648
        %v1634 = vxor.u32 %v1606, 2147483648
        %v1635 = vmul.f32 %v1633, 1.442695
        %v1636 = vpow.pop %v1635
        %v1637 = vmul.f32 %v1634, 1.442695
        %v1638 = vpow.pop %v1637
        %v1639 = vadd.f32 %v1636, 1.0
        %v1640 = vadd.f32 %v1638, 1.0
        %v1641 = vrcp.pop %v1639
        %v1642 = vmul.f32 1.0, %v1641
        %v1643 = vrcp.pop %v1640
        %v1644 = vmul.f32 1.0, %v1643
        %v1645 = vmul.f32 %v1628, %v1479
        %v1646 = vmul.f32 %v1630, %v1480
        %v1647 = vmul.f32 %v1616, %v1631
        %v1648 = vmul.f32 %v1618, %v1632
        %v1649 = vadd.f32 %v1645, %v1647
        %v1650 = vadd.f32 %v1646, %v1648
        %v1651 = vtanh.pop %v1649
        %v1652 = vtanh.pop %v1650
        %v1653 = vmul.f32 %v1642, %v1651
        %v1654 = vmul.f32 %v1644, %v1652
        %v1655 = vpack.c.bf16 %v1654, %v1653
        %v1657 = vunpack.c.l.b16 %v1655
        %v1658 = vunpack.c.h.b16 %v1655
        %v1659 = vpack.c.b16 %v1657, %v1657
        %v1660 = vpack.c.b16 %v1658, %v1658
        %s1663 = smul.addr %s1500, 4
        %s1664 = scalar_lea.vmem %s327, %s1663 [#allocation5]
        %1665 = vst [vmem:[%s1664] sm:$0xf] %v1659
        %1666 = vst [vmem:[%s1664 + $0x4] sm:$0xf] %v1660
        %s1667 = sadd.s32 %s22, 3
        %s1668 = smul.u32 %s1667, 16
        %s1669 = sshra.s32 %s1668, 3
        %s1670 = sand.u32 %s1668, 7
        %s1671 = smul.u32 %s1669, 4
        %s1672 = smul.addr %s1671, 8
        %s1673 = scalar_lea.vmem [#allocation2], %s1672
        %v1674 = vld [vmem:[%s1673] sm:$0xff]
        %v1675 = vld [vmem:[%s1673 + $0x8] sm:$0xff]
        %v1676 = vld [vmem:[%s1673 + $0x10] sm:$0xff]
        %v1677 = vld [vmem:[%s1673 + $0x18] sm:$0xff]
        %v1678 = vld [vmem:[%s1673 + $0x20] sm:$0xff]
        %v1679 = vld [vmem:[%s1673 + $0x28] sm:$0xff]
        %v1680 = vld [vmem:[%s1673 + $0x30] sm:$0xff]
        %v1681 = vld [vmem:[%s1673 + $0x38] sm:$0xff]
        %1682 = vmatprep.subr.bf16.mxu0 %v1138
        %1683 = vmatpush1.bf16.msra.mxu0 %v1137
        %1684 = vmatprep.subr.bf16.mxu0 %v1134
        %1685 = vmatpush1.bf16.msra.mxu0 %v1133
        %1686 = vmatprep.subr.bf16.mxu0 %v1130
        %1687 = vmatpush1.bf16.msra.mxu0 %v1129
        %1688 = vmatprep.subr.bf16.mxu0 %v1126
        %1689 = vmatpush1.bf16.msra.mxu0 %v1125
        %1690 = vmatprep.subr.bf16.mxu0 %v1122
        %1691 = vmatpush1.bf16.msra.mxu0 %v1121
        %1692 = vmatprep.subr.bf16.mxu0 %v1118
        %1693 = vmatpush1.bf16.msra.mxu0 %v1117
        %1694 = vmatprep.subr.bf16.mxu0 %v1114
        %1695 = vmatpush1.bf16.msra.mxu0 %v1113
        %1696 = vmatprep.subr.bf16.mxu0 %v1110
        %1697 = vmatpush1.bf16.msra.mxu0 %v1109
        %1698 = vmatprep.subr.bf16.mxu0 0
        %1699 = vmatpush2.bf16.msra.mxu0 0
        %1700 = vmatprep.subr.bf16.mxu0 0
        %1701 = vmatpush2.bf16.msra.mxu0 0
        %1702 = vmatprep.subr.bf16.mxu0 0
        %1703 = vmatpush2.bf16.msra.mxu0 0
        %1704 = vmatprep.subr.bf16.mxu0 0
        %1705 = vmatpush2.bf16.msra.mxu0 0
        %1706 = vmatprep.subr.bf16.mxu0 0
        %1707 = vmatpush2.bf16.msra.mxu0 0
        %1708 = vmatprep.subr.bf16.mxu0 0
        %1709 = vmatpush2.bf16.msra.mxu0 0
        %1710 = vmatprep.subr.bf16.mxu0 0
        %1711 = vmatpush2.bf16.msra.mxu0 0
        %1712 = vmatprep.subr.bf16.mxu0 0
        %1713 = vmatpush2.bf16.msra.mxu0 0
        %1714 = vmatprep.mubr.bf16.mxu0 0
        %1715 = vmatmul.mubr.bf16.gmra.mxu0 %v1655
        %v1716 = vpop.f32.mrf.mxu0
        %v1717 = vadd.f32 0.0, %v1716
        %v1718 = vpop.f32.mrf.mxu0
        %v1719 = vadd.f32 0.0, %v1718
        %v1720 = vpop.f32.mrf.mxu0
        %v1721 = vadd.f32 0.0, %v1720
        %v1722 = vpop.f32.mrf.mxu0
        %v1723 = vadd.f32 0.0, %v1722
        %1724 = vdwg.mxu0
        %1725 = vmatprep.subr.bf16.mxu0 %v1140
        %1726 = vmatpush1.bf16.msra.mxu0 %v1139
        %1727 = vmatprep.subr.bf16.mxu0 %v1136
        %1728 = vmatpush1.bf16.msra.mxu0 %v1135
        %1729 = vmatprep.subr.bf16.mxu0 %v1132
        %1730 = vmatpush1.bf16.msra.mxu0 %v1131
        %1731 = vmatprep.subr.bf16.mxu0 %v1128
        %1732 = vmatpush1.bf16.msra.mxu0 %v1127
        %1733 = vmatprep.subr.bf16.mxu0 %v1124
        %1734 = vmatpush1.bf16.msra.mxu0 %v1123
        %1735 = vmatprep.subr.bf16.mxu0 %v1120
        %1736 = vmatpush1.bf16.msra.mxu0 %v1119
        %1737 = vmatprep.subr.bf16.mxu0 %v1116
        %1738 = vmatpush1.bf16.msra.mxu0 %v1115
        %1739 = vmatprep.subr.bf16.mxu0 %v1112
        %1740 = vmatpush1.bf16.msra.mxu0 %v1111
        %1741 = vmatprep.subr.bf16.mxu0 0
        %1742 = vmatpush2.bf16.msra.mxu0 0
        %1743 = vmatprep.subr.bf16.mxu0 0
        %1744 = vmatpush2.bf16.msra.mxu0 0
        %1745 = vmatprep.subr.bf16.mxu0 0
        %1746 = vmatpush2.bf16.msra.mxu0 0
        %1747 = vmatprep.subr.bf16.mxu0 0
        %1748 = vmatpush2.bf16.msra.mxu0 0
        %1749 = vmatprep.subr.bf16.mxu0 0
        %1750 = vmatpush2.bf16.msra.mxu0 0
        %1751 = vmatprep.subr.bf16.mxu0 0
        %1752 = vmatpush2.bf16.msra.mxu0 0
        %1753 = vmatprep.subr.bf16.mxu0 0
        %1754 = vmatpush2.bf16.msra.mxu0 0
        %1755 = vmatprep.subr.bf16.mxu0 0
        %1756 = vmatpush2.bf16.msra.mxu0 0
        %1757 = vmatprep.mubr.bf16.mxu0 0
        %1758 = vmatmul.mubr.bf16.gmra.mxu0 %v1655
        %v1759 = vpop.f32.mrf.mxu0
        %v1760 = vadd.f32 0.0, %v1759
        %v1761 = vpop.f32.mrf.mxu0
        %v1762 = vadd.f32 0.0, %v1761
        %v1763 = vpop.f32.mrf.mxu0
        %v1764 = vadd.f32 0.0, %v1763
        %v1765 = vpop.f32.mrf.mxu0
        %v1766 = vadd.f32 0.0, %v1765
        %1767 = vdwg.mxu0
        %v1768 = vadd.f32 %v1674, %v1717
        %v1769 = vadd.f32 %v1675, %v1719
        %v1770 = vadd.f32 %v1676, %v1760
        %v1771 = vadd.f32 %v1677, %v1762
        %v1772 = vadd.f32 %v1678, %v1721
        %v1773 = vadd.f32 %v1679, %v1723
        %v1774 = vadd.f32 %v1680, %v1764
        %v1775 = vadd.f32 %v1681, %v1766
        %v1776 = vxor.u32 %v1768, 2147483648
        %v1777 = vxor.u32 %v1772, 2147483648
        %v1778 = vmul.f32 %v1776, 1.442695
        %v1779 = vpow.pop %v1778
        %v1780 = vmul.f32 %v1777, 1.442695
        %v1781 = vpow.pop %v1780
        %v1782 = vadd.f32 %v1779, 1.0
        %v1783 = vadd.f32 %v1781, 1.0
        %v1784 = vrcp.pop %v1782
        %v1785 = vmul.f32 1.0, %v1784
        %v1786 = vrcp.pop %v1783
        %v1787 = vmul.f32 1.0, %v1786
        %v1788 = vxor.u32 %v1769, 2147483648
        %v1789 = vxor.u32 %v1773, 2147483648
        %v1790 = vmul.f32 %v1788, 1.442695
        %v1791 = vpow.pop %v1790
        %v1792 = vmul.f32 %v1789, 1.442695
        %v1793 = vpow.pop %v1792
        %v1794 = vadd.f32 %v1791, 1.0
        %v1795 = vadd.f32 %v1793, 1.0
        %v1796 = vrcp.pop %v1794
        %v1797 = vmul.f32 1.0, %v1796
        %v1798 = vrcp.pop %v1795
        %v1799 = vmul.f32 1.0, %v1798
        %v1800 = vtanh.pop %v1770
        %v1801 = vtanh.pop %v1774
        %v1802 = vxor.u32 %v1771, 2147483648
        %v1803 = vxor.u32 %v1775, 2147483648
        %v1804 = vmul.f32 %v1802, 1.442695
        %v1805 = vpow.pop %v1804
        %v1806 = vmul.f32 %v1803, 1.442695
        %v1807 = vpow.pop %v1806
        %v1808 = vadd.f32 %v1805, 1.0
        %v1809 = vadd.f32 %v1807, 1.0
        %v1810 = vrcp.pop %v1808
        %v1811 = vmul.f32 1.0, %v1810
        %v1812 = vrcp.pop %v1809
        %v1813 = vmul.f32 1.0, %v1812
        %v1814 = vmul.f32 %v1797, %v1649
        %v1815 = vmul.f32 %v1799, %v1650
        %v1816 = vmul.f32 %v1785, %v1800
        %v1817 = vmul.f32 %v1787, %v1801
        %v1818 = vadd.f32 %v1814, %v1816
        %v1819 = vadd.f32 %v1815, %v1817
        %v1820 = vtanh.pop %v1818
        %v1821 = vtanh.pop %v1819
        %v1822 = vmul.f32 %v1811, %v1820
        %v1823 = vmul.f32 %v1813, %v1821
        %v1824 = vpack.c.bf16 %v1823, %v1822
        %v1826 = vunpack.c.l.b16 %v1824
        %v1827 = vunpack.c.h.b16 %v1824
        %v1828 = vpack.c.b16 %v1826, %v1826
        %v1829 = vpack.c.b16 %v1827, %v1827
        %s1832 = smul.addr %s1669, 4
        %s1833 = scalar_lea.vmem %s327, %s1832 [#allocation5]
        %1834 = vst [vmem:[%s1833] sm:$0xf] %v1828
        %1835 = vst [vmem:[%s1833 + $0x4] sm:$0xf] %v1829
        %s1836 = ssub.s32 4, %s22
        %s1837 = smul.u32 %s1836, 16
        %s1838 = sshra.s32 %s1837, 3
        %s1839 = sand.u32 %s1837, 7
        %s1840 = smul.u32 %s1838, 4
        %s1841 = smul.addr %s1840, 8
        %s1842 = scalar_lea.vmem [#allocation2], %s1841
        %v1843 = vld [vmem:[%s1842] sm:$0xff]
        %v1844 = vld [vmem:[%s1842 + $0x8] sm:$0xff]
        %v1845 = vld [vmem:[%s1842 + $0x10] sm:$0xff]
        %v1846 = vld [vmem:[%s1842 + $0x18] sm:$0xff]
        %v1847 = vld [vmem:[%s1842 + $0x20] sm:$0xff]
        %v1848 = vld [vmem:[%s1842 + $0x28] sm:$0xff]
        %v1849 = vld [vmem:[%s1842 + $0x30] sm:$0xff]
        %v1850 = vld [vmem:[%s1842 + $0x38] sm:$0xff]
        %1851 = vmatprep.subr.bf16.mxu0 %v1138
        %1852 = vmatpush1.bf16.msra.mxu0 %v1137
        %1853 = vmatprep.subr.bf16.mxu0 %v1134
        %1854 = vmatpush1.bf16.msra.mxu0 %v1133
        %1855 = vmatprep.subr.bf16.mxu0 %v1130
        %1856 = vmatpush1.bf16.msra.mxu0 %v1129
        %1857 = vmatprep.subr.bf16.mxu0 %v1126
        %1858 = vmatpush1.bf16.msra.mxu0 %v1125
        %1859 = vmatprep.subr.bf16.mxu0 %v1122
        %1860 = vmatpush1.bf16.msra.mxu0 %v1121
        %1861 = vmatprep.subr.bf16.mxu0 %v1118
        %1862 = vmatpush1.bf16.msra.mxu0 %v1117
        %1863 = vmatprep.subr.bf16.mxu0 %v1114
        %1864 = vmatpush1.bf16.msra.mxu0 %v1113
        %1865 = vmatprep.subr.bf16.mxu0 %v1110
        %1866 = vmatpush1.bf16.msra.mxu0 %v1109
        %1867 = vmatprep.subr.bf16.mxu0 0
        %1868 = vmatpush2.bf16.msra.mxu0 0
        %1869 = vmatprep.subr.bf16.mxu0 0
        %1870 = vmatpush2.bf16.msra.mxu0 0
        %1871 = vmatprep.subr.bf16.mxu0 0
        %1872 = vmatpush2.bf16.msra.mxu0 0
        %1873 = vmatprep.subr.bf16.mxu0 0
        %1874 = vmatpush2.bf16.msra.mxu0 0
        %1875 = vmatprep.subr.bf16.mxu0 0
        %1876 = vmatpush2.bf16.msra.mxu0 0
        %1877 = vmatprep.subr.bf16.mxu0 0
        %1878 = vmatpush2.bf16.msra.mxu0 0
        %1879 = vmatprep.subr.bf16.mxu0 0
        %1880 = vmatpush2.bf16.msra.mxu0 0
        %1881 = vmatprep.subr.bf16.mxu0 0
        %1882 = vmatpush2.bf16.msra.mxu0 0
        %1883 = vmatprep.mubr.bf16.mxu0 0
        %1884 = vmatmul.mubr.bf16.gmra.mxu0 %v1824
        %v1885 = vpop.f32.mrf.mxu0
        %v1886 = vadd.f32 0.0, %v1885
        %v1887 = vpop.f32.mrf.mxu0
        %v1888 = vadd.f32 0.0, %v1887
        %v1889 = vpop.f32.mrf.mxu0
        %v1890 = vadd.f32 0.0, %v1889
        %v1891 = vpop.f32.mrf.mxu0
        %v1892 = vadd.f32 0.0, %v1891
        %1893 = vdwg.mxu0
        %1894 = vmatprep.subr.bf16.mxu0 %v1140
        %1895 = vmatpush1.bf16.msra.mxu0 %v1139
        %1896 = vmatprep.subr.bf16.mxu0 %v1136
        %1897 = vmatpush1.bf16.msra.mxu0 %v1135
        %1898 = vmatprep.subr.bf16.mxu0 %v1132
        %1899 = vmatpush1.bf16.msra.mxu0 %v1131
        %1900 = vmatprep.subr.bf16.mxu0 %v1128
        %1901 = vmatpush1.bf16.msra.mxu0 %v1127
        %1902 = vmatprep.subr.bf16.mxu0 %v1124
        %1903 = vmatpush1.bf16.msra.mxu0 %v1123
        %1904 = vmatprep.subr.bf16.mxu0 %v1120
        %1905 = vmatpush1.bf16.msra.mxu0 %v1119
        %1906 = vmatprep.subr.bf16.mxu0 %v1116
        %1907 = vmatpush1.bf16.msra.mxu0 %v1115
        %1908 = vmatprep.subr.bf16.mxu0 %v1112
        %1909 = vmatpush1.bf16.msra.mxu0 %v1111
        %1910 = vmatprep.subr.bf16.mxu0 0
        %1911 = vmatpush2.bf16.msra.mxu0 0
        %1912 = vmatprep.subr.bf16.mxu0 0
        %1913 = vmatpush2.bf16.msra.mxu0 0
        %1914 = vmatprep.subr.bf16.mxu0 0
        %1915 = vmatpush2.bf16.msra.mxu0 0
        %1916 = vmatprep.subr.bf16.mxu0 0
        %1917 = vmatpush2.bf16.msra.mxu0 0
        %1918 = vmatprep.subr.bf16.mxu0 0
        %1919 = vmatpush2.bf16.msra.mxu0 0
        %1920 = vmatprep.subr.bf16.mxu0 0
        %1921 = vmatpush2.bf16.msra.mxu0 0
        %1922 = vmatprep.subr.bf16.mxu0 0
        %1923 = vmatpush2.bf16.msra.mxu0 0
        %1924 = vmatprep.subr.bf16.mxu0 0
        %1925 = vmatpush2.bf16.msra.mxu0 0
        %1926 = vmatprep.mubr.bf16.mxu0 0
        %1927 = vmatmul.mubr.bf16.gmra.mxu0 %v1824
        %v1928 = vpop.f32.mrf.mxu0
        %v1929 = vadd.f32 0.0, %v1928
        %v1930 = vpop.f32.mrf.mxu0
        %v1931 = vadd.f32 0.0, %v1930
        %v1932 = vpop.f32.mrf.mxu0
        %v1933 = vadd.f32 0.0, %v1932
        %v1934 = vpop.f32.mrf.mxu0
        %v1935 = vadd.f32 0.0, %v1934
        %1936 = vdwg.mxu0
        %v1937 = vadd.f32 %v1843, %v1886
        %v1938 = vadd.f32 %v1844, %v1888
        %v1939 = vadd.f32 %v1845, %v1929
        %v1940 = vadd.f32 %v1846, %v1931
        %v1941 = vadd.f32 %v1847, %v1890
        %v1942 = vadd.f32 %v1848, %v1892
        %v1943 = vadd.f32 %v1849, %v1933
        %v1944 = vadd.f32 %v1850, %v1935
        %v1945 = vxor.u32 %v1937, 2147483648
        %v1946 = vxor.u32 %v1941, 2147483648
        %v1947 = vmul.f32 %v1945, 1.442695
        %v1948 = vpow.pop %v1947
        %v1949 = vmul.f32 %v1946, 1.442695
        %v1950 = vpow.pop %v1949
        %v1951 = vadd.f32 %v1948, 1.0
        %v1952 = vadd.f32 %v1950, 1.0
        %v1953 = vrcp.pop %v1951
        %v1954 = vmul.f32 1.0, %v1953
        %v1955 = vrcp.pop %v1952
        %v1956 = vmul.f32 1.0, %v1955
        %v1957 = vxor.u32 %v1938, 2147483648
        %v1958 = vxor.u32 %v1942, 2147483648
        %v1959 = vmul.f32 %v1957, 1.442695
        %v1960 = vpow.pop %v1959
        %v1961 = vmul.f32 %v1958, 1.442695
        %v1962 = vpow.pop %v1961
        %v1963 = vadd.f32 %v1960, 1.0
        %v1964 = vadd.f32 %v1962, 1.0
        %v1965 = vrcp.pop %v1963
        %v1966 = vmul.f32 1.0, %v1965
        %v1967 = vrcp.pop %v1964
        %v1968 = vmul.f32 1.0, %v1967
        %v1969 = vtanh.pop %v1939
        %v1970 = vtanh.pop %v1943
        %v1971 = vxor.u32 %v1940, 2147483648
        %v1972 = vxor.u32 %v1944, 2147483648
        %v1973 = vmul.f32 %v1971, 1.442695
        %v1974 = vpow.pop %v1973
        %v1975 = vmul.f32 %v1972, 1.442695
        %v1976 = vpow.pop %v1975
        %v1977 = vadd.f32 %v1974, 1.0
        %v1978 = vadd.f32 %v1976, 1.0
        %v1979 = vrcp.pop %v1977
        %v1980 = vmul.f32 1.0, %v1979
        %v1981 = vrcp.pop %v1978
        %v1982 = vmul.f32 1.0, %v1981
        %v1983 = vmul.f32 %v1966, %v1818
        %v1984 = vmul.f32 %v1968, %v1819
        %v1985 = vmul.f32 %v1954, %v1969
        %v1986 = vmul.f32 %v1956, %v1970
        %v1987 = vadd.f32 %v1983, %v1985
        %v1988 = vadd.f32 %v1984, %v1986
        %v1989 = vtanh.pop %v1987
        %v1990 = vtanh.pop %v1988
        %v1991 = vmul.f32 %v1980, %v1989
        %v1992 = vmul.f32 %v1982, %v1990
        %v1993 = vpack.c.bf16 %v1992, %v1991
        %v1995 = vunpack.c.l.b16 %v1993
        %v1996 = vunpack.c.h.b16 %v1993
        %v1997 = vpack.c.b16 %v1995, %v1995
        %v1998 = vpack.c.b16 %v1996, %v1996
        %s2001 = smul.addr %s1838, 4
        %s2002 = scalar_lea.vmem %s327, %s2001 [#allocation5]
        %2003 = vst [vmem:[%s2002] sm:$0xf] %v1997
        %2004 = vst [vmem:[%s2002 + $0x4] sm:$0xf] %v1998
        %s2005 = smul.u32 %s22, 4294967293
        %s2006 = sadd.s32 %s2005, 5
        %s2007 = smul.u32 %s2006, 16
        %s2008 = sshra.s32 %s2007, 3
        %s2009 = sand.u32 %s2007, 7
        %s2010 = smul.u32 %s2008, 4
        %s2011 = smul.addr %s2010, 8
        %s2012 = scalar_lea.vmem [#allocation2], %s2011
        %v2013 = vld [vmem:[%s2012] sm:$0xff]
        %v2014 = vld [vmem:[%s2012 + $0x8] sm:$0xff]
        %v2015 = vld [vmem:[%s2012 + $0x10] sm:$0xff]
        %v2016 = vld [vmem:[%s2012 + $0x18] sm:$0xff]
        %v2017 = vld [vmem:[%s2012 + $0x20] sm:$0xff]
        %v2018 = vld [vmem:[%s2012 + $0x28] sm:$0xff]
        %v2019 = vld [vmem:[%s2012 + $0x30] sm:$0xff]
        %v2020 = vld [vmem:[%s2012 + $0x38] sm:$0xff]
        %2021 = vmatprep.subr.bf16.mxu0 %v1138
        %2022 = vmatpush1.bf16.msra.mxu0 %v1137
        %2023 = vmatprep.subr.bf16.mxu0 %v1134
        %2024 = vmatpush1.bf16.msra.mxu0 %v1133
        %2025 = vmatprep.subr.bf16.mxu0 %v1130
        %2026 = vmatpush1.bf16.msra.mxu0 %v1129
        %2027 = vmatprep.subr.bf16.mxu0 %v1126
        %2028 = vmatpush1.bf16.msra.mxu0 %v1125
        %2029 = vmatprep.subr.bf16.mxu0 %v1122
        %2030 = vmatpush1.bf16.msra.mxu0 %v1121
        %2031 = vmatprep.subr.bf16.mxu0 %v1118
        %2032 = vmatpush1.bf16.msra.mxu0 %v1117
        %2033 = vmatprep.subr.bf16.mxu0 %v1114
        %2034 = vmatpush1.bf16.msra.mxu0 %v1113
        %2035 = vmatprep.subr.bf16.mxu0 %v1110
        %2036 = vmatpush1.bf16.msra.mxu0 %v1109
        %2037 = vmatprep.subr.bf16.mxu0 0
        %2038 = vmatpush2.bf16.msra.mxu0 0
        %2039 = vmatprep.subr.bf16.mxu0 0
        %2040 = vmatpush2.bf16.msra.mxu0 0
        %2041 = vmatprep.subr.bf16.mxu0 0
        %2042 = vmatpush2.bf16.msra.mxu0 0
        %2043 = vmatprep.subr.bf16.mxu0 0
        %2044 = vmatpush2.bf16.msra.mxu0 0
        %2045 = vmatprep.subr.bf16.mxu0 0
        %2046 = vmatpush2.bf16.msra.mxu0 0
        %2047 = vmatprep.subr.bf16.mxu0 0
        %2048 = vmatpush2.bf16.msra.mxu0 0
        %2049 = vmatprep.subr.bf16.mxu0 0
        %2050 = vmatpush2.bf16.msra.mxu0 0
        %2051 = vmatprep.subr.bf16.mxu0 0
        %2052 = vmatpush2.bf16.msra.mxu0 0
        %2053 = vmatprep.mubr.bf16.mxu0 0
        %2054 = vmatmul.mubr.bf16.gmra.mxu0 %v1993
        %v2055 = vpop.f32.mrf.mxu0
        %v2056 = vadd.f32 0.0, %v2055
        %v2057 = vpop.f32.mrf.mxu0
        %v2058 = vadd.f32 0.0, %v2057
        %v2059 = vpop.f32.mrf.mxu0
        %v2060 = vadd.f32 0.0, %v2059
        %v2061 = vpop.f32.mrf.mxu0
        %v2062 = vadd.f32 0.0, %v2061
        %2063 = vdwg.mxu0
        %2064 = vmatprep.subr.bf16.mxu0 %v1140
        %2065 = vmatpush1.bf16.msra.mxu0 %v1139
        %2066 = vmatprep.subr.bf16.mxu0 %v1136
        %2067 = vmatpush1.bf16.msra.mxu0 %v1135
        %2068 = vmatprep.subr.bf16.mxu0 %v1132
        %2069 = vmatpush1.bf16.msra.mxu0 %v1131
        %2070 = vmatprep.subr.bf16.mxu0 %v1128
        %2071 = vmatpush1.bf16.msra.mxu0 %v1127
        %2072 = vmatprep.subr.bf16.mxu0 %v1124
        %2073 = vmatpush1.bf16.msra.mxu0 %v1123
        %2074 = vmatprep.subr.bf16.mxu0 %v1120
        %2075 = vmatpush1.bf16.msra.mxu0 %v1119
        %2076 = vmatprep.subr.bf16.mxu0 %v1116
        %2077 = vmatpush1.bf16.msra.mxu0 %v1115
        %2078 = vmatprep.subr.bf16.mxu0 %v1112
        %2079 = vmatpush1.bf16.msra.mxu0 %v1111
        %2080 = vmatprep.subr.bf16.mxu0 0
        %2081 = vmatpush2.bf16.msra.mxu0 0
        %2082 = vmatprep.subr.bf16.mxu0 0
        %2083 = vmatpush2.bf16.msra.mxu0 0
        %2084 = vmatprep.subr.bf16.mxu0 0
        %2085 = vmatpush2.bf16.msra.mxu0 0
        %2086 = vmatprep.subr.bf16.mxu0 0
        %2087 = vmatpush2.bf16.msra.mxu0 0
        %2088 = vmatprep.subr.bf16.mxu0 0
        %2089 = vmatpush2.bf16.msra.mxu0 0
        %2090 = vmatprep.subr.bf16.mxu0 0
        %2091 = vmatpush2.bf16.msra.mxu0 0
        %2092 = vmatprep.subr.bf16.mxu0 0
        %2093 = vmatpush2.bf16.msra.mxu0 0
        %2094 = vmatprep.subr.bf16.mxu0 0
        %2095 = vmatpush2.bf16.msra.mxu0 0
        %2096 = vmatprep.mubr.bf16.mxu0 0
        %2097 = vmatmul.mubr.bf16.gmra.mxu0 %v1993
        %v2098 = vpop.f32.mrf.mxu0
        %v2099 = vadd.f32 0.0, %v2098
        %v2100 = vpop.f32.mrf.mxu0
        %v2101 = vadd.f32 0.0, %v2100
        %v2102 = vpop.f32.mrf.mxu0
        %v2103 = vadd.f32 0.0, %v2102
        %v2104 = vpop.f32.mrf.mxu0
        %v2105 = vadd.f32 0.0, %v2104
        %2106 = vdwg.mxu0
        %v2107 = vadd.f32 %v2013, %v2056
        %v2108 = vadd.f32 %v2014, %v2058
        %v2109 = vadd.f32 %v2015, %v2099
        %v2110 = vadd.f32 %v2016, %v2101
        %v2111 = vadd.f32 %v2017, %v2060
        %v2112 = vadd.f32 %v2018, %v2062
        %v2113 = vadd.f32 %v2019, %v2103
        %v2114 = vadd.f32 %v2020, %v2105
        %v2115 = vxor.u32 %v2107, 2147483648
        %v2116 = vxor.u32 %v2111, 2147483648
        %v2117 = vmul.f32 %v2115, 1.442695
        %v2118 = vpow.pop %v2117
        %v2119 = vmul.f32 %v2116, 1.442695
        %v2120 = vpow.pop %v2119
        %v2121 = vadd.f32 %v2118, 1.0
        %v2122 = vadd.f32 %v2120, 1.0
        %v2123 = vrcp.pop %v2121
        %v2124 = vmul.f32 1.0, %v2123
        %v2125 = vrcp.pop %v2122
        %v2126 = vmul.f32 1.0, %v2125
        %v2127 = vxor.u32 %v2108, 2147483648
        %v2128 = vxor.u32 %v2112, 2147483648
        %v2129 = vmul.f32 %v2127, 1.442695
        %v2130 = vpow.pop %v2129
        %v2131 = vmul.f32 %v2128, 1.442695
        %v2132 = vpow.pop %v2131
        %v2133 = vadd.f32 %v2130, 1.0
        %v2134 = vadd.f32 %v2132, 1.0
        %v2135 = vrcp.pop %v2133
        %v2136 = vmul.f32 1.0, %v2135
        %v2137 = vrcp.pop %v2134
        %v2138 = vmul.f32 1.0, %v2137
        %v2139 = vtanh.pop %v2109
        %v2140 = vtanh.pop %v2113
        %v2141 = vxor.u32 %v2110, 2147483648
        %v2142 = vxor.u32 %v2114, 2147483648
        %v2143 = vmul.f32 %v2141, 1.442695
        %v2144 = vpow.pop %v2143
        %v2145 = vmul.f32 %v2142, 1.442695
        %v2146 = vpow.pop %v2145
        %v2147 = vadd.f32 %v2144, 1.0
        %v2148 = vadd.f32 %v2146, 1.0
        %v2149 = vrcp.pop %v2147
        %v2150 = vmul.f32 1.0, %v2149
        %v2151 = vrcp.pop %v2148
        %v2152 = vmul.f32 1.0, %v2151
        %v2153 = vmul.f32 %v2136, %v1987
        %v2154 = vmul.f32 %v2138, %v1988
        %v2155 = vmul.f32 %v2124, %v2139
        %v2156 = vmul.f32 %v2126, %v2140
        %v2157 = vadd.f32 %v2153, %v2155
        %v2158 = vadd.f32 %v2154, %v2156
        %v2159 = vtanh.pop %v2157
        %v2160 = vtanh.pop %v2158
        %v2161 = vmul.f32 %v2150, %v2159
        %v2162 = vmul.f32 %v2152, %v2160
        %v2163 = vpack.c.bf16 %v2162, %v2161
        %v2165 = vunpack.c.l.b16 %v2163
        %v2166 = vunpack.c.h.b16 %v2163
        %v2167 = vpack.c.b16 %v2165, %v2165
        %v2168 = vpack.c.b16 %v2166, %v2166
        %s2171 = smul.addr %s2008, 4
        %s2172 = scalar_lea.vmem %s327, %s2171 [#allocation5]
        %2173 = vst [vmem:[%s2172] sm:$0xf] %v2167
        %2174 = vst [vmem:[%s2172 + $0x4] sm:$0xf] %v2168
        %s2175 = smul.u32 %s22, 4294967291
        %s2176 = sadd.s32 %s2175, 6
        %s2177 = smul.u32 %s2176, 16
        %s2178 = sshra.s32 %s2177, 3
        %s2179 = sand.u32 %s2177, 7
        %s2180 = smul.u32 %s2178, 4
        %s2181 = smul.addr %s2180, 8
        %s2182 = scalar_lea.vmem [#allocation2], %s2181
        %v2183 = vld [vmem:[%s2182] sm:$0xff]
        %v2184 = vld [vmem:[%s2182 + $0x8] sm:$0xff]
        %v2185 = vld [vmem:[%s2182 + $0x10] sm:$0xff]
        %v2186 = vld [vmem:[%s2182 + $0x18] sm:$0xff]
        %v2187 = vld [vmem:[%s2182 + $0x20] sm:$0xff]
        %v2188 = vld [vmem:[%s2182 + $0x28] sm:$0xff]
        %v2189 = vld [vmem:[%s2182 + $0x30] sm:$0xff]
        %v2190 = vld [vmem:[%s2182 + $0x38] sm:$0xff]
        %2191 = vmatprep.subr.bf16.mxu0 %v1138
        %2192 = vmatpush1.bf16.msra.mxu0 %v1137
        %2193 = vmatprep.subr.bf16.mxu0 %v1134
        %2194 = vmatpush1.bf16.msra.mxu0 %v1133
        %2195 = vmatprep.subr.bf16.mxu0 %v1130
        %2196 = vmatpush1.bf16.msra.mxu0 %v1129
        %2197 = vmatprep.subr.bf16.mxu0 %v1126
        %2198 = vmatpush1.bf16.msra.mxu0 %v1125
        %2199 = vmatprep.subr.bf16.mxu0 %v1122
        %2200 = vmatpush1.bf16.msra.mxu0 %v1121
        %2201 = vmatprep.subr.bf16.mxu0 %v1118
        %2202 = vmatpush1.bf16.msra.mxu0 %v1117
        %2203 = vmatprep.subr.bf16.mxu0 %v1114
        %2204 = vmatpush1.bf16.msra.mxu0 %v1113
        %2205 = vmatprep.subr.bf16.mxu0 %v1110
        %2206 = vmatpush1.bf16.msra.mxu0 %v1109
        %2207 = vmatprep.subr.bf16.mxu0 0
        %2208 = vmatpush2.bf16.msra.mxu0 0
        %2209 = vmatprep.subr.bf16.mxu0 0
        %2210 = vmatpush2.bf16.msra.mxu0 0
        %2211 = vmatprep.subr.bf16.mxu0 0
        %2212 = vmatpush2.bf16.msra.mxu0 0
        %2213 = vmatprep.subr.bf16.mxu0 0
        %2214 = vmatpush2.bf16.msra.mxu0 0
        %2215 = vmatprep.subr.bf16.mxu0 0
        %2216 = vmatpush2.bf16.msra.mxu0 0
        %2217 = vmatprep.subr.bf16.mxu0 0
        %2218 = vmatpush2.bf16.msra.mxu0 0
        %2219 = vmatprep.subr.bf16.mxu0 0
        %2220 = vmatpush2.bf16.msra.mxu0 0
        %2221 = vmatprep.subr.bf16.mxu0 0
        %2222 = vmatpush2.bf16.msra.mxu0 0
        %2223 = vmatprep.mubr.bf16.mxu0 0
        %2224 = vmatmul.mubr.bf16.gmra.mxu0 %v2163
        %v2225 = vpop.f32.mrf.mxu0
        %v2226 = vadd.f32 0.0, %v2225
        %v2227 = vpop.f32.mrf.mxu0
        %v2228 = vadd.f32 0.0, %v2227
        %v2229 = vpop.f32.mrf.mxu0
        %v2230 = vadd.f32 0.0, %v2229
        %v2231 = vpop.f32.mrf.mxu0
        %v2232 = vadd.f32 0.0, %v2231
        %2233 = vdwg.mxu0
        %2234 = vmatprep.subr.bf16.mxu0 %v1140
        %2235 = vmatpush1.bf16.msra.mxu0 %v1139
        %2236 = vmatprep.subr.bf16.mxu0 %v1136
        %2237 = vmatpush1.bf16.msra.mxu0 %v1135
        %2238 = vmatprep.subr.bf16.mxu0 %v1132
        %2239 = vmatpush1.bf16.msra.mxu0 %v1131
        %2240 = vmatprep.subr.bf16.mxu0 %v1128
        %2241 = vmatpush1.bf16.msra.mxu0 %v1127
        %2242 = vmatprep.subr.bf16.mxu0 %v1124
        %2243 = vmatpush1.bf16.msra.mxu0 %v1123
        %2244 = vmatprep.subr.bf16.mxu0 %v1120
        %2245 = vmatpush1.bf16.msra.mxu0 %v1119
        %2246 = vmatprep.subr.bf16.mxu0 %v1116
        %2247 = vmatpush1.bf16.msra.mxu0 %v1115
        %2248 = vmatprep.subr.bf16.mxu0 %v1112
        %2249 = vmatpush1.bf16.msra.mxu0 %v1111
        %2250 = vmatprep.subr.bf16.mxu0 0
        %2251 = vmatpush2.bf16.msra.mxu0 0
        %2252 = vmatprep.subr.bf16.mxu0 0
        %2253 = vmatpush2.bf16.msra.mxu0 0
        %2254 = vmatprep.subr.bf16.mxu0 0
        %2255 = vmatpush2.bf16.msra.mxu0 0
        %2256 = vmatprep.subr.bf16.mxu0 0
        %2257 = vmatpush2.bf16.msra.mxu0 0
        %2258 = vmatprep.subr.bf16.mxu0 0
        %2259 = vmatpush2.bf16.msra.mxu0 0
        %2260 = vmatprep.subr.bf16.mxu0 0
        %2261 = vmatpush2.bf16.msra.mxu0 0
        %2262 = vmatprep.subr.bf16.mxu0 0
        %2263 = vmatpush2.bf16.msra.mxu0 0
        %2264 = vmatprep.subr.bf16.mxu0 0
        %2265 = vmatpush2.bf16.msra.mxu0 0
        %2266 = vmatprep.mubr.bf16.mxu0 0
        %2267 = vmatmul.mubr.bf16.gmra.mxu0 %v2163
        %v2268 = vpop.f32.mrf.mxu0
        %v2269 = vadd.f32 0.0, %v2268
        %v2270 = vpop.f32.mrf.mxu0
        %v2271 = vadd.f32 0.0, %v2270
        %v2272 = vpop.f32.mrf.mxu0
        %v2273 = vadd.f32 0.0, %v2272
        %v2274 = vpop.f32.mrf.mxu0
        %v2275 = vadd.f32 0.0, %v2274
        %2276 = vdwg.mxu0
        %v2277 = vadd.f32 %v2183, %v2226
        %v2278 = vadd.f32 %v2184, %v2228
        %v2279 = vadd.f32 %v2185, %v2269
        %v2280 = vadd.f32 %v2186, %v2271
        %v2281 = vadd.f32 %v2187, %v2230
        %v2282 = vadd.f32 %v2188, %v2232
        %v2283 = vadd.f32 %v2189, %v2273
        %v2284 = vadd.f32 %v2190, %v2275
        %v2285 = vxor.u32 %v2277, 2147483648
        %v2286 = vxor.u32 %v2281, 2147483648
        %v2287 = vmul.f32 %v2285, 1.442695
        %v2288 = vpow.pop %v2287
        %v2289 = vmul.f32 %v2286, 1.442695
        %v2290 = vpow.pop %v2289
        %v2291 = vadd.f32 %v2288, 1.0
        %v2292 = vadd.f32 %v2290, 1.0
        %v2293 = vrcp.pop %v2291
        %v2294 = vmul.f32 1.0, %v2293
        %v2295 = vrcp.pop %v2292
        %v2296 = vmul.f32 1.0, %v2295
        %v2297 = vxor.u32 %v2278, 2147483648
        %v2298 = vxor.u32 %v2282, 2147483648
        %v2299 = vmul.f32 %v2297, 1.442695
        %v2300 = vpow.pop %v2299
        %v2301 = vmul.f32 %v2298, 1.442695
        %v2302 = vpow.pop %v2301
        %v2303 = vadd.f32 %v2300, 1.0
        %v2304 = vadd.f32 %v2302, 1.0
        %v2305 = vrcp.pop %v2303
        %v2306 = vmul.f32 1.0, %v2305
        %v2307 = vrcp.pop %v2304
        %v2308 = vmul.f32 1.0, %v2307
        %v2309 = vtanh.pop %v2279
        %v2310 = vtanh.pop %v2283
        %v2311 = vxor.u32 %v2280, 2147483648
        %v2312 = vxor.u32 %v2284, 2147483648
        %v2313 = vmul.f32 %v2311, 1.442695
        %v2314 = vpow.pop %v2313
        %v2315 = vmul.f32 %v2312, 1.442695
        %v2316 = vpow.pop %v2315
        %v2317 = vadd.f32 %v2314, 1.0
        %v2318 = vadd.f32 %v2316, 1.0
        %v2319 = vrcp.pop %v2317
        %v2320 = vmul.f32 1.0, %v2319
        %v2321 = vrcp.pop %v2318
        %v2322 = vmul.f32 1.0, %v2321
        %v2323 = vmul.f32 %v2306, %v2157
        %v2324 = vmul.f32 %v2308, %v2158
        %v2325 = vmul.f32 %v2294, %v2309
        %v2326 = vmul.f32 %v2296, %v2310
        %v2327 = vadd.f32 %v2323, %v2325
        %v2328 = vadd.f32 %v2324, %v2326
        %v2329 = vtanh.pop %v2327
        %v2330 = vtanh.pop %v2328
        %v2331 = vmul.f32 %v2320, %v2329
        %v2332 = vmul.f32 %v2322, %v2330
        %v2333 = vpack.c.bf16 %v2332, %v2331
        %v2335 = vunpack.c.l.b16 %v2333
        %v2336 = vunpack.c.h.b16 %v2333
        %v2337 = vpack.c.b16 %v2335, %v2335
        %v2338 = vpack.c.b16 %v2336, %v2336
        %s2341 = smul.addr %s2178, 4
        %s2342 = scalar_lea.vmem %s327, %s2341 [#allocation5]
        %2343 = vst [vmem:[%s2342] sm:$0xf] %v2337
        %2344 = vst [vmem:[%s2342 + $0x4] sm:$0xf] %v2338
        %s2345 = smul.u32 %s22, 4294967289
        %s2346 = sadd.s32 %s2345, 7
        %s2347 = smul.u32 %s2346, 16
        %s2348 = sshra.s32 %s2347, 3
        %s2349 = sand.u32 %s2347, 7
        %s2350 = smul.u32 %s2348, 4
        %s2351 = smul.addr %s2350, 8
        %s2352 = scalar_lea.vmem [#allocation2], %s2351
        %v2353 = vld [vmem:[%s2352] sm:$0xff]
        %v2354 = vld [vmem:[%s2352 + $0x8] sm:$0xff]
        %v2355 = vld [vmem:[%s2352 + $0x10] sm:$0xff]
        %v2356 = vld [vmem:[%s2352 + $0x18] sm:$0xff]
        %v2357 = vld [vmem:[%s2352 + $0x20] sm:$0xff]
        %v2358 = vld [vmem:[%s2352 + $0x28] sm:$0xff]
        %v2359 = vld [vmem:[%s2352 + $0x30] sm:$0xff]
        %v2360 = vld [vmem:[%s2352 + $0x38] sm:$0xff]
        %2361 = vmatprep.subr.bf16.mxu0 %v1138
        %2362 = vmatpush1.bf16.msra.mxu0 %v1137
        %2363 = vmatprep.subr.bf16.mxu0 %v1134
        %2364 = vmatpush1.bf16.msra.mxu0 %v1133
        %2365 = vmatprep.subr.bf16.mxu0 %v1130
        %2366 = vmatpush1.bf16.msra.mxu0 %v1129
        %2367 = vmatprep.subr.bf16.mxu0 %v1126
        %2368 = vmatpush1.bf16.msra.mxu0 %v1125
        %2369 = vmatprep.subr.bf16.mxu0 %v1122
        %2370 = vmatpush1.bf16.msra.mxu0 %v1121
        %2371 = vmatprep.subr.bf16.mxu0 %v1118
        %2372 = vmatpush1.bf16.msra.mxu0 %v1117
        %2373 = vmatprep.subr.bf16.mxu0 %v1114
        %2374 = vmatpush1.bf16.msra.mxu0 %v1113
        %2375 = vmatprep.subr.bf16.mxu0 %v1110
        %2376 = vmatpush1.bf16.msra.mxu0 %v1109
        %2377 = vmatprep.subr.bf16.mxu0 0
        %2378 = vmatpush2.bf16.msra.mxu0 0
        %2379 = vmatprep.subr.bf16.mxu0 0
        %2380 = vmatpush2.bf16.msra.mxu0 0
        %2381 = vmatprep.subr.bf16.mxu0 0
        %2382 = vmatpush2.bf16.msra.mxu0 0
        %2383 = vmatprep.subr.bf16.mxu0 0
        %2384 = vmatpush2.bf16.msra.mxu0 0
        %2385 = vmatprep.subr.bf16.mxu0 0
        %2386 = vmatpush2.bf16.msra.mxu0 0
        %2387 = vmatprep.subr.bf16.mxu0 0
        %2388 = vmatpush2.bf16.msra.mxu0 0
        %2389 = vmatprep.subr.bf16.mxu0 0
        %2390 = vmatpush2.bf16.msra.mxu0 0
        %2391 = vmatprep.subr.bf16.mxu0 0
        %2392 = vmatpush2.bf16.msra.mxu0 0
        %2393 = vmatprep.mubr.bf16.mxu0 0
        %2394 = vmatmul.mubr.bf16.gmra.mxu0 %v2333
        %v2395 = vpop.f32.mrf.mxu0
        %v2396 = vadd.f32 0.0, %v2395
        %v2397 = vpop.f32.mrf.mxu0
        %v2398 = vadd.f32 0.0, %v2397
        %v2399 = vpop.f32.mrf.mxu0
        %v2400 = vadd.f32 0.0, %v2399
        %v2401 = vpop.f32.mrf.mxu0
        %v2402 = vadd.f32 0.0, %v2401
        %2403 = vdwg.mxu0
        %2404 = vmatprep.subr.bf16.mxu0 %v1140
        %2405 = vmatpush1.bf16.msra.mxu0 %v1139
        %2406 = vmatprep.subr.bf16.mxu0 %v1136
        %2407 = vmatpush1.bf16.msra.mxu0 %v1135
        %2408 = vmatprep.subr.bf16.mxu0 %v1132
        %2409 = vmatpush1.bf16.msra.mxu0 %v1131
        %2410 = vmatprep.subr.bf16.mxu0 %v1128
        %2411 = vmatpush1.bf16.msra.mxu0 %v1127
        %2412 = vmatprep.subr.bf16.mxu0 %v1124
        %2413 = vmatpush1.bf16.msra.mxu0 %v1123
        %2414 = vmatprep.subr.bf16.mxu0 %v1120
        %2415 = vmatpush1.bf16.msra.mxu0 %v1119
        %2416 = vmatprep.subr.bf16.mxu0 %v1116
        %2417 = vmatpush1.bf16.msra.mxu0 %v1115
        %2418 = vmatprep.subr.bf16.mxu0 %v1112
        %2419 = vmatpush1.bf16.msra.mxu0 %v1111
        %2420 = vmatprep.subr.bf16.mxu0 0
        %2421 = vmatpush2.bf16.msra.mxu0 0
        %2422 = vmatprep.subr.bf16.mxu0 0
        %2423 = vmatpush2.bf16.msra.mxu0 0
        %2424 = vmatprep.subr.bf16.mxu0 0
        %2425 = vmatpush2.bf16.msra.mxu0 0
        %2426 = vmatprep.subr.bf16.mxu0 0
        %2427 = vmatpush2.bf16.msra.mxu0 0
        %2428 = vmatprep.subr.bf16.mxu0 0
        %2429 = vmatpush2.bf16.msra.mxu0 0
        %2430 = vmatprep.subr.bf16.mxu0 0
        %2431 = vmatpush2.bf16.msra.mxu0 0
        %2432 = vmatprep.subr.bf16.mxu0 0
        %2433 = vmatpush2.bf16.msra.mxu0 0
        %2434 = vmatprep.subr.bf16.mxu0 0
        %2435 = vmatpush2.bf16.msra.mxu0 0
        %2436 = vmatprep.mubr.bf16.mxu0 0
        %2437 = vmatmul.mubr.bf16.gmra.mxu0 %v2333
        %v2438 = vpop.f32.mrf.mxu0
        %v2439 = vadd.f32 0.0, %v2438
        %v2440 = vpop.f32.mrf.mxu0
        %v2441 = vadd.f32 0.0, %v2440
        %v2442 = vpop.f32.mrf.mxu0
        %v2443 = vadd.f32 0.0, %v2442
        %v2444 = vpop.f32.mrf.mxu0
        %v2445 = vadd.f32 0.0, %v2444
        %2446 = vdwg.mxu0
        %v2447 = vadd.f32 %v2353, %v2396
        %v2448 = vadd.f32 %v2354, %v2398
        %v2449 = vadd.f32 %v2355, %v2439
        %v2450 = vadd.f32 %v2356, %v2441
        %v2451 = vadd.f32 %v2357, %v2400
        %v2452 = vadd.f32 %v2358, %v2402
        %v2453 = vadd.f32 %v2359, %v2443
        %v2454 = vadd.f32 %v2360, %v2445
        %v2455 = vxor.u32 %v2447, 2147483648
        %v2456 = vxor.u32 %v2451, 2147483648
        %v2457 = vmul.f32 %v2455, 1.442695
        %v2458 = vpow.pop %v2457
        %v2459 = vmul.f32 %v2456, 1.442695
        %v2460 = vpow.pop %v2459
        %v2461 = vadd.f32 %v2458, 1.0
        %v2462 = vadd.f32 %v2460, 1.0
        %v2463 = vrcp.pop %v2461
        %v2464 = vmul.f32 1.0, %v2463
        %v2465 = vrcp.pop %v2462
        %v2466 = vmul.f32 1.0, %v2465
        %v2467 = vxor.u32 %v2448, 2147483648
        %v2468 = vxor.u32 %v2452, 2147483648
        %v2469 = vmul.f32 %v2467, 1.442695
        %v2470 = vpow.pop %v2469
        %v2471 = vmul.f32 %v2468, 1.442695
        %v2472 = vpow.pop %v2471
        %v2473 = vadd.f32 %v2470, 1.0
        %v2474 = vadd.f32 %v2472, 1.0
        %v2475 = vrcp.pop %v2473
        %v2476 = vmul.f32 1.0, %v2475
        %v2477 = vrcp.pop %v2474
        %v2478 = vmul.f32 1.0, %v2477
        %v2479 = vtanh.pop %v2449
        %v2480 = vtanh.pop %v2453
        %v2481 = vxor.u32 %v2450, 2147483648
        %v2482 = vxor.u32 %v2454, 2147483648
        %v2483 = vmul.f32 %v2481, 1.442695
        %v2484 = vpow.pop %v2483
        %v2485 = vmul.f32 %v2482, 1.442695
        %v2486 = vpow.pop %v2485
        %v2487 = vadd.f32 %v2484, 1.0
        %v2488 = vadd.f32 %v2486, 1.0
        %v2489 = vrcp.pop %v2487
        %v2490 = vmul.f32 1.0, %v2489
        %v2491 = vrcp.pop %v2488
        %v2492 = vmul.f32 1.0, %v2491
        %v2493 = vmul.f32 %v2476, %v2327
        %v2494 = vmul.f32 %v2478, %v2328
        %v2495 = vmul.f32 %v2464, %v2479
        %v2496 = vmul.f32 %v2466, %v2480
        %v2497 = vadd.f32 %v2493, %v2495
        %v2498 = vadd.f32 %v2494, %v2496
        %v2499 = vtanh.pop %v2497
        %v2500 = vtanh.pop %v2498
        %v2501 = vmul.f32 %v2490, %v2499
        %v2502 = vmul.f32 %v2492, %v2500
        %v2503 = vpack.c.bf16 %v2502, %v2501
        %v2505 = vunpack.c.l.b16 %v2503
        %v2506 = vunpack.c.h.b16 %v2503
        %v2507 = vpack.c.b16 %v2505, %v2505
        %v2508 = vpack.c.b16 %v2506, %v2506
        %s2511 = smul.addr %s2348, 4
        %s2512 = scalar_lea.vmem %s327, %s2511 [#allocation5]
        %2513 = vst [vmem:[%s2512] sm:$0xf] %v2507
        %2514 = vst [vmem:[%s2512 + $0x4] sm:$0xf] %v2508
        %2515 = vst [vmem:[#allocation3] sm:$0xff] %v2501
        %2516 = vst [vmem:[#allocation3 + $0x8] sm:$0xff] %v2502
        %2517 = vst [vmem:[#allocation4] sm:$0xff] %v2497
        %2518 = vst [vmem:[#allocation4 + $0x8] sm:$0xff] %v2498
        // Predicated region
        $region41: #{encoder_rnn_forward.2} parent=35 // pred_check
          %p2519 = pneg %p386
        $region42: #{encoder_rnn_forward.2} parent=35 // pred_check_branch
          %2521 = sbr.rel (%p2519) target = $region44
        $region43: #{encoder_rnn_forward.2} parent=35 // pred_region
          %2522 = vst [vmem:[%s379] sm:$0xff] %v2501
          %2523 = vst [vmem:[%s379 + $0x8] sm:$0xff] %v2502
          %2524 = vst [vmem:[%s384] sm:$0xff] %v2497
          %2525 = vst [vmem:[%s384 + $0x8] sm:$0xff] %v2498
        $region44: #{encoder_rnn_forward.2} parent=35 // pred_fallthru
          _
        %s2526 = sand.u32 %s160, 1
        %s2527 = sand.u32 %s160, 1
        %s2528 = smul.addr %s2527, 64
        %s2529 = scalar_lea.vmem [#allocation5], %s2528
        %p2530 = scmp.lt.s32.totalorder %s22, 1
        %s2531 = scalar_select %p2530, %s22, 1
        %s2532 = smul.addr %s2531, 2
        %s2533 = smul.addr %s2532, 8
        %s2534 = scalar_lea.vmem %s5, %s2533
        %p2535 = scmp.lt.s32.totalorder %s22, 1
        %s2536 = scalar_select %p2535, %s22, 1
        %s2537 = smul.addr %s2536, 2
        %s2538 = smul.addr %s2537, 8
        %s2539 = scalar_lea.vmem %s6, %s2538
        // Predicated region
        $region45: #{encoder_rnn_forward.2} parent=35 // pred_check
          %p2540 = pneg %p170
        $region46: #{encoder_rnn_forward.2} parent=35 // pred_check_branch
          %2542 = sbr.rel (%p2540) target = $region48
        $region47: #{encoder_rnn_forward.2} parent=35 // pred_region
          %s2543 = smul.u32 %s23, 2
          %s2544 = ssub.s32 0, %s2543
          %s2545 = smul.u32 %s22, %s2544
          %s2546 = sadd.s32 %s23, %s2545
          %s2547 = smul.u32 16, %s2546
          %s2548 = smul.addr %s2547, 2
          %s2549 = sadd.s32 %s22, %s2548
          %s2550 = smul.addr %s2549, 4
          %s2551 = scalar_lea.vmem %s4, %s2550
          // Predicated region
          $region49: #{encoder_rnn_forward.2} parent=47 // pred_check
            _
          $region50: #{encoder_rnn_forward.2} parent=47 // pred_check_branch
            %2553 = sbr.rel (0) target = $region52
          $region51: #{encoder_rnn_forward.2} parent=47 // pred_region
            // Predicated region
            $region53: #{encoder_rnn_forward.2} parent=51 // pred_check
              _
            $region54: #{encoder_rnn_forward.2} parent=51 // pred_check_branch
              %2555 = sbr.rel target = $region56
            $region55: #{encoder_rnn_forward.2} parent=51 // pred_region
              // Predicated region
              $region68: #{encoder_rnn_forward.2} parent=55 // pred_check
                _
              $region69: #{encoder_rnn_forward.2} parent=55 // pred_check_branch
                %2601 = sbr.rel (0) target = $region71
              $region70: #{encoder_rnn_forward.2} parent=55 // pred_region
                loop: start=0, step=1, limit=1
                $region72: #{encoder_rnn_forward.2} parent=70 // loop_pre_header
                  _
                $region73: #{encoder_rnn_forward.2} parent=70 // loop_header
                  %s2603 = sphi 0, %s2607
                  %p2604 = scmp.ge.s32.totalorder %s2603, 1
                  %s2608 = sphi %s2529, %s2529
                  %s2609 = sphi %s2551, %s2551
                $region74: #{encoder_rnn_forward.2} parent=70 // loop_header_branch
                  %2606 = sbr.rel (%p2604) target = $region78
                $region75: #{encoder_rnn_forward.2} parent=70 // loop_body
                  _
                $region76: #{encoder_rnn_forward.2} parent=70 // loop_footer
                  %s2607 = sadd.s32 1, %s2603
                $region77: #{encoder_rnn_forward.2} parent=70 // loop_footer_branch
                  %2602 = sbr.rel target = $region73
                $region78: #{encoder_rnn_forward.2} parent=70 // loop_exit
                  _
                %s2611 = ssub.s32 16, 1
                loop: start=0, step=1, limit=1
                $region79: #{encoder_rnn_forward.2} parent=70 // loop_pre_header
                  _
                $region80: #{encoder_rnn_forward.2} parent=70 // loop_header
                  %s2613 = sphi 0, %s2617
                  %p2614 = scmp.ge.s32.totalorder %s2613, 1
                  %s2618 = sphi %s2529, %s2529
                  %s2619 = sphi %s2551, %s2551
                $region81: #{encoder_rnn_forward.2} parent=70 // loop_header_branch
                  %2616 = sbr.rel (%p2614) target = $region85
                $region82: #{encoder_rnn_forward.2} parent=70 // loop_body
                  %v2620 = vld [vmem:[%s2618] sm:%s2611]
                  %2621 = vst [vmem:[%s2619] sm:%s2611] %v2620
                  %v2622 = vld [vmem:[%s2618 + $0x4] sm:%s2611]
                  %2623 = vst [vmem:[%s2619 + $0x8] sm:%s2611] %v2622
                  %v2624 = vld [vmem:[%s2618 + $0x8] sm:%s2611]
                  %2625 = vst [vmem:[%s2619 + $0x10] sm:%s2611] %v2624
                  %v2626 = vld [vmem:[%s2618 + $0xc] sm:%s2611]
                  %2627 = vst [vmem:[%s2619 + $0x18] sm:%s2611] %v2626
                  %v2628 = vld [vmem:[%s2618 + $0x10] sm:%s2611]
                  %2629 = vst [vmem:[%s2619 + $0x20] sm:%s2611] %v2628
                  %v2630 = vld [vmem:[%s2618 + $0x14] sm:%s2611]
                  %2631 = vst [vmem:[%s2619 + $0x28] sm:%s2611] %v2630
                  %v2632 = vld [vmem:[%s2618 + $0x18] sm:%s2611]
                  %2633 = vst [vmem:[%s2619 + $0x30] sm:%s2611] %v2632
                  %v2634 = vld [vmem:[%s2618 + $0x1c] sm:%s2611]
                  %2635 = vst [vmem:[%s2619 + $0x38] sm:%s2611] %v2634
                  %v2636 = vld [vmem:[%s2618 + $0x20] sm:%s2611]
                  %2637 = vst [vmem:[%s2619 + $0x40] sm:%s2611] %v2636
                  %v2638 = vld [vmem:[%s2618 + $0x24] sm:%s2611]
                  %2639 = vst [vmem:[%s2619 + $0x48] sm:%s2611] %v2638
                  %v2640 = vld [vmem:[%s2618 + $0x28] sm:%s2611]
                  %2641 = vst [vmem:[%s2619 + $0x50] sm:%s2611] %v2640
                  %v2642 = vld [vmem:[%s2618 + $0x2c] sm:%s2611]
                  %2643 = vst [vmem:[%s2619 + $0x58] sm:%s2611] %v2642
                  %v2644 = vld [vmem:[%s2618 + $0x30] sm:%s2611]
                  %2645 = vst [vmem:[%s2619 + $0x60] sm:%s2611] %v2644
                  %v2646 = vld [vmem:[%s2618 + $0x34] sm:%s2611]
                  %2647 = vst [vmem:[%s2619 + $0x68] sm:%s2611] %v2646
                  %v2648 = vld [vmem:[%s2618 + $0x38] sm:%s2611]
                  %2649 = vst [vmem:[%s2619 + $0x70] sm:%s2611] %v2648
                  %v2650 = vld [vmem:[%s2618 + $0x3c] sm:%s2611]
                  %2651 = vst [vmem:[%s2619 + $0x78] sm:%s2611] %v2650
                $region83: #{encoder_rnn_forward.2} parent=70 // loop_footer
                  %s2617 = sadd.s32 1, %s2613
                $region84: #{encoder_rnn_forward.2} parent=70 // loop_footer_branch
                  %2612 = sbr.rel target = $region80
                $region85: #{encoder_rnn_forward.2} parent=70 // loop_exit
                  _
              $region71: #{encoder_rnn_forward.2} parent=55 // pred_fallthru
                _
            $region56: #{encoder_rnn_forward.2} parent=51 // pred_fallthru
              _
            // Predicated region
            $region57: #{encoder_rnn_forward.2} parent=51 // pred_check
              _
            $region58: #{encoder_rnn_forward.2} parent=51 // pred_check_branch
              %2557 = sbr.rel (0) target = $region60
            $region59: #{encoder_rnn_forward.2} parent=51 // pred_region
              %s2559 = ssub.s32 16, 1
              loop: start=0, step=1, limit=1
              $region61: #{encoder_rnn_forward.2} parent=59 // loop_pre_header
                _
              $region62: #{encoder_rnn_forward.2} parent=59 // loop_header
                %s2561 = sphi 0, %s2565
                %p2562 = scmp.ge.s32.totalorder %s2561, 1
                %s2566 = sphi %s2529, %s2529
                %s2567 = sphi %s2551, %s2551
              $region63: #{encoder_rnn_forward.2} parent=59 // loop_header_branch
                %2564 = sbr.rel (%p2562) target = $region67
              $region64: #{encoder_rnn_forward.2} parent=59 // loop_body
                %v2568 = vld [vmem:[%s2566] sm:%s2559]
                %2569 = vst [vmem:[%s2567] sm:%s2559] %v2568
                %v2570 = vld [vmem:[%s2566 + $0x4] sm:%s2559]
                %2571 = vst [vmem:[%s2567 + $0x8] sm:%s2559] %v2570
                %v2572 = vld [vmem:[%s2566 + $0x8] sm:%s2559]
                %2573 = vst [vmem:[%s2567 + $0x10] sm:%s2559] %v2572
                %v2574 = vld [vmem:[%s2566 + $0xc] sm:%s2559]
                %2575 = vst [vmem:[%s2567 + $0x18] sm:%s2559] %v2574
                %v2576 = vld [vmem:[%s2566 + $0x10] sm:%s2559]
                %2577 = vst [vmem:[%s2567 + $0x20] sm:%s2559] %v2576
                %v2578 = vld [vmem:[%s2566 + $0x14] sm:%s2559]
                %2579 = vst [vmem:[%s2567 + $0x28] sm:%s2559] %v2578
                %v2580 = vld [vmem:[%s2566 + $0x18] sm:%s2559]
                %2581 = vst [vmem:[%s2567 + $0x30] sm:%s2559] %v2580
                %v2582 = vld [vmem:[%s2566 + $0x1c] sm:%s2559]
                %2583 = vst [vmem:[%s2567 + $0x38] sm:%s2559] %v2582
                %v2584 = vld [vmem:[%s2566 + $0x20] sm:%s2559]
                %2585 = vst [vmem:[%s2567 + $0x40] sm:%s2559] %v2584
                %v2586 = vld [vmem:[%s2566 + $0x24] sm:%s2559]
                %2587 = vst [vmem:[%s2567 + $0x48] sm:%s2559] %v2586
                %v2588 = vld [vmem:[%s2566 + $0x28] sm:%s2559]
                %2589 = vst [vmem:[%s2567 + $0x50] sm:%s2559] %v2588
                %v2590 = vld [vmem:[%s2566 + $0x2c] sm:%s2559]
                %2591 = vst [vmem:[%s2567 + $0x58] sm:%s2559] %v2590
                %v2592 = vld [vmem:[%s2566 + $0x30] sm:%s2559]
                %2593 = vst [vmem:[%s2567 + $0x60] sm:%s2559] %v2592
                %v2594 = vld [vmem:[%s2566 + $0x34] sm:%s2559]
                %2595 = vst [vmem:[%s2567 + $0x68] sm:%s2559] %v2594
                %v2596 = vld [vmem:[%s2566 + $0x38] sm:%s2559]
                %2597 = vst [vmem:[%s2567 + $0x70] sm:%s2559] %v2596
                %v2598 = vld [vmem:[%s2566 + $0x3c] sm:%s2559]
                %2599 = vst [vmem:[%s2567 + $0x78] sm:%s2559] %v2598
              $region65: #{encoder_rnn_forward.2} parent=59 // loop_footer
                %s2565 = sadd.s32 1, %s2561
              $region66: #{encoder_rnn_forward.2} parent=59 // loop_footer_branch
                %2560 = sbr.rel target = $region62
              $region67: #{encoder_rnn_forward.2} parent=59 // loop_exit
                _
            $region60: #{encoder_rnn_forward.2} parent=51 // pred_fallthru
              _
          $region52: #{encoder_rnn_forward.2} parent=47 // pred_fallthru
            _
          %2652 = vnop
        $region48: #{encoder_rnn_forward.2} parent=35 // pred_fallthru
          _
        // Predicated region
        $region86: #{encoder_rnn_forward.2} parent=35 // pred_check
          %p2653 = pneg %p196
        $region87: #{encoder_rnn_forward.2} parent=35 // pred_check_branch
          %2655 = sbr.rel (%p2653) target = $region89
        $region88: #{encoder_rnn_forward.2} parent=35 // pred_region
          _
        $region89: #{encoder_rnn_forward.2} parent=35 // pred_fallthru
          _
        // Predicated region
        $region90: #{encoder_rnn_forward.2} parent=35 // pred_check
          %p2656 = pneg %p222
        $region91: #{encoder_rnn_forward.2} parent=35 // pred_check_branch
          %2658 = sbr.rel (%p2656) target = $region93
        $region92: #{encoder_rnn_forward.2} parent=35 // pred_region
          _
        $region93: #{encoder_rnn_forward.2} parent=35 // pred_fallthru
          _
      $region36: #{encoder_rnn_forward.2} parent=5 // pred_fallthru
        _
      %p2659 = scmp.le.s32.totalorder 2, %s13
      // Predicated region
      $region94: #{encoder_rnn_forward.2} parent=5 // pred_check
        %p2660 = pneg %p2659
      $region95: #{encoder_rnn_forward.2} parent=5 // pred_check_branch
        %2662 = sbr.rel (%p2660) target = $region97
      $region96: #{encoder_rnn_forward.2} parent=5 // pred_region
        %s2663 = ssub.s32 %s13, 2
        // Predicated region
        $region98: #{encoder_rnn_forward.2} parent=96 // pred_check
          %p2664 = pneg %p176
        $region99: #{encoder_rnn_forward.2} parent=96 // pred_check_branch
          %2666 = sbr.rel (%p2664) target = $region101
        $region100: #{encoder_rnn_forward.2} parent=96 // pred_region
          %s2667 = sand.u32 %s161, 1
          %s2668 = sand.u32 %s161, 1
          %s2669 = smul.addr %s2668, 64
          %s2670 = scalar_lea.vmem [#allocation5], %s2669
        $region101: #{encoder_rnn_forward.2} parent=96 // pred_fallthru
          _
        // Predicated region
        $region102: #{encoder_rnn_forward.2} parent=96 // pred_check
          %p2671 = pneg %p202
        $region103: #{encoder_rnn_forward.2} parent=96 // pred_check_branch
          %2673 = sbr.rel (%p2671) target = $region105
        $region104: #{encoder_rnn_forward.2} parent=96 // pred_region
          %p2674 = scmp.lt.s32.totalorder %s24, 1
          %s2675 = scalar_select %p2674, %s24, 1
          %s2676 = smul.addr %s2675, 2
          %s2677 = smul.addr %s2676, 8
          %s2678 = scalar_lea.vmem %s5, %s2677
        $region105: #{encoder_rnn_forward.2} parent=96 // pred_fallthru
          _
        // Predicated region
        $region106: #{encoder_rnn_forward.2} parent=96 // pred_check
          %p2679 = pneg %p228
        $region107: #{encoder_rnn_forward.2} parent=96 // pred_check_branch
          %2681 = sbr.rel (%p2679) target = $region109
        $region108: #{encoder_rnn_forward.2} parent=96 // pred_region
          %p2682 = scmp.lt.s32.totalorder %s24, 1
          %s2683 = scalar_select %p2682, %s24, 1
          %s2684 = smul.addr %s2683, 2
          %s2685 = smul.addr %s2684, 8
          %s2686 = scalar_lea.vmem %s6, %s2685
        $region109: #{encoder_rnn_forward.2} parent=96 // pred_fallthru
          _
      $region97: #{encoder_rnn_forward.2} parent=5 // pred_fallthru
        _
    $region6: #{encoder_rnn_forward.2} parent=1 // loop_footer
      %s17 = sadd.s32 1, %s13
    $region7: #{encoder_rnn_forward.2} parent=1 // loop_footer_branch
      %12 = sbr.rel target = $region3
    $region8: #{encoder_rnn_forward.2} parent=1 // loop_exit
      _

// kernel: encoder_rnn_forward.3
$region0: #{encoder_rnn_forward.3}
  #allocation0 [shape = 'u32[]', space=smem, size = 0x4, offset = 0x4, fixed_abs, tag = 'smem constant byte address 0x4 - core index']
  #allocation1 [shape = 'u32[144,128]{1,0:T(1,128)}', space=vmem, size = 0x12000, scoped, tag = 'internal scratch']
  #allocation2 [shape = 'f32[128,512]{1,0:T(8,128)}', space=vmem, size = 0x40000, scoped, tag = 'scratch operand']
  #allocation3 [shape = 'f32[16,128]{1,0:T(8,128)}', space=vmem, size = 0x2000, scoped, tag = 'scratch operand']
  #allocation4 [shape = 'f32[16,128]{1,0:T(8,128)}', space=vmem, size = 0x2000, scoped, tag = 'scratch operand']
  %s0 = inlined_call_operand.vmem [shape: bf16[128,256], index: 0, kind: input, shape index: {}]
  %s1 = inlined_call_operand.vmem [shape: bf16[2,256,512], index: 1, kind: input, shape index: {}]
  %s2 = inlined_call_operand.vmem [shape: bf16[2,128,512], index: 2, kind: input, shape index: {}]
  %s3 = inlined_call_operand.vmem [shape: f32[2,1,512], index: 3, kind: input, shape index: {}]
  %s4 = inlined_call_operand.hbm [shape: bf16[128,256], index: 4, kind: output, shape index: {0}]
  %s5 = inlined_call_operand.vmem [shape: f32[2,16,128], index: 5, kind: output, shape index: {1}]
  %s6 = inlined_call_operand.vmem [shape: f32[2,16,128], index: 6, kind: output, shape index: {2}]
  %7 = xla_tuple %s4, %s5, %s6
  %s8 = sld [smem:[#allocation0]]
  $region73: #{encoder_rnn_forward.3} parent=0
    _
  %s10 = ssub.s32 1, %s8
  %s11 = scalar_select 0, %s10, %s8
  $region1: #{encoder_rnn_forward.3} parent=0
    #allocation5 [shape = 'u8[65536]{0}', space=vmem, size = 0x10000, scoped, tag = 'output window, operand 0']
    #allocation6 [shape = 's32[2]{0}', space=sflag, size = 0x8, scoped, tag = 'scoped memory for encoder_rnn_forward.3']
    %12 = vsyncpa [#allocation6], 0
    %s13 = scalar_lea.sflag [#allocation6], 1
    %14 = vsyncpa %s13, 0
    loop: start=0, step=1, limit=4
    $region2: #{encoder_rnn_forward.3} parent=1 // loop_pre_header
      _
    $region3: #{encoder_rnn_forward.3} parent=1 // loop_header
      %s16 = sphi 0, %s20
      %p17 = scmp.ge.s32.totalorder %s16, 4
      %s23 = sphi 0, %s35
      %s24 = sphi 0, %s31
      %s25 = sphi 0, %s23
      %s26 = sphi 0, %s24
      %s27 = sphi 0, %s25
      %s28 = sphi 0, %s26
      %s46 = sphi 0, %s48
      %s49 = sphi 0, %s46
      %s50 = sphi 0, %s49
      %s66 = sphi 0, %s50
      %s72 = sphi 0, %s74
      %s75 = sphi 0, %s72
      %s76 = sphi 0, %s75
      %s92 = sphi 0, %s76
      %s98 = sphi 0, %s100
      %s101 = sphi 0, %s98
      %s102 = sphi 0, %s101
      %s118 = sphi 0, %s102
      %s124 = sphi 0, %s126
      %s127 = sphi 0, %s124
      %s128 = sphi 0, %s127
      %s144 = sphi 0, %s128
      %s160 = sphi 0, %s162
      %s163 = sphi 0, %s160
      %s164 = sphi 0, %s163
      %s180 = sphi 0, %s164
      %s186 = sphi 0, %s188
      %s189 = sphi 0, %s186
      %s190 = sphi 0, %s189
      %s206 = sphi 0, %s190
      %s212 = sphi 0, %s214
      %s215 = sphi 0, %s212
      %s216 = sphi 0, %s215
      %s232 = sphi 0, %s216
    $region4: #{encoder_rnn_forward.3} parent=1 // loop_header_branch
      %19 = sbr.rel (%p17) target = $region8
    $region5: #{encoder_rnn_forward.3} parent=1 // loop_body
      %s21 = ssub.s32 %s16, 1
      %s22 = ssub.s32 %s16, 2
      %s29 = sadd.s32 1, %s24
      %p30 = scmp.ge.s32.totalorder %s29, 1
      %s31 = scalar_select %p30, 0, %s29
      %s32 = sadd.s32 1, %s23
      %s33 = scalar_select %p30, %s32, %s23
      %p34 = scmp.ge.s32.totalorder %s33, 2
      %s35 = scalar_select %p34, 0, %s33
      %s36 = smul.u32 %s24, 2
      %s37 = ssub.s32 0, %s36
      %s38 = smul.u32 %s23, %s37
      %s39 = sadd.s32 %s24, %s38
      %s40 = smul.u32 %s31, 2
      %s41 = ssub.s32 0, %s40
      %s42 = smul.u32 %s35, %s41
      %s43 = sadd.s32 %s31, %s42
      %s44 = ssub.s32 %s39, %s43
      %p45 = scmp.eq.s32.totalorder %s44, 0
      %s47 = sadd.s32 %s46, 1
      %s48 = scalar_select %p45, %s46, %s47
      %p51 = pneg %p45
      %p52 = scmp.eq.s32.totalorder %s16, 1
      %p53 = por %p51, %p52
      %p54 = scmp.ne.s32.totalorder %s46, %s49
      %p55 = scmp.eq.s32.totalorder %s16, 0
      %p56 = por %p54, %p55
      %p57 = scmp.ne.s32.totalorder %s46, %s49
      %p58 = scmp.eq.s32.totalorder %s21, 1
      %p59 = por %p57, %p58
      %p60 = scmp.ne.s32.totalorder %s49, %s50
      %p61 = scmp.eq.s32.totalorder %s21, 0
      %p62 = por %p60, %p61
      %p63 = scmp.ne.s32.totalorder %s49, %s50
      %p64 = scmp.eq.s32.totalorder %s22, 1
      %p65 = por %p63, %p64
      %p67 = scmp.ne.s32.totalorder %s50, %s66
      %p68 = scmp.eq.s32.totalorder %s22, 0
      %p69 = por %p67, %p68
      %s70 = ssub.s32 %s23, %s35
      %p71 = scmp.eq.s32.totalorder %s70, 0
      %s73 = sadd.s32 %s72, 1
      %s74 = scalar_select %p71, %s72, %s73
      %p77 = pneg %p71
      %p78 = scmp.eq.s32.totalorder %s16, 1
      %p79 = por %p77, %p78
      %p80 = scmp.ne.s32.totalorder %s72, %s75
      %p81 = scmp.eq.s32.totalorder %s16, 0
      %p82 = por %p80, %p81
      %p83 = scmp.ne.s32.totalorder %s72, %s75
      %p84 = scmp.eq.s32.totalorder %s21, 1
      %p85 = por %p83, %p84
      %p86 = scmp.ne.s32.totalorder %s75, %s76
      %p87 = scmp.eq.s32.totalorder %s21, 0
      %p88 = por %p86, %p87
      %p89 = scmp.ne.s32.totalorder %s75, %s76
      %p90 = scmp.eq.s32.totalorder %s22, 1
      %p91 = por %p89, %p90
      %p93 = scmp.ne.s32.totalorder %s76, %s92
      %p94 = scmp.eq.s32.totalorder %s22, 0
      %p95 = por %p93, %p94
      %s96 = ssub.s32 %s23, %s35
      %p97 = scmp.eq.s32.totalorder %s96, 0
      %s99 = sadd.s32 %s98, 1
      %s100 = scalar_select %p97, %s98, %s99
      %p103 = pneg %p97
      %p104 = scmp.eq.s32.totalorder %s16, 1
      %p105 = por %p103, %p104
      %p106 = scmp.ne.s32.totalorder %s98, %s101
      %p107 = scmp.eq.s32.totalorder %s16, 0
      %p108 = por %p106, %p107
      %p109 = scmp.ne.s32.totalorder %s98, %s101
      %p110 = scmp.eq.s32.totalorder %s21, 1
      %p111 = por %p109, %p110
      %p112 = scmp.ne.s32.totalorder %s101, %s102
      %p113 = scmp.eq.s32.totalorder %s21, 0
      %p114 = por %p112, %p113
      %p115 = scmp.ne.s32.totalorder %s101, %s102
      %p116 = scmp.eq.s32.totalorder %s22, 1
      %p117 = por %p115, %p116
      %p119 = scmp.ne.s32.totalorder %s102, %s118
      %p120 = scmp.eq.s32.totalorder %s22, 0
      %p121 = por %p119, %p120
      %s122 = ssub.s32 %s23, %s35
      %p123 = scmp.eq.s32.totalorder %s122, 0
      %s125 = sadd.s32 %s124, 1
      %s126 = scalar_select %p123, %s124, %s125
      %p129 = pneg %p123
      %p130 = scmp.eq.s32.totalorder %s16, 1
      %p131 = por %p129, %p130
      %p132 = scmp.ne.s32.totalorder %s124, %s127
      %p133 = scmp.eq.s32.totalorder %s16, 0
      %p134 = por %p132, %p133
      %p135 = scmp.ne.s32.totalorder %s124, %s127
      %p136 = scmp.eq.s32.totalorder %s21, 1
      %p137 = por %p135, %p136
      %p138 = scmp.ne.s32.totalorder %s127, %s128
      %p139 = scmp.eq.s32.totalorder %s21, 0
      %p140 = por %p138, %p139
      %p141 = scmp.ne.s32.totalorder %s127, %s128
      %p142 = scmp.eq.s32.totalorder %s22, 1
      %p143 = por %p141, %p142
      %p145 = scmp.ne.s32.totalorder %s128, %s144
      %p146 = scmp.eq.s32.totalorder %s22, 0
      %p147 = por %p145, %p146
      %s148 = smul.u32 %s24, 2
      %s149 = ssub.s32 0, %s148
      %s150 = smul.u32 %s23, %s149
      %s151 = sadd.s32 %s24, %s150
      %s152 = smul.u32 %s31, 2
      %s153 = ssub.s32 0, %s152
      %s154 = smul.u32 %s35, %s153
      %s155 = sadd.s32 %s31, %s154
      %s156 = ssub.s32 %s151, %s155
      %s157 = ssub.s32 %s23, %s35
      %s158 = sor.u32 %s156, %s157
      %p159 = scmp.eq.s32.totalorder %s158, 0
      %s161 = sadd.s32 %s160, 1
      %s162 = scalar_select %p159, %s160, %s161
      %p165 = pneg %p159
      %p166 = scmp.eq.s32.totalorder %s16, 1
      %p167 = por %p165, %p166
      %p168 = scmp.ne.s32.totalorder %s160, %s163
      %p169 = scmp.eq.s32.totalorder %s16, 0
      %p170 = por %p168, %p169
      %p171 = scmp.ne.s32.totalorder %s160, %s163
      %p172 = scmp.eq.s32.totalorder %s21, 1
      %p173 = por %p171, %p172
      %p174 = scmp.ne.s32.totalorder %s163, %s164
      %p175 = scmp.eq.s32.totalorder %s21, 0
      %p176 = por %p174, %p175
      %p177 = scmp.ne.s32.totalorder %s163, %s164
      %p178 = scmp.eq.s32.totalorder %s22, 1
      %p179 = por %p177, %p178
      %p181 = scmp.ne.s32.totalorder %s164, %s180
      %p182 = scmp.eq.s32.totalorder %s22, 0
      %p183 = por %p181, %p182
      %s184 = ssub.s32 %s23, %s35
      %p185 = scmp.eq.s32.totalorder %s184, 0
      %s187 = sadd.s32 %s186, 1
      %s188 = scalar_select %p185, %s186, %s187
      %p191 = pneg %p185
      %p192 = scmp.eq.s32.totalorder %s16, 1
      %p193 = por %p191, %p192
      %p194 = scmp.ne.s32.totalorder %s186, %s189
      %p195 = scmp.eq.s32.totalorder %s16, 0
      %p196 = por %p194, %p195
      %p197 = scmp.ne.s32.totalorder %s186, %s189
      %p198 = scmp.eq.s32.totalorder %s21, 1
      %p199 = por %p197, %p198
      %p200 = scmp.ne.s32.totalorder %s189, %s190
      %p201 = scmp.eq.s32.totalorder %s21, 0
      %p202 = por %p200, %p201
      %p203 = scmp.ne.s32.totalorder %s189, %s190
      %p204 = scmp.eq.s32.totalorder %s22, 1
      %p205 = por %p203, %p204
      %p207 = scmp.ne.s32.totalorder %s190, %s206
      %p208 = scmp.eq.s32.totalorder %s22, 0
      %p209 = por %p207, %p208
      %s210 = ssub.s32 %s23, %s35
      %p211 = scmp.eq.s32.totalorder %s210, 0
      %s213 = sadd.s32 %s212, 1
      %s214 = scalar_select %p211, %s212, %s213
      %p217 = pneg %p211
      %p218 = scmp.eq.s32.totalorder %s16, 1
      %p219 = por %p217, %p218
      %p220 = scmp.ne.s32.totalorder %s212, %s215
      %p221 = scmp.eq.s32.totalorder %s16, 0
      %p222 = por %p220, %p221
      %p223 = scmp.ne.s32.totalorder %s212, %s215
      %p224 = scmp.eq.s32.totalorder %s21, 1
      %p225 = por %p223, %p224
      %p226 = scmp.ne.s32.totalorder %s215, %s216
      %p227 = scmp.eq.s32.totalorder %s21, 0
      %p228 = por %p226, %p227
      %p229 = scmp.ne.s32.totalorder %s215, %s216
      %p230 = scmp.eq.s32.totalorder %s22, 1
      %p231 = por %p229, %p230
      %p233 = scmp.ne.s32.totalorder %s216, %s232
      %p234 = scmp.eq.s32.totalorder %s22, 0
      %p235 = por %p233, %p234
      %p236 = scmp.le.s32.totalorder 1, %s16
      %p237 = scmp.lt.s32.totalorder %s16, 3
      %p238 = pnand %p236, %p237
      %p239 = pneg %p238
      // Predicated region
      $region9: #{encoder_rnn_forward.3} parent=5 // pred_check
        _
      $region10: #{encoder_rnn_forward.3} parent=5 // pred_check_branch
        %241 = sbr.rel (%p238) target = $region12
      $region11: #{encoder_rnn_forward.3} parent=5 // pred_region
        %s242 = ssub.s32 %s16, 1
      $region12: #{encoder_rnn_forward.3} parent=5 // pred_fallthru
        _
      %p243 = scmp.lt.s32.totalorder %s16, 2
      // Predicated region
      $region13: #{encoder_rnn_forward.3} parent=5 // pred_check
        %p244 = pneg %p243
      $region14: #{encoder_rnn_forward.3} parent=5 // pred_check_branch
        %246 = sbr.rel (%p244) target = $region16
      $region15: #{encoder_rnn_forward.3} parent=5 // pred_region
        // Predicated region
        $region17: #{encoder_rnn_forward.3} parent=15 // pred_check
          %p247 = pneg %p56
        $region18: #{encoder_rnn_forward.3} parent=15 // pred_check_branch
          %249 = sbr.rel (%p247) target = $region20
        $region19: #{encoder_rnn_forward.3} parent=15 // pred_region
          %s250 = smul.u32 %s24, 2
          %s251 = ssub.s32 0, %s250
          %s252 = smul.u32 %s23, %s251
          %s253 = sadd.s32 %s24, %s252
          %s254 = smul.u32 16, %s253
          %p255 = scmp.lt.s32.totalorder %s254, 15
          %s256 = scalar_select %p255, %s254, 15
          %s257 = smul.addr %s256, 2
          %s258 = smul.addr %s257, 4
          %s259 = scalar_lea.vmem %s0, %s258
          %s260 = smul.u32 %s24, 2
          %s261 = ssub.s32 0, %s260
          %s262 = smul.u32 %s23, %s261
          %s263 = sadd.s32 %s24, %s262
          %s264 = smul.u32 16, %s263
        $region20: #{encoder_rnn_forward.3} parent=15 // pred_fallthru
          _
        // Predicated region
        $region21: #{encoder_rnn_forward.3} parent=15 // pred_check
          %p265 = pneg %p82
        $region22: #{encoder_rnn_forward.3} parent=15 // pred_check_branch
          %267 = sbr.rel (%p265) target = $region24
        $region23: #{encoder_rnn_forward.3} parent=15 // pred_region
          %p268 = scmp.lt.s32.totalorder %s23, 1
          %s269 = scalar_select %p268, %s23, 1
          %s270 = smul.addr %s269, 128
          %s271 = smul.addr %s270, 4
          %s272 = scalar_lea.vmem %s1, %s271
        $region24: #{encoder_rnn_forward.3} parent=15 // pred_fallthru
          _
        // Predicated region
        $region25: #{encoder_rnn_forward.3} parent=15 // pred_check
          %p273 = pneg %p108
        $region26: #{encoder_rnn_forward.3} parent=15 // pred_check_branch
          %275 = sbr.rel (%p273) target = $region28
        $region27: #{encoder_rnn_forward.3} parent=15 // pred_region
          %p276 = scmp.lt.s32.totalorder %s23, 1
          %s277 = scalar_select %p276, %s23, 1
          %s278 = smul.addr %s277, 64
          %s279 = smul.addr %s278, 4
          %s280 = scalar_lea.vmem %s2, %s279
        $region28: #{encoder_rnn_forward.3} parent=15 // pred_fallthru
          _
        // Predicated region
        $region29: #{encoder_rnn_forward.3} parent=15 // pred_check
          %p281 = pneg %p134
        $region30: #{encoder_rnn_forward.3} parent=15 // pred_check_branch
          %283 = sbr.rel (%p281) target = $region32
        $region31: #{encoder_rnn_forward.3} parent=15 // pred_region
          %p284 = scmp.lt.s32.totalorder %s23, 1
          %s285 = scalar_select %p284, %s23, 1
          %s286 = smul.addr %s285, 4
          %s287 = scalar_lea.vmem %s3, %s286
        $region32: #{encoder_rnn_forward.3} parent=15 // pred_fallthru
          _
      $region16: #{encoder_rnn_forward.3} parent=5 // pred_fallthru
        _
      %p288 = scmp.le.s32.totalorder 1, %s16
      %p289 = scmp.lt.s32.totalorder %s16, 3
      %p290 = pnand %p288, %p289
      %p291 = pneg %p290
      // Predicated region
      $region33: #{encoder_rnn_forward.3} parent=5 // pred_check
        _
      $region34: #{encoder_rnn_forward.3} parent=5 // pred_check_branch
        %293 = sbr.rel (%p290) target = $region36
      $region35: #{encoder_rnn_forward.3} parent=5 // pred_region
        %s294 = ssub.s32 %s16, 1
        %s295 = smul.u32 %s26, 2
        %s296 = ssub.s32 0, %s295
        %s297 = smul.u32 %s25, %s296
        %s298 = sadd.s32 %s26, %s297
        %s299 = smul.u32 16, %s298
        %p300 = scmp.lt.s32.totalorder %s299, 15
        %s301 = scalar_select %p300, %s299, 15
        %s302 = smul.addr %s301, 2
        %s303 = smul.addr %s302, 4
        %s304 = scalar_lea.vmem %s0, %s303
        %p305 = pneg %p62
        %p306 = pneg %p59
        %p307 = scmp.lt.s32.totalorder %s25, 1
        %s308 = scalar_select %p307, %s25, 1
        %s309 = smul.addr %s308, 128
        %s310 = smul.addr %s309, 4
        %s311 = scalar_lea.vmem %s1, %s310
        %p312 = pneg %p88
        %p313 = pneg %p85
        %p314 = scmp.lt.s32.totalorder %s25, 1
        %s315 = scalar_select %p314, %s25, 1
        %s316 = smul.addr %s315, 64
        %s317 = smul.addr %s316, 4
        %s318 = scalar_lea.vmem %s2, %s317
        %p319 = pneg %p114
        %p320 = pneg %p111
        %p321 = scmp.lt.s32.totalorder %s25, 1
        %s322 = scalar_select %p321, %s25, 1
        %s323 = smul.addr %s322, 4
        %s324 = scalar_lea.vmem %s3, %s323
        %p325 = pneg %p140
        %p326 = pneg %p137
        %p327 = pneg %p176
        %p328 = pneg %p173
        %s329 = sand.u32 %s163, 1
        %s330 = scalar_lea.sflag [#allocation6], %s329
        %s331 = sand.u32 %s163, 1
        %s332 = smul.addr %s331, 64
        %s333 = scalar_lea.vmem [#allocation5], %s332
        %p334 = pneg %p202
        %p335 = pneg %p199
        %p336 = scmp.lt.s32.totalorder %s25, 1
        %s337 = scalar_select %p336, %s25, 1
        %s338 = smul.addr %s337, 2
        %s339 = smul.addr %s338, 8
        %s340 = scalar_lea.vmem %s5, %s339
        %p341 = pneg %p228
        %p342 = pneg %p225
        %p343 = scmp.lt.s32.totalorder %s25, 1
        %s344 = scalar_select %p343, %s25, 1
        %s345 = smul.addr %s344, 2
        %s346 = smul.addr %s345, 8
        %s347 = scalar_lea.vmem %s6, %s346
        %s348 = smul.u32 %s26, 2
        %s349 = ssub.s32 0, %s348
        %s350 = smul.u32 %s25, %s349
        %s351 = sadd.s32 %s26, %s350
        %s352 = smul.u32 16, %s351
        %p353 = scmp.lt.s32.totalorder %s352, 15
        %s354 = scalar_select %p353, %s352, 15
        %s355 = smul.addr %s354, 2
        %s356 = smul.addr %s355, 4
        %s357 = scalar_lea.vmem %s0, %s356
        %s358 = smul.u32 %s26, 2
        %s359 = ssub.s32 0, %s358
        %s360 = smul.u32 %s25, %s359
        %s361 = sadd.s32 %s26, %s360
        %s362 = smul.u32 16, %s361
        %p363 = scmp.lt.s32.totalorder %s25, 1
        %s364 = scalar_select %p363, %s25, 1
        %s365 = smul.addr %s364, 128
        %s366 = smul.addr %s365, 4
        %s367 = scalar_lea.vmem %s1, %s366
        %p368 = scmp.lt.s32.totalorder %s25, 1
        %s369 = scalar_select %p368, %s25, 1
        %s370 = smul.addr %s369, 64
        %s371 = smul.addr %s370, 4
        %s372 = scalar_lea.vmem %s2, %s371
        %p373 = scmp.lt.s32.totalorder %s25, 1
        %s374 = scalar_select %p373, %s25, 1
        %s375 = smul.addr %s374, 4
        %s376 = scalar_lea.vmem %s3, %s375
        %s377 = smul.u32 %s26, 2
        %s378 = ssub.s32 0, %s377
        %s379 = smul.u32 %s25, %s378
        %s380 = sadd.s32 %s26, %s379
        %s381 = smul.u32 16, %s380
        %p382 = scmp.lt.s32.totalorder %s25, 1
        %s383 = scalar_select %p382, %s25, 1
        %s384 = smul.addr %s383, 2
        %s385 = smul.addr %s384, 8
        %s386 = scalar_lea.vmem %s5, %s385
        %p387 = scmp.lt.s32.totalorder %s25, 1
        %s388 = scalar_select %p387, %s25, 1
        %s389 = smul.addr %s388, 2
        %s390 = smul.addr %s389, 8
        %s391 = scalar_lea.vmem %s6, %s390
        %p393 = scmp.eq.s32.totalorder %s26, 0
        // Predicated region
        $region37: #{encoder_rnn_forward.3} parent=35 // pred_check
          %p394 = pneg %p393
        $region38: #{encoder_rnn_forward.3} parent=35 // pred_check_branch
          %396 = sbr.rel (%p394) target = $region40
        $region39: #{encoder_rnn_forward.3} parent=35 // pred_region
          %397 = vst [vmem:[#allocation3] sm:$0xff] 0.0
          %398 = vst [vmem:[#allocation3 + $0x8] sm:$0xff] 0.0
          %399 = vst [vmem:[#allocation4] sm:$0xff] 0.0
          %400 = vst [vmem:[#allocation4 + $0x8] sm:$0xff] 0.0
        $region40: #{encoder_rnn_forward.3} parent=35 // pred_fallthru
          _
        %v401 = vld [vmem:[%s357] sm:$0xff]
        %v402 = vld [vmem:[%s357 + $0x8] sm:$0xff]
        %v403 = vld [vmem:[%s357 + $0x10] sm:$0xff]
        %v404 = vld [vmem:[%s357 + $0x18] sm:$0xff]
        %v405 = vld [vmem:[%s357 + $0x20] sm:$0xff]
        %v406 = vld [vmem:[%s357 + $0x28] sm:$0xff]
        %v407 = vld [vmem:[%s357 + $0x30] sm:$0xff]
        %v408 = vld [vmem:[%s357 + $0x38] sm:$0xff]
        %v409 = vld [vmem:[%s357 + $0x40] sm:$0xff]
        %v410 = vld [vmem:[%s357 + $0x48] sm:$0xff]
        %v411 = vld [vmem:[%s357 + $0x50] sm:$0xff]
        %v412 = vld [vmem:[%s357 + $0x58] sm:$0xff]
        %v413 = vld [vmem:[%s357 + $0x60] sm:$0xff]
        %v414 = vld [vmem:[%s357 + $0x68] sm:$0xff]
        %v415 = vld [vmem:[%s357 + $0x70] sm:$0xff]
        %v416 = vld [vmem:[%s357 + $0x78] sm:$0xff]
        %v417 = vld [vmem:[%s367] sm:$0xff]
        %v418 = vld [vmem:[%s367 + $0x8] sm:$0xff]
        %v419 = vld [vmem:[%s367 + $0x10] sm:$0xff]
        %v420 = vld [vmem:[%s367 + $0x18] sm:$0xff]
        %v421 = vld [vmem:[%s367 + $0x20] sm:$0xff]
        %v422 = vld [vmem:[%s367 + $0x28] sm:$0xff]
        %v423 = vld [vmem:[%s367 + $0x30] sm:$0xff]
        %v424 = vld [vmem:[%s367 + $0x38] sm:$0xff]
        %v425 = vld [vmem:[%s367 + $0x40] sm:$0xff]
        %v426 = vld [vmem:[%s367 + $0x48] sm:$0xff]
        %v427 = vld [vmem:[%s367 + $0x50] sm:$0xff]
        %v428 = vld [vmem:[%s367 + $0x58] sm:$0xff]
        %v429 = vld [vmem:[%s367 + $0x60] sm:$0xff]
        %v430 = vld [vmem:[%s367 + $0x68] sm:$0xff]
        %v431 = vld [vmem:[%s367 + $0x70] sm:$0xff]
        %v432 = vld [vmem:[%s367 + $0x78] sm:$0xff]
        %v433 = vld [vmem:[%s367 + $0x80] sm:$0xff]
        %v434 = vld [vmem:[%s367 + $0x88] sm:$0xff]
        %v435 = vld [vmem:[%s367 + $0x90] sm:$0xff]
        %v436 = vld [vmem:[%s367 + $0x98] sm:$0xff]
        %v437 = vld [vmem:[%s367 + $0xa0] sm:$0xff]
        %v438 = vld [vmem:[%s367 + $0xa8] sm:$0xff]
        %v439 = vld [vmem:[%s367 + $0xb0] sm:$0xff]
        %v440 = vld [vmem:[%s367 + $0xb8] sm:$0xff]
        %v441 = vld [vmem:[%s367 + $0xc0] sm:$0xff]
        %v442 = vld [vmem:[%s367 + $0xc8] sm:$0xff]
        %v443 = vld [vmem:[%s367 + $0xd0] sm:$0xff]
        %v444 = vld [vmem:[%s367 + $0xd8] sm:$0xff]
        %v445 = vld [vmem:[%s367 + $0xe0] sm:$0xff]
        %v446 = vld [vmem:[%s367 + $0xe8] sm:$0xff]
        %v447 = vld [vmem:[%s367 + $0xf0] sm:$0xff]
        %v448 = vld [vmem:[%s367 + $0xf8] sm:$0xff]
        %v449 = vld [vmem:[%s367 + $0x100] sm:$0xff]
        %v450 = vld [vmem:[%s367 + $0x108] sm:$0xff]
        %v451 = vld [vmem:[%s367 + $0x110] sm:$0xff]
        %v452 = vld [vmem:[%s367 + $0x118] sm:$0xff]
        %v453 = vld [vmem:[%s367 + $0x120] sm:$0xff]
        %v454 = vld [vmem:[%s367 + $0x128] sm:$0xff]
        %v455 = vld [vmem:[%s367 + $0x130] sm:$0xff]
        %v456 = vld [vmem:[%s367 + $0x138] sm:$0xff]
        %v457 = vld [vmem:[%s367 + $0x140] sm:$0xff]
        %v458 = vld [vmem:[%s367 + $0x148] sm:$0xff]
        %v459 = vld [vmem:[%s367 + $0x150] sm:$0xff]
        %v460 = vld [vmem:[%s367 + $0x158] sm:$0xff]
        %v461 = vld [vmem:[%s367 + $0x160] sm:$0xff]
        %v462 = vld [vmem:[%s367 + $0x168] sm:$0xff]
        %v463 = vld [vmem:[%s367 + $0x170] sm:$0xff]
        %v464 = vld [vmem:[%s367 + $0x178] sm:$0xff]
        %v465 = vld [vmem:[%s367 + $0x180] sm:$0xff]
        %v466 = vld [vmem:[%s367 + $0x188] sm:$0xff]
        %v467 = vld [vmem:[%s367 + $0x190] sm:$0xff]
        %v468 = vld [vmem:[%s367 + $0x198] sm:$0xff]
        %v469 = vld [vmem:[%s367 + $0x1a0] sm:$0xff]
        %v470 = vld [vmem:[%s367 + $0x1a8] sm:$0xff]
        %v471 = vld [vmem:[%s367 + $0x1b0] sm:$0xff]
        %v472 = vld [vmem:[%s367 + $0x1b8] sm:$0xff]
        %v473 = vld [vmem:[%s367 + $0x1c0] sm:$0xff]
        %v474 = vld [vmem:[%s367 + $0x1c8] sm:$0xff]
        %v475 = vld [vmem:[%s367 + $0x1d0] sm:$0xff]
        %v476 = vld [vmem:[%s367 + $0x1d8] sm:$0xff]
        %v477 = vld [vmem:[%s367 + $0x1e0] sm:$0xff]
        %v478 = vld [vmem:[%s367 + $0x1e8] sm:$0xff]
        %v479 = vld [vmem:[%s367 + $0x1f0] sm:$0xff]
        %v480 = vld [vmem:[%s367 + $0x1f8] sm:$0xff]
        %v481 = vld [vmem:[%s376] sm:$0xf]
        %v483 = vlaneseq
        %v484 = vshrl.u32 %v483, 7
        %v485 = vsub.s32 0, %v484
        %v486 = vrot.slane %v481, %v485
        %v487 = vlaneseq
        %v488 = vshrl.u32 %v487, 7
        %v489 = vsub.s32 1, %v488
        %v490 = vrot.slane %v481, %v489
        %v491 = vlaneseq
        %v492 = vshrl.u32 %v491, 7
        %v493 = vsub.s32 2, %v492
        %v494 = vrot.slane %v481, %v493
        %v495 = vlaneseq
        %v496 = vshrl.u32 %v495, 7
        %v497 = vsub.s32 3, %v496
        %v498 = vrot.slane %v481, %v497
        %v519 = vunpack.c.l.b16 %v401
        %v520 = vunpack.c.h.b16 %v401
        %v521 = vunpack.c.l.b16 %v402
        %v522 = vunpack.c.h.b16 %v402
        %v523 = vunpack.c.l.b16 %v403
        %v524 = vunpack.c.h.b16 %v403
        %v525 = vunpack.c.l.b16 %v404
        %v526 = vunpack.c.h.b16 %v404
        %v527 = vunpack.c.l.b16 %v405
        %v528 = vunpack.c.h.b16 %v405
        %v529 = vunpack.c.l.b16 %v406
        %v530 = vunpack.c.h.b16 %v406
        %v531 = vunpack.c.l.b16 %v407
        %v532 = vunpack.c.h.b16 %v407
        %v533 = vunpack.c.l.b16 %v408
        %v534 = vunpack.c.h.b16 %v408
        %v535 = vunpack.c.l.b16 %v409
        %v536 = vunpack.c.h.b16 %v409
        %v537 = vunpack.c.l.b16 %v410
        %v538 = vunpack.c.h.b16 %v410
        %v539 = vunpack.c.l.b16 %v411
        %v540 = vunpack.c.h.b16 %v411
        %v541 = vunpack.c.l.b16 %v412
        %v542 = vunpack.c.h.b16 %v412
        %v543 = vunpack.c.l.b16 %v413
        %v544 = vunpack.c.h.b16 %v413
        %v545 = vunpack.c.l.b16 %v414
        %v546 = vunpack.c.h.b16 %v414
        %v547 = vunpack.c.l.b16 %v415
        %v548 = vunpack.c.h.b16 %v415
        %v549 = vunpack.c.l.b16 %v416
        %v550 = vunpack.c.h.b16 %v416
        %v551 = vpack.c.b16 %v521, %v519
        %v552 = vpack.c.b16 %v522, %v520
        %v553 = vpack.c.b16 %v525, %v523
        %v554 = vpack.c.b16 %v526, %v524
        %v555 = vpack.c.b16 %v529, %v527
        %v556 = vpack.c.b16 %v530, %v528
        %v557 = vpack.c.b16 %v533, %v531
        %v558 = vpack.c.b16 %v534, %v532
        %v559 = vpack.c.b16 %v537, %v535
        %v560 = vpack.c.b16 %v538, %v536
        %v561 = vpack.c.b16 %v541, %v539
        %v562 = vpack.c.b16 %v542, %v540
        %v563 = vpack.c.b16 %v545, %v543
        %v564 = vpack.c.b16 %v546, %v544
        %v565 = vpack.c.b16 %v549, %v547
        %v566 = vpack.c.b16 %v550, %v548
        %v647 = vunpack.c.l.b16 %v417
        %v648 = vunpack.c.h.b16 %v417
        %v649 = vunpack.c.l.b16 %v418
        %v650 = vunpack.c.h.b16 %v418
        %v651 = vunpack.c.l.b16 %v419
        %v652 = vunpack.c.h.b16 %v419
        %v653 = vunpack.c.l.b16 %v420
        %v654 = vunpack.c.h.b16 %v420
        %v655 = vunpack.c.l.b16 %v421
        %v656 = vunpack.c.h.b16 %v421
        %v657 = vunpack.c.l.b16 %v422
        %v658 = vunpack.c.h.b16 %v422
        %v659 = vunpack.c.l.b16 %v423
        %v660 = vunpack.c.h.b16 %v423
        %v661 = vunpack.c.l.b16 %v424
        %v662 = vunpack.c.h.b16 %v424
        %v663 = vunpack.c.l.b16 %v425
        %v664 = vunpack.c.h.b16 %v425
        %v665 = vunpack.c.l.b16 %v426
        %v666 = vunpack.c.h.b16 %v426
        %v667 = vunpack.c.l.b16 %v427
        %v668 = vunpack.c.h.b16 %v427
        %v669 = vunpack.c.l.b16 %v428
        %v670 = vunpack.c.h.b16 %v428
        %v671 = vunpack.c.l.b16 %v429
        %v672 = vunpack.c.h.b16 %v429
        %v673 = vunpack.c.l.b16 %v430
        %v674 = vunpack.c.h.b16 %v430
        %v675 = vunpack.c.l.b16 %v431
        %v676 = vunpack.c.h.b16 %v431
        %v677 = vunpack.c.l.b16 %v432
        %v678 = vunpack.c.h.b16 %v432
        %v679 = vunpack.c.l.b16 %v433
        %v680 = vunpack.c.h.b16 %v433
        %v681 = vunpack.c.l.b16 %v434
        %v682 = vunpack.c.h.b16 %v434
        %v683 = vunpack.c.l.b16 %v435
        %v684 = vunpack.c.h.b16 %v435
        %v685 = vunpack.c.l.b16 %v436
        %v686 = vunpack.c.h.b16 %v436
        %v687 = vunpack.c.l.b16 %v437
        %v688 = vunpack.c.h.b16 %v437
        %v689 = vunpack.c.l.b16 %v438
        %v690 = vunpack.c.h.b16 %v438
        %v691 = vunpack.c.l.b16 %v439
        %v692 = vunpack.c.h.b16 %v439
        %v693 = vunpack.c.l.b16 %v440
        %v694 = vunpack.c.h.b16 %v440
        %v695 = vunpack.c.l.b16 %v441
        %v696 = vunpack.c.h.b16 %v441
        %v697 = vunpack.c.l.b16 %v442
        %v698 = vunpack.c.h.b16 %v442
        %v699 = vunpack.c.l.b16 %v443
        %v700 = vunpack.c.h.b16 %v443
        %v701 = vunpack.c.l.b16 %v444
        %v702 = vunpack.c.h.b16 %v444
        %v703 = vunpack.c.l.b16 %v445
        %v704 = vunpack.c.h.b16 %v445
        %v705 = vunpack.c.l.b16 %v446
        %v706 = vunpack.c.h.b16 %v446
        %v707 = vunpack.c.l.b16 %v447
        %v708 = vunpack.c.h.b16 %v447
        %v709 = vunpack.c.l.b16 %v448
        %v710 = vunpack.c.h.b16 %v448
        %v711 = vunpack.c.l.b16 %v449
        %v712 = vunpack.c.h.b16 %v449
        %v713 = vunpack.c.l.b16 %v450
        %v714 = vunpack.c.h.b16 %v450
        %v715 = vunpack.c.l.b16 %v451
        %v716 = vunpack.c.h.b16 %v451
        %v717 = vunpack.c.l.b16 %v452
        %v718 = vunpack.c.h.b16 %v452
        %v719 = vunpack.c.l.b16 %v453
        %v720 = vunpack.c.h.b16 %v453
        %v721 = vunpack.c.l.b16 %v454
        %v722 = vunpack.c.h.b16 %v454
        %v723 = vunpack.c.l.b16 %v455
        %v724 = vunpack.c.h.b16 %v455
        %v725 = vunpack.c.l.b16 %v456
        %v726 = vunpack.c.h.b16 %v456
        %v727 = vunpack.c.l.b16 %v457
        %v728 = vunpack.c.h.b16 %v457
        %v729 = vunpack.c.l.b16 %v458
        %v730 = vunpack.c.h.b16 %v458
        %v731 = vunpack.c.l.b16 %v459
        %v732 = vunpack.c.h.b16 %v459
        %v733 = vunpack.c.l.b16 %v460
        %v734 = vunpack.c.h.b16 %v460
        %v735 = vunpack.c.l.b16 %v461
        %v736 = vunpack.c.h.b16 %v461
        %v737 = vunpack.c.l.b16 %v462
        %v738 = vunpack.c.h.b16 %v462
        %v739 = vunpack.c.l.b16 %v463
        %v740 = vunpack.c.h.b16 %v463
        %v741 = vunpack.c.l.b16 %v464
        %v742 = vunpack.c.h.b16 %v464
        %v743 = vunpack.c.l.b16 %v465
        %v744 = vunpack.c.h.b16 %v465
        %v745 = vunpack.c.l.b16 %v466
        %v746 = vunpack.c.h.b16 %v466
        %v747 = vunpack.c.l.b16 %v467
        %v748 = vunpack.c.h.b16 %v467
        %v749 = vunpack.c.l.b16 %v468
        %v750 = vunpack.c.h.b16 %v468
        %v751 = vunpack.c.l.b16 %v469
        %v752 = vunpack.c.h.b16 %v469
        %v753 = vunpack.c.l.b16 %v470
        %v754 = vunpack.c.h.b16 %v470
        %v755 = vunpack.c.l.b16 %v471
        %v756 = vunpack.c.h.b16 %v471
        %v757 = vunpack.c.l.b16 %v472
        %v758 = vunpack.c.h.b16 %v472
        %v759 = vunpack.c.l.b16 %v473
        %v760 = vunpack.c.h.b16 %v473
        %v761 = vunpack.c.l.b16 %v474
        %v762 = vunpack.c.h.b16 %v474
        %v763 = vunpack.c.l.b16 %v475
        %v764 = vunpack.c.h.b16 %v475
        %v765 = vunpack.c.l.b16 %v476
        %v766 = vunpack.c.h.b16 %v476
        %v767 = vunpack.c.l.b16 %v477
        %v768 = vunpack.c.h.b16 %v477
        %v769 = vunpack.c.l.b16 %v478
        %v770 = vunpack.c.h.b16 %v478
        %v771 = vunpack.c.l.b16 %v479
        %v772 = vunpack.c.h.b16 %v479
        %v773 = vunpack.c.l.b16 %v480
        %v774 = vunpack.c.h.b16 %v480
        %v775 = vpack.c.b16 %v651, %v647
        %v776 = vpack.c.b16 %v652, %v648
        %v777 = vpack.c.b16 %v653, %v649
        %v778 = vpack.c.b16 %v654, %v650
        %v779 = vpack.c.b16 %v659, %v655
        %v780 = vpack.c.b16 %v660, %v656
        %v781 = vpack.c.b16 %v661, %v657
        %v782 = vpack.c.b16 %v662, %v658
        %v783 = vpack.c.b16 %v667, %v663
        %v784 = vpack.c.b16 %v668, %v664
        %v785 = vpack.c.b16 %v669, %v665
        %v786 = vpack.c.b16 %v670, %v666
        %v787 = vpack.c.b16 %v675, %v671
        %v788 = vpack.c.b16 %v676, %v672
        %v789 = vpack.c.b16 %v677, %v673
        %v790 = vpack.c.b16 %v678, %v674
        %v791 = vpack.c.b16 %v683, %v679
        %v792 = vpack.c.b16 %v684, %v680
        %v793 = vpack.c.b16 %v685, %v681
        %v794 = vpack.c.b16 %v686, %v682
        %v795 = vpack.c.b16 %v691, %v687
        %v796 = vpack.c.b16 %v692, %v688
        %v797 = vpack.c.b16 %v693, %v689
        %v798 = vpack.c.b16 %v694, %v690
        %v799 = vpack.c.b16 %v699, %v695
        %v800 = vpack.c.b16 %v700, %v696
        %v801 = vpack.c.b16 %v701, %v697
        %v802 = vpack.c.b16 %v702, %v698
        %v803 = vpack.c.b16 %v707, %v703
        %v804 = vpack.c.b16 %v708, %v704
        %v805 = vpack.c.b16 %v709, %v705
        %v806 = vpack.c.b16 %v710, %v706
        %v807 = vpack.c.b16 %v715, %v711
        %v808 = vpack.c.b16 %v716, %v712
        %v809 = vpack.c.b16 %v717, %v713
        %v810 = vpack.c.b16 %v718, %v714
        %v811 = vpack.c.b16 %v723, %v719
        %v812 = vpack.c.b16 %v724, %v720
        %v813 = vpack.c.b16 %v725, %v721
        %v814 = vpack.c.b16 %v726, %v722
        %v815 = vpack.c.b16 %v731, %v727
        %v816 = vpack.c.b16 %v732, %v728
        %v817 = vpack.c.b16 %v733, %v729
        %v818 = vpack.c.b16 %v734, %v730
        %v819 = vpack.c.b16 %v739, %v735
        %v820 = vpack.c.b16 %v740, %v736
        %v821 = vpack.c.b16 %v741, %v737
        %v822 = vpack.c.b16 %v742, %v738
        %v823 = vpack.c.b16 %v747, %v743
        %v824 = vpack.c.b16 %v748, %v744
        %v825 = vpack.c.b16 %v749, %v745
        %v826 = vpack.c.b16 %v750, %v746
        %v827 = vpack.c.b16 %v755, %v751
        %v828 = vpack.c.b16 %v756, %v752
        %v829 = vpack.c.b16 %v757, %v753
        %v830 = vpack.c.b16 %v758, %v754
        %v831 = vpack.c.b16 %v763, %v759
        %v832 = vpack.c.b16 %v764, %v760
        %v833 = vpack.c.b16 %v765, %v761
        %v834 = vpack.c.b16 %v766, %v762
        %v835 = vpack.c.b16 %v771, %v767
        %v836 = vpack.c.b16 %v772, %v768
        %v837 = vpack.c.b16 %v773, %v769
        %v838 = vpack.c.b16 %v774, %v770
        %903 = vmatprep.subr.bf16.mxu0 %v804
        %904 = vmatpush1.bf16.msra.mxu0 %v803
        %905 = vmatprep.subr.bf16.mxu0 %v800
        %906 = vmatpush1.bf16.msra.mxu0 %v799
        %907 = vmatprep.subr.bf16.mxu0 %v796
        %908 = vmatpush1.bf16.msra.mxu0 %v795
        %909 = vmatprep.subr.bf16.mxu0 %v792
        %910 = vmatpush1.bf16.msra.mxu0 %v791
        %911 = vmatprep.subr.bf16.mxu0 %v788
        %912 = vmatpush1.bf16.msra.mxu0 %v787
        %913 = vmatprep.subr.bf16.mxu0 %v784
        %914 = vmatpush1.bf16.msra.mxu0 %v783
        %915 = vmatprep.subr.bf16.mxu0 %v780
        %916 = vmatpush1.bf16.msra.mxu0 %v779
        %917 = vmatprep.subr.bf16.mxu0 %v776
        %918 = vmatpush1.bf16.msra.mxu0 %v775
        %919 = vmatprep.subr.bf16.mxu0 %v836
        %920 = vmatpush2.bf16.msra.mxu0 %v835
        %921 = vmatprep.subr.bf16.mxu0 %v832
        %922 = vmatpush2.bf16.msra.mxu0 %v831
        %923 = vmatprep.subr.bf16.mxu0 %v828
        %924 = vmatpush2.bf16.msra.mxu0 %v827
        %925 = vmatprep.subr.bf16.mxu0 %v824
        %926 = vmatpush2.bf16.msra.mxu0 %v823
        %927 = vmatprep.subr.bf16.mxu0 %v820
        %928 = vmatpush2.bf16.msra.mxu0 %v819
        %929 = vmatprep.subr.bf16.mxu0 %v816
        %930 = vmatpush2.bf16.msra.mxu0 %v815
        %931 = vmatprep.subr.bf16.mxu0 %v812
        %932 = vmatpush2.bf16.msra.mxu0 %v811
        %933 = vmatprep.subr.bf16.mxu0 %v808
        %934 = vmatpush2.bf16.msra.mxu0 %v807
        %935 = vmatprep.mubr.bf16.mxu0 %v552
        %936 = vmatmul.mubr.bf16.gmra.mxu0 %v551
        %v937 = vpop.f32.mrf.mxu0
        %v938 = vadd.f32 %v486, %v937
        %v939 = vpop.f32.mrf.mxu0
        %v940 = vadd.f32 %v490, %v939
        %v941 = vpop.f32.mrf.mxu0
        %v942 = vadd.f32 %v486, %v941
        %v943 = vpop.f32.mrf.mxu0
        %v944 = vadd.f32 %v490, %v943
        %945 = vmatprep.mubr.bf16.mxu0 %v554
        %946 = vmatmul.mubr.bf16.gmra.mxu0 %v553
        %v947 = vpop.f32.mrf.mxu0
        %v948 = vadd.f32 %v486, %v947
        %v949 = vpop.f32.mrf.mxu0
        %v950 = vadd.f32 %v490, %v949
        %v951 = vpop.f32.mrf.mxu0
        %v952 = vadd.f32 %v486, %v951
        %v953 = vpop.f32.mrf.mxu0
        %v954 = vadd.f32 %v490, %v953
        %955 = vmatprep.mubr.bf16.mxu0 %v556
        %956 = vmatmul.mubr.bf16.gmra.mxu0 %v555
        %v957 = vpop.f32.mrf.mxu0
        %v958 = vadd.f32 %v486, %v957
        %v959 = vpop.f32.mrf.mxu0
        %v960 = vadd.f32 %v490, %v959
        %v961 = vpop.f32.mrf.mxu0
        %v962 = vadd.f32 %v486, %v961
        %v963 = vpop.f32.mrf.mxu0
        %v964 = vadd.f32 %v490, %v963
        %965 = vmatprep.mubr.bf16.mxu0 %v558
        %966 = vmatmul.mubr.bf16.gmra.mxu0 %v557
        %v967 = vpop.f32.mrf.mxu0
        %v968 = vadd.f32 %v486, %v967
        %v969 = vpop.f32.mrf.mxu0
        %v970 = vadd.f32 %v490, %v969
        %v971 = vpop.f32.mrf.mxu0
        %v972 = vadd.f32 %v486, %v971
        %v973 = vpop.f32.mrf.mxu0
        %v974 = vadd.f32 %v490, %v973
        %975 = vmatprep.mubr.bf16.mxu0 %v560
        %976 = vmatmul.mubr.bf16.gmra.mxu0 %v559
        %v977 = vpop.f32.mrf.mxu0
        %v978 = vadd.f32 %v486, %v977
        %v979 = vpop.f32.mrf.mxu0
        %v980 = vadd.f32 %v490, %v979
        %v981 = vpop.f32.mrf.mxu0
        %v982 = vadd.f32 %v486, %v981
        %v983 = vpop.f32.mrf.mxu0
        %v984 = vadd.f32 %v490, %v983
        %985 = vmatprep.mubr.bf16.mxu0 %v562
        %986 = vmatmul.mubr.bf16.gmra.mxu0 %v561
        %v987 = vpop.f32.mrf.mxu0
        %v988 = vadd.f32 %v486, %v987
        %v989 = vpop.f32.mrf.mxu0
        %v990 = vadd.f32 %v490, %v989
        %v991 = vpop.f32.mrf.mxu0
        %v992 = vadd.f32 %v486, %v991
        %v993 = vpop.f32.mrf.mxu0
        %v994 = vadd.f32 %v490, %v993
        %995 = vmatprep.mubr.bf16.mxu0 %v564
        %996 = vmatmul.mubr.bf16.gmra.mxu0 %v563
        %v997 = vpop.f32.mrf.mxu0
        %v998 = vadd.f32 %v486, %v997
        %v999 = vpop.f32.mrf.mxu0
        %v1000 = vadd.f32 %v490, %v999
        %v1001 = vpop.f32.mrf.mxu0
        %v1002 = vadd.f32 %v486, %v1001
        %v1003 = vpop.f32.mrf.mxu0
        %v1004 = vadd.f32 %v490, %v1003
        %1005 = vmatprep.mubr.bf16.mxu0 %v566
        %1006 = vmatmul.mubr.bf16.gmra.mxu0 %v565
        %v1007 = vpop.f32.mrf.mxu0
        %v1008 = vadd.f32 %v486, %v1007
        %v1009 = vpop.f32.mrf.mxu0
        %v1010 = vadd.f32 %v490, %v1009
        %v1011 = vpop.f32.mrf.mxu0
        %v1012 = vadd.f32 %v486, %v1011
        %v1013 = vpop.f32.mrf.mxu0
        %v1014 = vadd.f32 %v490, %v1013
        %1015 = vdwg.mxu0
        %1016 = vmatprep.subr.bf16.mxu0 %v806
        %1017 = vmatpush1.bf16.msra.mxu0 %v805
        %1018 = vmatprep.subr.bf16.mxu0 %v802
        %1019 = vmatpush1.bf16.msra.mxu0 %v801
        %1020 = vmatprep.subr.bf16.mxu0 %v798
        %1021 = vmatpush1.bf16.msra.mxu0 %v797
        %1022 = vmatprep.subr.bf16.mxu0 %v794
        %1023 = vmatpush1.bf16.msra.mxu0 %v793
        %1024 = vmatprep.subr.bf16.mxu0 %v790
        %1025 = vmatpush1.bf16.msra.mxu0 %v789
        %1026 = vmatprep.subr.bf16.mxu0 %v786
        %1027 = vmatpush1.bf16.msra.mxu0 %v785
        %1028 = vmatprep.subr.bf16.mxu0 %v782
        %1029 = vmatpush1.bf16.msra.mxu0 %v781
        %1030 = vmatprep.subr.bf16.mxu0 %v778
        %1031 = vmatpush1.bf16.msra.mxu0 %v777
        %1032 = vmatprep.subr.bf16.mxu0 %v838
        %1033 = vmatpush2.bf16.msra.mxu0 %v837
        %1034 = vmatprep.subr.bf16.mxu0 %v834
        %1035 = vmatpush2.bf16.msra.mxu0 %v833
        %1036 = vmatprep.subr.bf16.mxu0 %v830
        %1037 = vmatpush2.bf16.msra.mxu0 %v829
        %1038 = vmatprep.subr.bf16.mxu0 %v826
        %1039 = vmatpush2.bf16.msra.mxu0 %v825
        %1040 = vmatprep.subr.bf16.mxu0 %v822
        %1041 = vmatpush2.bf16.msra.mxu0 %v821
        %1042 = vmatprep.subr.bf16.mxu0 %v818
        %1043 = vmatpush2.bf16.msra.mxu0 %v817
        %1044 = vmatprep.subr.bf16.mxu0 %v814
        %1045 = vmatpush2.bf16.msra.mxu0 %v813
        %1046 = vmatprep.subr.bf16.mxu0 %v810
        %1047 = vmatpush2.bf16.msra.mxu0 %v809
        %1048 = vmatprep.mubr.bf16.mxu0 %v552
        %1049 = vmatmul.mubr.bf16.gmra.mxu0 %v551
        %v1050 = vpop.f32.mrf.mxu0
        %v1051 = vadd.f32 %v494, %v1050
        %v1052 = vpop.f32.mrf.mxu0
        %v1053 = vadd.f32 %v498, %v1052
        %v1054 = vpop.f32.mrf.mxu0
        %v1055 = vadd.f32 %v494, %v1054
        %v1056 = vpop.f32.mrf.mxu0
        %v1057 = vadd.f32 %v498, %v1056
        %1058 = vmatprep.mubr.bf16.mxu0 %v554
        %1059 = vmatmul.mubr.bf16.gmra.mxu0 %v553
        %v1060 = vpop.f32.mrf.mxu0
        %v1061 = vadd.f32 %v494, %v1060
        %v1062 = vpop.f32.mrf.mxu0
        %v1063 = vadd.f32 %v498, %v1062
        %v1064 = vpop.f32.mrf.mxu0
        %v1065 = vadd.f32 %v494, %v1064
        %v1066 = vpop.f32.mrf.mxu0
        %v1067 = vadd.f32 %v498, %v1066
        %1068 = vmatprep.mubr.bf16.mxu0 %v556
        %1069 = vmatmul.mubr.bf16.gmra.mxu0 %v555
        %v1070 = vpop.f32.mrf.mxu0
        %v1071 = vadd.f32 %v494, %v1070
        %v1072 = vpop.f32.mrf.mxu0
        %v1073 = vadd.f32 %v498, %v1072
        %v1074 = vpop.f32.mrf.mxu0
        %v1075 = vadd.f32 %v494, %v1074
        %v1076 = vpop.f32.mrf.mxu0
        %v1077 = vadd.f32 %v498, %v1076
        %1078 = vmatprep.mubr.bf16.mxu0 %v558
        %1079 = vmatmul.mubr.bf16.gmra.mxu0 %v557
        %v1080 = vpop.f32.mrf.mxu0
        %v1081 = vadd.f32 %v494, %v1080
        %v1082 = vpop.f32.mrf.mxu0
        %v1083 = vadd.f32 %v498, %v1082
        %v1084 = vpop.f32.mrf.mxu0
        %v1085 = vadd.f32 %v494, %v1084
        %v1086 = vpop.f32.mrf.mxu0
        %v1087 = vadd.f32 %v498, %v1086
        %1088 = vmatprep.mubr.bf16.mxu0 %v560
        %1089 = vmatmul.mubr.bf16.gmra.mxu0 %v559
        %v1090 = vpop.f32.mrf.mxu0
        %v1091 = vadd.f32 %v494, %v1090
        %v1092 = vpop.f32.mrf.mxu0
        %v1093 = vadd.f32 %v498, %v1092
        %v1094 = vpop.f32.mrf.mxu0
        %v1095 = vadd.f32 %v494, %v1094
        %v1096 = vpop.f32.mrf.mxu0
        %v1097 = vadd.f32 %v498, %v1096
        %1098 = vmatprep.mubr.bf16.mxu0 %v562
        %1099 = vmatmul.mubr.bf16.gmra.mxu0 %v561
        %v1100 = vpop.f32.mrf.mxu0
        %v1101 = vadd.f32 %v494, %v1100
        %v1102 = vpop.f32.mrf.mxu0
        %v1103 = vadd.f32 %v498, %v1102
        %v1104 = vpop.f32.mrf.mxu0
        %v1105 = vadd.f32 %v494, %v1104
        %v1106 = vpop.f32.mrf.mxu0
        %v1107 = vadd.f32 %v498, %v1106
        %1108 = vmatprep.mubr.bf16.mxu0 %v564
        %1109 = vmatmul.mubr.bf16.gmra.mxu0 %v563
        %v1110 = vpop.f32.mrf.mxu0
        %v1111 = vadd.f32 %v494, %v1110
        %v1112 = vpop.f32.mrf.mxu0
        %v1113 = vadd.f32 %v498, %v1112
        %v1114 = vpop.f32.mrf.mxu0
        %v1115 = vadd.f32 %v494, %v1114
        %v1116 = vpop.f32.mrf.mxu0
        %v1117 = vadd.f32 %v498, %v1116
        %1118 = vmatprep.mubr.bf16.mxu0 %v566
        %1119 = vmatmul.mubr.bf16.gmra.mxu0 %v565
        %v1120 = vpop.f32.mrf.mxu0
        %v1121 = vadd.f32 %v494, %v1120
        %v1122 = vpop.f32.mrf.mxu0
        %v1123 = vadd.f32 %v498, %v1122
        %v1124 = vpop.f32.mrf.mxu0
        %v1125 = vadd.f32 %v494, %v1124
        %v1126 = vpop.f32.mrf.mxu0
        %v1127 = vadd.f32 %v498, %v1126
        %1128 = vdwg.mxu0
        %1129 = vst [vmem:[#allocation2] sm:$0xff] %v938
        %1130 = vst [vmem:[#allocation2 + $0x8] sm:$0xff] %v940
        %1131 = vst [vmem:[#allocation2 + $0x10] sm:$0xff] %v1051
        %1132 = vst [vmem:[#allocation2 + $0x18] sm:$0xff] %v1053
        %1133 = vst [vmem:[#allocation2 + $0x20] sm:$0xff] %v942
        %1134 = vst [vmem:[#allocation2 + $0x28] sm:$0xff] %v944
        %1135 = vst [vmem:[#allocation2 + $0x30] sm:$0xff] %v1055
        %1136 = vst [vmem:[#allocation2 + $0x38] sm:$0xff] %v1057
        %1137 = vst [vmem:[#allocation2 + $0x40] sm:$0xff] %v948
        %1138 = vst [vmem:[#allocation2 + $0x48] sm:$0xff] %v950
        %1139 = vst [vmem:[#allocation2 + $0x50] sm:$0xff] %v1061
        %1140 = vst [vmem:[#allocation2 + $0x58] sm:$0xff] %v1063
        %1141 = vst [vmem:[#allocation2 + $0x60] sm:$0xff] %v952
        %1142 = vst [vmem:[#allocation2 + $0x68] sm:$0xff] %v954
        %1143 = vst [vmem:[#allocation2 + $0x70] sm:$0xff] %v1065
        %1144 = vst [vmem:[#allocation2 + $0x78] sm:$0xff] %v1067
        %1145 = vst [vmem:[#allocation2 + $0x80] sm:$0xff] %v958
        %1146 = vst [vmem:[#allocation2 + $0x88] sm:$0xff] %v960
        %1147 = vst [vmem:[#allocation2 + $0x90] sm:$0xff] %v1071
        %1148 = vst [vmem:[#allocation2 + $0x98] sm:$0xff] %v1073
        %1149 = vst [vmem:[#allocation2 + $0xa0] sm:$0xff] %v962
        %1150 = vst [vmem:[#allocation2 + $0xa8] sm:$0xff] %v964
        %1151 = vst [vmem:[#allocation2 + $0xb0] sm:$0xff] %v1075
        %1152 = vst [vmem:[#allocation2 + $0xb8] sm:$0xff] %v1077
        %1153 = vst [vmem:[#allocation2 + $0xc0] sm:$0xff] %v968
        %1154 = vst [vmem:[#allocation2 + $0xc8] sm:$0xff] %v970
        %1155 = vst [vmem:[#allocation2 + $0xd0] sm:$0xff] %v1081
        %1156 = vst [vmem:[#allocation2 + $0xd8] sm:$0xff] %v1083
        %1157 = vst [vmem:[#allocation2 + $0xe0] sm:$0xff] %v972
        %1158 = vst [vmem:[#allocation2 + $0xe8] sm:$0xff] %v974
        %1159 = vst [vmem:[#allocation2 + $0xf0] sm:$0xff] %v1085
        %1160 = vst [vmem:[#allocation2 + $0xf8] sm:$0xff] %v1087
        %1161 = vst [vmem:[#allocation2 + $0x100] sm:$0xff] %v978
        %1162 = vst [vmem:[#allocation2 + $0x108] sm:$0xff] %v980
        %1163 = vst [vmem:[#allocation2 + $0x110] sm:$0xff] %v1091
        %1164 = vst [vmem:[#allocation2 + $0x118] sm:$0xff] %v1093
        %1165 = vst [vmem:[#allocation2 + $0x120] sm:$0xff] %v982
        %1166 = vst [vmem:[#allocation2 + $0x128] sm:$0xff] %v984
        %1167 = vst [vmem:[#allocation2 + $0x130] sm:$0xff] %v1095
        %1168 = vst [vmem:[#allocation2 + $0x138] sm:$0xff] %v1097
        %1169 = vst [vmem:[#allocation2 + $0x140] sm:$0xff] %v988
        %1170 = vst [vmem:[#allocation2 + $0x148] sm:$0xff] %v990
        %1171 = vst [vmem:[#allocation2 + $0x150] sm:$0xff] %v1101
        %1172 = vst [vmem:[#allocation2 + $0x158] sm:$0xff] %v1103
        %1173 = vst [vmem:[#allocation2 + $0x160] sm:$0xff] %v992
        %1174 = vst [vmem:[#allocation2 + $0x168] sm:$0xff] %v994
        %1175 = vst [vmem:[#allocation2 + $0x170] sm:$0xff] %v1105
        %1176 = vst [vmem:[#allocation2 + $0x178] sm:$0xff] %v1107
        %1177 = vst [vmem:[#allocation2 + $0x180] sm:$0xff] %v998
        %1178 = vst [vmem:[#allocation2 + $0x188] sm:$0xff] %v1000
        %1179 = vst [vmem:[#allocation2 + $0x190] sm:$0xff] %v1111
        %1180 = vst [vmem:[#allocation2 + $0x198] sm:$0xff] %v1113
        %1181 = vst [vmem:[#allocation2 + $0x1a0] sm:$0xff] %v1002
        %1182 = vst [vmem:[#allocation2 + $0x1a8] sm:$0xff] %v1004
        %1183 = vst [vmem:[#allocation2 + $0x1b0] sm:$0xff] %v1115
        %1184 = vst [vmem:[#allocation2 + $0x1b8] sm:$0xff] %v1117
        %1185 = vst [vmem:[#allocation2 + $0x1c0] sm:$0xff] %v1008
        %1186 = vst [vmem:[#allocation2 + $0x1c8] sm:$0xff] %v1010
        %1187 = vst [vmem:[#allocation2 + $0x1d0] sm:$0xff] %v1121
        %1188 = vst [vmem:[#allocation2 + $0x1d8] sm:$0xff] %v1123
        %1189 = vst [vmem:[#allocation2 + $0x1e0] sm:$0xff] %v1012
        %1190 = vst [vmem:[#allocation2 + $0x1e8] sm:$0xff] %v1014
        %1191 = vst [vmem:[#allocation2 + $0x1f0] sm:$0xff] %v1125
        %1192 = vst [vmem:[#allocation2 + $0x1f8] sm:$0xff] %v1127
        %v1193 = vld [vmem:[%s372] sm:$0xff]
        %v1194 = vld [vmem:[%s372 + $0x8] sm:$0xff]
        %v1195 = vld [vmem:[%s372 + $0x10] sm:$0xff]
        %v1196 = vld [vmem:[%s372 + $0x18] sm:$0xff]
        %v1197 = vld [vmem:[%s372 + $0x20] sm:$0xff]
        %v1198 = vld [vmem:[%s372 + $0x28] sm:$0xff]
        %v1199 = vld [vmem:[%s372 + $0x30] sm:$0xff]
        %v1200 = vld [vmem:[%s372 + $0x38] sm:$0xff]
        %v1201 = vld [vmem:[%s372 + $0x40] sm:$0xff]
        %v1202 = vld [vmem:[%s372 + $0x48] sm:$0xff]
        %v1203 = vld [vmem:[%s372 + $0x50] sm:$0xff]
        %v1204 = vld [vmem:[%s372 + $0x58] sm:$0xff]
        %v1205 = vld [vmem:[%s372 + $0x60] sm:$0xff]
        %v1206 = vld [vmem:[%s372 + $0x68] sm:$0xff]
        %v1207 = vld [vmem:[%s372 + $0x70] sm:$0xff]
        %v1208 = vld [vmem:[%s372 + $0x78] sm:$0xff]
        %v1209 = vld [vmem:[%s372 + $0x80] sm:$0xff]
        %v1210 = vld [vmem:[%s372 + $0x88] sm:$0xff]
        %v1211 = vld [vmem:[%s372 + $0x90] sm:$0xff]
        %v1212 = vld [vmem:[%s372 + $0x98] sm:$0xff]
        %v1213 = vld [vmem:[%s372 + $0xa0] sm:$0xff]
        %v1214 = vld [vmem:[%s372 + $0xa8] sm:$0xff]
        %v1215 = vld [vmem:[%s372 + $0xb0] sm:$0xff]
        %v1216 = vld [vmem:[%s372 + $0xb8] sm:$0xff]
        %v1217 = vld [vmem:[%s372 + $0xc0] sm:$0xff]
        %v1218 = vld [vmem:[%s372 + $0xc8] sm:$0xff]
        %v1219 = vld [vmem:[%s372 + $0xd0] sm:$0xff]
        %v1220 = vld [vmem:[%s372 + $0xd8] sm:$0xff]
        %v1221 = vld [vmem:[%s372 + $0xe0] sm:$0xff]
        %v1222 = vld [vmem:[%s372 + $0xe8] sm:$0xff]
        %v1223 = vld [vmem:[%s372 + $0xf0] sm:$0xff]
        %v1224 = vld [vmem:[%s372 + $0xf8] sm:$0xff]
        %v1225 = vld [vmem:[#allocation3] sm:$0xff]
        %v1226 = vld [vmem:[#allocation3 + $0x8] sm:$0xff]
        %v1227 = vld [vmem:[#allocation4] sm:$0xff]
        %v1228 = vld [vmem:[#allocation4 + $0x8] sm:$0xff]
        %s1229 = smul.u32 %s25, 112
        %s1230 = sshra.s32 %s1229, 3
        %s1231 = sand.u32 %s1229, 7
        %s1232 = smul.u32 %s1230, 4
        %s1233 = smul.addr %s1232, 8
        %s1234 = scalar_lea.vmem [#allocation2], %s1233
        %v1235 = vld [vmem:[%s1234] sm:$0xff]
        %v1236 = vld [vmem:[%s1234 + $0x8] sm:$0xff]
        %v1237 = vld [vmem:[%s1234 + $0x10] sm:$0xff]
        %v1238 = vld [vmem:[%s1234 + $0x18] sm:$0xff]
        %v1239 = vld [vmem:[%s1234 + $0x20] sm:$0xff]
        %v1240 = vld [vmem:[%s1234 + $0x28] sm:$0xff]
        %v1241 = vld [vmem:[%s1234 + $0x30] sm:$0xff]
        %v1242 = vld [vmem:[%s1234 + $0x38] sm:$0xff]
        %v1243 = vpack.c.bf16 %v1226, %v1225
        %v1276 = vunpack.c.l.b16 %v1193
        %v1277 = vunpack.c.h.b16 %v1193
        %v1278 = vunpack.c.l.b16 %v1194
        %v1279 = vunpack.c.h.b16 %v1194
        %v1280 = vunpack.c.l.b16 %v1195
        %v1281 = vunpack.c.h.b16 %v1195
        %v1282 = vunpack.c.l.b16 %v1196
        %v1283 = vunpack.c.h.b16 %v1196
        %v1284 = vunpack.c.l.b16 %v1197
        %v1285 = vunpack.c.h.b16 %v1197
        %v1286 = vunpack.c.l.b16 %v1198
        %v1287 = vunpack.c.h.b16 %v1198
        %v1288 = vunpack.c.l.b16 %v1199
        %v1289 = vunpack.c.h.b16 %v1199
        %v1290 = vunpack.c.l.b16 %v1200
        %v1291 = vunpack.c.h.b16 %v1200
        %v1292 = vunpack.c.l.b16 %v1201
        %v1293 = vunpack.c.h.b16 %v1201
        %v1294 = vunpack.c.l.b16 %v1202
        %v1295 = vunpack.c.h.b16 %v1202
        %v1296 = vunpack.c.l.b16 %v1203
        %v1297 = vunpack.c.h.b16 %v1203
        %v1298 = vunpack.c.l.b16 %v1204
        %v1299 = vunpack.c.h.b16 %v1204
        %v1300 = vunpack.c.l.b16 %v1205
        %v1301 = vunpack.c.h.b16 %v1205
        %v1302 = vunpack.c.l.b16 %v1206
        %v1303 = vunpack.c.h.b16 %v1206
        %v1304 = vunpack.c.l.b16 %v1207
        %v1305 = vunpack.c.h.b16 %v1207
        %v1306 = vunpack.c.l.b16 %v1208
        %v1307 = vunpack.c.h.b16 %v1208
        %v1308 = vunpack.c.l.b16 %v1209
        %v1309 = vunpack.c.h.b16 %v1209
        %v1310 = vunpack.c.l.b16 %v1210
        %v1311 = vunpack.c.h.b16 %v1210
        %v1312 = vunpack.c.l.b16 %v1211
        %v1313 = vunpack.c.h.b16 %v1211
        %v1314 = vunpack.c.l.b16 %v1212
        %v1315 = vunpack.c.h.b16 %v1212
        %v1316 = vunpack.c.l.b16 %v1213
        %v1317 = vunpack.c.h.b16 %v1213
        %v1318 = vunpack.c.l.b16 %v1214
        %v1319 = vunpack.c.h.b16 %v1214
        %v1320 = vunpack.c.l.b16 %v1215
        %v1321 = vunpack.c.h.b16 %v1215
        %v1322 = vunpack.c.l.b16 %v1216
        %v1323 = vunpack.c.h.b16 %v1216
        %v1324 = vunpack.c.l.b16 %v1217
        %v1325 = vunpack.c.h.b16 %v1217
        %v1326 = vunpack.c.l.b16 %v1218
        %v1327 = vunpack.c.h.b16 %v1218
        %v1328 = vunpack.c.l.b16 %v1219
        %v1329 = vunpack.c.h.b16 %v1219
        %v1330 = vunpack.c.l.b16 %v1220
        %v1331 = vunpack.c.h.b16 %v1220
        %v1332 = vunpack.c.l.b16 %v1221
        %v1333 = vunpack.c.h.b16 %v1221
        %v1334 = vunpack.c.l.b16 %v1222
        %v1335 = vunpack.c.h.b16 %v1222
        %v1336 = vunpack.c.l.b16 %v1223
        %v1337 = vunpack.c.h.b16 %v1223
        %v1338 = vunpack.c.l.b16 %v1224
        %v1339 = vunpack.c.h.b16 %v1224
        %v1340 = vpack.c.b16 %v1280, %v1276
        %v1341 = vpack.c.b16 %v1281, %v1277
        %v1342 = vpack.c.b16 %v1282, %v1278
        %v1343 = vpack.c.b16 %v1283, %v1279
        %v1344 = vpack.c.b16 %v1288, %v1284
        %v1345 = vpack.c.b16 %v1289, %v1285
        %v1346 = vpack.c.b16 %v1290, %v1286
        %v1347 = vpack.c.b16 %v1291, %v1287
        %v1348 = vpack.c.b16 %v1296, %v1292
        %v1349 = vpack.c.b16 %v1297, %v1293
        %v1350 = vpack.c.b16 %v1298, %v1294
        %v1351 = vpack.c.b16 %v1299, %v1295
        %v1352 = vpack.c.b16 %v1304, %v1300
        %v1353 = vpack.c.b16 %v1305, %v1301
        %v1354 = vpack.c.b16 %v1306, %v1302
        %v1355 = vpack.c.b16 %v1307, %v1303
        %v1356 = vpack.c.b16 %v1312, %v1308
        %v1357 = vpack.c.b16 %v1313, %v1309
        %v1358 = vpack.c.b16 %v1314, %v1310
        %v1359 = vpack.c.b16 %v1315, %v1311
        %v1360 = vpack.c.b16 %v1320, %v1316
        %v1361 = vpack.c.b16 %v1321, %v1317
        %v1362 = vpack.c.b16 %v1322, %v1318
        %v1363 = vpack.c.b16 %v1323, %v1319
        %v1364 = vpack.c.b16 %v1328, %v1324
        %v1365 = vpack.c.b16 %v1329, %v1325
        %v1366 = vpack.c.b16 %v1330, %v1326
        %v1367 = vpack.c.b16 %v1331, %v1327
        %v1368 = vpack.c.b16 %v1336, %v1332
        %v1369 = vpack.c.b16 %v1337, %v1333
        %v1370 = vpack.c.b16 %v1338, %v1334
        %v1371 = vpack.c.b16 %v1339, %v1335
        %1404 = vmatprep.subr.bf16.mxu0 %v1369
        %1405 = vmatpush1.bf16.msra.mxu0 %v1368
        %1406 = vmatprep.subr.bf16.mxu0 %v1365
        %1407 = vmatpush1.bf16.msra.mxu0 %v1364
        %1408 = vmatprep.subr.bf16.mxu0 %v1361
        %1409 = vmatpush1.bf16.msra.mxu0 %v1360
        %1410 = vmatprep.subr.bf16.mxu0 %v1357
        %1411 = vmatpush1.bf16.msra.mxu0 %v1356
        %1412 = vmatprep.subr.bf16.mxu0 %v1353
        %1413 = vmatpush1.bf16.msra.mxu0 %v1352
        %1414 = vmatprep.subr.bf16.mxu0 %v1349
        %1415 = vmatpush1.bf16.msra.mxu0 %v1348
        %1416 = vmatprep.subr.bf16.mxu0 %v1345
        %1417 = vmatpush1.bf16.msra.mxu0 %v1344
        %1418 = vmatprep.subr.bf16.mxu0 %v1341
        %1419 = vmatpush1.bf16.msra.mxu0 %v1340
        %1420 = vmatprep.subr.bf16.mxu0 0
        %1421 = vmatpush2.bf16.msra.mxu0 0
        %1422 = vmatprep.subr.bf16.mxu0 0
        %1423 = vmatpush2.bf16.msra.mxu0 0
        %1424 = vmatprep.subr.bf16.mxu0 0
        %1425 = vmatpush2.bf16.msra.mxu0 0
        %1426 = vmatprep.subr.bf16.mxu0 0
        %1427 = vmatpush2.bf16.msra.mxu0 0
        %1428 = vmatprep.subr.bf16.mxu0 0
        %1429 = vmatpush2.bf16.msra.mxu0 0
        %1430 = vmatprep.subr.bf16.mxu0 0
        %1431 = vmatpush2.bf16.msra.mxu0 0
        %1432 = vmatprep.subr.bf16.mxu0 0
        %1433 = vmatpush2.bf16.msra.mxu0 0
        %1434 = vmatprep.subr.bf16.mxu0 0
        %1435 = vmatpush2.bf16.msra.mxu0 0
        %1436 = vmatprep.mubr.bf16.mxu0 0
        %1437 = vmatmul.mubr.bf16.gmra.mxu0 %v1243
        %v1438 = vpop.f32.mrf.mxu0
        %v1439 = vadd.f32 0.0, %v1438
        %v1440 = vpop.f32.mrf.mxu0
        %v1441 = vadd.f32 0.0, %v1440
        %v1442 = vpop.f32.mrf.mxu0
        %v1443 = vadd.f32 0.0, %v1442
        %v1444 = vpop.f32.mrf.mxu0
        %v1445 = vadd.f32 0.0, %v1444
        %1446 = vdwg.mxu0
        %1447 = vmatprep.subr.bf16.mxu0 %v1371
        %1448 = vmatpush1.bf16.msra.mxu0 %v1370
        %1449 = vmatprep.subr.bf16.mxu0 %v1367
        %1450 = vmatpush1.bf16.msra.mxu0 %v1366
        %1451 = vmatprep.subr.bf16.mxu0 %v1363
        %1452 = vmatpush1.bf16.msra.mxu0 %v1362
        %1453 = vmatprep.subr.bf16.mxu0 %v1359
        %1454 = vmatpush1.bf16.msra.mxu0 %v1358
        %1455 = vmatprep.subr.bf16.mxu0 %v1355
        %1456 = vmatpush1.bf16.msra.mxu0 %v1354
        %1457 = vmatprep.subr.bf16.mxu0 %v1351
        %1458 = vmatpush1.bf16.msra.mxu0 %v1350
        %1459 = vmatprep.subr.bf16.mxu0 %v1347
        %1460 = vmatpush1.bf16.msra.mxu0 %v1346
        %1461 = vmatprep.subr.bf16.mxu0 %v1343
        %1462 = vmatpush1.bf16.msra.mxu0 %v1342
        %1463 = vmatprep.subr.bf16.mxu0 0
        %1464 = vmatpush2.bf16.msra.mxu0 0
        %1465 = vmatprep.subr.bf16.mxu0 0
        %1466 = vmatpush2.bf16.msra.mxu0 0
        %1467 = vmatprep.subr.bf16.mxu0 0
        %1468 = vmatpush2.bf16.msra.mxu0 0
        %1469 = vmatprep.subr.bf16.mxu0 0
        %1470 = vmatpush2.bf16.msra.mxu0 0
        %1471 = vmatprep.subr.bf16.mxu0 0
        %1472 = vmatpush2.bf16.msra.mxu0 0
        %1473 = vmatprep.subr.bf16.mxu0 0
        %1474 = vmatpush2.bf16.msra.mxu0 0
        %1475 = vmatprep.subr.bf16.mxu0 0
        %1476 = vmatpush2.bf16.msra.mxu0 0
        %1477 = vmatprep.subr.bf16.mxu0 0
        %1478 = vmatpush2.bf16.msra.mxu0 0
        %1479 = vmatprep.mubr.bf16.mxu0 0
        %1480 = vmatmul.mubr.bf16.gmra.mxu0 %v1243
        %v1481 = vpop.f32.mrf.mxu0
        %v1482 = vadd.f32 0.0, %v1481
        %v1483 = vpop.f32.mrf.mxu0
        %v1484 = vadd.f32 0.0, %v1483
        %v1485 = vpop.f32.mrf.mxu0
        %v1486 = vadd.f32 0.0, %v1485
        %v1487 = vpop.f32.mrf.mxu0
        %v1488 = vadd.f32 0.0, %v1487
        %1489 = vdwg.mxu0
        %v1490 = vadd.f32 %v1235, %v1439
        %v1491 = vadd.f32 %v1236, %v1441
        %v1492 = vadd.f32 %v1237, %v1482
        %v1493 = vadd.f32 %v1238, %v1484
        %v1494 = vadd.f32 %v1239, %v1443
        %v1495 = vadd.f32 %v1240, %v1445
        %v1496 = vadd.f32 %v1241, %v1486
        %v1497 = vadd.f32 %v1242, %v1488
        %v1498 = vxor.u32 %v1490, 2147483648
        %v1499 = vxor.u32 %v1494, 2147483648
        %v1500 = vmul.f32 %v1498, 1.442695
        %v1501 = vpow.pop %v1500
        %v1502 = vmul.f32 %v1499, 1.442695
        %v1503 = vpow.pop %v1502
        %v1504 = vadd.f32 %v1501, 1.0
        %v1505 = vadd.f32 %v1503, 1.0
        %v1506 = vrcp.pop %v1504
        %v1507 = vmul.f32 1.0, %v1506
        %v1508 = vrcp.pop %v1505
        %v1509 = vmul.f32 1.0, %v1508
        %v1510 = vxor.u32 %v1491, 2147483648
        %v1511 = vxor.u32 %v1495, 2147483648
        %v1512 = vmul.f32 %v1510, 1.442695
        %v1513 = vpow.pop %v1512
        %v1514 = vmul.f32 %v1511, 1.442695
        %v1515 = vpow.pop %v1514
        %v1516 = vadd.f32 %v1513, 1.0
        %v1517 = vadd.f32 %v1515, 1.0
        %v1518 = vrcp.pop %v1516
        %v1519 = vmul.f32 1.0, %v1518
        %v1520 = vrcp.pop %v1517
        %v1521 = vmul.f32 1.0, %v1520
        %v1522 = vtanh.pop %v1492
        %v1523 = vtanh.pop %v1496
        %v1524 = vxor.u32 %v1493, 2147483648
        %v1525 = vxor.u32 %v1497, 2147483648
        %v1526 = vmul.f32 %v1524, 1.442695
        %v1527 = vpow.pop %v1526
        %v1528 = vmul.f32 %v1525, 1.442695
        %v1529 = vpow.pop %v1528
        %v1530 = vadd.f32 %v1527, 1.0
        %v1531 = vadd.f32 %v1529, 1.0
        %v1532 = vrcp.pop %v1530
        %v1533 = vmul.f32 1.0, %v1532
        %v1534 = vrcp.pop %v1531
        %v1535 = vmul.f32 1.0, %v1534
        %v1536 = vmul.f32 %v1519, %v1227
        %v1537 = vmul.f32 %v1521, %v1228
        %v1538 = vmul.f32 %v1507, %v1522
        %v1539 = vmul.f32 %v1509, %v1523
        %v1540 = vadd.f32 %v1536, %v1538
        %v1541 = vadd.f32 %v1537, %v1539
        %v1542 = vtanh.pop %v1540
        %v1543 = vtanh.pop %v1541
        %v1544 = vmul.f32 %v1533, %v1542
        %v1545 = vmul.f32 %v1535, %v1543
        %v1546 = vpack.c.bf16 %v1545, %v1544
        %v1548 = vunpack.c.l.b16 %v1546
        %v1549 = vunpack.c.h.b16 %v1546
        %v1550 = vpack.c.b16 %v1548, %v1548
        %v1551 = vpack.c.b16 %v1549, %v1549
        %s1554 = smul.addr %s1230, 4
        %s1555 = scalar_lea.vmem %s333, %s1554 [#allocation5]
        %1556 = vst [vmem:[%s1555] sm:$0xf] %v1550
        %1557 = vst [vmem:[%s1555 + $0x4] sm:$0xf] %v1551
        %s1558 = smul.u32 %s25, 5
        %s1559 = sadd.s32 %s1558, 1
        %s1560 = smul.u32 %s1559, 16
        %s1561 = sshra.s32 %s1560, 3
        %s1562 = sand.u32 %s1560, 7
        %s1563 = smul.u32 %s1561, 4
        %s1564 = smul.addr %s1563, 8
        %s1565 = scalar_lea.vmem [#allocation2], %s1564
        %v1566 = vld [vmem:[%s1565] sm:$0xff]
        %v1567 = vld [vmem:[%s1565 + $0x8] sm:$0xff]
        %v1568 = vld [vmem:[%s1565 + $0x10] sm:$0xff]
        %v1569 = vld [vmem:[%s1565 + $0x18] sm:$0xff]
        %v1570 = vld [vmem:[%s1565 + $0x20] sm:$0xff]
        %v1571 = vld [vmem:[%s1565 + $0x28] sm:$0xff]
        %v1572 = vld [vmem:[%s1565 + $0x30] sm:$0xff]
        %v1573 = vld [vmem:[%s1565 + $0x38] sm:$0xff]
        %1574 = vmatprep.subr.bf16.mxu0 %v1369
        %1575 = vmatpush1.bf16.msra.mxu0 %v1368
        %1576 = vmatprep.subr.bf16.mxu0 %v1365
        %1577 = vmatpush1.bf16.msra.mxu0 %v1364
        %1578 = vmatprep.subr.bf16.mxu0 %v1361
        %1579 = vmatpush1.bf16.msra.mxu0 %v1360
        %1580 = vmatprep.subr.bf16.mxu0 %v1357
        %1581 = vmatpush1.bf16.msra.mxu0 %v1356
        %1582 = vmatprep.subr.bf16.mxu0 %v1353
        %1583 = vmatpush1.bf16.msra.mxu0 %v1352
        %1584 = vmatprep.subr.bf16.mxu0 %v1349
        %1585 = vmatpush1.bf16.msra.mxu0 %v1348
        %1586 = vmatprep.subr.bf16.mxu0 %v1345
        %1587 = vmatpush1.bf16.msra.mxu0 %v1344
        %1588 = vmatprep.subr.bf16.mxu0 %v1341
        %1589 = vmatpush1.bf16.msra.mxu0 %v1340
        %1590 = vmatprep.subr.bf16.mxu0 0
        %1591 = vmatpush2.bf16.msra.mxu0 0
        %1592 = vmatprep.subr.bf16.mxu0 0
        %1593 = vmatpush2.bf16.msra.mxu0 0
        %1594 = vmatprep.subr.bf16.mxu0 0
        %1595 = vmatpush2.bf16.msra.mxu0 0
        %1596 = vmatprep.subr.bf16.mxu0 0
        %1597 = vmatpush2.bf16.msra.mxu0 0
        %1598 = vmatprep.subr.bf16.mxu0 0
        %1599 = vmatpush2.bf16.msra.mxu0 0
        %1600 = vmatprep.subr.bf16.mxu0 0
        %1601 = vmatpush2.bf16.msra.mxu0 0
        %1602 = vmatprep.subr.bf16.mxu0 0
        %1603 = vmatpush2.bf16.msra.mxu0 0
        %1604 = vmatprep.subr.bf16.mxu0 0
        %1605 = vmatpush2.bf16.msra.mxu0 0
        %1606 = vmatprep.mubr.bf16.mxu0 0
        %1607 = vmatmul.mubr.bf16.gmra.mxu0 %v1546
        %v1608 = vpop.f32.mrf.mxu0
        %v1609 = vadd.f32 0.0, %v1608
        %v1610 = vpop.f32.mrf.mxu0
        %v1611 = vadd.f32 0.0, %v1610
        %v1612 = vpop.f32.mrf.mxu0
        %v1613 = vadd.f32 0.0, %v1612
        %v1614 = vpop.f32.mrf.mxu0
        %v1615 = vadd.f32 0.0, %v1614
        %1616 = vdwg.mxu0
        %1617 = vmatprep.subr.bf16.mxu0 %v1371
        %1618 = vmatpush1.bf16.msra.mxu0 %v1370
        %1619 = vmatprep.subr.bf16.mxu0 %v1367
        %1620 = vmatpush1.bf16.msra.mxu0 %v1366
        %1621 = vmatprep.subr.bf16.mxu0 %v1363
        %1622 = vmatpush1.bf16.msra.mxu0 %v1362
        %1623 = vmatprep.subr.bf16.mxu0 %v1359
        %1624 = vmatpush1.bf16.msra.mxu0 %v1358
        %1625 = vmatprep.subr.bf16.mxu0 %v1355
        %1626 = vmatpush1.bf16.msra.mxu0 %v1354
        %1627 = vmatprep.subr.bf16.mxu0 %v1351
        %1628 = vmatpush1.bf16.msra.mxu0 %v1350
        %1629 = vmatprep.subr.bf16.mxu0 %v1347
        %1630 = vmatpush1.bf16.msra.mxu0 %v1346
        %1631 = vmatprep.subr.bf16.mxu0 %v1343
        %1632 = vmatpush1.bf16.msra.mxu0 %v1342
        %1633 = vmatprep.subr.bf16.mxu0 0
        %1634 = vmatpush2.bf16.msra.mxu0 0
        %1635 = vmatprep.subr.bf16.mxu0 0
        %1636 = vmatpush2.bf16.msra.mxu0 0
        %1637 = vmatprep.subr.bf16.mxu0 0
        %1638 = vmatpush2.bf16.msra.mxu0 0
        %1639 = vmatprep.subr.bf16.mxu0 0
        %1640 = vmatpush2.bf16.msra.mxu0 0
        %1641 = vmatprep.subr.bf16.mxu0 0
        %1642 = vmatpush2.bf16.msra.mxu0 0
        %1643 = vmatprep.subr.bf16.mxu0 0
        %1644 = vmatpush2.bf16.msra.mxu0 0
        %1645 = vmatprep.subr.bf16.mxu0 0
        %1646 = vmatpush2.bf16.msra.mxu0 0
        %1647 = vmatprep.subr.bf16.mxu0 0
        %1648 = vmatpush2.bf16.msra.mxu0 0
        %1649 = vmatprep.mubr.bf16.mxu0 0
        %1650 = vmatmul.mubr.bf16.gmra.mxu0 %v1546
        %v1651 = vpop.f32.mrf.mxu0
        %v1652 = vadd.f32 0.0, %v1651
        %v1653 = vpop.f32.mrf.mxu0
        %v1654 = vadd.f32 0.0, %v1653
        %v1655 = vpop.f32.mrf.mxu0
        %v1656 = vadd.f32 0.0, %v1655
        %v1657 = vpop.f32.mrf.mxu0
        %v1658 = vadd.f32 0.0, %v1657
        %1659 = vdwg.mxu0
        %v1660 = vadd.f32 %v1566, %v1609
        %v1661 = vadd.f32 %v1567, %v1611
        %v1662 = vadd.f32 %v1568, %v1652
        %v1663 = vadd.f32 %v1569, %v1654
        %v1664 = vadd.f32 %v1570, %v1613
        %v1665 = vadd.f32 %v1571, %v1615
        %v1666 = vadd.f32 %v1572, %v1656
        %v1667 = vadd.f32 %v1573, %v1658
        %v1668 = vxor.u32 %v1660, 2147483648
        %v1669 = vxor.u32 %v1664, 2147483648
        %v1670 = vmul.f32 %v1668, 1.442695
        %v1671 = vpow.pop %v1670
        %v1672 = vmul.f32 %v1669, 1.442695
        %v1673 = vpow.pop %v1672
        %v1674 = vadd.f32 %v1671, 1.0
        %v1675 = vadd.f32 %v1673, 1.0
        %v1676 = vrcp.pop %v1674
        %v1677 = vmul.f32 1.0, %v1676
        %v1678 = vrcp.pop %v1675
        %v1679 = vmul.f32 1.0, %v1678
        %v1680 = vxor.u32 %v1661, 2147483648
        %v1681 = vxor.u32 %v1665, 2147483648
        %v1682 = vmul.f32 %v1680, 1.442695
        %v1683 = vpow.pop %v1682
        %v1684 = vmul.f32 %v1681, 1.442695
        %v1685 = vpow.pop %v1684
        %v1686 = vadd.f32 %v1683, 1.0
        %v1687 = vadd.f32 %v1685, 1.0
        %v1688 = vrcp.pop %v1686
        %v1689 = vmul.f32 1.0, %v1688
        %v1690 = vrcp.pop %v1687
        %v1691 = vmul.f32 1.0, %v1690
        %v1692 = vtanh.pop %v1662
        %v1693 = vtanh.pop %v1666
        %v1694 = vxor.u32 %v1663, 2147483648
        %v1695 = vxor.u32 %v1667, 2147483648
        %v1696 = vmul.f32 %v1694, 1.442695
        %v1697 = vpow.pop %v1696
        %v1698 = vmul.f32 %v1695, 1.442695
        %v1699 = vpow.pop %v1698
        %v1700 = vadd.f32 %v1697, 1.0
        %v1701 = vadd.f32 %v1699, 1.0
        %v1702 = vrcp.pop %v1700
        %v1703 = vmul.f32 1.0, %v1702
        %v1704 = vrcp.pop %v1701
        %v1705 = vmul.f32 1.0, %v1704
        %v1706 = vmul.f32 %v1689, %v1540
        %v1707 = vmul.f32 %v1691, %v1541
        %v1708 = vmul.f32 %v1677, %v1692
        %v1709 = vmul.f32 %v1679, %v1693
        %v1710 = vadd.f32 %v1706, %v1708
        %v1711 = vadd.f32 %v1707, %v1709
        %v1712 = vtanh.pop %v1710
        %v1713 = vtanh.pop %v1711
        %v1714 = vmul.f32 %v1703, %v1712
        %v1715 = vmul.f32 %v1705, %v1713
        %v1716 = vpack.c.bf16 %v1715, %v1714
        %v1718 = vunpack.c.l.b16 %v1716
        %v1719 = vunpack.c.h.b16 %v1716
        %v1720 = vpack.c.b16 %v1718, %v1718
        %v1721 = vpack.c.b16 %v1719, %v1719
        %s1724 = smul.addr %s1561, 4
        %s1725 = scalar_lea.vmem %s333, %s1724 [#allocation5]
        %1726 = vst [vmem:[%s1725] sm:$0xf] %v1720
        %1727 = vst [vmem:[%s1725 + $0x4] sm:$0xf] %v1721
        %s1728 = smul.u32 %s25, 3
        %s1729 = sadd.s32 %s1728, 2
        %s1730 = smul.u32 %s1729, 16
        %s1731 = sshra.s32 %s1730, 3
        %s1732 = sand.u32 %s1730, 7
        %s1733 = smul.u32 %s1731, 4
        %s1734 = smul.addr %s1733, 8
        %s1735 = scalar_lea.vmem [#allocation2], %s1734
        %v1736 = vld [vmem:[%s1735] sm:$0xff]
        %v1737 = vld [vmem:[%s1735 + $0x8] sm:$0xff]
        %v1738 = vld [vmem:[%s1735 + $0x10] sm:$0xff]
        %v1739 = vld [vmem:[%s1735 + $0x18] sm:$0xff]
        %v1740 = vld [vmem:[%s1735 + $0x20] sm:$0xff]
        %v1741 = vld [vmem:[%s1735 + $0x28] sm:$0xff]
        %v1742 = vld [vmem:[%s1735 + $0x30] sm:$0xff]
        %v1743 = vld [vmem:[%s1735 + $0x38] sm:$0xff]
        %1744 = vmatprep.subr.bf16.mxu0 %v1369
        %1745 = vmatpush1.bf16.msra.mxu0 %v1368
        %1746 = vmatprep.subr.bf16.mxu0 %v1365
        %1747 = vmatpush1.bf16.msra.mxu0 %v1364
        %1748 = vmatprep.subr.bf16.mxu0 %v1361
        %1749 = vmatpush1.bf16.msra.mxu0 %v1360
        %1750 = vmatprep.subr.bf16.mxu0 %v1357
        %1751 = vmatpush1.bf16.msra.mxu0 %v1356
        %1752 = vmatprep.subr.bf16.mxu0 %v1353
        %1753 = vmatpush1.bf16.msra.mxu0 %v1352
        %1754 = vmatprep.subr.bf16.mxu0 %v1349
        %1755 = vmatpush1.bf16.msra.mxu0 %v1348
        %1756 = vmatprep.subr.bf16.mxu0 %v1345
        %1757 = vmatpush1.bf16.msra.mxu0 %v1344
        %1758 = vmatprep.subr.bf16.mxu0 %v1341
        %1759 = vmatpush1.bf16.msra.mxu0 %v1340
        %1760 = vmatprep.subr.bf16.mxu0 0
        %1761 = vmatpush2.bf16.msra.mxu0 0
        %1762 = vmatprep.subr.bf16.mxu0 0
        %1763 = vmatpush2.bf16.msra.mxu0 0
        %1764 = vmatprep.subr.bf16.mxu0 0
        %1765 = vmatpush2.bf16.msra.mxu0 0
        %1766 = vmatprep.subr.bf16.mxu0 0
        %1767 = vmatpush2.bf16.msra.mxu0 0
        %1768 = vmatprep.subr.bf16.mxu0 0
        %1769 = vmatpush2.bf16.msra.mxu0 0
        %1770 = vmatprep.subr.bf16.mxu0 0
        %1771 = vmatpush2.bf16.msra.mxu0 0
        %1772 = vmatprep.subr.bf16.mxu0 0
        %1773 = vmatpush2.bf16.msra.mxu0 0
        %1774 = vmatprep.subr.bf16.mxu0 0
        %1775 = vmatpush2.bf16.msra.mxu0 0
        %1776 = vmatprep.mubr.bf16.mxu0 0
        %1777 = vmatmul.mubr.bf16.gmra.mxu0 %v1716
        %v1778 = vpop.f32.mrf.mxu0
        %v1779 = vadd.f32 0.0, %v1778
        %v1780 = vpop.f32.mrf.mxu0
        %v1781 = vadd.f32 0.0, %v1780
        %v1782 = vpop.f32.mrf.mxu0
        %v1783 = vadd.f32 0.0, %v1782
        %v1784 = vpop.f32.mrf.mxu0
        %v1785 = vadd.f32 0.0, %v1784
        %1786 = vdwg.mxu0
        %1787 = vmatprep.subr.bf16.mxu0 %v1371
        %1788 = vmatpush1.bf16.msra.mxu0 %v1370
        %1789 = vmatprep.subr.bf16.mxu0 %v1367
        %1790 = vmatpush1.bf16.msra.mxu0 %v1366
        %1791 = vmatprep.subr.bf16.mxu0 %v1363
        %1792 = vmatpush1.bf16.msra.mxu0 %v1362
        %1793 = vmatprep.subr.bf16.mxu0 %v1359
        %1794 = vmatpush1.bf16.msra.mxu0 %v1358
        %1795 = vmatprep.subr.bf16.mxu0 %v1355
        %1796 = vmatpush1.bf16.msra.mxu0 %v1354
        %1797 = vmatprep.subr.bf16.mxu0 %v1351
        %1798 = vmatpush1.bf16.msra.mxu0 %v1350
        %1799 = vmatprep.subr.bf16.mxu0 %v1347
        %1800 = vmatpush1.bf16.msra.mxu0 %v1346
        %1801 = vmatprep.subr.bf16.mxu0 %v1343
        %1802 = vmatpush1.bf16.msra.mxu0 %v1342
        %1803 = vmatprep.subr.bf16.mxu0 0
        %1804 = vmatpush2.bf16.msra.mxu0 0
        %1805 = vmatprep.subr.bf16.mxu0 0
        %1806 = vmatpush2.bf16.msra.mxu0 0
        %1807 = vmatprep.subr.bf16.mxu0 0
        %1808 = vmatpush2.bf16.msra.mxu0 0
        %1809 = vmatprep.subr.bf16.mxu0 0
        %1810 = vmatpush2.bf16.msra.mxu0 0
        %1811 = vmatprep.subr.bf16.mxu0 0
        %1812 = vmatpush2.bf16.msra.mxu0 0
        %1813 = vmatprep.subr.bf16.mxu0 0
        %1814 = vmatpush2.bf16.msra.mxu0 0
        %1815 = vmatprep.subr.bf16.mxu0 0
        %1816 = vmatpush2.bf16.msra.mxu0 0
        %1817 = vmatprep.subr.bf16.mxu0 0
        %1818 = vmatpush2.bf16.msra.mxu0 0
        %1819 = vmatprep.mubr.bf16.mxu0 0
        %1820 = vmatmul.mubr.bf16.gmra.mxu0 %v1716
        %v1821 = vpop.f32.mrf.mxu0
        %v1822 = vadd.f32 0.0, %v1821
        %v1823 = vpop.f32.mrf.mxu0
        %v1824 = vadd.f32 0.0, %v1823
        %v1825 = vpop.f32.mrf.mxu0
        %v1826 = vadd.f32 0.0, %v1825
        %v1827 = vpop.f32.mrf.mxu0
        %v1828 = vadd.f32 0.0, %v1827
        %1829 = vdwg.mxu0
        %v1830 = vadd.f32 %v1736, %v1779
        %v1831 = vadd.f32 %v1737, %v1781
        %v1832 = vadd.f32 %v1738, %v1822
        %v1833 = vadd.f32 %v1739, %v1824
        %v1834 = vadd.f32 %v1740, %v1783
        %v1835 = vadd.f32 %v1741, %v1785
        %v1836 = vadd.f32 %v1742, %v1826
        %v1837 = vadd.f32 %v1743, %v1828
        %v1838 = vxor.u32 %v1830, 2147483648
        %v1839 = vxor.u32 %v1834, 2147483648
        %v1840 = vmul.f32 %v1838, 1.442695
        %v1841 = vpow.pop %v1840
        %v1842 = vmul.f32 %v1839, 1.442695
        %v1843 = vpow.pop %v1842
        %v1844 = vadd.f32 %v1841, 1.0
        %v1845 = vadd.f32 %v1843, 1.0
        %v1846 = vrcp.pop %v1844
        %v1847 = vmul.f32 1.0, %v1846
        %v1848 = vrcp.pop %v1845
        %v1849 = vmul.f32 1.0, %v1848
        %v1850 = vxor.u32 %v1831, 2147483648
        %v1851 = vxor.u32 %v1835, 2147483648
        %v1852 = vmul.f32 %v1850, 1.442695
        %v1853 = vpow.pop %v1852
        %v1854 = vmul.f32 %v1851, 1.442695
        %v1855 = vpow.pop %v1854
        %v1856 = vadd.f32 %v1853, 1.0
        %v1857 = vadd.f32 %v1855, 1.0
        %v1858 = vrcp.pop %v1856
        %v1859 = vmul.f32 1.0, %v1858
        %v1860 = vrcp.pop %v1857
        %v1861 = vmul.f32 1.0, %v1860
        %v1862 = vtanh.pop %v1832
        %v1863 = vtanh.pop %v1836
        %v1864 = vxor.u32 %v1833, 2147483648
        %v1865 = vxor.u32 %v1837, 2147483648
        %v1866 = vmul.f32 %v1864, 1.442695
        %v1867 = vpow.pop %v1866
        %v1868 = vmul.f32 %v1865, 1.442695
        %v1869 = vpow.pop %v1868
        %v1870 = vadd.f32 %v1867, 1.0
        %v1871 = vadd.f32 %v1869, 1.0
        %v1872 = vrcp.pop %v1870
        %v1873 = vmul.f32 1.0, %v1872
        %v1874 = vrcp.pop %v1871
        %v1875 = vmul.f32 1.0, %v1874
        %v1876 = vmul.f32 %v1859, %v1710
        %v1877 = vmul.f32 %v1861, %v1711
        %v1878 = vmul.f32 %v1847, %v1862
        %v1879 = vmul.f32 %v1849, %v1863
        %v1880 = vadd.f32 %v1876, %v1878
        %v1881 = vadd.f32 %v1877, %v1879
        %v1882 = vtanh.pop %v1880
        %v1883 = vtanh.pop %v1881
        %v1884 = vmul.f32 %v1873, %v1882
        %v1885 = vmul.f32 %v1875, %v1883
        %v1886 = vpack.c.bf16 %v1885, %v1884
        %v1888 = vunpack.c.l.b16 %v1886
        %v1889 = vunpack.c.h.b16 %v1886
        %v1890 = vpack.c.b16 %v1888, %v1888
        %v1891 = vpack.c.b16 %v1889, %v1889
        %s1894 = smul.addr %s1731, 4
        %s1895 = scalar_lea.vmem %s333, %s1894 [#allocation5]
        %1896 = vst [vmem:[%s1895] sm:$0xf] %v1890
        %1897 = vst [vmem:[%s1895 + $0x4] sm:$0xf] %v1891
        %s1898 = sadd.s32 %s25, 3
        %s1899 = smul.u32 %s1898, 16
        %s1900 = sshra.s32 %s1899, 3
        %s1901 = sand.u32 %s1899, 7
        %s1902 = smul.u32 %s1900, 4
        %s1903 = smul.addr %s1902, 8
        %s1904 = scalar_lea.vmem [#allocation2], %s1903
        %v1905 = vld [vmem:[%s1904] sm:$0xff]
        %v1906 = vld [vmem:[%s1904 + $0x8] sm:$0xff]
        %v1907 = vld [vmem:[%s1904 + $0x10] sm:$0xff]
        %v1908 = vld [vmem:[%s1904 + $0x18] sm:$0xff]
        %v1909 = vld [vmem:[%s1904 + $0x20] sm:$0xff]
        %v1910 = vld [vmem:[%s1904 + $0x28] sm:$0xff]
        %v1911 = vld [vmem:[%s1904 + $0x30] sm:$0xff]
        %v1912 = vld [vmem:[%s1904 + $0x38] sm:$0xff]
        %1913 = vmatprep.subr.bf16.mxu0 %v1369
        %1914 = vmatpush1.bf16.msra.mxu0 %v1368
        %1915 = vmatprep.subr.bf16.mxu0 %v1365
        %1916 = vmatpush1.bf16.msra.mxu0 %v1364
        %1917 = vmatprep.subr.bf16.mxu0 %v1361
        %1918 = vmatpush1.bf16.msra.mxu0 %v1360
        %1919 = vmatprep.subr.bf16.mxu0 %v1357
        %1920 = vmatpush1.bf16.msra.mxu0 %v1356
        %1921 = vmatprep.subr.bf16.mxu0 %v1353
        %1922 = vmatpush1.bf16.msra.mxu0 %v1352
        %1923 = vmatprep.subr.bf16.mxu0 %v1349
        %1924 = vmatpush1.bf16.msra.mxu0 %v1348
        %1925 = vmatprep.subr.bf16.mxu0 %v1345
        %1926 = vmatpush1.bf16.msra.mxu0 %v1344
        %1927 = vmatprep.subr.bf16.mxu0 %v1341
        %1928 = vmatpush1.bf16.msra.mxu0 %v1340
        %1929 = vmatprep.subr.bf16.mxu0 0
        %1930 = vmatpush2.bf16.msra.mxu0 0
        %1931 = vmatprep.subr.bf16.mxu0 0
        %1932 = vmatpush2.bf16.msra.mxu0 0
        %1933 = vmatprep.subr.bf16.mxu0 0
        %1934 = vmatpush2.bf16.msra.mxu0 0
        %1935 = vmatprep.subr.bf16.mxu0 0
        %1936 = vmatpush2.bf16.msra.mxu0 0
        %1937 = vmatprep.subr.bf16.mxu0 0
        %1938 = vmatpush2.bf16.msra.mxu0 0
        %1939 = vmatprep.subr.bf16.mxu0 0
        %1940 = vmatpush2.bf16.msra.mxu0 0
        %1941 = vmatprep.subr.bf16.mxu0 0
        %1942 = vmatpush2.bf16.msra.mxu0 0
        %1943 = vmatprep.subr.bf16.mxu0 0
        %1944 = vmatpush2.bf16.msra.mxu0 0
        %1945 = vmatprep.mubr.bf16.mxu0 0
        %1946 = vmatmul.mubr.bf16.gmra.mxu0 %v1886
        %v1947 = vpop.f32.mrf.mxu0
        %v1948 = vadd.f32 0.0, %v1947
        %v1949 = vpop.f32.mrf.mxu0
        %v1950 = vadd.f32 0.0, %v1949
        %v1951 = vpop.f32.mrf.mxu0
        %v1952 = vadd.f32 0.0, %v1951
        %v1953 = vpop.f32.mrf.mxu0
        %v1954 = vadd.f32 0.0, %v1953
        %1955 = vdwg.mxu0
        %1956 = vmatprep.subr.bf16.mxu0 %v1371
        %1957 = vmatpush1.bf16.msra.mxu0 %v1370
        %1958 = vmatprep.subr.bf16.mxu0 %v1367
        %1959 = vmatpush1.bf16.msra.mxu0 %v1366
        %1960 = vmatprep.subr.bf16.mxu0 %v1363
        %1961 = vmatpush1.bf16.msra.mxu0 %v1362
        %1962 = vmatprep.subr.bf16.mxu0 %v1359
        %1963 = vmatpush1.bf16.msra.mxu0 %v1358
        %1964 = vmatprep.subr.bf16.mxu0 %v1355
        %1965 = vmatpush1.bf16.msra.mxu0 %v1354
        %1966 = vmatprep.subr.bf16.mxu0 %v1351
        %1967 = vmatpush1.bf16.msra.mxu0 %v1350
        %1968 = vmatprep.subr.bf16.mxu0 %v1347
        %1969 = vmatpush1.bf16.msra.mxu0 %v1346
        %1970 = vmatprep.subr.bf16.mxu0 %v1343
        %1971 = vmatpush1.bf16.msra.mxu0 %v1342
        %1972 = vmatprep.subr.bf16.mxu0 0
        %1973 = vmatpush2.bf16.msra.mxu0 0
        %1974 = vmatprep.subr.bf16.mxu0 0
        %1975 = vmatpush2.bf16.msra.mxu0 0
        %1976 = vmatprep.subr.bf16.mxu0 0
        %1977 = vmatpush2.bf16.msra.mxu0 0
        %1978 = vmatprep.subr.bf16.mxu0 0
        %1979 = vmatpush2.bf16.msra.mxu0 0
        %1980 = vmatprep.subr.bf16.mxu0 0
        %1981 = vmatpush2.bf16.msra.mxu0 0
        %1982 = vmatprep.subr.bf16.mxu0 0
        %1983 = vmatpush2.bf16.msra.mxu0 0
        %1984 = vmatprep.subr.bf16.mxu0 0
        %1985 = vmatpush2.bf16.msra.mxu0 0
        %1986 = vmatprep.subr.bf16.mxu0 0
        %1987 = vmatpush2.bf16.msra.mxu0 0
        %1988 = vmatprep.mubr.bf16.mxu0 0
        %1989 = vmatmul.mubr.bf16.gmra.mxu0 %v1886
        %v1990 = vpop.f32.mrf.mxu0
        %v1991 = vadd.f32 0.0, %v1990
        %v1992 = vpop.f32.mrf.mxu0
        %v1993 = vadd.f32 0.0, %v1992
        %v1994 = vpop.f32.mrf.mxu0
        %v1995 = vadd.f32 0.0, %v1994
        %v1996 = vpop.f32.mrf.mxu0
        %v1997 = vadd.f32 0.0, %v1996
        %1998 = vdwg.mxu0
        %v1999 = vadd.f32 %v1905, %v1948
        %v2000 = vadd.f32 %v1906, %v1950
        %v2001 = vadd.f32 %v1907, %v1991
        %v2002 = vadd.f32 %v1908, %v1993
        %v2003 = vadd.f32 %v1909, %v1952
        %v2004 = vadd.f32 %v1910, %v1954
        %v2005 = vadd.f32 %v1911, %v1995
        %v2006 = vadd.f32 %v1912, %v1997
        %v2007 = vxor.u32 %v1999, 2147483648
        %v2008 = vxor.u32 %v2003, 2147483648
        %v2009 = vmul.f32 %v2007, 1.442695
        %v2010 = vpow.pop %v2009
        %v2011 = vmul.f32 %v2008, 1.442695
        %v2012 = vpow.pop %v2011
        %v2013 = vadd.f32 %v2010, 1.0
        %v2014 = vadd.f32 %v2012, 1.0
        %v2015 = vrcp.pop %v2013
        %v2016 = vmul.f32 1.0, %v2015
        %v2017 = vrcp.pop %v2014
        %v2018 = vmul.f32 1.0, %v2017
        %v2019 = vxor.u32 %v2000, 2147483648
        %v2020 = vxor.u32 %v2004, 2147483648
        %v2021 = vmul.f32 %v2019, 1.442695
        %v2022 = vpow.pop %v2021
        %v2023 = vmul.f32 %v2020, 1.442695
        %v2024 = vpow.pop %v2023
        %v2025 = vadd.f32 %v2022, 1.0
        %v2026 = vadd.f32 %v2024, 1.0
        %v2027 = vrcp.pop %v2025
        %v2028 = vmul.f32 1.0, %v2027
        %v2029 = vrcp.pop %v2026
        %v2030 = vmul.f32 1.0, %v2029
        %v2031 = vtanh.pop %v2001
        %v2032 = vtanh.pop %v2005
        %v2033 = vxor.u32 %v2002, 2147483648
        %v2034 = vxor.u32 %v2006, 2147483648
        %v2035 = vmul.f32 %v2033, 1.442695
        %v2036 = vpow.pop %v2035
        %v2037 = vmul.f32 %v2034, 1.442695
        %v2038 = vpow.pop %v2037
        %v2039 = vadd.f32 %v2036, 1.0
        %v2040 = vadd.f32 %v2038, 1.0
        %v2041 = vrcp.pop %v2039
        %v2042 = vmul.f32 1.0, %v2041
        %v2043 = vrcp.pop %v2040
        %v2044 = vmul.f32 1.0, %v2043
        %v2045 = vmul.f32 %v2028, %v1880
        %v2046 = vmul.f32 %v2030, %v1881
        %v2047 = vmul.f32 %v2016, %v2031
        %v2048 = vmul.f32 %v2018, %v2032
        %v2049 = vadd.f32 %v2045, %v2047
        %v2050 = vadd.f32 %v2046, %v2048
        %v2051 = vtanh.pop %v2049
        %v2052 = vtanh.pop %v2050
        %v2053 = vmul.f32 %v2042, %v2051
        %v2054 = vmul.f32 %v2044, %v2052
        %v2055 = vpack.c.bf16 %v2054, %v2053
        %v2057 = vunpack.c.l.b16 %v2055
        %v2058 = vunpack.c.h.b16 %v2055
        %v2059 = vpack.c.b16 %v2057, %v2057
        %v2060 = vpack.c.b16 %v2058, %v2058
        %s2063 = smul.addr %s1900, 4
        %s2064 = scalar_lea.vmem %s333, %s2063 [#allocation5]
        %2065 = vst [vmem:[%s2064] sm:$0xf] %v2059
        %2066 = vst [vmem:[%s2064 + $0x4] sm:$0xf] %v2060
        %s2067 = ssub.s32 4, %s25
        %s2068 = smul.u32 %s2067, 16
        %s2069 = sshra.s32 %s2068, 3
        %s2070 = sand.u32 %s2068, 7
        %s2071 = smul.u32 %s2069, 4
        %s2072 = smul.addr %s2071, 8
        %s2073 = scalar_lea.vmem [#allocation2], %s2072
        %v2074 = vld [vmem:[%s2073] sm:$0xff]
        %v2075 = vld [vmem:[%s2073 + $0x8] sm:$0xff]
        %v2076 = vld [vmem:[%s2073 + $0x10] sm:$0xff]
        %v2077 = vld [vmem:[%s2073 + $0x18] sm:$0xff]
        %v2078 = vld [vmem:[%s2073 + $0x20] sm:$0xff]
        %v2079 = vld [vmem:[%s2073 + $0x28] sm:$0xff]
        %v2080 = vld [vmem:[%s2073 + $0x30] sm:$0xff]
        %v2081 = vld [vmem:[%s2073 + $0x38] sm:$0xff]
        %2082 = vmatprep.subr.bf16.mxu0 %v1369
        %2083 = vmatpush1.bf16.msra.mxu0 %v1368
        %2084 = vmatprep.subr.bf16.mxu0 %v1365
        %2085 = vmatpush1.bf16.msra.mxu0 %v1364
        %2086 = vmatprep.subr.bf16.mxu0 %v1361
        %2087 = vmatpush1.bf16.msra.mxu0 %v1360
        %2088 = vmatprep.subr.bf16.mxu0 %v1357
        %2089 = vmatpush1.bf16.msra.mxu0 %v1356
        %2090 = vmatprep.subr.bf16.mxu0 %v1353
        %2091 = vmatpush1.bf16.msra.mxu0 %v1352
        %2092 = vmatprep.subr.bf16.mxu0 %v1349
        %2093 = vmatpush1.bf16.msra.mxu0 %v1348
        %2094 = vmatprep.subr.bf16.mxu0 %v1345
        %2095 = vmatpush1.bf16.msra.mxu0 %v1344
        %2096 = vmatprep.subr.bf16.mxu0 %v1341
        %2097 = vmatpush1.bf16.msra.mxu0 %v1340
        %2098 = vmatprep.subr.bf16.mxu0 0
        %2099 = vmatpush2.bf16.msra.mxu0 0
        %2100 = vmatprep.subr.bf16.mxu0 0
        %2101 = vmatpush2.bf16.msra.mxu0 0
        %2102 = vmatprep.subr.bf16.mxu0 0
        %2103 = vmatpush2.bf16.msra.mxu0 0
        %2104 = vmatprep.subr.bf16.mxu0 0
        %2105 = vmatpush2.bf16.msra.mxu0 0
        %2106 = vmatprep.subr.bf16.mxu0 0
        %2107 = vmatpush2.bf16.msra.mxu0 0
        %2108 = vmatprep.subr.bf16.mxu0 0
        %2109 = vmatpush2.bf16.msra.mxu0 0
        %2110 = vmatprep.subr.bf16.mxu0 0
        %2111 = vmatpush2.bf16.msra.mxu0 0
        %2112 = vmatprep.subr.bf16.mxu0 0
        %2113 = vmatpush2.bf16.msra.mxu0 0
        %2114 = vmatprep.mubr.bf16.mxu0 0
        %2115 = vmatmul.mubr.bf16.gmra.mxu0 %v2055
        %v2116 = vpop.f32.mrf.mxu0
        %v2117 = vadd.f32 0.0, %v2116
        %v2118 = vpop.f32.mrf.mxu0
        %v2119 = vadd.f32 0.0, %v2118
        %v2120 = vpop.f32.mrf.mxu0
        %v2121 = vadd.f32 0.0, %v2120
        %v2122 = vpop.f32.mrf.mxu0
        %v2123 = vadd.f32 0.0, %v2122
        %2124 = vdwg.mxu0
        %2125 = vmatprep.subr.bf16.mxu0 %v1371
        %2126 = vmatpush1.bf16.msra.mxu0 %v1370
        %2127 = vmatprep.subr.bf16.mxu0 %v1367
        %2128 = vmatpush1.bf16.msra.mxu0 %v1366
        %2129 = vmatprep.subr.bf16.mxu0 %v1363
        %2130 = vmatpush1.bf16.msra.mxu0 %v1362
        %2131 = vmatprep.subr.bf16.mxu0 %v1359
        %2132 = vmatpush1.bf16.msra.mxu0 %v1358
        %2133 = vmatprep.subr.bf16.mxu0 %v1355
        %2134 = vmatpush1.bf16.msra.mxu0 %v1354
        %2135 = vmatprep.subr.bf16.mxu0 %v1351
        %2136 = vmatpush1.bf16.msra.mxu0 %v1350
        %2137 = vmatprep.subr.bf16.mxu0 %v1347
        %2138 = vmatpush1.bf16.msra.mxu0 %v1346
        %2139 = vmatprep.subr.bf16.mxu0 %v1343
        %2140 = vmatpush1.bf16.msra.mxu0 %v1342
        %2141 = vmatprep.subr.bf16.mxu0 0
        %2142 = vmatpush2.bf16.msra.mxu0 0
        %2143 = vmatprep.subr.bf16.mxu0 0
        %2144 = vmatpush2.bf16.msra.mxu0 0
        %2145 = vmatprep.subr.bf16.mxu0 0
        %2146 = vmatpush2.bf16.msra.mxu0 0
        %2147 = vmatprep.subr.bf16.mxu0 0
        %2148 = vmatpush2.bf16.msra.mxu0 0
        %2149 = vmatprep.subr.bf16.mxu0 0
        %2150 = vmatpush2.bf16.msra.mxu0 0
        %2151 = vmatprep.subr.bf16.mxu0 0
        %2152 = vmatpush2.bf16.msra.mxu0 0
        %2153 = vmatprep.subr.bf16.mxu0 0
        %2154 = vmatpush2.bf16.msra.mxu0 0
        %2155 = vmatprep.subr.bf16.mxu0 0
        %2156 = vmatpush2.bf16.msra.mxu0 0
        %2157 = vmatprep.mubr.bf16.mxu0 0
        %2158 = vmatmul.mubr.bf16.gmra.mxu0 %v2055
        %v2159 = vpop.f32.mrf.mxu0
        %v2160 = vadd.f32 0.0, %v2159
        %v2161 = vpop.f32.mrf.mxu0
        %v2162 = vadd.f32 0.0, %v2161
        %v2163 = vpop.f32.mrf.mxu0
        %v2164 = vadd.f32 0.0, %v2163
        %v2165 = vpop.f32.mrf.mxu0
        %v2166 = vadd.f32 0.0, %v2165
        %2167 = vdwg.mxu0
        %v2168 = vadd.f32 %v2074, %v2117
        %v2169 = vadd.f32 %v2075, %v2119
        %v2170 = vadd.f32 %v2076, %v2160
        %v2171 = vadd.f32 %v2077, %v2162
        %v2172 = vadd.f32 %v2078, %v2121
        %v2173 = vadd.f32 %v2079, %v2123
        %v2174 = vadd.f32 %v2080, %v2164
        %v2175 = vadd.f32 %v2081, %v2166
        %v2176 = vxor.u32 %v2168, 2147483648
        %v2177 = vxor.u32 %v2172, 2147483648
        %v2178 = vmul.f32 %v2176, 1.442695
        %v2179 = vpow.pop %v2178
        %v2180 = vmul.f32 %v2177, 1.442695
        %v2181 = vpow.pop %v2180
        %v2182 = vadd.f32 %v2179, 1.0
        %v2183 = vadd.f32 %v2181, 1.0
        %v2184 = vrcp.pop %v2182
        %v2185 = vmul.f32 1.0, %v2184
        %v2186 = vrcp.pop %v2183
        %v2187 = vmul.f32 1.0, %v2186
        %v2188 = vxor.u32 %v2169, 2147483648
        %v2189 = vxor.u32 %v2173, 2147483648
        %v2190 = vmul.f32 %v2188, 1.442695
        %v2191 = vpow.pop %v2190
        %v2192 = vmul.f32 %v2189, 1.442695
        %v2193 = vpow.pop %v2192
        %v2194 = vadd.f32 %v2191, 1.0
        %v2195 = vadd.f32 %v2193, 1.0
        %v2196 = vrcp.pop %v2194
        %v2197 = vmul.f32 1.0, %v2196
        %v2198 = vrcp.pop %v2195
        %v2199 = vmul.f32 1.0, %v2198
        %v2200 = vtanh.pop %v2170
        %v2201 = vtanh.pop %v2174
        %v2202 = vxor.u32 %v2171, 2147483648
        %v2203 = vxor.u32 %v2175, 2147483648
        %v2204 = vmul.f32 %v2202, 1.442695
        %v2205 = vpow.pop %v2204
        %v2206 = vmul.f32 %v2203, 1.442695
        %v2207 = vpow.pop %v2206
        %v2208 = vadd.f32 %v2205, 1.0
        %v2209 = vadd.f32 %v2207, 1.0
        %v2210 = vrcp.pop %v2208
        %v2211 = vmul.f32 1.0, %v2210
        %v2212 = vrcp.pop %v2209
        %v2213 = vmul.f32 1.0, %v2212
        %v2214 = vmul.f32 %v2197, %v2049
        %v2215 = vmul.f32 %v2199, %v2050
        %v2216 = vmul.f32 %v2185, %v2200
        %v2217 = vmul.f32 %v2187, %v2201
        %v2218 = vadd.f32 %v2214, %v2216
        %v2219 = vadd.f32 %v2215, %v2217
        %v2220 = vtanh.pop %v2218
        %v2221 = vtanh.pop %v2219
        %v2222 = vmul.f32 %v2211, %v2220
        %v2223 = vmul.f32 %v2213, %v2221
        %v2224 = vpack.c.bf16 %v2223, %v2222
        %v2226 = vunpack.c.l.b16 %v2224
        %v2227 = vunpack.c.h.b16 %v2224
        %v2228 = vpack.c.b16 %v2226, %v2226
        %v2229 = vpack.c.b16 %v2227, %v2227
        %s2232 = smul.addr %s2069, 4
        %s2233 = scalar_lea.vmem %s333, %s2232 [#allocation5]
        %2234 = vst [vmem:[%s2233] sm:$0xf] %v2228
        %2235 = vst [vmem:[%s2233 + $0x4] sm:$0xf] %v2229
        %s2236 = smul.u32 %s25, 4294967293
        %s2237 = sadd.s32 %s2236, 5
        %s2238 = smul.u32 %s2237, 16
        %s2239 = sshra.s32 %s2238, 3
        %s2240 = sand.u32 %s2238, 7
        %s2241 = smul.u32 %s2239, 4
        %s2242 = smul.addr %s2241, 8
        %s2243 = scalar_lea.vmem [#allocation2], %s2242
        %v2244 = vld [vmem:[%s2243] sm:$0xff]
        %v2245 = vld [vmem:[%s2243 + $0x8] sm:$0xff]
        %v2246 = vld [vmem:[%s2243 + $0x10] sm:$0xff]
        %v2247 = vld [vmem:[%s2243 + $0x18] sm:$0xff]
        %v2248 = vld [vmem:[%s2243 + $0x20] sm:$0xff]
        %v2249 = vld [vmem:[%s2243 + $0x28] sm:$0xff]
        %v2250 = vld [vmem:[%s2243 + $0x30] sm:$0xff]
        %v2251 = vld [vmem:[%s2243 + $0x38] sm:$0xff]
        %2252 = vmatprep.subr.bf16.mxu0 %v1369
        %2253 = vmatpush1.bf16.msra.mxu0 %v1368
        %2254 = vmatprep.subr.bf16.mxu0 %v1365
        %2255 = vmatpush1.bf16.msra.mxu0 %v1364
        %2256 = vmatprep.subr.bf16.mxu0 %v1361
        %2257 = vmatpush1.bf16.msra.mxu0 %v1360
        %2258 = vmatprep.subr.bf16.mxu0 %v1357
        %2259 = vmatpush1.bf16.msra.mxu0 %v1356
        %2260 = vmatprep.subr.bf16.mxu0 %v1353
        %2261 = vmatpush1.bf16.msra.mxu0 %v1352
        %2262 = vmatprep.subr.bf16.mxu0 %v1349
        %2263 = vmatpush1.bf16.msra.mxu0 %v1348
        %2264 = vmatprep.subr.bf16.mxu0 %v1345
        %2265 = vmatpush1.bf16.msra.mxu0 %v1344
        %2266 = vmatprep.subr.bf16.mxu0 %v1341
        %2267 = vmatpush1.bf16.msra.mxu0 %v1340
        %2268 = vmatprep.subr.bf16.mxu0 0
        %2269 = vmatpush2.bf16.msra.mxu0 0
        %2270 = vmatprep.subr.bf16.mxu0 0
        %2271 = vmatpush2.bf16.msra.mxu0 0
        %2272 = vmatprep.subr.bf16.mxu0 0
        %2273 = vmatpush2.bf16.msra.mxu0 0
        %2274 = vmatprep.subr.bf16.mxu0 0
        %2275 = vmatpush2.bf16.msra.mxu0 0
        %2276 = vmatprep.subr.bf16.mxu0 0
        %2277 = vmatpush2.bf16.msra.mxu0 0
        %2278 = vmatprep.subr.bf16.mxu0 0
        %2279 = vmatpush2.bf16.msra.mxu0 0
        %2280 = vmatprep.subr.bf16.mxu0 0
        %2281 = vmatpush2.bf16.msra.mxu0 0
        %2282 = vmatprep.subr.bf16.mxu0 0
        %2283 = vmatpush2.bf16.msra.mxu0 0
        %2284 = vmatprep.mubr.bf16.mxu0 0
        %2285 = vmatmul.mubr.bf16.gmra.mxu0 %v2224
        %v2286 = vpop.f32.mrf.mxu0
        %v2287 = vadd.f32 0.0, %v2286
        %v2288 = vpop.f32.mrf.mxu0
        %v2289 = vadd.f32 0.0, %v2288
        %v2290 = vpop.f32.mrf.mxu0
        %v2291 = vadd.f32 0.0, %v2290
        %v2292 = vpop.f32.mrf.mxu0
        %v2293 = vadd.f32 0.0, %v2292
        %2294 = vdwg.mxu0
        %2295 = vmatprep.subr.bf16.mxu0 %v1371
        %2296 = vmatpush1.bf16.msra.mxu0 %v1370
        %2297 = vmatprep.subr.bf16.mxu0 %v1367
        %2298 = vmatpush1.bf16.msra.mxu0 %v1366
        %2299 = vmatprep.subr.bf16.mxu0 %v1363
        %2300 = vmatpush1.bf16.msra.mxu0 %v1362
        %2301 = vmatprep.subr.bf16.mxu0 %v1359
        %2302 = vmatpush1.bf16.msra.mxu0 %v1358
        %2303 = vmatprep.subr.bf16.mxu0 %v1355
        %2304 = vmatpush1.bf16.msra.mxu0 %v1354
        %2305 = vmatprep.subr.bf16.mxu0 %v1351
        %2306 = vmatpush1.bf16.msra.mxu0 %v1350
        %2307 = vmatprep.subr.bf16.mxu0 %v1347
        %2308 = vmatpush1.bf16.msra.mxu0 %v1346
        %2309 = vmatprep.subr.bf16.mxu0 %v1343
        %2310 = vmatpush1.bf16.msra.mxu0 %v1342
        %2311 = vmatprep.subr.bf16.mxu0 0
        %2312 = vmatpush2.bf16.msra.mxu0 0
        %2313 = vmatprep.subr.bf16.mxu0 0
        %2314 = vmatpush2.bf16.msra.mxu0 0
        %2315 = vmatprep.subr.bf16.mxu0 0
        %2316 = vmatpush2.bf16.msra.mxu0 0
        %2317 = vmatprep.subr.bf16.mxu0 0
        %2318 = vmatpush2.bf16.msra.mxu0 0
        %2319 = vmatprep.subr.bf16.mxu0 0
        %2320 = vmatpush2.bf16.msra.mxu0 0
        %2321 = vmatprep.subr.bf16.mxu0 0
        %2322 = vmatpush2.bf16.msra.mxu0 0
        %2323 = vmatprep.subr.bf16.mxu0 0
        %2324 = vmatpush2.bf16.msra.mxu0 0
        %2325 = vmatprep.subr.bf16.mxu0 0
        %2326 = vmatpush2.bf16.msra.mxu0 0
        %2327 = vmatprep.mubr.bf16.mxu0 0
        %2328 = vmatmul.mubr.bf16.gmra.mxu0 %v2224
        %v2329 = vpop.f32.mrf.mxu0
        %v2330 = vadd.f32 0.0, %v2329
        %v2331 = vpop.f32.mrf.mxu0
        %v2332 = vadd.f32 0.0, %v2331
        %v2333 = vpop.f32.mrf.mxu0
        %v2334 = vadd.f32 0.0, %v2333
        %v2335 = vpop.f32.mrf.mxu0
        %v2336 = vadd.f32 0.0, %v2335
        %2337 = vdwg.mxu0
        %v2338 = vadd.f32 %v2244, %v2287
        %v2339 = vadd.f32 %v2245, %v2289
        %v2340 = vadd.f32 %v2246, %v2330
        %v2341 = vadd.f32 %v2247, %v2332
        %v2342 = vadd.f32 %v2248, %v2291
        %v2343 = vadd.f32 %v2249, %v2293
        %v2344 = vadd.f32 %v2250, %v2334
        %v2345 = vadd.f32 %v2251, %v2336
        %v2346 = vxor.u32 %v2338, 2147483648
        %v2347 = vxor.u32 %v2342, 2147483648
        %v2348 = vmul.f32 %v2346, 1.442695
        %v2349 = vpow.pop %v2348
        %v2350 = vmul.f32 %v2347, 1.442695
        %v2351 = vpow.pop %v2350
        %v2352 = vadd.f32 %v2349, 1.0
        %v2353 = vadd.f32 %v2351, 1.0
        %v2354 = vrcp.pop %v2352
        %v2355 = vmul.f32 1.0, %v2354
        %v2356 = vrcp.pop %v2353
        %v2357 = vmul.f32 1.0, %v2356
        %v2358 = vxor.u32 %v2339, 2147483648
        %v2359 = vxor.u32 %v2343, 2147483648
        %v2360 = vmul.f32 %v2358, 1.442695
        %v2361 = vpow.pop %v2360
        %v2362 = vmul.f32 %v2359, 1.442695
        %v2363 = vpow.pop %v2362
        %v2364 = vadd.f32 %v2361, 1.0
        %v2365 = vadd.f32 %v2363, 1.0
        %v2366 = vrcp.pop %v2364
        %v2367 = vmul.f32 1.0, %v2366
        %v2368 = vrcp.pop %v2365
        %v2369 = vmul.f32 1.0, %v2368
        %v2370 = vtanh.pop %v2340
        %v2371 = vtanh.pop %v2344
        %v2372 = vxor.u32 %v2341, 2147483648
        %v2373 = vxor.u32 %v2345, 2147483648
        %v2374 = vmul.f32 %v2372, 1.442695
        %v2375 = vpow.pop %v2374
        %v2376 = vmul.f32 %v2373, 1.442695
        %v2377 = vpow.pop %v2376
        %v2378 = vadd.f32 %v2375, 1.0
        %v2379 = vadd.f32 %v2377, 1.0
        %v2380 = vrcp.pop %v2378
        %v2381 = vmul.f32 1.0, %v2380
        %v2382 = vrcp.pop %v2379
        %v2383 = vmul.f32 1.0, %v2382
        %v2384 = vmul.f32 %v2367, %v2218
        %v2385 = vmul.f32 %v2369, %v2219
        %v2386 = vmul.f32 %v2355, %v2370
        %v2387 = vmul.f32 %v2357, %v2371
        %v2388 = vadd.f32 %v2384, %v2386
        %v2389 = vadd.f32 %v2385, %v2387
        %v2390 = vtanh.pop %v2388
        %v2391 = vtanh.pop %v2389
        %v2392 = vmul.f32 %v2381, %v2390
        %v2393 = vmul.f32 %v2383, %v2391
        %v2394 = vpack.c.bf16 %v2393, %v2392
        %v2396 = vunpack.c.l.b16 %v2394
        %v2397 = vunpack.c.h.b16 %v2394
        %v2398 = vpack.c.b16 %v2396, %v2396
        %v2399 = vpack.c.b16 %v2397, %v2397
        %s2402 = smul.addr %s2239, 4
        %s2403 = scalar_lea.vmem %s333, %s2402 [#allocation5]
        %2404 = vst [vmem:[%s2403] sm:$0xf] %v2398
        %2405 = vst [vmem:[%s2403 + $0x4] sm:$0xf] %v2399
        %s2406 = smul.u32 %s25, 4294967291
        %s2407 = sadd.s32 %s2406, 6
        %s2408 = smul.u32 %s2407, 16
        %s2409 = sshra.s32 %s2408, 3
        %s2410 = sand.u32 %s2408, 7
        %s2411 = smul.u32 %s2409, 4
        %s2412 = smul.addr %s2411, 8
        %s2413 = scalar_lea.vmem [#allocation2], %s2412
        %v2414 = vld [vmem:[%s2413] sm:$0xff]
        %v2415 = vld [vmem:[%s2413 + $0x8] sm:$0xff]
        %v2416 = vld [vmem:[%s2413 + $0x10] sm:$0xff]
        %v2417 = vld [vmem:[%s2413 + $0x18] sm:$0xff]
        %v2418 = vld [vmem:[%s2413 + $0x20] sm:$0xff]
        %v2419 = vld [vmem:[%s2413 + $0x28] sm:$0xff]
        %v2420 = vld [vmem:[%s2413 + $0x30] sm:$0xff]
        %v2421 = vld [vmem:[%s2413 + $0x38] sm:$0xff]
        %2422 = vmatprep.subr.bf16.mxu0 %v1369
        %2423 = vmatpush1.bf16.msra.mxu0 %v1368
        %2424 = vmatprep.subr.bf16.mxu0 %v1365
        %2425 = vmatpush1.bf16.msra.mxu0 %v1364
        %2426 = vmatprep.subr.bf16.mxu0 %v1361
        %2427 = vmatpush1.bf16.msra.mxu0 %v1360
        %2428 = vmatprep.subr.bf16.mxu0 %v1357
        %2429 = vmatpush1.bf16.msra.mxu0 %v1356
        %2430 = vmatprep.subr.bf16.mxu0 %v1353
        %2431 = vmatpush1.bf16.msra.mxu0 %v1352
        %2432 = vmatprep.subr.bf16.mxu0 %v1349
        %2433 = vmatpush1.bf16.msra.mxu0 %v1348
        %2434 = vmatprep.subr.bf16.mxu0 %v1345
        %2435 = vmatpush1.bf16.msra.mxu0 %v1344
        %2436 = vmatprep.subr.bf16.mxu0 %v1341
        %2437 = vmatpush1.bf16.msra.mxu0 %v1340
        %2438 = vmatprep.subr.bf16.mxu0 0
        %2439 = vmatpush2.bf16.msra.mxu0 0
        %2440 = vmatprep.subr.bf16.mxu0 0
        %2441 = vmatpush2.bf16.msra.mxu0 0
        %2442 = vmatprep.subr.bf16.mxu0 0
        %2443 = vmatpush2.bf16.msra.mxu0 0
        %2444 = vmatprep.subr.bf16.mxu0 0
        %2445 = vmatpush2.bf16.msra.mxu0 0
        %2446 = vmatprep.subr.bf16.mxu0 0
        %2447 = vmatpush2.bf16.msra.mxu0 0
        %2448 = vmatprep.subr.bf16.mxu0 0
        %2449 = vmatpush2.bf16.msra.mxu0 0
        %2450 = vmatprep.subr.bf16.mxu0 0
        %2451 = vmatpush2.bf16.msra.mxu0 0
        %2452 = vmatprep.subr.bf16.mxu0 0
        %2453 = vmatpush2.bf16.msra.mxu0 0
        %2454 = vmatprep.mubr.bf16.mxu0 0
        %2455 = vmatmul.mubr.bf16.gmra.mxu0 %v2394
        %v2456 = vpop.f32.mrf.mxu0
        %v2457 = vadd.f32 0.0, %v2456
        %v2458 = vpop.f32.mrf.mxu0
        %v2459 = vadd.f32 0.0, %v2458
        %v2460 = vpop.f32.mrf.mxu0
        %v2461 = vadd.f32 0.0, %v2460
        %v2462 = vpop.f32.mrf.mxu0
        %v2463 = vadd.f32 0.0, %v2462
        %2464 = vdwg.mxu0
        %2465 = vmatprep.subr.bf16.mxu0 %v1371
        %2466 = vmatpush1.bf16.msra.mxu0 %v1370
        %2467 = vmatprep.subr.bf16.mxu0 %v1367
        %2468 = vmatpush1.bf16.msra.mxu0 %v1366
        %2469 = vmatprep.subr.bf16.mxu0 %v1363
        %2470 = vmatpush1.bf16.msra.mxu0 %v1362
        %2471 = vmatprep.subr.bf16.mxu0 %v1359
        %2472 = vmatpush1.bf16.msra.mxu0 %v1358
        %2473 = vmatprep.subr.bf16.mxu0 %v1355
        %2474 = vmatpush1.bf16.msra.mxu0 %v1354
        %2475 = vmatprep.subr.bf16.mxu0 %v1351
        %2476 = vmatpush1.bf16.msra.mxu0 %v1350
        %2477 = vmatprep.subr.bf16.mxu0 %v1347
        %2478 = vmatpush1.bf16.msra.mxu0 %v1346
        %2479 = vmatprep.subr.bf16.mxu0 %v1343
        %2480 = vmatpush1.bf16.msra.mxu0 %v1342
        %2481 = vmatprep.subr.bf16.mxu0 0
        %2482 = vmatpush2.bf16.msra.mxu0 0
        %2483 = vmatprep.subr.bf16.mxu0 0
        %2484 = vmatpush2.bf16.msra.mxu0 0
        %2485 = vmatprep.subr.bf16.mxu0 0
        %2486 = vmatpush2.bf16.msra.mxu0 0
        %2487 = vmatprep.subr.bf16.mxu0 0
        %2488 = vmatpush2.bf16.msra.mxu0 0
        %2489 = vmatprep.subr.bf16.mxu0 0
        %2490 = vmatpush2.bf16.msra.mxu0 0
        %2491 = vmatprep.subr.bf16.mxu0 0
        %2492 = vmatpush2.bf16.msra.mxu0 0
        %2493 = vmatprep.subr.bf16.mxu0 0
        %2494 = vmatpush2.bf16.msra.mxu0 0
        %2495 = vmatprep.subr.bf16.mxu0 0
        %2496 = vmatpush2.bf16.msra.mxu0 0
        %2497 = vmatprep.mubr.bf16.mxu0 0
        %2498 = vmatmul.mubr.bf16.gmra.mxu0 %v2394
        %v2499 = vpop.f32.mrf.mxu0
        %v2500 = vadd.f32 0.0, %v2499
        %v2501 = vpop.f32.mrf.mxu0
        %v2502 = vadd.f32 0.0, %v2501
        %v2503 = vpop.f32.mrf.mxu0
        %v2504 = vadd.f32 0.0, %v2503
        %v2505 = vpop.f32.mrf.mxu0
        %v2506 = vadd.f32 0.0, %v2505
        %2507 = vdwg.mxu0
        %v2508 = vadd.f32 %v2414, %v2457
        %v2509 = vadd.f32 %v2415, %v2459
        %v2510 = vadd.f32 %v2416, %v2500
        %v2511 = vadd.f32 %v2417, %v2502
        %v2512 = vadd.f32 %v2418, %v2461
        %v2513 = vadd.f32 %v2419, %v2463
        %v2514 = vadd.f32 %v2420, %v2504
        %v2515 = vadd.f32 %v2421, %v2506
        %v2516 = vxor.u32 %v2508, 2147483648
        %v2517 = vxor.u32 %v2512, 2147483648
        %v2518 = vmul.f32 %v2516, 1.442695
        %v2519 = vpow.pop %v2518
        %v2520 = vmul.f32 %v2517, 1.442695
        %v2521 = vpow.pop %v2520
        %v2522 = vadd.f32 %v2519, 1.0
        %v2523 = vadd.f32 %v2521, 1.0
        %v2524 = vrcp.pop %v2522
        %v2525 = vmul.f32 1.0, %v2524
        %v2526 = vrcp.pop %v2523
        %v2527 = vmul.f32 1.0, %v2526
        %v2528 = vxor.u32 %v2509, 2147483648
        %v2529 = vxor.u32 %v2513, 2147483648
        %v2530 = vmul.f32 %v2528, 1.442695
        %v2531 = vpow.pop %v2530
        %v2532 = vmul.f32 %v2529, 1.442695
        %v2533 = vpow.pop %v2532
        %v2534 = vadd.f32 %v2531, 1.0
        %v2535 = vadd.f32 %v2533, 1.0
        %v2536 = vrcp.pop %v2534
        %v2537 = vmul.f32 1.0, %v2536
        %v2538 = vrcp.pop %v2535
        %v2539 = vmul.f32 1.0, %v2538
        %v2540 = vtanh.pop %v2510
        %v2541 = vtanh.pop %v2514
        %v2542 = vxor.u32 %v2511, 2147483648
        %v2543 = vxor.u32 %v2515, 2147483648
        %v2544 = vmul.f32 %v2542, 1.442695
        %v2545 = vpow.pop %v2544
        %v2546 = vmul.f32 %v2543, 1.442695
        %v2547 = vpow.pop %v2546
        %v2548 = vadd.f32 %v2545, 1.0
        %v2549 = vadd.f32 %v2547, 1.0
        %v2550 = vrcp.pop %v2548
        %v2551 = vmul.f32 1.0, %v2550
        %v2552 = vrcp.pop %v2549
        %v2553 = vmul.f32 1.0, %v2552
        %v2554 = vmul.f32 %v2537, %v2388
        %v2555 = vmul.f32 %v2539, %v2389
        %v2556 = vmul.f32 %v2525, %v2540
        %v2557 = vmul.f32 %v2527, %v2541
        %v2558 = vadd.f32 %v2554, %v2556
        %v2559 = vadd.f32 %v2555, %v2557
        %v2560 = vtanh.pop %v2558
        %v2561 = vtanh.pop %v2559
        %v2562 = vmul.f32 %v2551, %v2560
        %v2563 = vmul.f32 %v2553, %v2561
        %v2564 = vpack.c.bf16 %v2563, %v2562
        %v2566 = vunpack.c.l.b16 %v2564
        %v2567 = vunpack.c.h.b16 %v2564
        %v2568 = vpack.c.b16 %v2566, %v2566
        %v2569 = vpack.c.b16 %v2567, %v2567
        %s2572 = smul.addr %s2409, 4
        %s2573 = scalar_lea.vmem %s333, %s2572 [#allocation5]
        %2574 = vst [vmem:[%s2573] sm:$0xf] %v2568
        %2575 = vst [vmem:[%s2573 + $0x4] sm:$0xf] %v2569
        %s2576 = smul.u32 %s25, 4294967289
        %s2577 = sadd.s32 %s2576, 7
        %s2578 = smul.u32 %s2577, 16
        %s2579 = sshra.s32 %s2578, 3
        %s2580 = sand.u32 %s2578, 7
        %s2581 = smul.u32 %s2579, 4
        %s2582 = smul.addr %s2581, 8
        %s2583 = scalar_lea.vmem [#allocation2], %s2582
        %v2584 = vld [vmem:[%s2583] sm:$0xff]
        %v2585 = vld [vmem:[%s2583 + $0x8] sm:$0xff]
        %v2586 = vld [vmem:[%s2583 + $0x10] sm:$0xff]
        %v2587 = vld [vmem:[%s2583 + $0x18] sm:$0xff]
        %v2588 = vld [vmem:[%s2583 + $0x20] sm:$0xff]
        %v2589 = vld [vmem:[%s2583 + $0x28] sm:$0xff]
        %v2590 = vld [vmem:[%s2583 + $0x30] sm:$0xff]
        %v2591 = vld [vmem:[%s2583 + $0x38] sm:$0xff]
        %2592 = vmatprep.subr.bf16.mxu0 %v1369
        %2593 = vmatpush1.bf16.msra.mxu0 %v1368
        %2594 = vmatprep.subr.bf16.mxu0 %v1365
        %2595 = vmatpush1.bf16.msra.mxu0 %v1364
        %2596 = vmatprep.subr.bf16.mxu0 %v1361
        %2597 = vmatpush1.bf16.msra.mxu0 %v1360
        %2598 = vmatprep.subr.bf16.mxu0 %v1357
        %2599 = vmatpush1.bf16.msra.mxu0 %v1356
        %2600 = vmatprep.subr.bf16.mxu0 %v1353
        %2601 = vmatpush1.bf16.msra.mxu0 %v1352
        %2602 = vmatprep.subr.bf16.mxu0 %v1349
        %2603 = vmatpush1.bf16.msra.mxu0 %v1348
        %2604 = vmatprep.subr.bf16.mxu0 %v1345
        %2605 = vmatpush1.bf16.msra.mxu0 %v1344
        %2606 = vmatprep.subr.bf16.mxu0 %v1341
        %2607 = vmatpush1.bf16.msra.mxu0 %v1340
        %2608 = vmatprep.subr.bf16.mxu0 0
        %2609 = vmatpush2.bf16.msra.mxu0 0
        %2610 = vmatprep.subr.bf16.mxu0 0
        %2611 = vmatpush2.bf16.msra.mxu0 0
        %2612 = vmatprep.subr.bf16.mxu0 0
        %2613 = vmatpush2.bf16.msra.mxu0 0
        %2614 = vmatprep.subr.bf16.mxu0 0
        %2615 = vmatpush2.bf16.msra.mxu0 0
        %2616 = vmatprep.subr.bf16.mxu0 0
        %2617 = vmatpush2.bf16.msra.mxu0 0
        %2618 = vmatprep.subr.bf16.mxu0 0
        %2619 = vmatpush2.bf16.msra.mxu0 0
        %2620 = vmatprep.subr.bf16.mxu0 0
        %2621 = vmatpush2.bf16.msra.mxu0 0
        %2622 = vmatprep.subr.bf16.mxu0 0
        %2623 = vmatpush2.bf16.msra.mxu0 0
        %2624 = vmatprep.mubr.bf16.mxu0 0
        %2625 = vmatmul.mubr.bf16.gmra.mxu0 %v2564
        %v2626 = vpop.f32.mrf.mxu0
        %v2627 = vadd.f32 0.0, %v2626
        %v2628 = vpop.f32.mrf.mxu0
        %v2629 = vadd.f32 0.0, %v2628
        %v2630 = vpop.f32.mrf.mxu0
        %v2631 = vadd.f32 0.0, %v2630
        %v2632 = vpop.f32.mrf.mxu0
        %v2633 = vadd.f32 0.0, %v2632
        %2634 = vdwg.mxu0
        %2635 = vmatprep.subr.bf16.mxu0 %v1371
        %2636 = vmatpush1.bf16.msra.mxu0 %v1370
        %2637 = vmatprep.subr.bf16.mxu0 %v1367
        %2638 = vmatpush1.bf16.msra.mxu0 %v1366
        %2639 = vmatprep.subr.bf16.mxu0 %v1363
        %2640 = vmatpush1.bf16.msra.mxu0 %v1362
        %2641 = vmatprep.subr.bf16.mxu0 %v1359
        %2642 = vmatpush1.bf16.msra.mxu0 %v1358
        %2643 = vmatprep.subr.bf16.mxu0 %v1355
        %2644 = vmatpush1.bf16.msra.mxu0 %v1354
        %2645 = vmatprep.subr.bf16.mxu0 %v1351
        %2646 = vmatpush1.bf16.msra.mxu0 %v1350
        %2647 = vmatprep.subr.bf16.mxu0 %v1347
        %2648 = vmatpush1.bf16.msra.mxu0 %v1346
        %2649 = vmatprep.subr.bf16.mxu0 %v1343
        %2650 = vmatpush1.bf16.msra.mxu0 %v1342
        %2651 = vmatprep.subr.bf16.mxu0 0
        %2652 = vmatpush2.bf16.msra.mxu0 0
        %2653 = vmatprep.subr.bf16.mxu0 0
        %2654 = vmatpush2.bf16.msra.mxu0 0
        %2655 = vmatprep.subr.bf16.mxu0 0
        %2656 = vmatpush2.bf16.msra.mxu0 0
        %2657 = vmatprep.subr.bf16.mxu0 0
        %2658 = vmatpush2.bf16.msra.mxu0 0
        %2659 = vmatprep.subr.bf16.mxu0 0
        %2660 = vmatpush2.bf16.msra.mxu0 0
        %2661 = vmatprep.subr.bf16.mxu0 0
        %2662 = vmatpush2.bf16.msra.mxu0 0
        %2663 = vmatprep.subr.bf16.mxu0 0
        %2664 = vmatpush2.bf16.msra.mxu0 0
        %2665 = vmatprep.subr.bf16.mxu0 0
        %2666 = vmatpush2.bf16.msra.mxu0 0
        %2667 = vmatprep.mubr.bf16.mxu0 0
        %2668 = vmatmul.mubr.bf16.gmra.mxu0 %v2564
        %v2669 = vpop.f32.mrf.mxu0
        %v2670 = vadd.f32 0.0, %v2669
        %v2671 = vpop.f32.mrf.mxu0
        %v2672 = vadd.f32 0.0, %v2671
        %v2673 = vpop.f32.mrf.mxu0
        %v2674 = vadd.f32 0.0, %v2673
        %v2675 = vpop.f32.mrf.mxu0
        %v2676 = vadd.f32 0.0, %v2675
        %2677 = vdwg.mxu0
        %v2678 = vadd.f32 %v2584, %v2627
        %v2679 = vadd.f32 %v2585, %v2629
        %v2680 = vadd.f32 %v2586, %v2670
        %v2681 = vadd.f32 %v2587, %v2672
        %v2682 = vadd.f32 %v2588, %v2631
        %v2683 = vadd.f32 %v2589, %v2633
        %v2684 = vadd.f32 %v2590, %v2674
        %v2685 = vadd.f32 %v2591, %v2676
        %v2686 = vxor.u32 %v2678, 2147483648
        %v2687 = vxor.u32 %v2682, 2147483648
        %v2688 = vmul.f32 %v2686, 1.442695
        %v2689 = vpow.pop %v2688
        %v2690 = vmul.f32 %v2687, 1.442695
        %v2691 = vpow.pop %v2690
        %v2692 = vadd.f32 %v2689, 1.0
        %v2693 = vadd.f32 %v2691, 1.0
        %v2694 = vrcp.pop %v2692
        %v2695 = vmul.f32 1.0, %v2694
        %v2696 = vrcp.pop %v2693
        %v2697 = vmul.f32 1.0, %v2696
        %v2698 = vxor.u32 %v2679, 2147483648
        %v2699 = vxor.u32 %v2683, 2147483648
        %v2700 = vmul.f32 %v2698, 1.442695
        %v2701 = vpow.pop %v2700
        %v2702 = vmul.f32 %v2699, 1.442695
        %v2703 = vpow.pop %v2702
        %v2704 = vadd.f32 %v2701, 1.0
        %v2705 = vadd.f32 %v2703, 1.0
        %v2706 = vrcp.pop %v2704
        %v2707 = vmul.f32 1.0, %v2706
        %v2708 = vrcp.pop %v2705
        %v2709 = vmul.f32 1.0, %v2708
        %v2710 = vtanh.pop %v2680
        %v2711 = vtanh.pop %v2684
        %v2712 = vxor.u32 %v2681, 2147483648
        %v2713 = vxor.u32 %v2685, 2147483648
        %v2714 = vmul.f32 %v2712, 1.442695
        %v2715 = vpow.pop %v2714
        %v2716 = vmul.f32 %v2713, 1.442695
        %v2717 = vpow.pop %v2716
        %v2718 = vadd.f32 %v2715, 1.0
        %v2719 = vadd.f32 %v2717, 1.0
        %v2720 = vrcp.pop %v2718
        %v2721 = vmul.f32 1.0, %v2720
        %v2722 = vrcp.pop %v2719
        %v2723 = vmul.f32 1.0, %v2722
        %v2724 = vmul.f32 %v2707, %v2558
        %v2725 = vmul.f32 %v2709, %v2559
        %v2726 = vmul.f32 %v2695, %v2710
        %v2727 = vmul.f32 %v2697, %v2711
        %v2728 = vadd.f32 %v2724, %v2726
        %v2729 = vadd.f32 %v2725, %v2727
        %v2730 = vtanh.pop %v2728
        %v2731 = vtanh.pop %v2729
        %v2732 = vmul.f32 %v2721, %v2730
        %v2733 = vmul.f32 %v2723, %v2731
        %v2734 = vpack.c.bf16 %v2733, %v2732
        %v2736 = vunpack.c.l.b16 %v2734
        %v2737 = vunpack.c.h.b16 %v2734
        %v2738 = vpack.c.b16 %v2736, %v2736
        %v2739 = vpack.c.b16 %v2737, %v2737
        %s2742 = smul.addr %s2579, 4
        %s2743 = scalar_lea.vmem %s333, %s2742 [#allocation5]
        %2744 = vst [vmem:[%s2743] sm:$0xf] %v2738
        %2745 = vst [vmem:[%s2743 + $0x4] sm:$0xf] %v2739
        %2746 = vst [vmem:[#allocation3] sm:$0xff] %v2732
        %2747 = vst [vmem:[#allocation3 + $0x8] sm:$0xff] %v2733
        %2748 = vst [vmem:[#allocation4] sm:$0xff] %v2728
        %2749 = vst [vmem:[#allocation4 + $0x8] sm:$0xff] %v2729
        // Predicated region
        $region41: #{encoder_rnn_forward.3} parent=35 // pred_check
          %p2750 = pneg %p393
        $region42: #{encoder_rnn_forward.3} parent=35 // pred_check_branch
          %2752 = sbr.rel (%p2750) target = $region44
        $region43: #{encoder_rnn_forward.3} parent=35 // pred_region
          %2753 = vst [vmem:[%s386] sm:$0xff] %v2732
          %2754 = vst [vmem:[%s386 + $0x8] sm:$0xff] %v2733
          %2755 = vst [vmem:[%s391] sm:$0xff] %v2728
          %2756 = vst [vmem:[%s391 + $0x8] sm:$0xff] %v2729
        $region44: #{encoder_rnn_forward.3} parent=35 // pred_fallthru
          _
        %s2757 = sand.u32 %s163, 1
        %s2758 = scalar_lea.sflag [#allocation6], %s2757
        %s2759 = sand.u32 %s163, 1
        %s2760 = smul.addr %s2759, 64
        %s2761 = scalar_lea.vmem [#allocation5], %s2760
        %p2762 = scmp.lt.s32.totalorder %s25, 1
        %s2763 = scalar_select %p2762, %s25, 1
        %s2764 = smul.addr %s2763, 2
        %s2765 = smul.addr %s2764, 8
        %s2766 = scalar_lea.vmem %s5, %s2765
        %p2767 = scmp.lt.s32.totalorder %s25, 1
        %s2768 = scalar_select %p2767, %s25, 1
        %s2769 = smul.addr %s2768, 2
        %s2770 = smul.addr %s2769, 8
        %s2771 = scalar_lea.vmem %s6, %s2770
        // Predicated region
        $region45: #{encoder_rnn_forward.3} parent=35 // pred_check
          %p2772 = pneg %p173
        $region46: #{encoder_rnn_forward.3} parent=35 // pred_check_branch
          %2774 = sbr.rel (%p2772) target = $region48
        $region47: #{encoder_rnn_forward.3} parent=35 // pred_region
          %s2775 = smul.u32 %s26, 2
          %s2776 = ssub.s32 0, %s2775
          %s2777 = smul.u32 %s25, %s2776
          %s2778 = sadd.s32 %s26, %s2777
          %s2779 = smul.u32 16, %s2778
          %s2781 = ssub.s32 1024, 1024
          %2782 = vsyncadd %s2758, %s2781
          %s2783 = smul.addr %s2779, 2
          %s2784 = sadd.s32 %s25, %s2783
          %s2785 = smul.addr %s2784, 64
          %s2786 = scalar_lea.hbm %s4, %s2785
          %s2787 = sshll.u32 %s2761, 4
          %s2788 = int_to_ptr.vmem [resolvable:$true] %s2787
          %2793 = dma.vmem_to_hbm [thread:$0]  %s2788, 1024, %s2786, %s2758, 64, 128, 4
        $region48: #{encoder_rnn_forward.3} parent=35 // pred_fallthru
          _
        // Predicated region
        $region49: #{encoder_rnn_forward.3} parent=35 // pred_check
          %p2794 = pneg %p199
        $region50: #{encoder_rnn_forward.3} parent=35 // pred_check_branch
          %2796 = sbr.rel (%p2794) target = $region52
        $region51: #{encoder_rnn_forward.3} parent=35 // pred_region
          _
        $region52: #{encoder_rnn_forward.3} parent=35 // pred_fallthru
          _
        // Predicated region
        $region53: #{encoder_rnn_forward.3} parent=35 // pred_check
          %p2797 = pneg %p225
        $region54: #{encoder_rnn_forward.3} parent=35 // pred_check_branch
          %2799 = sbr.rel (%p2797) target = $region56
        $region55: #{encoder_rnn_forward.3} parent=35 // pred_region
          _
        $region56: #{encoder_rnn_forward.3} parent=35 // pred_fallthru
          _
      $region36: #{encoder_rnn_forward.3} parent=5 // pred_fallthru
        _
      %p2800 = scmp.le.s32.totalorder 2, %s16
      // Predicated region
      $region57: #{encoder_rnn_forward.3} parent=5 // pred_check
        %p2801 = pneg %p2800
      $region58: #{encoder_rnn_forward.3} parent=5 // pred_check_branch
        %2803 = sbr.rel (%p2801) target = $region60
      $region59: #{encoder_rnn_forward.3} parent=5 // pred_region
        %s2804 = ssub.s32 %s16, 2
        // Predicated region
        $region61: #{encoder_rnn_forward.3} parent=59 // pred_check
          %p2805 = pneg %p179
        $region62: #{encoder_rnn_forward.3} parent=59 // pred_check_branch
          %2807 = sbr.rel (%p2805) target = $region64
        $region63: #{encoder_rnn_forward.3} parent=59 // pred_region
          %s2808 = sand.u32 %s164, 1
          %s2809 = scalar_lea.sflag [#allocation6], %s2808
          %s2810 = sand.u32 %s164, 1
          %s2811 = smul.addr %s2810, 64
          %s2812 = scalar_lea.vmem [#allocation5], %s2811
          %2813 = dma.done %s2809, 1024
        $region64: #{encoder_rnn_forward.3} parent=59 // pred_fallthru
          _
        // Predicated region
        $region65: #{encoder_rnn_forward.3} parent=59 // pred_check
          %p2814 = pneg %p205
        $region66: #{encoder_rnn_forward.3} parent=59 // pred_check_branch
          %2816 = sbr.rel (%p2814) target = $region68
        $region67: #{encoder_rnn_forward.3} parent=59 // pred_region
          %p2817 = scmp.lt.s32.totalorder %s27, 1
          %s2818 = scalar_select %p2817, %s27, 1
          %s2819 = smul.addr %s2818, 2
          %s2820 = smul.addr %s2819, 8
          %s2821 = scalar_lea.vmem %s5, %s2820
        $region68: #{encoder_rnn_forward.3} parent=59 // pred_fallthru
          _
        // Predicated region
        $region69: #{encoder_rnn_forward.3} parent=59 // pred_check
          %p2822 = pneg %p231
        $region70: #{encoder_rnn_forward.3} parent=59 // pred_check_branch
          %2824 = sbr.rel (%p2822) target = $region72
        $region71: #{encoder_rnn_forward.3} parent=59 // pred_region
          %p2825 = scmp.lt.s32.totalorder %s27, 1
          %s2826 = scalar_select %p2825, %s27, 1
          %s2827 = smul.addr %s2826, 2
          %s2828 = smul.addr %s2827, 8
          %s2829 = scalar_lea.vmem %s6, %s2828
        $region72: #{encoder_rnn_forward.3} parent=59 // pred_fallthru
          _
      $region60: #{encoder_rnn_forward.3} parent=5 // pred_fallthru
        _
    $region6: #{encoder_rnn_forward.3} parent=1 // loop_footer
      %s20 = sadd.s32 1, %s16
    $region7: #{encoder_rnn_forward.3} parent=1 // loop_footer_branch
      %15 = sbr.rel target = $region3
    $region8: #{encoder_rnn_forward.3} parent=1 // loop_exit
      _
    %2830 = vsyncpa [#allocation6], 1
    %s2831 = scalar_lea.sflag [#allocation6], 1
    %2832 = vsyncpa %s2831, 1

</llo_original>
